<compile_context>
chip_gen: v6e
topology: v6e:2x2x1
jax: 0.10.0
libtpu: 0.0.40
codegen_flags: <defaults>
</compile_context>

<pallas_src>
import functools

import jax
import jax.numpy as jnp
from jax.experimental import pallas as pl
from jax.experimental.pallas import tpu as pltpu


def attention_kernel(x_ref, wqkv_ref, bqkv_ref, wout_ref, bout_ref, o_ref,
                     *, approx_recip):
    """One grid step processes a block of Bb batch elements, all heads at once.

    Block shapes:
      x_ref    : (Bb, N, D)     compute dtype (bf16 in the perf config)
      wqkv_ref : (3*H, D, dh)   compute dtype, `scale` folded into the q slice
      bqkv_ref : (3*H, 1, dh)   f32, `scale` folded into the q slice
      wout_ref : (H, dh, D)     compute dtype
      bout_ref : (1, 1, D)      f32
      o_ref    : (Bb, N, D)     original input dtype
    """
    Bb, N, D = x_ref.shape
    G, _, dh = wqkv_ref.shape            # G = 3 * heads
    H = G // 3
    HB = H * Bb
    cdt = wqkv_ref.dtype                 # MXU operand dtype

    x = x_ref[...]                                                   # (Bb, N, D)

    # --- qkv projection: one batched MXU contraction over all 3*H projections.
    # Only major-dim broadcasts / reshapes here (no lane slicing / relayouts).
    xb = jnp.broadcast_to(x[None], (G, Bb, N, D)).reshape(G * Bb, N, D)
    wb = jnp.broadcast_to(wqkv_ref[...][:, None],
                          (G, Bb, D, dh)).reshape(G * Bb, D, dh)
    bb = jnp.broadcast_to(bqkv_ref[...][:, None],
                          (G, Bb, 1, dh)).reshape(G * Bb, 1, dh)
    qkv = jnp.einsum("gnd,gdk->gnk", xb, wb,
                     preferred_element_type=jnp.float32) + bb        # (3*H*Bb, N, dh)

    q = qkv[0 * HB:1 * HB]               # (H*Bb, N, dh); scale already folded in
    k = qkv[1 * HB:2 * HB]
    v = qkv[2 * HB:3 * HB]

    # --- attention scores + softmax.  Softmax math stays in f32; only the MXU
    # operands are cast to the compute dtype. ---
    dots = jnp.einsum("gid,gjd->gij", q.astype(cdt), k.astype(cdt),
                      preferred_element_type=jnp.float32)            # (H*Bb, N, N)
    dots = dots - jnp.max(dots, axis=-1, keepdims=True)
    p = jnp.exp(dots)
    attn = p * pl.reciprocal(jnp.sum(p, axis=-1, keepdims=True),
                             approx=approx_recip)

    out_h = jnp.einsum("gij,gjd->gid", attn.astype(cdt), v.astype(cdt),
                       preferred_element_type=jnp.float32)           # (H*Bb, N, dh)

    # --- output projection: per-head (N, dh) @ (dh, D), then sum over heads.
    # This equals concat_h(out_h) @ W_out without materializing the
    # 'h n d -> n (h d)' relayout inside the kernel. ---
    wob = jnp.broadcast_to(wout_ref[...][:, None],
                           (H, Bb, dh, D)).reshape(HB, dh, D)
    y_h = jnp.einsum("gnd,gdk->gnk", out_h.astype(cdt), wob,
                     preferred_element_type=jnp.float32)             # (H*Bb, N, D)

    # Compile-time-unrolled chain of H-1 full-tile VPU adds (head reduction).
    y = y_h[0:Bb]
    for h in range(1, H):
        y = y + y_h[h * Bb:(h + 1) * Bb]
    y = y + bout_ref[...]

    # TODO(synk): nn.Dropout(p=0.1) is identity at inference time; not applied.
    # TODO(synk): optional attention mask path not implemented (mask=None).
    o_ref[...] = y.astype(o_ref.dtype)


def attention_pallas(x, w_qkv, b_qkv, w_out, b_out, heads, *,
                     compute_dtype=jnp.bfloat16, approx_recip=True,
                     batch_block=None):
    B, N, D = x.shape
    assert D % heads == 0
    dh = D // heads
    scale = float(D) ** (-0.5)          # full model dim, matching the module
    if batch_block is None:
        batch_block = B                 # collapse the whole batch into one step
    assert B % batch_block == 0
    nb = B // batch_block
    out_dtype = x.dtype

    # ---- trace-time (XLA) weight re-layout: all head rearrangement happens
    # here for free, so the kernel never touches 4-lane head columns. ----
    # to_qkv weight columns are laid out as (qkv, head, dh).
    w3 = jnp.transpose(w_qkv.reshape(D, 3, heads, dh), (1, 2, 0, 3))  # (3,H,D,dh)
    w3 = w3.at[0].multiply(scale)       # fold `scale` into the q projection
    b3 = b_qkv.reshape(3, heads, 1, dh)
    b3 = b3.at[0].multiply(scale)
    wqkv_h = w3.reshape(3 * heads, D, dh).astype(compute_dtype)
    bqkv_h = b3.reshape(3 * heads, 1, dh).astype(jnp.float32)
    wout_h = w_out.reshape(heads, dh, D).astype(compute_dtype)
    bout_2 = b_out.reshape(1, 1, D).astype(jnp.float32)
    xc = x.astype(compute_dtype)

    kernel = functools.partial(attention_kernel, approx_recip=approx_recip)

    return pl.pallas_call(
        kernel,
        out_shape=jax.ShapeDtypeStruct((B, N, D), out_dtype),
        grid_spec=pltpu.PrefetchScalarGridSpec(
            num_scalar_prefetch=0,
            grid=(nb,),
            in_specs=[
                pl.BlockSpec((batch_block, N, D), lambda i: (i, 0, 0)),   # x
                pl.BlockSpec((3 * heads, D, dh), lambda i: (0, 0, 0)),    # w_qkv
                pl.BlockSpec((3 * heads, 1, dh), lambda i: (0, 0, 0)),    # b_qkv
                pl.BlockSpec((heads, dh, D), lambda i: (0, 0, 0)),        # w_out
                pl.BlockSpec((1, 1, D), lambda i: (0, 0, 0)),             # b_out
            ],
            out_specs=pl.BlockSpec((batch_block, N, D), lambda i: (i, 0, 0)),
        ),
        compiler_params=pltpu.CompilerParams(
            dimension_semantics=("parallel",)),
    )(xc, wqkv_h, bqkv_h, wout_h, bout_2)


def attention_reference(x, w_qkv, b_qkv, w_out, b_out, heads):
    B, N, D = x.shape
    d = D // heads
    scale = float(D) ** (-0.5)
    qkv = jnp.einsum("bnd,de->bne", x, w_qkv) + b_qkv[None, None, :]
    qkv = qkv.reshape(B, N, 3, heads, d)
    q = jnp.transpose(qkv[:, :, 0], (0, 2, 1, 3))   # (B, h, N, d)
    k = jnp.transpose(qkv[:, :, 1], (0, 2, 1, 3))
    v = jnp.transpose(qkv[:, :, 2], (0, 2, 1, 3))
    dots = jnp.einsum("bhid,bhjd->bhij", q, k) * scale
    attn = jax.nn.softmax(dots, axis=-1)
    out = jnp.einsum("bhij,bhjd->bhid", attn, v)
    out = jnp.transpose(out, (0, 2, 1, 3)).reshape(B, N, D)
    return jnp.einsum("bnd,de->bne", out, w_out) + b_out[None, None, :]


def xavier_uniform(key, fan_in, fan_out, dtype=jnp.float32):
    # Same distribution as torch.nn.init.xavier_uniform_.
    bound = (6.0 / (fan_in + fan_out)) ** 0.5
    return jax.random.uniform(key, (fan_in, fan_out), dtype, -bound, bound)


if __name__ == "__main__":
    B, N, D, H = 2, 8, 32, 8

    root = jax.random.PRNGKey(0)
    kx, kqkv, kout = jax.random.split(root, 3)

    x = jax.random.normal(kx, (B, N, D), jnp.float32)
    # to_qkv: Linear(dim, 3*dim), xavier_uniform weight, zero bias
    w_qkv = xavier_uniform(kqkv, D, 3 * D)
    b_qkv = jnp.zeros((3 * D,), jnp.float32)
    # nn1: Linear(dim, dim), xavier_uniform weight, zero bias
    w_out = xavier_uniform(kout, D, D)
    b_out = jnp.zeros((D,), jnp.float32)

    y_ref = attention_reference(x, w_qkv, b_qkv, w_out, b_out, heads=H)

    # Exact-math config (f32 MXU operands, exact reciprocal): tight check.
    y_f32 = attention_pallas(x, w_qkv, b_qkv, w_out, b_out, heads=H,
                             compute_dtype=jnp.float32, approx_recip=False)
    y_f32 = jax.block_until_ready(y_f32)
    assert jnp.allclose(y_f32, y_ref, atol=1e-5, rtol=1e-5), "f32 mismatch vs reference"

    # Performance config (bf16 MXU operands, f32 accumulation/softmax,
    # EUP approximate reciprocal).
    y_bf16 = attention_pallas(x, w_qkv, b_qkv, w_out, b_out, heads=H,
                              compute_dtype=jnp.bfloat16, approx_recip=True)
    y_bf16 = jax.block_until_ready(y_bf16)
    assert jnp.allclose(y_bf16, y_ref, atol=3e-2, rtol=3e-2), "bf16 mismatch vs reference"

    print("KERNEL_OK")
</pallas_src>

<mosaic_0001>
module attributes {stable_mosaic.version = 11 : i64} {
  func.func @attention_kernel(%arg0: i32, %arg1: memref<2x8x32xf32, #tpu.memory_space<vmem>>, %arg2: memref<24x32x4xf32, #tpu.memory_space<vmem>>, %arg3: memref<24x1x4xf32, #tpu.memory_space<vmem>>, %arg4: memref<8x4x32xf32, #tpu.memory_space<vmem>>, %arg5: memref<1x1x32xf32, #tpu.memory_space<vmem>>, %arg6: memref<2x8x32xf32, #tpu.memory_space<vmem>>) attributes {dimension_semantics = [#tpu.dimension_semantics<parallel>], iteration_bounds = array<i64: 1>, scalar_prefetch = 0 : i64, scratch_operands = 0 : i64, tpu.core_type = #tpu.core_type<tc>, window_params = [{transform_indices = @transform_0, window_bounds = array<i64: 2, 8, 32>}, {pipeline_mode = #tpu.pipeline_mode<synchronous>, transform_indices = @transform_1, window_bounds = array<i64: 24, 32, 4>}, {pipeline_mode = #tpu.pipeline_mode<synchronous>, transform_indices = @transform_2, window_bounds = array<i64: 24, 1, 4>}, {pipeline_mode = #tpu.pipeline_mode<synchronous>, transform_indices = @transform_3, window_bounds = array<i64: 8, 4, 32>}, {pipeline_mode = #tpu.pipeline_mode<synchronous>, transform_indices = @transform_4, window_bounds = array<i64: 1, 1, 32>}, {transform_indices = @transform_5, window_bounds = array<i64: 2, 8, 32>}]} {
    %c0 = arith.constant 0 : index
    %c0_0 = arith.constant 0 : index
    %c0_1 = arith.constant 0 : index
    %0 = vector.load %arg1[%c0, %c0_0, %c0_1] : memref<2x8x32xf32, #tpu.memory_space<vmem>>, vector<2x8x32xf32>
    %1 = vector.shape_cast %0 : vector<2x8x32xf32> to vector<1x2x8x32xf32>
    %2 = vector.shape_cast %1 : vector<1x2x8x32xf32> to vector<1x2x8x32xf32>
    %3 = vector.broadcast %2 : vector<1x2x8x32xf32> to vector<24x2x8x32xf32>
    %4 = vector.shape_cast %3 : vector<24x2x8x32xf32> to vector<48x8x32xf32>
    %c0_2 = arith.constant 0 : index
    %c0_3 = arith.constant 0 : index
    %c0_4 = arith.constant 0 : index
    %5 = vector.load %arg2[%c0_2, %c0_3, %c0_4] : memref<24x32x4xf32, #tpu.memory_space<vmem>>, vector<24x32x4xf32>
    %6 = vector.shape_cast %5 : vector<24x32x4xf32> to vector<24x1x32x4xf32>
    %7 = vector.shape_cast %6 : vector<24x1x32x4xf32> to vector<24x1x32x4xf32>
    %8 = vector.broadcast %7 : vector<24x1x32x4xf32> to vector<24x2x32x4xf32>
    %9 = vector.shape_cast %8 : vector<24x2x32x4xf32> to vector<48x32x4xf32>
    %c0_5 = arith.constant 0 : index
    %c0_6 = arith.constant 0 : index
    %c0_7 = arith.constant 0 : index
    %10 = vector.load %arg3[%c0_5, %c0_6, %c0_7] : memref<24x1x4xf32, #tpu.memory_space<vmem>>, vector<24x1x4xf32>
    %11 = vector.shape_cast %10 : vector<24x1x4xf32> to vector<24x1x1x4xf32>
    %12 = vector.shape_cast %11 : vector<24x1x1x4xf32> to vector<24x1x1x4xf32>
    %13 = vector.broadcast %12 : vector<24x1x1x4xf32> to vector<24x2x1x4xf32>
    %14 = vector.shape_cast %13 : vector<24x2x1x4xf32> to vector<48x1x4xf32>
    "tpu.trace_start"() <{level = 10 : i32, message = "gnd,gdk->gnk"}> : () -> ()
    %cst = arith.constant dense<0.000000e+00> : vector<48x8x4xf32>
    %15 = tpu.matmul %4, %9, %cst {dimension_numbers = #tpu.dot_dimension_numbers<[2], [1], [1], [2], [0, 0, 0, 1, 1, 2], [0], [0]>} : vector<48x8x32xf32>, vector<48x32x4xf32>, vector<48x8x4xf32> -> vector<48x8x4xf32>
    "tpu.trace_stop"() : () -> ()
    %16 = vector.broadcast %14 : vector<48x1x4xf32> to vector<48x8x4xf32>
    %17 = arith.addf %15, %16 : vector<48x8x4xf32>
    %18 = vector.extract_strided_slice %17 {offsets = [0, 0, 0], sizes = [16, 8, 4], strides = [1, 1, 1]} : vector<48x8x4xf32> to vector<16x8x4xf32>
    %19 = vector.extract_strided_slice %17 {offsets = [16, 0, 0], sizes = [16, 8, 4], strides = [1, 1, 1]} : vector<48x8x4xf32> to vector<16x8x4xf32>
    %20 = vector.extract_strided_slice %17 {offsets = [32, 0, 0], sizes = [16, 8, 4], strides = [1, 1, 1]} : vector<48x8x4xf32> to vector<16x8x4xf32>
    "tpu.trace_start"() <{level = 10 : i32, message = "gid,gjd->gij"}> : () -> ()
    %cst_8 = arith.constant dense<0.000000e+00> : vector<16x8x8xf32>
    %21 = tpu.matmul %18, %19, %cst_8 {dimension_numbers = #tpu.dot_dimension_numbers<[2], [2], [1], [1], [0, 0, 0, 1, 1, 1], [0], [0]>} : vector<16x8x4xf32>, vector<16x8x4xf32>, vector<16x8x8xf32> -> vector<16x8x8xf32>
    "tpu.trace_stop"() : () -> ()
    %cst_9 = arith.constant dense<0xFF800000> : vector<16x8xf32>
    %22 = vector.multi_reduction <maximumf>, %21, %cst_9 [2] : vector<16x8x8xf32> to vector<16x8xf32>
    %23 = vector.shape_cast %22 : vector<16x8xf32> to vector<16x8x1xf32>
    %24 = vector.broadcast %23 : vector<16x8x1xf32> to vector<16x8x8xf32>
    %25 = arith.subf %21, %24 : vector<16x8x8xf32>
    %26 = math.exp %25 : vector<16x8x8xf32>
    %cst_10 = arith.constant dense<0.000000e+00> : vector<16x8xf32>
    %27 = vector.multi_reduction <add>, %26, %cst_10 [2] : vector<16x8x8xf32> to vector<16x8xf32>
    %28 = vector.shape_cast %27 : vector<16x8xf32> to vector<16x8x1xf32>
    %29 = tpu.reciprocal %28 : vector<16x8x1xf32> -> vector<16x8x1xf32>
    %30 = vector.broadcast %29 : vector<16x8x1xf32> to vector<16x8x8xf32>
    %31 = arith.mulf %26, %30 : vector<16x8x8xf32>
    "tpu.trace_start"() <{level = 10 : i32, message = "gij,gjd->gid"}> : () -> ()
    %cst_11 = arith.constant dense<0.000000e+00> : vector<16x8x4xf32>
    %32 = tpu.matmul %31, %20, %cst_11 {dimension_numbers = #tpu.dot_dimension_numbers<[2], [1], [1], [2], [0, 0, 0, 1, 1, 2], [0], [0]>} : vector<16x8x8xf32>, vector<16x8x4xf32>, vector<16x8x4xf32> -> vector<16x8x4xf32>
    "tpu.trace_stop"() : () -> ()
    %c0_12 = arith.constant 0 : index
    %c0_13 = arith.constant 0 : index
    %c0_14 = arith.constant 0 : index
    %33 = vector.load %arg4[%c0_12, %c0_13, %c0_14] : memref<8x4x32xf32, #tpu.memory_space<vmem>>, vector<8x4x32xf32>
    %34 = vector.shape_cast %33 : vector<8x4x32xf32> to vector<8x1x4x32xf32>
    %35 = vector.shape_cast %34 : vector<8x1x4x32xf32> to vector<8x1x4x32xf32>
    %36 = vector.broadcast %35 : vector<8x1x4x32xf32> to vector<8x2x4x32xf32>
    %37 = vector.shape_cast %36 : vector<8x2x4x32xf32> to vector<16x4x32xf32>
    "tpu.trace_start"() <{level = 10 : i32, message = "gnd,gdk->gnk"}> : () -> ()
    %cst_15 = arith.constant dense<0.000000e+00> : vector<16x8x32xf32>
    %38 = tpu.matmul %32, %37, %cst_15 {dimension_numbers = #tpu.dot_dimension_numbers<[2], [1], [1], [2], [0, 0, 0, 1, 1, 2], [0], [0]>} : vector<16x8x4xf32>, vector<16x4x32xf32>, vector<16x8x32xf32> -> vector<16x8x32xf32>
    "tpu.trace_stop"() : () -> ()
    %39 = vector.extract_strided_slice %38 {offsets = [0, 0, 0], sizes = [2, 8, 32], strides = [1, 1, 1]} : vector<16x8x32xf32> to vector<2x8x32xf32>
    %40 = vector.extract_strided_slice %38 {offsets = [2, 0, 0], sizes = [2, 8, 32], strides = [1, 1, 1]} : vector<16x8x32xf32> to vector<2x8x32xf32>
    %41 = arith.addf %39, %40 : vector<2x8x32xf32>
    %42 = vector.extract_strided_slice %38 {offsets = [4, 0, 0], sizes = [2, 8, 32], strides = [1, 1, 1]} : vector<16x8x32xf32> to vector<2x8x32xf32>
    %43 = arith.addf %41, %42 : vector<2x8x32xf32>
    %44 = vector.extract_strided_slice %38 {offsets = [6, 0, 0], sizes = [2, 8, 32], strides = [1, 1, 1]} : vector<16x8x32xf32> to vector<2x8x32xf32>
    %45 = arith.addf %43, %44 : vector<2x8x32xf32>
    %46 = vector.extract_strided_slice %38 {offsets = [8, 0, 0], sizes = [2, 8, 32], strides = [1, 1, 1]} : vector<16x8x32xf32> to vector<2x8x32xf32>
    %47 = arith.addf %45, %46 : vector<2x8x32xf32>
    %48 = vector.extract_strided_slice %38 {offsets = [10, 0, 0], sizes = [2, 8, 32], strides = [1, 1, 1]} : vector<16x8x32xf32> to vector<2x8x32xf32>
    %49 = arith.addf %47, %48 : vector<2x8x32xf32>
    %50 = vector.extract_strided_slice %38 {offsets = [12, 0, 0], sizes = [2, 8, 32], strides = [1, 1, 1]} : vector<16x8x32xf32> to vector<2x8x32xf32>
    %51 = arith.addf %49, %50 : vector<2x8x32xf32>
    %52 = vector.extract_strided_slice %38 {offsets = [14, 0, 0], sizes = [2, 8, 32], strides = [1, 1, 1]} : vector<16x8x32xf32> to vector<2x8x32xf32>
    %53 = arith.addf %51, %52 : vector<2x8x32xf32>
    %c0_16 = arith.constant 0 : index
    %c0_17 = arith.constant 0 : index
    %c0_18 = arith.constant 0 : index
    %54 = vector.load %arg5[%c0_16, %c0_17, %c0_18] : memref<1x1x32xf32, #tpu.memory_space<vmem>>, vector<1x1x32xf32>
    %55 = vector.broadcast %54 : vector<1x1x32xf32> to vector<2x8x32xf32>
    %56 = arith.addf %53, %55 : vector<2x8x32xf32>
    %c0_19 = arith.constant 0 : index
    %c0_20 = arith.constant 0 : index
    %c0_21 = arith.constant 0 : index
    %57 = vector.load %arg6[%c0_19, %c0_20, %c0_21] : memref<2x8x32xf32, #tpu.memory_space<vmem>>, vector<2x8x32xf32>
    tpu.vector_store %arg6[%c0_19, %c0_20, %c0_21], %56 {strides = array<i32>} : memref<2x8x32xf32, #tpu.memory_space<vmem>>, vector<2x8x32xf32>,
    return
  }
  func.func @transform_0(%arg0: i32) -> (i32, i32, i32) {
    %c0_i32 = arith.constant 0 : i32
    %c0_i32_0 = arith.constant 0 : i32
    %c0_i32_1 = arith.constant 0 : i32
    return %arg0, %c0_i32, %c0_i32_0 : i32, i32, i32
  }
  func.func @transform_1(%arg0: i32) -> (i32, i32, i32) {
    %c0_i32 = arith.constant 0 : i32
    %c0_i32_0 = arith.constant 0 : i32
    %c0_i32_1 = arith.constant 0 : i32
    %c0_i32_2 = arith.constant 0 : i32
    return %c0_i32, %c0_i32_0, %c0_i32_1 : i32, i32, i32
  }
  func.func @transform_2(%arg0: i32) -> (i32, i32, i32) {
    %c0_i32 = arith.constant 0 : i32
    %c0_i32_0 = arith.constant 0 : i32
    %c0_i32_1 = arith.constant 0 : i32
    %c0_i32_2 = arith.constant 0 : i32
    return %c0_i32, %c0_i32_0, %c0_i32_1 : i32, i32, i32
  }
  func.func @transform_3(%arg0: i32) -> (i32, i32, i32) {
    %c0_i32 = arith.constant 0 : i32
    %c0_i32_0 = arith.constant 0 : i32
    %c0_i32_1 = arith.constant 0 : i32
    %c0_i32_2 = arith.constant 0 : i32
    return %c0_i32, %c0_i32_0, %c0_i32_1 : i32, i32, i32
  }
  func.func @transform_4(%arg0: i32) -> (i32, i32, i32) {
    %c0_i32 = arith.constant 0 : i32
    %c0_i32_0 = arith.constant 0 : i32
    %c0_i32_1 = arith.constant 0 : i32
    %c0_i32_2 = arith.constant 0 : i32
    return %c0_i32, %c0_i32_0, %c0_i32_1 : i32, i32, i32
  }
  func.func @transform_5(%arg0: i32) -> (i32, i32, i32) {
    %c0_i32 = arith.constant 0 : i32
    %c0_i32_0 = arith.constant 0 : i32
    %c0_i32_1 = arith.constant 0 : i32
    return %arg0, %c0_i32, %c0_i32_0 : i32, i32, i32
  }
}

</mosaic_0001>

<llo_original>
// kernel: tpu_custom_call.1
$region0: #{tpu_custom_call.1}
  #allocation0 [shape = 'u32[]', space=smem, size = 0x4, offset = 0x4, fixed_abs, tag = 'smem constant byte address 0x4 - core index']
  #allocation1 [shape = 'u32[144,128]{1,0:T(1,128)}', space=vmem, size = 0x12000, scoped, tag = 'internal scratch']
  %s0 = inlined_call_operand.vmem [shape: f32[2,8,32], index: 0, kind: input, shape index: {}]
  %s1 = inlined_call_operand.vmem [shape: f32[24,32,4], index: 1, kind: input, shape index: {}]
  %s2 = inlined_call_operand.vmem [shape: f32[24,1,4], index: 2, kind: input, shape index: {}]
  %s3 = inlined_call_operand.vmem [shape: f32[8,4,32], index: 3, kind: input, shape index: {}]
  %s4 = inlined_call_operand.vmem [shape: f32[1,1,32], index: 4, kind: input, shape index: {}]
  %s5 = inlined_call_operand.hbm [shape: f32[2,8,32], index: 5, kind: output, shape index: {}]
  %s6 = sld [smem:[#allocation0]]
  $region30: #{tpu_custom_call.1} parent=0
    _
  %s8 = ssub.s32 1, %s6
  %s9 = scalar_select 0, %s8, %s6
  $region1: #{tpu_custom_call.1} parent=0
    #allocation2 [shape = 'u8[8192]{0}', space=vmem, size = 0x2000, scoped, tag = 'output window, operand 0, single buffered']
    #allocation3 [shape = 's32[1]{0}', space=sflag, size = 0x4, scoped, tag = 'scoped memory for tpu_custom_call.1']
    %10 = vsyncpa [#allocation3], 0
    // Predicated region
    $region2: #{tpu_custom_call.1} parent=1 // pred_check
      _
    $region3: #{tpu_custom_call.1} parent=1 // pred_check_branch
      %12 = sbr.rel (0) target = $region5
    $region4: #{tpu_custom_call.1} parent=1 // pred_region
      _
    $region5: #{tpu_custom_call.1} parent=1 // pred_fallthru
      _
    // Predicated region
    $region6: #{tpu_custom_call.1} parent=1 // pred_check
      _
    $region7: #{tpu_custom_call.1} parent=1 // pred_check_branch
      %14 = sbr.rel (0) target = $region9
    $region8: #{tpu_custom_call.1} parent=1 // pred_region
      _
    $region9: #{tpu_custom_call.1} parent=1 // pred_fallthru
      _
    // Predicated region
    $region10: #{tpu_custom_call.1} parent=1 // pred_check
      _
    $region11: #{tpu_custom_call.1} parent=1 // pred_check_branch
      %16 = sbr.rel (0) target = $region13
    $region12: #{tpu_custom_call.1} parent=1 // pred_region
      _
    $region13: #{tpu_custom_call.1} parent=1 // pred_fallthru
      _
    // Predicated region
    $region14: #{tpu_custom_call.1} parent=1 // pred_check
      _
    $region15: #{tpu_custom_call.1} parent=1 // pred_check_branch
      %18 = sbr.rel (0) target = $region17
    $region16: #{tpu_custom_call.1} parent=1 // pred_region
      _
    $region17: #{tpu_custom_call.1} parent=1 // pred_fallthru
      _
    // Predicated region
    $region18: #{tpu_custom_call.1} parent=1 // pred_check
      _
    $region19: #{tpu_custom_call.1} parent=1 // pred_check_branch
      %20 = sbr.rel (0) target = $region21
    $region20: #{tpu_custom_call.1} parent=1 // pred_region
      _
    $region21: #{tpu_custom_call.1} parent=1 // pred_fallthru
      _
    %v21 = vld [vmem:[%s0] sm:$0xff]
    %v22 = vld [vmem:[%s0 + $0x8] sm:$0xff]
    %v23 = vld [vmem:[%s1] sm:$0xff]
    %v24 = vld [vmem:[%s1 + $0x8] sm:$0xff]
    %v25 = vld [vmem:[%s1 + $0x10] sm:$0xff]
    %v26 = vld [vmem:[%s1 + $0x18] sm:$0xff]
    %v27 = vld [vmem:[%s1 + $0x20] sm:$0xff]
    %v28 = vld [vmem:[%s1 + $0x28] sm:$0xff]
    %v29 = vld [vmem:[%s1 + $0x30] sm:$0xff]
    %v30 = vld [vmem:[%s1 + $0x38] sm:$0xff]
    %v31 = vld [vmem:[%s1 + $0x40] sm:$0xff]
    %v32 = vld [vmem:[%s1 + $0x48] sm:$0xff]
    %v33 = vld [vmem:[%s1 + $0x50] sm:$0xff]
    %v34 = vld [vmem:[%s1 + $0x58] sm:$0xff]
    %v35 = vld [vmem:[%s1 + $0x60] sm:$0xff]
    %v36 = vld [vmem:[%s1 + $0x68] sm:$0xff]
    %v37 = vld [vmem:[%s1 + $0x70] sm:$0xff]
    %v38 = vld [vmem:[%s1 + $0x78] sm:$0xff]
    %v39 = vld [vmem:[%s1 + $0x80] sm:$0xff]
    %v40 = vld [vmem:[%s1 + $0x88] sm:$0xff]
    %v41 = vld [vmem:[%s1 + $0x90] sm:$0xff]
    %v42 = vld [vmem:[%s1 + $0x98] sm:$0xff]
    %v43 = vld [vmem:[%s1 + $0xa0] sm:$0xff]
    %v44 = vld [vmem:[%s1 + $0xa8] sm:$0xff]
    %v45 = vld [vmem:[%s1 + $0xb0] sm:$0xff]
    %v46 = vld [vmem:[%s1 + $0xb8] sm:$0xff]
    %v47 = vld [vmem:[%s1 + $0xc0] sm:$0xff]
    %v48 = vld [vmem:[%s1 + $0xc8] sm:$0xff]
    %v49 = vld [vmem:[%s1 + $0xd0] sm:$0xff]
    %v50 = vld [vmem:[%s1 + $0xd8] sm:$0xff]
    %v51 = vld [vmem:[%s1 + $0xe0] sm:$0xff]
    %v52 = vld [vmem:[%s1 + $0xe8] sm:$0xff]
    %v53 = vld [vmem:[%s1 + $0xf0] sm:$0xff]
    %v54 = vld [vmem:[%s1 + $0xf8] sm:$0xff]
    %v55 = vld [vmem:[%s1 + $0x100] sm:$0xff]
    %v56 = vld [vmem:[%s1 + $0x108] sm:$0xff]
    %v57 = vld [vmem:[%s1 + $0x110] sm:$0xff]
    %v58 = vld [vmem:[%s1 + $0x118] sm:$0xff]
    %v59 = vld [vmem:[%s1 + $0x120] sm:$0xff]
    %v60 = vld [vmem:[%s1 + $0x128] sm:$0xff]
    %v61 = vld [vmem:[%s1 + $0x130] sm:$0xff]
    %v62 = vld [vmem:[%s1 + $0x138] sm:$0xff]
    %v63 = vld [vmem:[%s1 + $0x140] sm:$0xff]
    %v64 = vld [vmem:[%s1 + $0x148] sm:$0xff]
    %v65 = vld [vmem:[%s1 + $0x150] sm:$0xff]
    %v66 = vld [vmem:[%s1 + $0x158] sm:$0xff]
    %v67 = vld [vmem:[%s1 + $0x160] sm:$0xff]
    %v68 = vld [vmem:[%s1 + $0x168] sm:$0xff]
    %v69 = vld [vmem:[%s1 + $0x170] sm:$0xff]
    %v70 = vld [vmem:[%s1 + $0x178] sm:$0xff]
    %v71 = vld [vmem:[%s1 + $0x180] sm:$0xff]
    %v72 = vld [vmem:[%s1 + $0x188] sm:$0xff]
    %v73 = vld [vmem:[%s1 + $0x190] sm:$0xff]
    %v74 = vld [vmem:[%s1 + $0x198] sm:$0xff]
    %v75 = vld [vmem:[%s1 + $0x1a0] sm:$0xff]
    %v76 = vld [vmem:[%s1 + $0x1a8] sm:$0xff]
    %v77 = vld [vmem:[%s1 + $0x1b0] sm:$0xff]
    %v78 = vld [vmem:[%s1 + $0x1b8] sm:$0xff]
    %v79 = vld [vmem:[%s1 + $0x1c0] sm:$0xff]
    %v80 = vld [vmem:[%s1 + $0x1c8] sm:$0xff]
    %v81 = vld [vmem:[%s1 + $0x1d0] sm:$0xff]
    %v82 = vld [vmem:[%s1 + $0x1d8] sm:$0xff]
    %v83 = vld [vmem:[%s1 + $0x1e0] sm:$0xff]
    %v84 = vld [vmem:[%s1 + $0x1e8] sm:$0xff]
    %v85 = vld [vmem:[%s1 + $0x1f0] sm:$0xff]
    %v86 = vld [vmem:[%s1 + $0x1f8] sm:$0xff]
    %v87 = vld [vmem:[%s1 + $0x200] sm:$0xff]
    %v88 = vld [vmem:[%s1 + $0x208] sm:$0xff]
    %v89 = vld [vmem:[%s1 + $0x210] sm:$0xff]
    %v90 = vld [vmem:[%s1 + $0x218] sm:$0xff]
    %v91 = vld [vmem:[%s1 + $0x220] sm:$0xff]
    %v92 = vld [vmem:[%s1 + $0x228] sm:$0xff]
    %v93 = vld [vmem:[%s1 + $0x230] sm:$0xff]
    %v94 = vld [vmem:[%s1 + $0x238] sm:$0xff]
    %v95 = vld [vmem:[%s1 + $0x240] sm:$0xff]
    %v96 = vld [vmem:[%s1 + $0x248] sm:$0xff]
    %v97 = vld [vmem:[%s1 + $0x250] sm:$0xff]
    %v98 = vld [vmem:[%s1 + $0x258] sm:$0xff]
    %v99 = vld [vmem:[%s1 + $0x260] sm:$0xff]
    %v100 = vld [vmem:[%s1 + $0x268] sm:$0xff]
    %v101 = vld [vmem:[%s1 + $0x270] sm:$0xff]
    %v102 = vld [vmem:[%s1 + $0x278] sm:$0xff]
    %v103 = vld [vmem:[%s1 + $0x280] sm:$0xff]
    %v104 = vld [vmem:[%s1 + $0x288] sm:$0xff]
    %v105 = vld [vmem:[%s1 + $0x290] sm:$0xff]
    %v106 = vld [vmem:[%s1 + $0x298] sm:$0xff]
    %v107 = vld [vmem:[%s1 + $0x2a0] sm:$0xff]
    %v108 = vld [vmem:[%s1 + $0x2a8] sm:$0xff]
    %v109 = vld [vmem:[%s1 + $0x2b0] sm:$0xff]
    %v110 = vld [vmem:[%s1 + $0x2b8] sm:$0xff]
    %v111 = vld [vmem:[%s1 + $0x2c0] sm:$0xff]
    %v112 = vld [vmem:[%s1 + $0x2c8] sm:$0xff]
    %v113 = vld [vmem:[%s1 + $0x2d0] sm:$0xff]
    %v114 = vld [vmem:[%s1 + $0x2d8] sm:$0xff]
    %v115 = vld [vmem:[%s1 + $0x2e0] sm:$0xff]
    %v116 = vld [vmem:[%s1 + $0x2e8] sm:$0xff]
    %v117 = vld [vmem:[%s1 + $0x2f0] sm:$0xff]
    %v118 = vld [vmem:[%s1 + $0x2f8] sm:$0xff]
    %v119 = vld [vmem:[%s2] sm:$0x1]
    %v120 = vld [vmem:[%s2 + $0x1] sm:$0x1]
    %v121 = vld [vmem:[%s2 + $0x2] sm:$0x1]
    %v122 = vld [vmem:[%s2 + $0x3] sm:$0x1]
    %v123 = vld [vmem:[%s2 + $0x4] sm:$0x1]
    %v124 = vld [vmem:[%s2 + $0x5] sm:$0x1]
    %v125 = vld [vmem:[%s2 + $0x6] sm:$0x1]
    %v126 = vld [vmem:[%s2 + $0x7] sm:$0x1]
    %v127 = vld [vmem:[%s2 + $0x8] sm:$0x1]
    %v128 = vld [vmem:[%s2 + $0x9] sm:$0x1]
    %v129 = vld [vmem:[%s2 + $0xa] sm:$0x1]
    %v130 = vld [vmem:[%s2 + $0xb] sm:$0x1]
    %v131 = vld [vmem:[%s2 + $0xc] sm:$0x1]
    %v132 = vld [vmem:[%s2 + $0xd] sm:$0x1]
    %v133 = vld [vmem:[%s2 + $0xe] sm:$0x1]
    %v134 = vld [vmem:[%s2 + $0xf] sm:$0x1]
    %v135 = vld [vmem:[%s2 + $0x10] sm:$0x1]
    %v136 = vld [vmem:[%s2 + $0x11] sm:$0x1]
    %v137 = vld [vmem:[%s2 + $0x12] sm:$0x1]
    %v138 = vld [vmem:[%s2 + $0x13] sm:$0x1]
    %v139 = vld [vmem:[%s2 + $0x14] sm:$0x1]
    %v140 = vld [vmem:[%s2 + $0x15] sm:$0x1]
    %v141 = vld [vmem:[%s2 + $0x16] sm:$0x1]
    %v142 = vld [vmem:[%s2 + $0x17] sm:$0x1]
    %v167 = vlaneseq
    %v168 = vshrl.u32 %v167, 7
    %v169 = vsub.s32 0, %v168
    %v170 = vrot.slane %v119, %v169
    %v171 = vlaneseq
    %v172 = vshrl.u32 %v171, 7
    %v173 = vsub.s32 0, %v172
    %v174 = vrot.slane %v120, %v173
    %v175 = vlaneseq
    %v176 = vshrl.u32 %v175, 7
    %v177 = vsub.s32 0, %v176
    %v178 = vrot.slane %v121, %v177
    %v179 = vlaneseq
    %v180 = vshrl.u32 %v179, 7
    %v181 = vsub.s32 0, %v180
    %v182 = vrot.slane %v122, %v181
    %v183 = vlaneseq
    %v184 = vshrl.u32 %v183, 7
    %v185 = vsub.s32 0, %v184
    %v186 = vrot.slane %v123, %v185
    %v187 = vlaneseq
    %v188 = vshrl.u32 %v187, 7
    %v189 = vsub.s32 0, %v188
    %v190 = vrot.slane %v124, %v189
    %v191 = vlaneseq
    %v192 = vshrl.u32 %v191, 7
    %v193 = vsub.s32 0, %v192
    %v194 = vrot.slane %v125, %v193
    %v195 = vlaneseq
    %v196 = vshrl.u32 %v195, 7
    %v197 = vsub.s32 0, %v196
    %v198 = vrot.slane %v126, %v197
    %v199 = vlaneseq
    %v200 = vshrl.u32 %v199, 7
    %v201 = vsub.s32 0, %v200
    %v202 = vrot.slane %v127, %v201
    %v203 = vlaneseq
    %v204 = vshrl.u32 %v203, 7
    %v205 = vsub.s32 0, %v204
    %v206 = vrot.slane %v128, %v205
    %v207 = vlaneseq
    %v208 = vshrl.u32 %v207, 7
    %v209 = vsub.s32 0, %v208
    %v210 = vrot.slane %v129, %v209
    %v211 = vlaneseq
    %v212 = vshrl.u32 %v211, 7
    %v213 = vsub.s32 0, %v212
    %v214 = vrot.slane %v130, %v213
    %v215 = vlaneseq
    %v216 = vshrl.u32 %v215, 7
    %v217 = vsub.s32 0, %v216
    %v218 = vrot.slane %v131, %v217
    %v219 = vlaneseq
    %v220 = vshrl.u32 %v219, 7
    %v221 = vsub.s32 0, %v220
    %v222 = vrot.slane %v132, %v221
    %v223 = vlaneseq
    %v224 = vshrl.u32 %v223, 7
    %v225 = vsub.s32 0, %v224
    %v226 = vrot.slane %v133, %v225
    %v227 = vlaneseq
    %v228 = vshrl.u32 %v227, 7
    %v229 = vsub.s32 0, %v228
    %v230 = vrot.slane %v134, %v229
    %v231 = vlaneseq
    %v232 = vshrl.u32 %v231, 7
    %v233 = vsub.s32 0, %v232
    %v234 = vrot.slane %v135, %v233
    %v235 = vlaneseq
    %v236 = vshrl.u32 %v235, 7
    %v237 = vsub.s32 0, %v236
    %v238 = vrot.slane %v136, %v237
    %v239 = vlaneseq
    %v240 = vshrl.u32 %v239, 7
    %v241 = vsub.s32 0, %v240
    %v242 = vrot.slane %v137, %v241
    %v243 = vlaneseq
    %v244 = vshrl.u32 %v243, 7
    %v245 = vsub.s32 0, %v244
    %v246 = vrot.slane %v138, %v245
    %v247 = vlaneseq
    %v248 = vshrl.u32 %v247, 7
    %v249 = vsub.s32 0, %v248
    %v250 = vrot.slane %v139, %v249
    %v251 = vlaneseq
    %v252 = vshrl.u32 %v251, 7
    %v253 = vsub.s32 0, %v252
    %v254 = vrot.slane %v140, %v253
    %v255 = vlaneseq
    %v256 = vshrl.u32 %v255, 7
    %v257 = vsub.s32 0, %v256
    %v258 = vrot.slane %v141, %v257
    %v259 = vlaneseq
    %v260 = vshrl.u32 %v259, 7
    %v261 = vsub.s32 0, %v260
    %v262 = vrot.slane %v142, %v261
    %vm287 = vcmask 261120
    %v289 = vsel %vm287, %v21, 0
    %291 = vmatprep.subr.mxu0 0.0
    %292 = vmatpush1.msra.mxu0 0.0
    %293 = vmatprep.subr.mxu0 0.0
    %294 = vmatpush1.msra.mxu0 0.0
    %295 = vmatprep.subr.mxu0 0.0
    %296 = vmatpush1.msra.mxu0 0.0
    %297 = vmatprep.subr.mxu0 0.0
    %298 = vmatpush1.msra.mxu0 0.0
    %299 = vmatprep.subr.mxu0 0.0
    %300 = vmatpush1.msra.mxu0 0.0
    %301 = vmatprep.subr.mxu0 0.0
    %302 = vmatpush1.msra.mxu0 0.0
    %303 = vmatprep.subr.mxu0 0.0
    %304 = vmatpush1.msra.mxu0 0.0
    %305 = vmatprep.subr.mxu0 0.0
    %306 = vmatpush1.msra.mxu0 0.0
    %307 = vmatprep.subr.mxu0 0.0
    %308 = vmatpush1.msra.mxu0 0.0
    %309 = vmatprep.subr.mxu0 0.0
    %310 = vmatpush1.msra.mxu0 0.0
    %311 = vmatprep.subr.mxu0 0.0
    %312 = vmatpush1.msra.mxu0 0.0
    %313 = vmatprep.subr.mxu0 0.0
    %314 = vmatpush1.msra.mxu0 0.0
    %315 = vmatprep.subr.mxu0 0.0
    %316 = vmatpush1.msra.mxu0 %v26
    %317 = vmatprep.subr.mxu0 0.0
    %318 = vmatpush1.msra.mxu0 %v25
    %319 = vmatprep.subr.mxu0 0.0
    %320 = vmatpush1.msra.mxu0 %v24
    %321 = vmatprep.subr.mxu0 0.0
    %322 = vmatpush1.msra.mxu0 %v23
    %323 = vmatprep.subr.mxu0 0.0
    %324 = vmatpush2.msra.mxu0 0.0
    %325 = vmatprep.subr.mxu0 0.0
    %326 = vmatpush2.msra.mxu0 0.0
    %327 = vmatprep.subr.mxu0 0.0
    %328 = vmatpush2.msra.mxu0 0.0
    %329 = vmatprep.subr.mxu0 0.0
    %330 = vmatpush2.msra.mxu0 0.0
    %331 = vmatprep.subr.mxu0 0.0
    %332 = vmatpush2.msra.mxu0 0.0
    %333 = vmatprep.subr.mxu0 0.0
    %334 = vmatpush2.msra.mxu0 0.0
    %335 = vmatprep.subr.mxu0 0.0
    %336 = vmatpush2.msra.mxu0 0.0
    %337 = vmatprep.subr.mxu0 0.0
    %338 = vmatpush2.msra.mxu0 0.0
    %339 = vmatprep.subr.mxu0 0.0
    %340 = vmatpush2.msra.mxu0 0.0
    %341 = vmatprep.subr.mxu0 0.0
    %342 = vmatpush2.msra.mxu0 0.0
    %343 = vmatprep.subr.mxu0 0.0
    %344 = vmatpush2.msra.mxu0 0.0
    %345 = vmatprep.subr.mxu0 0.0
    %346 = vmatpush2.msra.mxu0 0.0
    %347 = vmatprep.subr.mxu0 0.0
    %348 = vmatpush2.msra.mxu0 0.0
    %349 = vmatprep.subr.mxu0 0.0
    %350 = vmatpush2.msra.mxu0 0.0
    %351 = vmatprep.subr.mxu0 0.0
    %352 = vmatpush2.msra.mxu0 0.0
    %353 = vmatprep.subr.mxu0 0.0
    %354 = vmatpush2.msra.mxu0 0.0
    %355 = vmatprep.mubr.f32.mxu0 0.0
    %356 = vmatmul.mubr.f32.gmra.mxu0 %v289
    %v357 = vpop.f32.mrf.mxu0
    %v358 = vadd.f32 %v170, %v357
    %v359 = vpop.f32.mrf.mxu0
    %360 = vdwg.mxu0
    %v362 = vsel %vm287, %v22, 0
    %364 = vmatprep.subr.mxu0 0.0
    %365 = vmatpush1.msra.mxu0 0.0
    %366 = vmatprep.subr.mxu0 0.0
    %367 = vmatpush1.msra.mxu0 0.0
    %368 = vmatprep.subr.mxu0 0.0
    %369 = vmatpush1.msra.mxu0 0.0
    %370 = vmatprep.subr.mxu0 0.0
    %371 = vmatpush1.msra.mxu0 0.0
    %372 = vmatprep.subr.mxu0 0.0
    %373 = vmatpush1.msra.mxu0 0.0
    %374 = vmatprep.subr.mxu0 0.0
    %375 = vmatpush1.msra.mxu0 0.0
    %376 = vmatprep.subr.mxu0 0.0
    %377 = vmatpush1.msra.mxu0 0.0
    %378 = vmatprep.subr.mxu0 0.0
    %379 = vmatpush1.msra.mxu0 0.0
    %380 = vmatprep.subr.mxu0 0.0
    %381 = vmatpush1.msra.mxu0 0.0
    %382 = vmatprep.subr.mxu0 0.0
    %383 = vmatpush1.msra.mxu0 0.0
    %384 = vmatprep.subr.mxu0 0.0
    %385 = vmatpush1.msra.mxu0 0.0
    %386 = vmatprep.subr.mxu0 0.0
    %387 = vmatpush1.msra.mxu0 0.0
    %388 = vmatprep.subr.mxu0 0.0
    %389 = vmatpush1.msra.mxu0 %v26
    %390 = vmatprep.subr.mxu0 0.0
    %391 = vmatpush1.msra.mxu0 %v25
    %392 = vmatprep.subr.mxu0 0.0
    %393 = vmatpush1.msra.mxu0 %v24
    %394 = vmatprep.subr.mxu0 0.0
    %395 = vmatpush1.msra.mxu0 %v23
    %396 = vmatprep.subr.mxu0 0.0
    %397 = vmatpush2.msra.mxu0 0.0
    %398 = vmatprep.subr.mxu0 0.0
    %399 = vmatpush2.msra.mxu0 0.0
    %400 = vmatprep.subr.mxu0 0.0
    %401 = vmatpush2.msra.mxu0 0.0
    %402 = vmatprep.subr.mxu0 0.0
    %403 = vmatpush2.msra.mxu0 0.0
    %404 = vmatprep.subr.mxu0 0.0
    %405 = vmatpush2.msra.mxu0 0.0
    %406 = vmatprep.subr.mxu0 0.0
    %407 = vmatpush2.msra.mxu0 0.0
    %408 = vmatprep.subr.mxu0 0.0
    %409 = vmatpush2.msra.mxu0 0.0
    %410 = vmatprep.subr.mxu0 0.0
    %411 = vmatpush2.msra.mxu0 0.0
    %412 = vmatprep.subr.mxu0 0.0
    %413 = vmatpush2.msra.mxu0 0.0
    %414 = vmatprep.subr.mxu0 0.0
    %415 = vmatpush2.msra.mxu0 0.0
    %416 = vmatprep.subr.mxu0 0.0
    %417 = vmatpush2.msra.mxu0 0.0
    %418 = vmatprep.subr.mxu0 0.0
    %419 = vmatpush2.msra.mxu0 0.0
    %420 = vmatprep.subr.mxu0 0.0
    %421 = vmatpush2.msra.mxu0 0.0
    %422 = vmatprep.subr.mxu0 0.0
    %423 = vmatpush2.msra.mxu0 0.0
    %424 = vmatprep.subr.mxu0 0.0
    %425 = vmatpush2.msra.mxu0 0.0
    %426 = vmatprep.subr.mxu0 0.0
    %427 = vmatpush2.msra.mxu0 0.0
    %428 = vmatprep.mubr.f32.mxu0 0.0
    %429 = vmatmul.mubr.f32.gmra.mxu0 %v362
    %v430 = vpop.f32.mrf.mxu0
    %v431 = vadd.f32 %v170, %v430
    %v432 = vpop.f32.mrf.mxu0
    %433 = vdwg.mxu0
    %434 = vmatprep.subr.mxu0 0.0
    %435 = vmatpush1.msra.mxu0 0.0
    %436 = vmatprep.subr.mxu0 0.0
    %437 = vmatpush1.msra.mxu0 0.0
    %438 = vmatprep.subr.mxu0 0.0
    %439 = vmatpush1.msra.mxu0 0.0
    %440 = vmatprep.subr.mxu0 0.0
    %441 = vmatpush1.msra.mxu0 0.0
    %442 = vmatprep.subr.mxu0 0.0
    %443 = vmatpush1.msra.mxu0 0.0
    %444 = vmatprep.subr.mxu0 0.0
    %445 = vmatpush1.msra.mxu0 0.0
    %446 = vmatprep.subr.mxu0 0.0
    %447 = vmatpush1.msra.mxu0 0.0
    %448 = vmatprep.subr.mxu0 0.0
    %449 = vmatpush1.msra.mxu0 0.0
    %450 = vmatprep.subr.mxu0 0.0
    %451 = vmatpush1.msra.mxu0 0.0
    %452 = vmatprep.subr.mxu0 0.0
    %453 = vmatpush1.msra.mxu0 0.0
    %454 = vmatprep.subr.mxu0 0.0
    %455 = vmatpush1.msra.mxu0 0.0
    %456 = vmatprep.subr.mxu0 0.0
    %457 = vmatpush1.msra.mxu0 0.0
    %458 = vmatprep.subr.mxu0 0.0
    %459 = vmatpush1.msra.mxu0 %v30
    %460 = vmatprep.subr.mxu0 0.0
    %461 = vmatpush1.msra.mxu0 %v29
    %462 = vmatprep.subr.mxu0 0.0
    %463 = vmatpush1.msra.mxu0 %v28
    %464 = vmatprep.subr.mxu0 0.0
    %465 = vmatpush1.msra.mxu0 %v27
    %466 = vmatprep.subr.mxu0 0.0
    %467 = vmatpush2.msra.mxu0 0.0
    %468 = vmatprep.subr.mxu0 0.0
    %469 = vmatpush2.msra.mxu0 0.0
    %470 = vmatprep.subr.mxu0 0.0
    %471 = vmatpush2.msra.mxu0 0.0
    %472 = vmatprep.subr.mxu0 0.0
    %473 = vmatpush2.msra.mxu0 0.0
    %474 = vmatprep.subr.mxu0 0.0
    %475 = vmatpush2.msra.mxu0 0.0
    %476 = vmatprep.subr.mxu0 0.0
    %477 = vmatpush2.msra.mxu0 0.0
    %478 = vmatprep.subr.mxu0 0.0
    %479 = vmatpush2.msra.mxu0 0.0
    %480 = vmatprep.subr.mxu0 0.0
    %481 = vmatpush2.msra.mxu0 0.0
    %482 = vmatprep.subr.mxu0 0.0
    %483 = vmatpush2.msra.mxu0 0.0
    %484 = vmatprep.subr.mxu0 0.0
    %485 = vmatpush2.msra.mxu0 0.0
    %486 = vmatprep.subr.mxu0 0.0
    %487 = vmatpush2.msra.mxu0 0.0
    %488 = vmatprep.subr.mxu0 0.0
    %489 = vmatpush2.msra.mxu0 0.0
    %490 = vmatprep.subr.mxu0 0.0
    %491 = vmatpush2.msra.mxu0 0.0
    %492 = vmatprep.subr.mxu0 0.0
    %493 = vmatpush2.msra.mxu0 0.0
    %494 = vmatprep.subr.mxu0 0.0
    %495 = vmatpush2.msra.mxu0 0.0
    %496 = vmatprep.subr.mxu0 0.0
    %497 = vmatpush2.msra.mxu0 0.0
    %498 = vmatprep.mubr.f32.mxu0 0.0
    %499 = vmatmul.mubr.f32.gmra.mxu0 %v289
    %v500 = vpop.f32.mrf.mxu0
    %v501 = vadd.f32 %v174, %v500
    %v502 = vpop.f32.mrf.mxu0
    %503 = vdwg.mxu0
    %504 = vmatprep.subr.mxu0 0.0
    %505 = vmatpush1.msra.mxu0 0.0
    %506 = vmatprep.subr.mxu0 0.0
    %507 = vmatpush1.msra.mxu0 0.0
    %508 = vmatprep.subr.mxu0 0.0
    %509 = vmatpush1.msra.mxu0 0.0
    %510 = vmatprep.subr.mxu0 0.0
    %511 = vmatpush1.msra.mxu0 0.0
    %512 = vmatprep.subr.mxu0 0.0
    %513 = vmatpush1.msra.mxu0 0.0
    %514 = vmatprep.subr.mxu0 0.0
    %515 = vmatpush1.msra.mxu0 0.0
    %516 = vmatprep.subr.mxu0 0.0
    %517 = vmatpush1.msra.mxu0 0.0
    %518 = vmatprep.subr.mxu0 0.0
    %519 = vmatpush1.msra.mxu0 0.0
    %520 = vmatprep.subr.mxu0 0.0
    %521 = vmatpush1.msra.mxu0 0.0
    %522 = vmatprep.subr.mxu0 0.0
    %523 = vmatpush1.msra.mxu0 0.0
    %524 = vmatprep.subr.mxu0 0.0
    %525 = vmatpush1.msra.mxu0 0.0
    %526 = vmatprep.subr.mxu0 0.0
    %527 = vmatpush1.msra.mxu0 0.0
    %528 = vmatprep.subr.mxu0 0.0
    %529 = vmatpush1.msra.mxu0 %v30
    %530 = vmatprep.subr.mxu0 0.0
    %531 = vmatpush1.msra.mxu0 %v29
    %532 = vmatprep.subr.mxu0 0.0
    %533 = vmatpush1.msra.mxu0 %v28
    %534 = vmatprep.subr.mxu0 0.0
    %535 = vmatpush1.msra.mxu0 %v27
    %536 = vmatprep.subr.mxu0 0.0
    %537 = vmatpush2.msra.mxu0 0.0
    %538 = vmatprep.subr.mxu0 0.0
    %539 = vmatpush2.msra.mxu0 0.0
    %540 = vmatprep.subr.mxu0 0.0
    %541 = vmatpush2.msra.mxu0 0.0
    %542 = vmatprep.subr.mxu0 0.0
    %543 = vmatpush2.msra.mxu0 0.0
    %544 = vmatprep.subr.mxu0 0.0
    %545 = vmatpush2.msra.mxu0 0.0
    %546 = vmatprep.subr.mxu0 0.0
    %547 = vmatpush2.msra.mxu0 0.0
    %548 = vmatprep.subr.mxu0 0.0
    %549 = vmatpush2.msra.mxu0 0.0
    %550 = vmatprep.subr.mxu0 0.0
    %551 = vmatpush2.msra.mxu0 0.0
    %552 = vmatprep.subr.mxu0 0.0
    %553 = vmatpush2.msra.mxu0 0.0
    %554 = vmatprep.subr.mxu0 0.0
    %555 = vmatpush2.msra.mxu0 0.0
    %556 = vmatprep.subr.mxu0 0.0
    %557 = vmatpush2.msra.mxu0 0.0
    %558 = vmatprep.subr.mxu0 0.0
    %559 = vmatpush2.msra.mxu0 0.0
    %560 = vmatprep.subr.mxu0 0.0
    %561 = vmatpush2.msra.mxu0 0.0
    %562 = vmatprep.subr.mxu0 0.0
    %563 = vmatpush2.msra.mxu0 0.0
    %564 = vmatprep.subr.mxu0 0.0
    %565 = vmatpush2.msra.mxu0 0.0
    %566 = vmatprep.subr.mxu0 0.0
    %567 = vmatpush2.msra.mxu0 0.0
    %568 = vmatprep.mubr.f32.mxu0 0.0
    %569 = vmatmul.mubr.f32.gmra.mxu0 %v362
    %v570 = vpop.f32.mrf.mxu0
    %v571 = vadd.f32 %v174, %v570
    %v572 = vpop.f32.mrf.mxu0
    %573 = vdwg.mxu0
    %574 = vmatprep.subr.mxu0 0.0
    %575 = vmatpush1.msra.mxu0 0.0
    %576 = vmatprep.subr.mxu0 0.0
    %577 = vmatpush1.msra.mxu0 0.0
    %578 = vmatprep.subr.mxu0 0.0
    %579 = vmatpush1.msra.mxu0 0.0
    %580 = vmatprep.subr.mxu0 0.0
    %581 = vmatpush1.msra.mxu0 0.0
    %582 = vmatprep.subr.mxu0 0.0
    %583 = vmatpush1.msra.mxu0 0.0
    %584 = vmatprep.subr.mxu0 0.0
    %585 = vmatpush1.msra.mxu0 0.0
    %586 = vmatprep.subr.mxu0 0.0
    %587 = vmatpush1.msra.mxu0 0.0
    %588 = vmatprep.subr.mxu0 0.0
    %589 = vmatpush1.msra.mxu0 0.0
    %590 = vmatprep.subr.mxu0 0.0
    %591 = vmatpush1.msra.mxu0 0.0
    %592 = vmatprep.subr.mxu0 0.0
    %593 = vmatpush1.msra.mxu0 0.0
    %594 = vmatprep.subr.mxu0 0.0
    %595 = vmatpush1.msra.mxu0 0.0
    %596 = vmatprep.subr.mxu0 0.0
    %597 = vmatpush1.msra.mxu0 0.0
    %598 = vmatprep.subr.mxu0 0.0
    %599 = vmatpush1.msra.mxu0 %v34
    %600 = vmatprep.subr.mxu0 0.0
    %601 = vmatpush1.msra.mxu0 %v33
    %602 = vmatprep.subr.mxu0 0.0
    %603 = vmatpush1.msra.mxu0 %v32
    %604 = vmatprep.subr.mxu0 0.0
    %605 = vmatpush1.msra.mxu0 %v31
    %606 = vmatprep.subr.mxu0 0.0
    %607 = vmatpush2.msra.mxu0 0.0
    %608 = vmatprep.subr.mxu0 0.0
    %609 = vmatpush2.msra.mxu0 0.0
    %610 = vmatprep.subr.mxu0 0.0
    %611 = vmatpush2.msra.mxu0 0.0
    %612 = vmatprep.subr.mxu0 0.0
    %613 = vmatpush2.msra.mxu0 0.0
    %614 = vmatprep.subr.mxu0 0.0
    %615 = vmatpush2.msra.mxu0 0.0
    %616 = vmatprep.subr.mxu0 0.0
    %617 = vmatpush2.msra.mxu0 0.0
    %618 = vmatprep.subr.mxu0 0.0
    %619 = vmatpush2.msra.mxu0 0.0
    %620 = vmatprep.subr.mxu0 0.0
    %621 = vmatpush2.msra.mxu0 0.0
    %622 = vmatprep.subr.mxu0 0.0
    %623 = vmatpush2.msra.mxu0 0.0
    %624 = vmatprep.subr.mxu0 0.0
    %625 = vmatpush2.msra.mxu0 0.0
    %626 = vmatprep.subr.mxu0 0.0
    %627 = vmatpush2.msra.mxu0 0.0
    %628 = vmatprep.subr.mxu0 0.0
    %629 = vmatpush2.msra.mxu0 0.0
    %630 = vmatprep.subr.mxu0 0.0
    %631 = vmatpush2.msra.mxu0 0.0
    %632 = vmatprep.subr.mxu0 0.0
    %633 = vmatpush2.msra.mxu0 0.0
    %634 = vmatprep.subr.mxu0 0.0
    %635 = vmatpush2.msra.mxu0 0.0
    %636 = vmatprep.subr.mxu0 0.0
    %637 = vmatpush2.msra.mxu0 0.0
    %638 = vmatprep.mubr.f32.mxu0 0.0
    %639 = vmatmul.mubr.f32.gmra.mxu0 %v289
    %v640 = vpop.f32.mrf.mxu0
    %v641 = vadd.f32 %v178, %v640
    %v642 = vpop.f32.mrf.mxu0
    %643 = vdwg.mxu0
    %644 = vmatprep.subr.mxu0 0.0
    %645 = vmatpush1.msra.mxu0 0.0
    %646 = vmatprep.subr.mxu0 0.0
    %647 = vmatpush1.msra.mxu0 0.0
    %648 = vmatprep.subr.mxu0 0.0
    %649 = vmatpush1.msra.mxu0 0.0
    %650 = vmatprep.subr.mxu0 0.0
    %651 = vmatpush1.msra.mxu0 0.0
    %652 = vmatprep.subr.mxu0 0.0
    %653 = vmatpush1.msra.mxu0 0.0
    %654 = vmatprep.subr.mxu0 0.0
    %655 = vmatpush1.msra.mxu0 0.0
    %656 = vmatprep.subr.mxu0 0.0
    %657 = vmatpush1.msra.mxu0 0.0
    %658 = vmatprep.subr.mxu0 0.0
    %659 = vmatpush1.msra.mxu0 0.0
    %660 = vmatprep.subr.mxu0 0.0
    %661 = vmatpush1.msra.mxu0 0.0
    %662 = vmatprep.subr.mxu0 0.0
    %663 = vmatpush1.msra.mxu0 0.0
    %664 = vmatprep.subr.mxu0 0.0
    %665 = vmatpush1.msra.mxu0 0.0
    %666 = vmatprep.subr.mxu0 0.0
    %667 = vmatpush1.msra.mxu0 0.0
    %668 = vmatprep.subr.mxu0 0.0
    %669 = vmatpush1.msra.mxu0 %v34
    %670 = vmatprep.subr.mxu0 0.0
    %671 = vmatpush1.msra.mxu0 %v33
    %672 = vmatprep.subr.mxu0 0.0
    %673 = vmatpush1.msra.mxu0 %v32
    %674 = vmatprep.subr.mxu0 0.0
    %675 = vmatpush1.msra.mxu0 %v31
    %676 = vmatprep.subr.mxu0 0.0
    %677 = vmatpush2.msra.mxu0 0.0
    %678 = vmatprep.subr.mxu0 0.0
    %679 = vmatpush2.msra.mxu0 0.0
    %680 = vmatprep.subr.mxu0 0.0
    %681 = vmatpush2.msra.mxu0 0.0
    %682 = vmatprep.subr.mxu0 0.0
    %683 = vmatpush2.msra.mxu0 0.0
    %684 = vmatprep.subr.mxu0 0.0
    %685 = vmatpush2.msra.mxu0 0.0
    %686 = vmatprep.subr.mxu0 0.0
    %687 = vmatpush2.msra.mxu0 0.0
    %688 = vmatprep.subr.mxu0 0.0
    %689 = vmatpush2.msra.mxu0 0.0
    %690 = vmatprep.subr.mxu0 0.0
    %691 = vmatpush2.msra.mxu0 0.0
    %692 = vmatprep.subr.mxu0 0.0
    %693 = vmatpush2.msra.mxu0 0.0
    %694 = vmatprep.subr.mxu0 0.0
    %695 = vmatpush2.msra.mxu0 0.0
    %696 = vmatprep.subr.mxu0 0.0
    %697 = vmatpush2.msra.mxu0 0.0
    %698 = vmatprep.subr.mxu0 0.0
    %699 = vmatpush2.msra.mxu0 0.0
    %700 = vmatprep.subr.mxu0 0.0
    %701 = vmatpush2.msra.mxu0 0.0
    %702 = vmatprep.subr.mxu0 0.0
    %703 = vmatpush2.msra.mxu0 0.0
    %704 = vmatprep.subr.mxu0 0.0
    %705 = vmatpush2.msra.mxu0 0.0
    %706 = vmatprep.subr.mxu0 0.0
    %707 = vmatpush2.msra.mxu0 0.0
    %708 = vmatprep.mubr.f32.mxu0 0.0
    %709 = vmatmul.mubr.f32.gmra.mxu0 %v362
    %v710 = vpop.f32.mrf.mxu0
    %v711 = vadd.f32 %v178, %v710
    %v712 = vpop.f32.mrf.mxu0
    %713 = vdwg.mxu0
    %714 = vmatprep.subr.mxu0 0.0
    %715 = vmatpush1.msra.mxu0 0.0
    %716 = vmatprep.subr.mxu0 0.0
    %717 = vmatpush1.msra.mxu0 0.0
    %718 = vmatprep.subr.mxu0 0.0
    %719 = vmatpush1.msra.mxu0 0.0
    %720 = vmatprep.subr.mxu0 0.0
    %721 = vmatpush1.msra.mxu0 0.0
    %722 = vmatprep.subr.mxu0 0.0
    %723 = vmatpush1.msra.mxu0 0.0
    %724 = vmatprep.subr.mxu0 0.0
    %725 = vmatpush1.msra.mxu0 0.0
    %726 = vmatprep.subr.mxu0 0.0
    %727 = vmatpush1.msra.mxu0 0.0
    %728 = vmatprep.subr.mxu0 0.0
    %729 = vmatpush1.msra.mxu0 0.0
    %730 = vmatprep.subr.mxu0 0.0
    %731 = vmatpush1.msra.mxu0 0.0
    %732 = vmatprep.subr.mxu0 0.0
    %733 = vmatpush1.msra.mxu0 0.0
    %734 = vmatprep.subr.mxu0 0.0
    %735 = vmatpush1.msra.mxu0 0.0
    %736 = vmatprep.subr.mxu0 0.0
    %737 = vmatpush1.msra.mxu0 0.0
    %738 = vmatprep.subr.mxu0 0.0
    %739 = vmatpush1.msra.mxu0 %v38
    %740 = vmatprep.subr.mxu0 0.0
    %741 = vmatpush1.msra.mxu0 %v37
    %742 = vmatprep.subr.mxu0 0.0
    %743 = vmatpush1.msra.mxu0 %v36
    %744 = vmatprep.subr.mxu0 0.0
    %745 = vmatpush1.msra.mxu0 %v35
    %746 = vmatprep.subr.mxu0 0.0
    %747 = vmatpush2.msra.mxu0 0.0
    %748 = vmatprep.subr.mxu0 0.0
    %749 = vmatpush2.msra.mxu0 0.0
    %750 = vmatprep.subr.mxu0 0.0
    %751 = vmatpush2.msra.mxu0 0.0
    %752 = vmatprep.subr.mxu0 0.0
    %753 = vmatpush2.msra.mxu0 0.0
    %754 = vmatprep.subr.mxu0 0.0
    %755 = vmatpush2.msra.mxu0 0.0
    %756 = vmatprep.subr.mxu0 0.0
    %757 = vmatpush2.msra.mxu0 0.0
    %758 = vmatprep.subr.mxu0 0.0
    %759 = vmatpush2.msra.mxu0 0.0
    %760 = vmatprep.subr.mxu0 0.0
    %761 = vmatpush2.msra.mxu0 0.0
    %762 = vmatprep.subr.mxu0 0.0
    %763 = vmatpush2.msra.mxu0 0.0
    %764 = vmatprep.subr.mxu0 0.0
    %765 = vmatpush2.msra.mxu0 0.0
    %766 = vmatprep.subr.mxu0 0.0
    %767 = vmatpush2.msra.mxu0 0.0
    %768 = vmatprep.subr.mxu0 0.0
    %769 = vmatpush2.msra.mxu0 0.0
    %770 = vmatprep.subr.mxu0 0.0
    %771 = vmatpush2.msra.mxu0 0.0
    %772 = vmatprep.subr.mxu0 0.0
    %773 = vmatpush2.msra.mxu0 0.0
    %774 = vmatprep.subr.mxu0 0.0
    %775 = vmatpush2.msra.mxu0 0.0
    %776 = vmatprep.subr.mxu0 0.0
    %777 = vmatpush2.msra.mxu0 0.0
    %778 = vmatprep.mubr.f32.mxu0 0.0
    %779 = vmatmul.mubr.f32.gmra.mxu0 %v289
    %v780 = vpop.f32.mrf.mxu0
    %v781 = vadd.f32 %v182, %v780
    %v782 = vpop.f32.mrf.mxu0
    %783 = vdwg.mxu0
    %784 = vmatprep.subr.mxu0 0.0
    %785 = vmatpush1.msra.mxu0 0.0
    %786 = vmatprep.subr.mxu0 0.0
    %787 = vmatpush1.msra.mxu0 0.0
    %788 = vmatprep.subr.mxu0 0.0
    %789 = vmatpush1.msra.mxu0 0.0
    %790 = vmatprep.subr.mxu0 0.0
    %791 = vmatpush1.msra.mxu0 0.0
    %792 = vmatprep.subr.mxu0 0.0
    %793 = vmatpush1.msra.mxu0 0.0
    %794 = vmatprep.subr.mxu0 0.0
    %795 = vmatpush1.msra.mxu0 0.0
    %796 = vmatprep.subr.mxu0 0.0
    %797 = vmatpush1.msra.mxu0 0.0
    %798 = vmatprep.subr.mxu0 0.0
    %799 = vmatpush1.msra.mxu0 0.0
    %800 = vmatprep.subr.mxu0 0.0
    %801 = vmatpush1.msra.mxu0 0.0
    %802 = vmatprep.subr.mxu0 0.0
    %803 = vmatpush1.msra.mxu0 0.0
    %804 = vmatprep.subr.mxu0 0.0
    %805 = vmatpush1.msra.mxu0 0.0
    %806 = vmatprep.subr.mxu0 0.0
    %807 = vmatpush1.msra.mxu0 0.0
    %808 = vmatprep.subr.mxu0 0.0
    %809 = vmatpush1.msra.mxu0 %v38
    %810 = vmatprep.subr.mxu0 0.0
    %811 = vmatpush1.msra.mxu0 %v37
    %812 = vmatprep.subr.mxu0 0.0
    %813 = vmatpush1.msra.mxu0 %v36
    %814 = vmatprep.subr.mxu0 0.0
    %815 = vmatpush1.msra.mxu0 %v35
    %816 = vmatprep.subr.mxu0 0.0
    %817 = vmatpush2.msra.mxu0 0.0
    %818 = vmatprep.subr.mxu0 0.0
    %819 = vmatpush2.msra.mxu0 0.0
    %820 = vmatprep.subr.mxu0 0.0
    %821 = vmatpush2.msra.mxu0 0.0
    %822 = vmatprep.subr.mxu0 0.0
    %823 = vmatpush2.msra.mxu0 0.0
    %824 = vmatprep.subr.mxu0 0.0
    %825 = vmatpush2.msra.mxu0 0.0
    %826 = vmatprep.subr.mxu0 0.0
    %827 = vmatpush2.msra.mxu0 0.0
    %828 = vmatprep.subr.mxu0 0.0
    %829 = vmatpush2.msra.mxu0 0.0
    %830 = vmatprep.subr.mxu0 0.0
    %831 = vmatpush2.msra.mxu0 0.0
    %832 = vmatprep.subr.mxu0 0.0
    %833 = vmatpush2.msra.mxu0 0.0
    %834 = vmatprep.subr.mxu0 0.0
    %835 = vmatpush2.msra.mxu0 0.0
    %836 = vmatprep.subr.mxu0 0.0
    %837 = vmatpush2.msra.mxu0 0.0
    %838 = vmatprep.subr.mxu0 0.0
    %839 = vmatpush2.msra.mxu0 0.0
    %840 = vmatprep.subr.mxu0 0.0
    %841 = vmatpush2.msra.mxu0 0.0
    %842 = vmatprep.subr.mxu0 0.0
    %843 = vmatpush2.msra.mxu0 0.0
    %844 = vmatprep.subr.mxu0 0.0
    %845 = vmatpush2.msra.mxu0 0.0
    %846 = vmatprep.subr.mxu0 0.0
    %847 = vmatpush2.msra.mxu0 0.0
    %848 = vmatprep.mubr.f32.mxu0 0.0
    %849 = vmatmul.mubr.f32.gmra.mxu0 %v362
    %v850 = vpop.f32.mrf.mxu0
    %v851 = vadd.f32 %v182, %v850
    %v852 = vpop.f32.mrf.mxu0
    %853 = vdwg.mxu0
    %854 = vmatprep.subr.mxu0 0.0
    %855 = vmatpush1.msra.mxu0 0.0
    %856 = vmatprep.subr.mxu0 0.0
    %857 = vmatpush1.msra.mxu0 0.0
    %858 = vmatprep.subr.mxu0 0.0
    %859 = vmatpush1.msra.mxu0 0.0
    %860 = vmatprep.subr.mxu0 0.0
    %861 = vmatpush1.msra.mxu0 0.0
    %862 = vmatprep.subr.mxu0 0.0
    %863 = vmatpush1.msra.mxu0 0.0
    %864 = vmatprep.subr.mxu0 0.0
    %865 = vmatpush1.msra.mxu0 0.0
    %866 = vmatprep.subr.mxu0 0.0
    %867 = vmatpush1.msra.mxu0 0.0
    %868 = vmatprep.subr.mxu0 0.0
    %869 = vmatpush1.msra.mxu0 0.0
    %870 = vmatprep.subr.mxu0 0.0
    %871 = vmatpush1.msra.mxu0 0.0
    %872 = vmatprep.subr.mxu0 0.0
    %873 = vmatpush1.msra.mxu0 0.0
    %874 = vmatprep.subr.mxu0 0.0
    %875 = vmatpush1.msra.mxu0 0.0
    %876 = vmatprep.subr.mxu0 0.0
    %877 = vmatpush1.msra.mxu0 0.0
    %878 = vmatprep.subr.mxu0 0.0
    %879 = vmatpush1.msra.mxu0 %v42
    %880 = vmatprep.subr.mxu0 0.0
    %881 = vmatpush1.msra.mxu0 %v41
    %882 = vmatprep.subr.mxu0 0.0
    %883 = vmatpush1.msra.mxu0 %v40
    %884 = vmatprep.subr.mxu0 0.0
    %885 = vmatpush1.msra.mxu0 %v39
    %886 = vmatprep.subr.mxu0 0.0
    %887 = vmatpush2.msra.mxu0 0.0
    %888 = vmatprep.subr.mxu0 0.0
    %889 = vmatpush2.msra.mxu0 0.0
    %890 = vmatprep.subr.mxu0 0.0
    %891 = vmatpush2.msra.mxu0 0.0
    %892 = vmatprep.subr.mxu0 0.0
    %893 = vmatpush2.msra.mxu0 0.0
    %894 = vmatprep.subr.mxu0 0.0
    %895 = vmatpush2.msra.mxu0 0.0
    %896 = vmatprep.subr.mxu0 0.0
    %897 = vmatpush2.msra.mxu0 0.0
    %898 = vmatprep.subr.mxu0 0.0
    %899 = vmatpush2.msra.mxu0 0.0
    %900 = vmatprep.subr.mxu0 0.0
    %901 = vmatpush2.msra.mxu0 0.0
    %902 = vmatprep.subr.mxu0 0.0
    %903 = vmatpush2.msra.mxu0 0.0
    %904 = vmatprep.subr.mxu0 0.0
    %905 = vmatpush2.msra.mxu0 0.0
    %906 = vmatprep.subr.mxu0 0.0
    %907 = vmatpush2.msra.mxu0 0.0
    %908 = vmatprep.subr.mxu0 0.0
    %909 = vmatpush2.msra.mxu0 0.0
    %910 = vmatprep.subr.mxu0 0.0
    %911 = vmatpush2.msra.mxu0 0.0
    %912 = vmatprep.subr.mxu0 0.0
    %913 = vmatpush2.msra.mxu0 0.0
    %914 = vmatprep.subr.mxu0 0.0
    %915 = vmatpush2.msra.mxu0 0.0
    %916 = vmatprep.subr.mxu0 0.0
    %917 = vmatpush2.msra.mxu0 0.0
    %918 = vmatprep.mubr.f32.mxu0 0.0
    %919 = vmatmul.mubr.f32.gmra.mxu0 %v289
    %v920 = vpop.f32.mrf.mxu0
    %v921 = vadd.f32 %v186, %v920
    %v922 = vpop.f32.mrf.mxu0
    %923 = vdwg.mxu0
    %924 = vmatprep.subr.mxu0 0.0
    %925 = vmatpush1.msra.mxu0 0.0
    %926 = vmatprep.subr.mxu0 0.0
    %927 = vmatpush1.msra.mxu0 0.0
    %928 = vmatprep.subr.mxu0 0.0
    %929 = vmatpush1.msra.mxu0 0.0
    %930 = vmatprep.subr.mxu0 0.0
    %931 = vmatpush1.msra.mxu0 0.0
    %932 = vmatprep.subr.mxu0 0.0
    %933 = vmatpush1.msra.mxu0 0.0
    %934 = vmatprep.subr.mxu0 0.0
    %935 = vmatpush1.msra.mxu0 0.0
    %936 = vmatprep.subr.mxu0 0.0
    %937 = vmatpush1.msra.mxu0 0.0
    %938 = vmatprep.subr.mxu0 0.0
    %939 = vmatpush1.msra.mxu0 0.0
    %940 = vmatprep.subr.mxu0 0.0
    %941 = vmatpush1.msra.mxu0 0.0
    %942 = vmatprep.subr.mxu0 0.0
    %943 = vmatpush1.msra.mxu0 0.0
    %944 = vmatprep.subr.mxu0 0.0
    %945 = vmatpush1.msra.mxu0 0.0
    %946 = vmatprep.subr.mxu0 0.0
    %947 = vmatpush1.msra.mxu0 0.0
    %948 = vmatprep.subr.mxu0 0.0
    %949 = vmatpush1.msra.mxu0 %v42
    %950 = vmatprep.subr.mxu0 0.0
    %951 = vmatpush1.msra.mxu0 %v41
    %952 = vmatprep.subr.mxu0 0.0
    %953 = vmatpush1.msra.mxu0 %v40
    %954 = vmatprep.subr.mxu0 0.0
    %955 = vmatpush1.msra.mxu0 %v39
    %956 = vmatprep.subr.mxu0 0.0
    %957 = vmatpush2.msra.mxu0 0.0
    %958 = vmatprep.subr.mxu0 0.0
    %959 = vmatpush2.msra.mxu0 0.0
    %960 = vmatprep.subr.mxu0 0.0
    %961 = vmatpush2.msra.mxu0 0.0
    %962 = vmatprep.subr.mxu0 0.0
    %963 = vmatpush2.msra.mxu0 0.0
    %964 = vmatprep.subr.mxu0 0.0
    %965 = vmatpush2.msra.mxu0 0.0
    %966 = vmatprep.subr.mxu0 0.0
    %967 = vmatpush2.msra.mxu0 0.0
    %968 = vmatprep.subr.mxu0 0.0
    %969 = vmatpush2.msra.mxu0 0.0
    %970 = vmatprep.subr.mxu0 0.0
    %971 = vmatpush2.msra.mxu0 0.0
    %972 = vmatprep.subr.mxu0 0.0
    %973 = vmatpush2.msra.mxu0 0.0
    %974 = vmatprep.subr.mxu0 0.0
    %975 = vmatpush2.msra.mxu0 0.0
    %976 = vmatprep.subr.mxu0 0.0
    %977 = vmatpush2.msra.mxu0 0.0
    %978 = vmatprep.subr.mxu0 0.0
    %979 = vmatpush2.msra.mxu0 0.0
    %980 = vmatprep.subr.mxu0 0.0
    %981 = vmatpush2.msra.mxu0 0.0
    %982 = vmatprep.subr.mxu0 0.0
    %983 = vmatpush2.msra.mxu0 0.0
    %984 = vmatprep.subr.mxu0 0.0
    %985 = vmatpush2.msra.mxu0 0.0
    %986 = vmatprep.subr.mxu0 0.0
    %987 = vmatpush2.msra.mxu0 0.0
    %988 = vmatprep.mubr.f32.mxu0 0.0
    %989 = vmatmul.mubr.f32.gmra.mxu0 %v362
    %v990 = vpop.f32.mrf.mxu0
    %v991 = vadd.f32 %v186, %v990
    %v992 = vpop.f32.mrf.mxu0
    %993 = vdwg.mxu0
    %994 = vmatprep.subr.mxu0 0.0
    %995 = vmatpush1.msra.mxu0 0.0
    %996 = vmatprep.subr.mxu0 0.0
    %997 = vmatpush1.msra.mxu0 0.0
    %998 = vmatprep.subr.mxu0 0.0
    %999 = vmatpush1.msra.mxu0 0.0
    %1000 = vmatprep.subr.mxu0 0.0
    %1001 = vmatpush1.msra.mxu0 0.0
    %1002 = vmatprep.subr.mxu0 0.0
    %1003 = vmatpush1.msra.mxu0 0.0
    %1004 = vmatprep.subr.mxu0 0.0
    %1005 = vmatpush1.msra.mxu0 0.0
    %1006 = vmatprep.subr.mxu0 0.0
    %1007 = vmatpush1.msra.mxu0 0.0
    %1008 = vmatprep.subr.mxu0 0.0
    %1009 = vmatpush1.msra.mxu0 0.0
    %1010 = vmatprep.subr.mxu0 0.0
    %1011 = vmatpush1.msra.mxu0 0.0
    %1012 = vmatprep.subr.mxu0 0.0
    %1013 = vmatpush1.msra.mxu0 0.0
    %1014 = vmatprep.subr.mxu0 0.0
    %1015 = vmatpush1.msra.mxu0 0.0
    %1016 = vmatprep.subr.mxu0 0.0
    %1017 = vmatpush1.msra.mxu0 0.0
    %1018 = vmatprep.subr.mxu0 0.0
    %1019 = vmatpush1.msra.mxu0 %v46
    %1020 = vmatprep.subr.mxu0 0.0
    %1021 = vmatpush1.msra.mxu0 %v45
    %1022 = vmatprep.subr.mxu0 0.0
    %1023 = vmatpush1.msra.mxu0 %v44
    %1024 = vmatprep.subr.mxu0 0.0
    %1025 = vmatpush1.msra.mxu0 %v43
    %1026 = vmatprep.subr.mxu0 0.0
    %1027 = vmatpush2.msra.mxu0 0.0
    %1028 = vmatprep.subr.mxu0 0.0
    %1029 = vmatpush2.msra.mxu0 0.0
    %1030 = vmatprep.subr.mxu0 0.0
    %1031 = vmatpush2.msra.mxu0 0.0
    %1032 = vmatprep.subr.mxu0 0.0
    %1033 = vmatpush2.msra.mxu0 0.0
    %1034 = vmatprep.subr.mxu0 0.0
    %1035 = vmatpush2.msra.mxu0 0.0
    %1036 = vmatprep.subr.mxu0 0.0
    %1037 = vmatpush2.msra.mxu0 0.0
    %1038 = vmatprep.subr.mxu0 0.0
    %1039 = vmatpush2.msra.mxu0 0.0
    %1040 = vmatprep.subr.mxu0 0.0
    %1041 = vmatpush2.msra.mxu0 0.0
    %1042 = vmatprep.subr.mxu0 0.0
    %1043 = vmatpush2.msra.mxu0 0.0
    %1044 = vmatprep.subr.mxu0 0.0
    %1045 = vmatpush2.msra.mxu0 0.0
    %1046 = vmatprep.subr.mxu0 0.0
    %1047 = vmatpush2.msra.mxu0 0.0
    %1048 = vmatprep.subr.mxu0 0.0
    %1049 = vmatpush2.msra.mxu0 0.0
    %1050 = vmatprep.subr.mxu0 0.0
    %1051 = vmatpush2.msra.mxu0 0.0
    %1052 = vmatprep.subr.mxu0 0.0
    %1053 = vmatpush2.msra.mxu0 0.0
    %1054 = vmatprep.subr.mxu0 0.0
    %1055 = vmatpush2.msra.mxu0 0.0
    %1056 = vmatprep.subr.mxu0 0.0
    %1057 = vmatpush2.msra.mxu0 0.0
    %1058 = vmatprep.mubr.f32.mxu0 0.0
    %1059 = vmatmul.mubr.f32.gmra.mxu0 %v289
    %v1060 = vpop.f32.mrf.mxu0
    %v1061 = vadd.f32 %v190, %v1060
    %v1062 = vpop.f32.mrf.mxu0
    %1063 = vdwg.mxu0
    %1064 = vmatprep.subr.mxu0 0.0
    %1065 = vmatpush1.msra.mxu0 0.0
    %1066 = vmatprep.subr.mxu0 0.0
    %1067 = vmatpush1.msra.mxu0 0.0
    %1068 = vmatprep.subr.mxu0 0.0
    %1069 = vmatpush1.msra.mxu0 0.0
    %1070 = vmatprep.subr.mxu0 0.0
    %1071 = vmatpush1.msra.mxu0 0.0
    %1072 = vmatprep.subr.mxu0 0.0
    %1073 = vmatpush1.msra.mxu0 0.0
    %1074 = vmatprep.subr.mxu0 0.0
    %1075 = vmatpush1.msra.mxu0 0.0
    %1076 = vmatprep.subr.mxu0 0.0
    %1077 = vmatpush1.msra.mxu0 0.0
    %1078 = vmatprep.subr.mxu0 0.0
    %1079 = vmatpush1.msra.mxu0 0.0
    %1080 = vmatprep.subr.mxu0 0.0
    %1081 = vmatpush1.msra.mxu0 0.0
    %1082 = vmatprep.subr.mxu0 0.0
    %1083 = vmatpush1.msra.mxu0 0.0
    %1084 = vmatprep.subr.mxu0 0.0
    %1085 = vmatpush1.msra.mxu0 0.0
    %1086 = vmatprep.subr.mxu0 0.0
    %1087 = vmatpush1.msra.mxu0 0.0
    %1088 = vmatprep.subr.mxu0 0.0
    %1089 = vmatpush1.msra.mxu0 %v46
    %1090 = vmatprep.subr.mxu0 0.0
    %1091 = vmatpush1.msra.mxu0 %v45
    %1092 = vmatprep.subr.mxu0 0.0
    %1093 = vmatpush1.msra.mxu0 %v44
    %1094 = vmatprep.subr.mxu0 0.0
    %1095 = vmatpush1.msra.mxu0 %v43
    %1096 = vmatprep.subr.mxu0 0.0
    %1097 = vmatpush2.msra.mxu0 0.0
    %1098 = vmatprep.subr.mxu0 0.0
    %1099 = vmatpush2.msra.mxu0 0.0
    %1100 = vmatprep.subr.mxu0 0.0
    %1101 = vmatpush2.msra.mxu0 0.0
    %1102 = vmatprep.subr.mxu0 0.0
    %1103 = vmatpush2.msra.mxu0 0.0
    %1104 = vmatprep.subr.mxu0 0.0
    %1105 = vmatpush2.msra.mxu0 0.0
    %1106 = vmatprep.subr.mxu0 0.0
    %1107 = vmatpush2.msra.mxu0 0.0
    %1108 = vmatprep.subr.mxu0 0.0
    %1109 = vmatpush2.msra.mxu0 0.0
    %1110 = vmatprep.subr.mxu0 0.0
    %1111 = vmatpush2.msra.mxu0 0.0
    %1112 = vmatprep.subr.mxu0 0.0
    %1113 = vmatpush2.msra.mxu0 0.0
    %1114 = vmatprep.subr.mxu0 0.0
    %1115 = vmatpush2.msra.mxu0 0.0
    %1116 = vmatprep.subr.mxu0 0.0
    %1117 = vmatpush2.msra.mxu0 0.0
    %1118 = vmatprep.subr.mxu0 0.0
    %1119 = vmatpush2.msra.mxu0 0.0
    %1120 = vmatprep.subr.mxu0 0.0
    %1121 = vmatpush2.msra.mxu0 0.0
    %1122 = vmatprep.subr.mxu0 0.0
    %1123 = vmatpush2.msra.mxu0 0.0
    %1124 = vmatprep.subr.mxu0 0.0
    %1125 = vmatpush2.msra.mxu0 0.0
    %1126 = vmatprep.subr.mxu0 0.0
    %1127 = vmatpush2.msra.mxu0 0.0
    %1128 = vmatprep.mubr.f32.mxu0 0.0
    %1129 = vmatmul.mubr.f32.gmra.mxu0 %v362
    %v1130 = vpop.f32.mrf.mxu0
    %v1131 = vadd.f32 %v190, %v1130
    %v1132 = vpop.f32.mrf.mxu0
    %1133 = vdwg.mxu0
    %1134 = vmatprep.subr.mxu0 0.0
    %1135 = vmatpush1.msra.mxu0 0.0
    %1136 = vmatprep.subr.mxu0 0.0
    %1137 = vmatpush1.msra.mxu0 0.0
    %1138 = vmatprep.subr.mxu0 0.0
    %1139 = vmatpush1.msra.mxu0 0.0
    %1140 = vmatprep.subr.mxu0 0.0
    %1141 = vmatpush1.msra.mxu0 0.0
    %1142 = vmatprep.subr.mxu0 0.0
    %1143 = vmatpush1.msra.mxu0 0.0
    %1144 = vmatprep.subr.mxu0 0.0
    %1145 = vmatpush1.msra.mxu0 0.0
    %1146 = vmatprep.subr.mxu0 0.0
    %1147 = vmatpush1.msra.mxu0 0.0
    %1148 = vmatprep.subr.mxu0 0.0
    %1149 = vmatpush1.msra.mxu0 0.0
    %1150 = vmatprep.subr.mxu0 0.0
    %1151 = vmatpush1.msra.mxu0 0.0
    %1152 = vmatprep.subr.mxu0 0.0
    %1153 = vmatpush1.msra.mxu0 0.0
    %1154 = vmatprep.subr.mxu0 0.0
    %1155 = vmatpush1.msra.mxu0 0.0
    %1156 = vmatprep.subr.mxu0 0.0
    %1157 = vmatpush1.msra.mxu0 0.0
    %1158 = vmatprep.subr.mxu0 0.0
    %1159 = vmatpush1.msra.mxu0 %v50
    %1160 = vmatprep.subr.mxu0 0.0
    %1161 = vmatpush1.msra.mxu0 %v49
    %1162 = vmatprep.subr.mxu0 0.0
    %1163 = vmatpush1.msra.mxu0 %v48
    %1164 = vmatprep.subr.mxu0 0.0
    %1165 = vmatpush1.msra.mxu0 %v47
    %1166 = vmatprep.subr.mxu0 0.0
    %1167 = vmatpush2.msra.mxu0 0.0
    %1168 = vmatprep.subr.mxu0 0.0
    %1169 = vmatpush2.msra.mxu0 0.0
    %1170 = vmatprep.subr.mxu0 0.0
    %1171 = vmatpush2.msra.mxu0 0.0
    %1172 = vmatprep.subr.mxu0 0.0
    %1173 = vmatpush2.msra.mxu0 0.0
    %1174 = vmatprep.subr.mxu0 0.0
    %1175 = vmatpush2.msra.mxu0 0.0
    %1176 = vmatprep.subr.mxu0 0.0
    %1177 = vmatpush2.msra.mxu0 0.0
    %1178 = vmatprep.subr.mxu0 0.0
    %1179 = vmatpush2.msra.mxu0 0.0
    %1180 = vmatprep.subr.mxu0 0.0
    %1181 = vmatpush2.msra.mxu0 0.0
    %1182 = vmatprep.subr.mxu0 0.0
    %1183 = vmatpush2.msra.mxu0 0.0
    %1184 = vmatprep.subr.mxu0 0.0
    %1185 = vmatpush2.msra.mxu0 0.0
    %1186 = vmatprep.subr.mxu0 0.0
    %1187 = vmatpush2.msra.mxu0 0.0
    %1188 = vmatprep.subr.mxu0 0.0
    %1189 = vmatpush2.msra.mxu0 0.0
    %1190 = vmatprep.subr.mxu0 0.0
    %1191 = vmatpush2.msra.mxu0 0.0
    %1192 = vmatprep.subr.mxu0 0.0
    %1193 = vmatpush2.msra.mxu0 0.0
    %1194 = vmatprep.subr.mxu0 0.0
    %1195 = vmatpush2.msra.mxu0 0.0
    %1196 = vmatprep.subr.mxu0 0.0
    %1197 = vmatpush2.msra.mxu0 0.0
    %1198 = vmatprep.mubr.f32.mxu0 0.0
    %1199 = vmatmul.mubr.f32.gmra.mxu0 %v289
    %v1200 = vpop.f32.mrf.mxu0
    %v1201 = vadd.f32 %v194, %v1200
    %v1202 = vpop.f32.mrf.mxu0
    %1203 = vdwg.mxu0
    %1204 = vmatprep.subr.mxu0 0.0
    %1205 = vmatpush1.msra.mxu0 0.0
    %1206 = vmatprep.subr.mxu0 0.0
    %1207 = vmatpush1.msra.mxu0 0.0
    %1208 = vmatprep.subr.mxu0 0.0
    %1209 = vmatpush1.msra.mxu0 0.0
    %1210 = vmatprep.subr.mxu0 0.0
    %1211 = vmatpush1.msra.mxu0 0.0
    %1212 = vmatprep.subr.mxu0 0.0
    %1213 = vmatpush1.msra.mxu0 0.0
    %1214 = vmatprep.subr.mxu0 0.0
    %1215 = vmatpush1.msra.mxu0 0.0
    %1216 = vmatprep.subr.mxu0 0.0
    %1217 = vmatpush1.msra.mxu0 0.0
    %1218 = vmatprep.subr.mxu0 0.0
    %1219 = vmatpush1.msra.mxu0 0.0
    %1220 = vmatprep.subr.mxu0 0.0
    %1221 = vmatpush1.msra.mxu0 0.0
    %1222 = vmatprep.subr.mxu0 0.0
    %1223 = vmatpush1.msra.mxu0 0.0
    %1224 = vmatprep.subr.mxu0 0.0
    %1225 = vmatpush1.msra.mxu0 0.0
    %1226 = vmatprep.subr.mxu0 0.0
    %1227 = vmatpush1.msra.mxu0 0.0
    %1228 = vmatprep.subr.mxu0 0.0
    %1229 = vmatpush1.msra.mxu0 %v50
    %1230 = vmatprep.subr.mxu0 0.0
    %1231 = vmatpush1.msra.mxu0 %v49
    %1232 = vmatprep.subr.mxu0 0.0
    %1233 = vmatpush1.msra.mxu0 %v48
    %1234 = vmatprep.subr.mxu0 0.0
    %1235 = vmatpush1.msra.mxu0 %v47
    %1236 = vmatprep.subr.mxu0 0.0
    %1237 = vmatpush2.msra.mxu0 0.0
    %1238 = vmatprep.subr.mxu0 0.0
    %1239 = vmatpush2.msra.mxu0 0.0
    %1240 = vmatprep.subr.mxu0 0.0
    %1241 = vmatpush2.msra.mxu0 0.0
    %1242 = vmatprep.subr.mxu0 0.0
    %1243 = vmatpush2.msra.mxu0 0.0
    %1244 = vmatprep.subr.mxu0 0.0
    %1245 = vmatpush2.msra.mxu0 0.0
    %1246 = vmatprep.subr.mxu0 0.0
    %1247 = vmatpush2.msra.mxu0 0.0
    %1248 = vmatprep.subr.mxu0 0.0
    %1249 = vmatpush2.msra.mxu0 0.0
    %1250 = vmatprep.subr.mxu0 0.0
    %1251 = vmatpush2.msra.mxu0 0.0
    %1252 = vmatprep.subr.mxu0 0.0
    %1253 = vmatpush2.msra.mxu0 0.0
    %1254 = vmatprep.subr.mxu0 0.0
    %1255 = vmatpush2.msra.mxu0 0.0
    %1256 = vmatprep.subr.mxu0 0.0
    %1257 = vmatpush2.msra.mxu0 0.0
    %1258 = vmatprep.subr.mxu0 0.0
    %1259 = vmatpush2.msra.mxu0 0.0
    %1260 = vmatprep.subr.mxu0 0.0
    %1261 = vmatpush2.msra.mxu0 0.0
    %1262 = vmatprep.subr.mxu0 0.0
    %1263 = vmatpush2.msra.mxu0 0.0
    %1264 = vmatprep.subr.mxu0 0.0
    %1265 = vmatpush2.msra.mxu0 0.0
    %1266 = vmatprep.subr.mxu0 0.0
    %1267 = vmatpush2.msra.mxu0 0.0
    %1268 = vmatprep.mubr.f32.mxu0 0.0
    %1269 = vmatmul.mubr.f32.gmra.mxu0 %v362
    %v1270 = vpop.f32.mrf.mxu0
    %v1271 = vadd.f32 %v194, %v1270
    %v1272 = vpop.f32.mrf.mxu0
    %1273 = vdwg.mxu0
    %1274 = vmatprep.subr.mxu0 0.0
    %1275 = vmatpush1.msra.mxu0 0.0
    %1276 = vmatprep.subr.mxu0 0.0
    %1277 = vmatpush1.msra.mxu0 0.0
    %1278 = vmatprep.subr.mxu0 0.0
    %1279 = vmatpush1.msra.mxu0 0.0
    %1280 = vmatprep.subr.mxu0 0.0
    %1281 = vmatpush1.msra.mxu0 0.0
    %1282 = vmatprep.subr.mxu0 0.0
    %1283 = vmatpush1.msra.mxu0 0.0
    %1284 = vmatprep.subr.mxu0 0.0
    %1285 = vmatpush1.msra.mxu0 0.0
    %1286 = vmatprep.subr.mxu0 0.0
    %1287 = vmatpush1.msra.mxu0 0.0
    %1288 = vmatprep.subr.mxu0 0.0
    %1289 = vmatpush1.msra.mxu0 0.0
    %1290 = vmatprep.subr.mxu0 0.0
    %1291 = vmatpush1.msra.mxu0 0.0
    %1292 = vmatprep.subr.mxu0 0.0
    %1293 = vmatpush1.msra.mxu0 0.0
    %1294 = vmatprep.subr.mxu0 0.0
    %1295 = vmatpush1.msra.mxu0 0.0
    %1296 = vmatprep.subr.mxu0 0.0
    %1297 = vmatpush1.msra.mxu0 0.0
    %1298 = vmatprep.subr.mxu0 0.0
    %1299 = vmatpush1.msra.mxu0 %v54
    %1300 = vmatprep.subr.mxu0 0.0
    %1301 = vmatpush1.msra.mxu0 %v53
    %1302 = vmatprep.subr.mxu0 0.0
    %1303 = vmatpush1.msra.mxu0 %v52
    %1304 = vmatprep.subr.mxu0 0.0
    %1305 = vmatpush1.msra.mxu0 %v51
    %1306 = vmatprep.subr.mxu0 0.0
    %1307 = vmatpush2.msra.mxu0 0.0
    %1308 = vmatprep.subr.mxu0 0.0
    %1309 = vmatpush2.msra.mxu0 0.0
    %1310 = vmatprep.subr.mxu0 0.0
    %1311 = vmatpush2.msra.mxu0 0.0
    %1312 = vmatprep.subr.mxu0 0.0
    %1313 = vmatpush2.msra.mxu0 0.0
    %1314 = vmatprep.subr.mxu0 0.0
    %1315 = vmatpush2.msra.mxu0 0.0
    %1316 = vmatprep.subr.mxu0 0.0
    %1317 = vmatpush2.msra.mxu0 0.0
    %1318 = vmatprep.subr.mxu0 0.0
    %1319 = vmatpush2.msra.mxu0 0.0
    %1320 = vmatprep.subr.mxu0 0.0
    %1321 = vmatpush2.msra.mxu0 0.0
    %1322 = vmatprep.subr.mxu0 0.0
    %1323 = vmatpush2.msra.mxu0 0.0
    %1324 = vmatprep.subr.mxu0 0.0
    %1325 = vmatpush2.msra.mxu0 0.0
    %1326 = vmatprep.subr.mxu0 0.0
    %1327 = vmatpush2.msra.mxu0 0.0
    %1328 = vmatprep.subr.mxu0 0.0
    %1329 = vmatpush2.msra.mxu0 0.0
    %1330 = vmatprep.subr.mxu0 0.0
    %1331 = vmatpush2.msra.mxu0 0.0
    %1332 = vmatprep.subr.mxu0 0.0
    %1333 = vmatpush2.msra.mxu0 0.0
    %1334 = vmatprep.subr.mxu0 0.0
    %1335 = vmatpush2.msra.mxu0 0.0
    %1336 = vmatprep.subr.mxu0 0.0
    %1337 = vmatpush2.msra.mxu0 0.0
    %1338 = vmatprep.mubr.f32.mxu0 0.0
    %1339 = vmatmul.mubr.f32.gmra.mxu0 %v289
    %v1340 = vpop.f32.mrf.mxu0
    %v1341 = vadd.f32 %v198, %v1340
    %v1342 = vpop.f32.mrf.mxu0
    %1343 = vdwg.mxu0
    %1344 = vmatprep.subr.mxu0 0.0
    %1345 = vmatpush1.msra.mxu0 0.0
    %1346 = vmatprep.subr.mxu0 0.0
    %1347 = vmatpush1.msra.mxu0 0.0
    %1348 = vmatprep.subr.mxu0 0.0
    %1349 = vmatpush1.msra.mxu0 0.0
    %1350 = vmatprep.subr.mxu0 0.0
    %1351 = vmatpush1.msra.mxu0 0.0
    %1352 = vmatprep.subr.mxu0 0.0
    %1353 = vmatpush1.msra.mxu0 0.0
    %1354 = vmatprep.subr.mxu0 0.0
    %1355 = vmatpush1.msra.mxu0 0.0
    %1356 = vmatprep.subr.mxu0 0.0
    %1357 = vmatpush1.msra.mxu0 0.0
    %1358 = vmatprep.subr.mxu0 0.0
    %1359 = vmatpush1.msra.mxu0 0.0
    %1360 = vmatprep.subr.mxu0 0.0
    %1361 = vmatpush1.msra.mxu0 0.0
    %1362 = vmatprep.subr.mxu0 0.0
    %1363 = vmatpush1.msra.mxu0 0.0
    %1364 = vmatprep.subr.mxu0 0.0
    %1365 = vmatpush1.msra.mxu0 0.0
    %1366 = vmatprep.subr.mxu0 0.0
    %1367 = vmatpush1.msra.mxu0 0.0
    %1368 = vmatprep.subr.mxu0 0.0
    %1369 = vmatpush1.msra.mxu0 %v54
    %1370 = vmatprep.subr.mxu0 0.0
    %1371 = vmatpush1.msra.mxu0 %v53
    %1372 = vmatprep.subr.mxu0 0.0
    %1373 = vmatpush1.msra.mxu0 %v52
    %1374 = vmatprep.subr.mxu0 0.0
    %1375 = vmatpush1.msra.mxu0 %v51
    %1376 = vmatprep.subr.mxu0 0.0
    %1377 = vmatpush2.msra.mxu0 0.0
    %1378 = vmatprep.subr.mxu0 0.0
    %1379 = vmatpush2.msra.mxu0 0.0
    %1380 = vmatprep.subr.mxu0 0.0
    %1381 = vmatpush2.msra.mxu0 0.0
    %1382 = vmatprep.subr.mxu0 0.0
    %1383 = vmatpush2.msra.mxu0 0.0
    %1384 = vmatprep.subr.mxu0 0.0
    %1385 = vmatpush2.msra.mxu0 0.0
    %1386 = vmatprep.subr.mxu0 0.0
    %1387 = vmatpush2.msra.mxu0 0.0
    %1388 = vmatprep.subr.mxu0 0.0
    %1389 = vmatpush2.msra.mxu0 0.0
    %1390 = vmatprep.subr.mxu0 0.0
    %1391 = vmatpush2.msra.mxu0 0.0
    %1392 = vmatprep.subr.mxu0 0.0
    %1393 = vmatpush2.msra.mxu0 0.0
    %1394 = vmatprep.subr.mxu0 0.0
    %1395 = vmatpush2.msra.mxu0 0.0
    %1396 = vmatprep.subr.mxu0 0.0
    %1397 = vmatpush2.msra.mxu0 0.0
    %1398 = vmatprep.subr.mxu0 0.0
    %1399 = vmatpush2.msra.mxu0 0.0
    %1400 = vmatprep.subr.mxu0 0.0
    %1401 = vmatpush2.msra.mxu0 0.0
    %1402 = vmatprep.subr.mxu0 0.0
    %1403 = vmatpush2.msra.mxu0 0.0
    %1404 = vmatprep.subr.mxu0 0.0
    %1405 = vmatpush2.msra.mxu0 0.0
    %1406 = vmatprep.subr.mxu0 0.0
    %1407 = vmatpush2.msra.mxu0 0.0
    %1408 = vmatprep.mubr.f32.mxu0 0.0
    %1409 = vmatmul.mubr.f32.gmra.mxu0 %v362
    %v1410 = vpop.f32.mrf.mxu0
    %v1411 = vadd.f32 %v198, %v1410
    %v1412 = vpop.f32.mrf.mxu0
    %1413 = vdwg.mxu0
    %1414 = vmatprep.subr.mxu0 0.0
    %1415 = vmatpush1.msra.mxu0 0.0
    %1416 = vmatprep.subr.mxu0 0.0
    %1417 = vmatpush1.msra.mxu0 0.0
    %1418 = vmatprep.subr.mxu0 0.0
    %1419 = vmatpush1.msra.mxu0 0.0
    %1420 = vmatprep.subr.mxu0 0.0
    %1421 = vmatpush1.msra.mxu0 0.0
    %1422 = vmatprep.subr.mxu0 0.0
    %1423 = vmatpush1.msra.mxu0 0.0
    %1424 = vmatprep.subr.mxu0 0.0
    %1425 = vmatpush1.msra.mxu0 0.0
    %1426 = vmatprep.subr.mxu0 0.0
    %1427 = vmatpush1.msra.mxu0 0.0
    %1428 = vmatprep.subr.mxu0 0.0
    %1429 = vmatpush1.msra.mxu0 0.0
    %1430 = vmatprep.subr.mxu0 0.0
    %1431 = vmatpush1.msra.mxu0 0.0
    %1432 = vmatprep.subr.mxu0 0.0
    %1433 = vmatpush1.msra.mxu0 0.0
    %1434 = vmatprep.subr.mxu0 0.0
    %1435 = vmatpush1.msra.mxu0 0.0
    %1436 = vmatprep.subr.mxu0 0.0
    %1437 = vmatpush1.msra.mxu0 0.0
    %1438 = vmatprep.subr.mxu0 0.0
    %1439 = vmatpush1.msra.mxu0 %v58
    %1440 = vmatprep.subr.mxu0 0.0
    %1441 = vmatpush1.msra.mxu0 %v57
    %1442 = vmatprep.subr.mxu0 0.0
    %1443 = vmatpush1.msra.mxu0 %v56
    %1444 = vmatprep.subr.mxu0 0.0
    %1445 = vmatpush1.msra.mxu0 %v55
    %1446 = vmatprep.subr.mxu0 0.0
    %1447 = vmatpush2.msra.mxu0 0.0
    %1448 = vmatprep.subr.mxu0 0.0
    %1449 = vmatpush2.msra.mxu0 0.0
    %1450 = vmatprep.subr.mxu0 0.0
    %1451 = vmatpush2.msra.mxu0 0.0
    %1452 = vmatprep.subr.mxu0 0.0
    %1453 = vmatpush2.msra.mxu0 0.0
    %1454 = vmatprep.subr.mxu0 0.0
    %1455 = vmatpush2.msra.mxu0 0.0
    %1456 = vmatprep.subr.mxu0 0.0
    %1457 = vmatpush2.msra.mxu0 0.0
    %1458 = vmatprep.subr.mxu0 0.0
    %1459 = vmatpush2.msra.mxu0 0.0
    %1460 = vmatprep.subr.mxu0 0.0
    %1461 = vmatpush2.msra.mxu0 0.0
    %1462 = vmatprep.subr.mxu0 0.0
    %1463 = vmatpush2.msra.mxu0 0.0
    %1464 = vmatprep.subr.mxu0 0.0
    %1465 = vmatpush2.msra.mxu0 0.0
    %1466 = vmatprep.subr.mxu0 0.0
    %1467 = vmatpush2.msra.mxu0 0.0
    %1468 = vmatprep.subr.mxu0 0.0
    %1469 = vmatpush2.msra.mxu0 0.0
    %1470 = vmatprep.subr.mxu0 0.0
    %1471 = vmatpush2.msra.mxu0 0.0
    %1472 = vmatprep.subr.mxu0 0.0
    %1473 = vmatpush2.msra.mxu0 0.0
    %1474 = vmatprep.subr.mxu0 0.0
    %1475 = vmatpush2.msra.mxu0 0.0
    %1476 = vmatprep.subr.mxu0 0.0
    %1477 = vmatpush2.msra.mxu0 0.0
    %1478 = vmatprep.mubr.f32.mxu0 0.0
    %1479 = vmatmul.mubr.f32.gmra.mxu0 %v289
    %v1480 = vpop.f32.mrf.mxu0
    %v1481 = vadd.f32 %v202, %v1480
    %v1482 = vpop.f32.mrf.mxu0
    %1483 = vdwg.mxu0
    %1484 = vmatprep.subr.mxu0 0.0
    %1485 = vmatpush1.msra.mxu0 0.0
    %1486 = vmatprep.subr.mxu0 0.0
    %1487 = vmatpush1.msra.mxu0 0.0
    %1488 = vmatprep.subr.mxu0 0.0
    %1489 = vmatpush1.msra.mxu0 0.0
    %1490 = vmatprep.subr.mxu0 0.0
    %1491 = vmatpush1.msra.mxu0 0.0
    %1492 = vmatprep.subr.mxu0 0.0
    %1493 = vmatpush1.msra.mxu0 0.0
    %1494 = vmatprep.subr.mxu0 0.0
    %1495 = vmatpush1.msra.mxu0 0.0
    %1496 = vmatprep.subr.mxu0 0.0
    %1497 = vmatpush1.msra.mxu0 0.0
    %1498 = vmatprep.subr.mxu0 0.0
    %1499 = vmatpush1.msra.mxu0 0.0
    %1500 = vmatprep.subr.mxu0 0.0
    %1501 = vmatpush1.msra.mxu0 0.0
    %1502 = vmatprep.subr.mxu0 0.0
    %1503 = vmatpush1.msra.mxu0 0.0
    %1504 = vmatprep.subr.mxu0 0.0
    %1505 = vmatpush1.msra.mxu0 0.0
    %1506 = vmatprep.subr.mxu0 0.0
    %1507 = vmatpush1.msra.mxu0 0.0
    %1508 = vmatprep.subr.mxu0 0.0
    %1509 = vmatpush1.msra.mxu0 %v58
    %1510 = vmatprep.subr.mxu0 0.0
    %1511 = vmatpush1.msra.mxu0 %v57
    %1512 = vmatprep.subr.mxu0 0.0
    %1513 = vmatpush1.msra.mxu0 %v56
    %1514 = vmatprep.subr.mxu0 0.0
    %1515 = vmatpush1.msra.mxu0 %v55
    %1516 = vmatprep.subr.mxu0 0.0
    %1517 = vmatpush2.msra.mxu0 0.0
    %1518 = vmatprep.subr.mxu0 0.0
    %1519 = vmatpush2.msra.mxu0 0.0
    %1520 = vmatprep.subr.mxu0 0.0
    %1521 = vmatpush2.msra.mxu0 0.0
    %1522 = vmatprep.subr.mxu0 0.0
    %1523 = vmatpush2.msra.mxu0 0.0
    %1524 = vmatprep.subr.mxu0 0.0
    %1525 = vmatpush2.msra.mxu0 0.0
    %1526 = vmatprep.subr.mxu0 0.0
    %1527 = vmatpush2.msra.mxu0 0.0
    %1528 = vmatprep.subr.mxu0 0.0
    %1529 = vmatpush2.msra.mxu0 0.0
    %1530 = vmatprep.subr.mxu0 0.0
    %1531 = vmatpush2.msra.mxu0 0.0
    %1532 = vmatprep.subr.mxu0 0.0
    %1533 = vmatpush2.msra.mxu0 0.0
    %1534 = vmatprep.subr.mxu0 0.0
    %1535 = vmatpush2.msra.mxu0 0.0
    %1536 = vmatprep.subr.mxu0 0.0
    %1537 = vmatpush2.msra.mxu0 0.0
    %1538 = vmatprep.subr.mxu0 0.0
    %1539 = vmatpush2.msra.mxu0 0.0
    %1540 = vmatprep.subr.mxu0 0.0
    %1541 = vmatpush2.msra.mxu0 0.0
    %1542 = vmatprep.subr.mxu0 0.0
    %1543 = vmatpush2.msra.mxu0 0.0
    %1544 = vmatprep.subr.mxu0 0.0
    %1545 = vmatpush2.msra.mxu0 0.0
    %1546 = vmatprep.subr.mxu0 0.0
    %1547 = vmatpush2.msra.mxu0 0.0
    %1548 = vmatprep.mubr.f32.mxu0 0.0
    %1549 = vmatmul.mubr.f32.gmra.mxu0 %v362
    %v1550 = vpop.f32.mrf.mxu0
    %v1551 = vadd.f32 %v202, %v1550
    %v1552 = vpop.f32.mrf.mxu0
    %1553 = vdwg.mxu0
    %1554 = vmatprep.subr.mxu0 0.0
    %1555 = vmatpush1.msra.mxu0 0.0
    %1556 = vmatprep.subr.mxu0 0.0
    %1557 = vmatpush1.msra.mxu0 0.0
    %1558 = vmatprep.subr.mxu0 0.0
    %1559 = vmatpush1.msra.mxu0 0.0
    %1560 = vmatprep.subr.mxu0 0.0
    %1561 = vmatpush1.msra.mxu0 0.0
    %1562 = vmatprep.subr.mxu0 0.0
    %1563 = vmatpush1.msra.mxu0 0.0
    %1564 = vmatprep.subr.mxu0 0.0
    %1565 = vmatpush1.msra.mxu0 0.0
    %1566 = vmatprep.subr.mxu0 0.0
    %1567 = vmatpush1.msra.mxu0 0.0
    %1568 = vmatprep.subr.mxu0 0.0
    %1569 = vmatpush1.msra.mxu0 0.0
    %1570 = vmatprep.subr.mxu0 0.0
    %1571 = vmatpush1.msra.mxu0 0.0
    %1572 = vmatprep.subr.mxu0 0.0
    %1573 = vmatpush1.msra.mxu0 0.0
    %1574 = vmatprep.subr.mxu0 0.0
    %1575 = vmatpush1.msra.mxu0 0.0
    %1576 = vmatprep.subr.mxu0 0.0
    %1577 = vmatpush1.msra.mxu0 0.0
    %1578 = vmatprep.subr.mxu0 0.0
    %1579 = vmatpush1.msra.mxu0 %v62
    %1580 = vmatprep.subr.mxu0 0.0
    %1581 = vmatpush1.msra.mxu0 %v61
    %1582 = vmatprep.subr.mxu0 0.0
    %1583 = vmatpush1.msra.mxu0 %v60
    %1584 = vmatprep.subr.mxu0 0.0
    %1585 = vmatpush1.msra.mxu0 %v59
    %1586 = vmatprep.subr.mxu0 0.0
    %1587 = vmatpush2.msra.mxu0 0.0
    %1588 = vmatprep.subr.mxu0 0.0
    %1589 = vmatpush2.msra.mxu0 0.0
    %1590 = vmatprep.subr.mxu0 0.0
    %1591 = vmatpush2.msra.mxu0 0.0
    %1592 = vmatprep.subr.mxu0 0.0
    %1593 = vmatpush2.msra.mxu0 0.0
    %1594 = vmatprep.subr.mxu0 0.0
    %1595 = vmatpush2.msra.mxu0 0.0
    %1596 = vmatprep.subr.mxu0 0.0
    %1597 = vmatpush2.msra.mxu0 0.0
    %1598 = vmatprep.subr.mxu0 0.0
    %1599 = vmatpush2.msra.mxu0 0.0
    %1600 = vmatprep.subr.mxu0 0.0
    %1601 = vmatpush2.msra.mxu0 0.0
    %1602 = vmatprep.subr.mxu0 0.0
    %1603 = vmatpush2.msra.mxu0 0.0
    %1604 = vmatprep.subr.mxu0 0.0
    %1605 = vmatpush2.msra.mxu0 0.0
    %1606 = vmatprep.subr.mxu0 0.0
    %1607 = vmatpush2.msra.mxu0 0.0
    %1608 = vmatprep.subr.mxu0 0.0
    %1609 = vmatpush2.msra.mxu0 0.0
    %1610 = vmatprep.subr.mxu0 0.0
    %1611 = vmatpush2.msra.mxu0 0.0
    %1612 = vmatprep.subr.mxu0 0.0
    %1613 = vmatpush2.msra.mxu0 0.0
    %1614 = vmatprep.subr.mxu0 0.0
    %1615 = vmatpush2.msra.mxu0 0.0
    %1616 = vmatprep.subr.mxu0 0.0
    %1617 = vmatpush2.msra.mxu0 0.0
    %1618 = vmatprep.mubr.f32.mxu0 0.0
    %1619 = vmatmul.mubr.f32.gmra.mxu0 %v289
    %v1620 = vpop.f32.mrf.mxu0
    %v1621 = vadd.f32 %v206, %v1620
    %v1622 = vpop.f32.mrf.mxu0
    %1623 = vdwg.mxu0
    %1624 = vmatprep.subr.mxu0 0.0
    %1625 = vmatpush1.msra.mxu0 0.0
    %1626 = vmatprep.subr.mxu0 0.0
    %1627 = vmatpush1.msra.mxu0 0.0
    %1628 = vmatprep.subr.mxu0 0.0
    %1629 = vmatpush1.msra.mxu0 0.0
    %1630 = vmatprep.subr.mxu0 0.0
    %1631 = vmatpush1.msra.mxu0 0.0
    %1632 = vmatprep.subr.mxu0 0.0
    %1633 = vmatpush1.msra.mxu0 0.0
    %1634 = vmatprep.subr.mxu0 0.0
    %1635 = vmatpush1.msra.mxu0 0.0
    %1636 = vmatprep.subr.mxu0 0.0
    %1637 = vmatpush1.msra.mxu0 0.0
    %1638 = vmatprep.subr.mxu0 0.0
    %1639 = vmatpush1.msra.mxu0 0.0
    %1640 = vmatprep.subr.mxu0 0.0
    %1641 = vmatpush1.msra.mxu0 0.0
    %1642 = vmatprep.subr.mxu0 0.0
    %1643 = vmatpush1.msra.mxu0 0.0
    %1644 = vmatprep.subr.mxu0 0.0
    %1645 = vmatpush1.msra.mxu0 0.0
    %1646 = vmatprep.subr.mxu0 0.0
    %1647 = vmatpush1.msra.mxu0 0.0
    %1648 = vmatprep.subr.mxu0 0.0
    %1649 = vmatpush1.msra.mxu0 %v62
    %1650 = vmatprep.subr.mxu0 0.0
    %1651 = vmatpush1.msra.mxu0 %v61
    %1652 = vmatprep.subr.mxu0 0.0
    %1653 = vmatpush1.msra.mxu0 %v60
    %1654 = vmatprep.subr.mxu0 0.0
    %1655 = vmatpush1.msra.mxu0 %v59
    %1656 = vmatprep.subr.mxu0 0.0
    %1657 = vmatpush2.msra.mxu0 0.0
    %1658 = vmatprep.subr.mxu0 0.0
    %1659 = vmatpush2.msra.mxu0 0.0
    %1660 = vmatprep.subr.mxu0 0.0
    %1661 = vmatpush2.msra.mxu0 0.0
    %1662 = vmatprep.subr.mxu0 0.0
    %1663 = vmatpush2.msra.mxu0 0.0
    %1664 = vmatprep.subr.mxu0 0.0
    %1665 = vmatpush2.msra.mxu0 0.0
    %1666 = vmatprep.subr.mxu0 0.0
    %1667 = vmatpush2.msra.mxu0 0.0
    %1668 = vmatprep.subr.mxu0 0.0
    %1669 = vmatpush2.msra.mxu0 0.0
    %1670 = vmatprep.subr.mxu0 0.0
    %1671 = vmatpush2.msra.mxu0 0.0
    %1672 = vmatprep.subr.mxu0 0.0
    %1673 = vmatpush2.msra.mxu0 0.0
    %1674 = vmatprep.subr.mxu0 0.0
    %1675 = vmatpush2.msra.mxu0 0.0
    %1676 = vmatprep.subr.mxu0 0.0
    %1677 = vmatpush2.msra.mxu0 0.0
    %1678 = vmatprep.subr.mxu0 0.0
    %1679 = vmatpush2.msra.mxu0 0.0
    %1680 = vmatprep.subr.mxu0 0.0
    %1681 = vmatpush2.msra.mxu0 0.0
    %1682 = vmatprep.subr.mxu0 0.0
    %1683 = vmatpush2.msra.mxu0 0.0
    %1684 = vmatprep.subr.mxu0 0.0
    %1685 = vmatpush2.msra.mxu0 0.0
    %1686 = vmatprep.subr.mxu0 0.0
    %1687 = vmatpush2.msra.mxu0 0.0
    %1688 = vmatprep.mubr.f32.mxu0 0.0
    %1689 = vmatmul.mubr.f32.gmra.mxu0 %v362
    %v1690 = vpop.f32.mrf.mxu0
    %v1691 = vadd.f32 %v206, %v1690
    %v1692 = vpop.f32.mrf.mxu0
    %1693 = vdwg.mxu0
    %1694 = vmatprep.subr.mxu0 0.0
    %1695 = vmatpush1.msra.mxu0 0.0
    %1696 = vmatprep.subr.mxu0 0.0
    %1697 = vmatpush1.msra.mxu0 0.0
    %1698 = vmatprep.subr.mxu0 0.0
    %1699 = vmatpush1.msra.mxu0 0.0
    %1700 = vmatprep.subr.mxu0 0.0
    %1701 = vmatpush1.msra.mxu0 0.0
    %1702 = vmatprep.subr.mxu0 0.0
    %1703 = vmatpush1.msra.mxu0 0.0
    %1704 = vmatprep.subr.mxu0 0.0
    %1705 = vmatpush1.msra.mxu0 0.0
    %1706 = vmatprep.subr.mxu0 0.0
    %1707 = vmatpush1.msra.mxu0 0.0
    %1708 = vmatprep.subr.mxu0 0.0
    %1709 = vmatpush1.msra.mxu0 0.0
    %1710 = vmatprep.subr.mxu0 0.0
    %1711 = vmatpush1.msra.mxu0 0.0
    %1712 = vmatprep.subr.mxu0 0.0
    %1713 = vmatpush1.msra.mxu0 0.0
    %1714 = vmatprep.subr.mxu0 0.0
    %1715 = vmatpush1.msra.mxu0 0.0
    %1716 = vmatprep.subr.mxu0 0.0
    %1717 = vmatpush1.msra.mxu0 0.0
    %1718 = vmatprep.subr.mxu0 0.0
    %1719 = vmatpush1.msra.mxu0 %v66
    %1720 = vmatprep.subr.mxu0 0.0
    %1721 = vmatpush1.msra.mxu0 %v65
    %1722 = vmatprep.subr.mxu0 0.0
    %1723 = vmatpush1.msra.mxu0 %v64
    %1724 = vmatprep.subr.mxu0 0.0
    %1725 = vmatpush1.msra.mxu0 %v63
    %1726 = vmatprep.subr.mxu0 0.0
    %1727 = vmatpush2.msra.mxu0 0.0
    %1728 = vmatprep.subr.mxu0 0.0
    %1729 = vmatpush2.msra.mxu0 0.0
    %1730 = vmatprep.subr.mxu0 0.0
    %1731 = vmatpush2.msra.mxu0 0.0
    %1732 = vmatprep.subr.mxu0 0.0
    %1733 = vmatpush2.msra.mxu0 0.0
    %1734 = vmatprep.subr.mxu0 0.0
    %1735 = vmatpush2.msra.mxu0 0.0
    %1736 = vmatprep.subr.mxu0 0.0
    %1737 = vmatpush2.msra.mxu0 0.0
    %1738 = vmatprep.subr.mxu0 0.0
    %1739 = vmatpush2.msra.mxu0 0.0
    %1740 = vmatprep.subr.mxu0 0.0
    %1741 = vmatpush2.msra.mxu0 0.0
    %1742 = vmatprep.subr.mxu0 0.0
    %1743 = vmatpush2.msra.mxu0 0.0
    %1744 = vmatprep.subr.mxu0 0.0
    %1745 = vmatpush2.msra.mxu0 0.0
    %1746 = vmatprep.subr.mxu0 0.0
    %1747 = vmatpush2.msra.mxu0 0.0
    %1748 = vmatprep.subr.mxu0 0.0
    %1749 = vmatpush2.msra.mxu0 0.0
    %1750 = vmatprep.subr.mxu0 0.0
    %1751 = vmatpush2.msra.mxu0 0.0
    %1752 = vmatprep.subr.mxu0 0.0
    %1753 = vmatpush2.msra.mxu0 0.0
    %1754 = vmatprep.subr.mxu0 0.0
    %1755 = vmatpush2.msra.mxu0 0.0
    %1756 = vmatprep.subr.mxu0 0.0
    %1757 = vmatpush2.msra.mxu0 0.0
    %1758 = vmatprep.mubr.f32.mxu0 0.0
    %1759 = vmatmul.mubr.f32.gmra.mxu0 %v289
    %v1760 = vpop.f32.mrf.mxu0
    %v1761 = vadd.f32 %v210, %v1760
    %v1762 = vpop.f32.mrf.mxu0
    %1763 = vdwg.mxu0
    %1764 = vmatprep.subr.mxu0 0.0
    %1765 = vmatpush1.msra.mxu0 0.0
    %1766 = vmatprep.subr.mxu0 0.0
    %1767 = vmatpush1.msra.mxu0 0.0
    %1768 = vmatprep.subr.mxu0 0.0
    %1769 = vmatpush1.msra.mxu0 0.0
    %1770 = vmatprep.subr.mxu0 0.0
    %1771 = vmatpush1.msra.mxu0 0.0
    %1772 = vmatprep.subr.mxu0 0.0
    %1773 = vmatpush1.msra.mxu0 0.0
    %1774 = vmatprep.subr.mxu0 0.0
    %1775 = vmatpush1.msra.mxu0 0.0
    %1776 = vmatprep.subr.mxu0 0.0
    %1777 = vmatpush1.msra.mxu0 0.0
    %1778 = vmatprep.subr.mxu0 0.0
    %1779 = vmatpush1.msra.mxu0 0.0
    %1780 = vmatprep.subr.mxu0 0.0
    %1781 = vmatpush1.msra.mxu0 0.0
    %1782 = vmatprep.subr.mxu0 0.0
    %1783 = vmatpush1.msra.mxu0 0.0
    %1784 = vmatprep.subr.mxu0 0.0
    %1785 = vmatpush1.msra.mxu0 0.0
    %1786 = vmatprep.subr.mxu0 0.0
    %1787 = vmatpush1.msra.mxu0 0.0
    %1788 = vmatprep.subr.mxu0 0.0
    %1789 = vmatpush1.msra.mxu0 %v66
    %1790 = vmatprep.subr.mxu0 0.0
    %1791 = vmatpush1.msra.mxu0 %v65
    %1792 = vmatprep.subr.mxu0 0.0
    %1793 = vmatpush1.msra.mxu0 %v64
    %1794 = vmatprep.subr.mxu0 0.0
    %1795 = vmatpush1.msra.mxu0 %v63
    %1796 = vmatprep.subr.mxu0 0.0
    %1797 = vmatpush2.msra.mxu0 0.0
    %1798 = vmatprep.subr.mxu0 0.0
    %1799 = vmatpush2.msra.mxu0 0.0
    %1800 = vmatprep.subr.mxu0 0.0
    %1801 = vmatpush2.msra.mxu0 0.0
    %1802 = vmatprep.subr.mxu0 0.0
    %1803 = vmatpush2.msra.mxu0 0.0
    %1804 = vmatprep.subr.mxu0 0.0
    %1805 = vmatpush2.msra.mxu0 0.0
    %1806 = vmatprep.subr.mxu0 0.0
    %1807 = vmatpush2.msra.mxu0 0.0
    %1808 = vmatprep.subr.mxu0 0.0
    %1809 = vmatpush2.msra.mxu0 0.0
    %1810 = vmatprep.subr.mxu0 0.0
    %1811 = vmatpush2.msra.mxu0 0.0
    %1812 = vmatprep.subr.mxu0 0.0
    %1813 = vmatpush2.msra.mxu0 0.0
    %1814 = vmatprep.subr.mxu0 0.0
    %1815 = vmatpush2.msra.mxu0 0.0
    %1816 = vmatprep.subr.mxu0 0.0
    %1817 = vmatpush2.msra.mxu0 0.0
    %1818 = vmatprep.subr.mxu0 0.0
    %1819 = vmatpush2.msra.mxu0 0.0
    %1820 = vmatprep.subr.mxu0 0.0
    %1821 = vmatpush2.msra.mxu0 0.0
    %1822 = vmatprep.subr.mxu0 0.0
    %1823 = vmatpush2.msra.mxu0 0.0
    %1824 = vmatprep.subr.mxu0 0.0
    %1825 = vmatpush2.msra.mxu0 0.0
    %1826 = vmatprep.subr.mxu0 0.0
    %1827 = vmatpush2.msra.mxu0 0.0
    %1828 = vmatprep.mubr.f32.mxu0 0.0
    %1829 = vmatmul.mubr.f32.gmra.mxu0 %v362
    %v1830 = vpop.f32.mrf.mxu0
    %v1831 = vadd.f32 %v210, %v1830
    %v1832 = vpop.f32.mrf.mxu0
    %1833 = vdwg.mxu0
    %1834 = vmatprep.subr.mxu0 0.0
    %1835 = vmatpush1.msra.mxu0 0.0
    %1836 = vmatprep.subr.mxu0 0.0
    %1837 = vmatpush1.msra.mxu0 0.0
    %1838 = vmatprep.subr.mxu0 0.0
    %1839 = vmatpush1.msra.mxu0 0.0
    %1840 = vmatprep.subr.mxu0 0.0
    %1841 = vmatpush1.msra.mxu0 0.0
    %1842 = vmatprep.subr.mxu0 0.0
    %1843 = vmatpush1.msra.mxu0 0.0
    %1844 = vmatprep.subr.mxu0 0.0
    %1845 = vmatpush1.msra.mxu0 0.0
    %1846 = vmatprep.subr.mxu0 0.0
    %1847 = vmatpush1.msra.mxu0 0.0
    %1848 = vmatprep.subr.mxu0 0.0
    %1849 = vmatpush1.msra.mxu0 0.0
    %1850 = vmatprep.subr.mxu0 0.0
    %1851 = vmatpush1.msra.mxu0 0.0
    %1852 = vmatprep.subr.mxu0 0.0
    %1853 = vmatpush1.msra.mxu0 0.0
    %1854 = vmatprep.subr.mxu0 0.0
    %1855 = vmatpush1.msra.mxu0 0.0
    %1856 = vmatprep.subr.mxu0 0.0
    %1857 = vmatpush1.msra.mxu0 0.0
    %1858 = vmatprep.subr.mxu0 0.0
    %1859 = vmatpush1.msra.mxu0 %v70
    %1860 = vmatprep.subr.mxu0 0.0
    %1861 = vmatpush1.msra.mxu0 %v69
    %1862 = vmatprep.subr.mxu0 0.0
    %1863 = vmatpush1.msra.mxu0 %v68
    %1864 = vmatprep.subr.mxu0 0.0
    %1865 = vmatpush1.msra.mxu0 %v67
    %1866 = vmatprep.subr.mxu0 0.0
    %1867 = vmatpush2.msra.mxu0 0.0
    %1868 = vmatprep.subr.mxu0 0.0
    %1869 = vmatpush2.msra.mxu0 0.0
    %1870 = vmatprep.subr.mxu0 0.0
    %1871 = vmatpush2.msra.mxu0 0.0
    %1872 = vmatprep.subr.mxu0 0.0
    %1873 = vmatpush2.msra.mxu0 0.0
    %1874 = vmatprep.subr.mxu0 0.0
    %1875 = vmatpush2.msra.mxu0 0.0
    %1876 = vmatprep.subr.mxu0 0.0
    %1877 = vmatpush2.msra.mxu0 0.0
    %1878 = vmatprep.subr.mxu0 0.0
    %1879 = vmatpush2.msra.mxu0 0.0
    %1880 = vmatprep.subr.mxu0 0.0
    %1881 = vmatpush2.msra.mxu0 0.0
    %1882 = vmatprep.subr.mxu0 0.0
    %1883 = vmatpush2.msra.mxu0 0.0
    %1884 = vmatprep.subr.mxu0 0.0
    %1885 = vmatpush2.msra.mxu0 0.0
    %1886 = vmatprep.subr.mxu0 0.0
    %1887 = vmatpush2.msra.mxu0 0.0
    %1888 = vmatprep.subr.mxu0 0.0
    %1889 = vmatpush2.msra.mxu0 0.0
    %1890 = vmatprep.subr.mxu0 0.0
    %1891 = vmatpush2.msra.mxu0 0.0
    %1892 = vmatprep.subr.mxu0 0.0
    %1893 = vmatpush2.msra.mxu0 0.0
    %1894 = vmatprep.subr.mxu0 0.0
    %1895 = vmatpush2.msra.mxu0 0.0
    %1896 = vmatprep.subr.mxu0 0.0
    %1897 = vmatpush2.msra.mxu0 0.0
    %1898 = vmatprep.mubr.f32.mxu0 0.0
    %1899 = vmatmul.mubr.f32.gmra.mxu0 %v289
    %v1900 = vpop.f32.mrf.mxu0
    %v1901 = vadd.f32 %v214, %v1900
    %v1902 = vpop.f32.mrf.mxu0
    %1903 = vdwg.mxu0
    %1904 = vmatprep.subr.mxu0 0.0
    %1905 = vmatpush1.msra.mxu0 0.0
    %1906 = vmatprep.subr.mxu0 0.0
    %1907 = vmatpush1.msra.mxu0 0.0
    %1908 = vmatprep.subr.mxu0 0.0
    %1909 = vmatpush1.msra.mxu0 0.0
    %1910 = vmatprep.subr.mxu0 0.0
    %1911 = vmatpush1.msra.mxu0 0.0
    %1912 = vmatprep.subr.mxu0 0.0
    %1913 = vmatpush1.msra.mxu0 0.0
    %1914 = vmatprep.subr.mxu0 0.0
    %1915 = vmatpush1.msra.mxu0 0.0
    %1916 = vmatprep.subr.mxu0 0.0
    %1917 = vmatpush1.msra.mxu0 0.0
    %1918 = vmatprep.subr.mxu0 0.0
    %1919 = vmatpush1.msra.mxu0 0.0
    %1920 = vmatprep.subr.mxu0 0.0
    %1921 = vmatpush1.msra.mxu0 0.0
    %1922 = vmatprep.subr.mxu0 0.0
    %1923 = vmatpush1.msra.mxu0 0.0
    %1924 = vmatprep.subr.mxu0 0.0
    %1925 = vmatpush1.msra.mxu0 0.0
    %1926 = vmatprep.subr.mxu0 0.0
    %1927 = vmatpush1.msra.mxu0 0.0
    %1928 = vmatprep.subr.mxu0 0.0
    %1929 = vmatpush1.msra.mxu0 %v70
    %1930 = vmatprep.subr.mxu0 0.0
    %1931 = vmatpush1.msra.mxu0 %v69
    %1932 = vmatprep.subr.mxu0 0.0
    %1933 = vmatpush1.msra.mxu0 %v68
    %1934 = vmatprep.subr.mxu0 0.0
    %1935 = vmatpush1.msra.mxu0 %v67
    %1936 = vmatprep.subr.mxu0 0.0
    %1937 = vmatpush2.msra.mxu0 0.0
    %1938 = vmatprep.subr.mxu0 0.0
    %1939 = vmatpush2.msra.mxu0 0.0
    %1940 = vmatprep.subr.mxu0 0.0
    %1941 = vmatpush2.msra.mxu0 0.0
    %1942 = vmatprep.subr.mxu0 0.0
    %1943 = vmatpush2.msra.mxu0 0.0
    %1944 = vmatprep.subr.mxu0 0.0
    %1945 = vmatpush2.msra.mxu0 0.0
    %1946 = vmatprep.subr.mxu0 0.0
    %1947 = vmatpush2.msra.mxu0 0.0
    %1948 = vmatprep.subr.mxu0 0.0
    %1949 = vmatpush2.msra.mxu0 0.0
    %1950 = vmatprep.subr.mxu0 0.0
    %1951 = vmatpush2.msra.mxu0 0.0
    %1952 = vmatprep.subr.mxu0 0.0
    %1953 = vmatpush2.msra.mxu0 0.0
    %1954 = vmatprep.subr.mxu0 0.0
    %1955 = vmatpush2.msra.mxu0 0.0
    %1956 = vmatprep.subr.mxu0 0.0
    %1957 = vmatpush2.msra.mxu0 0.0
    %1958 = vmatprep.subr.mxu0 0.0
    %1959 = vmatpush2.msra.mxu0 0.0
    %1960 = vmatprep.subr.mxu0 0.0
    %1961 = vmatpush2.msra.mxu0 0.0
    %1962 = vmatprep.subr.mxu0 0.0
    %1963 = vmatpush2.msra.mxu0 0.0
    %1964 = vmatprep.subr.mxu0 0.0
    %1965 = vmatpush2.msra.mxu0 0.0
    %1966 = vmatprep.subr.mxu0 0.0
    %1967 = vmatpush2.msra.mxu0 0.0
    %1968 = vmatprep.mubr.f32.mxu0 0.0
    %1969 = vmatmul.mubr.f32.gmra.mxu0 %v362
    %v1970 = vpop.f32.mrf.mxu0
    %v1971 = vadd.f32 %v214, %v1970
    %v1972 = vpop.f32.mrf.mxu0
    %1973 = vdwg.mxu0
    %1974 = vmatprep.subr.mxu0 0.0
    %1975 = vmatpush1.msra.mxu0 0.0
    %1976 = vmatprep.subr.mxu0 0.0
    %1977 = vmatpush1.msra.mxu0 0.0
    %1978 = vmatprep.subr.mxu0 0.0
    %1979 = vmatpush1.msra.mxu0 0.0
    %1980 = vmatprep.subr.mxu0 0.0
    %1981 = vmatpush1.msra.mxu0 0.0
    %1982 = vmatprep.subr.mxu0 0.0
    %1983 = vmatpush1.msra.mxu0 0.0
    %1984 = vmatprep.subr.mxu0 0.0
    %1985 = vmatpush1.msra.mxu0 0.0
    %1986 = vmatprep.subr.mxu0 0.0
    %1987 = vmatpush1.msra.mxu0 0.0
    %1988 = vmatprep.subr.mxu0 0.0
    %1989 = vmatpush1.msra.mxu0 0.0
    %1990 = vmatprep.subr.mxu0 0.0
    %1991 = vmatpush1.msra.mxu0 0.0
    %1992 = vmatprep.subr.mxu0 0.0
    %1993 = vmatpush1.msra.mxu0 0.0
    %1994 = vmatprep.subr.mxu0 0.0
    %1995 = vmatpush1.msra.mxu0 0.0
    %1996 = vmatprep.subr.mxu0 0.0
    %1997 = vmatpush1.msra.mxu0 0.0
    %1998 = vmatprep.subr.mxu0 0.0
    %1999 = vmatpush1.msra.mxu0 %v74
    %2000 = vmatprep.subr.mxu0 0.0
    %2001 = vmatpush1.msra.mxu0 %v73
    %2002 = vmatprep.subr.mxu0 0.0
    %2003 = vmatpush1.msra.mxu0 %v72
    %2004 = vmatprep.subr.mxu0 0.0
    %2005 = vmatpush1.msra.mxu0 %v71
    %2006 = vmatprep.subr.mxu0 0.0
    %2007 = vmatpush2.msra.mxu0 0.0
    %2008 = vmatprep.subr.mxu0 0.0
    %2009 = vmatpush2.msra.mxu0 0.0
    %2010 = vmatprep.subr.mxu0 0.0
    %2011 = vmatpush2.msra.mxu0 0.0
    %2012 = vmatprep.subr.mxu0 0.0
    %2013 = vmatpush2.msra.mxu0 0.0
    %2014 = vmatprep.subr.mxu0 0.0
    %2015 = vmatpush2.msra.mxu0 0.0
    %2016 = vmatprep.subr.mxu0 0.0
    %2017 = vmatpush2.msra.mxu0 0.0
    %2018 = vmatprep.subr.mxu0 0.0
    %2019 = vmatpush2.msra.mxu0 0.0
    %2020 = vmatprep.subr.mxu0 0.0
    %2021 = vmatpush2.msra.mxu0 0.0
    %2022 = vmatprep.subr.mxu0 0.0
    %2023 = vmatpush2.msra.mxu0 0.0
    %2024 = vmatprep.subr.mxu0 0.0
    %2025 = vmatpush2.msra.mxu0 0.0
    %2026 = vmatprep.subr.mxu0 0.0
    %2027 = vmatpush2.msra.mxu0 0.0
    %2028 = vmatprep.subr.mxu0 0.0
    %2029 = vmatpush2.msra.mxu0 0.0
    %2030 = vmatprep.subr.mxu0 0.0
    %2031 = vmatpush2.msra.mxu0 0.0
    %2032 = vmatprep.subr.mxu0 0.0
    %2033 = vmatpush2.msra.mxu0 0.0
    %2034 = vmatprep.subr.mxu0 0.0
    %2035 = vmatpush2.msra.mxu0 0.0
    %2036 = vmatprep.subr.mxu0 0.0
    %2037 = vmatpush2.msra.mxu0 0.0
    %2038 = vmatprep.mubr.f32.mxu0 0.0
    %2039 = vmatmul.mubr.f32.gmra.mxu0 %v289
    %v2040 = vpop.f32.mrf.mxu0
    %v2041 = vadd.f32 %v218, %v2040
    %v2042 = vpop.f32.mrf.mxu0
    %2043 = vdwg.mxu0
    %2044 = vmatprep.subr.mxu0 0.0
    %2045 = vmatpush1.msra.mxu0 0.0
    %2046 = vmatprep.subr.mxu0 0.0
    %2047 = vmatpush1.msra.mxu0 0.0
    %2048 = vmatprep.subr.mxu0 0.0
    %2049 = vmatpush1.msra.mxu0 0.0
    %2050 = vmatprep.subr.mxu0 0.0
    %2051 = vmatpush1.msra.mxu0 0.0
    %2052 = vmatprep.subr.mxu0 0.0
    %2053 = vmatpush1.msra.mxu0 0.0
    %2054 = vmatprep.subr.mxu0 0.0
    %2055 = vmatpush1.msra.mxu0 0.0
    %2056 = vmatprep.subr.mxu0 0.0
    %2057 = vmatpush1.msra.mxu0 0.0
    %2058 = vmatprep.subr.mxu0 0.0
    %2059 = vmatpush1.msra.mxu0 0.0
    %2060 = vmatprep.subr.mxu0 0.0
    %2061 = vmatpush1.msra.mxu0 0.0
    %2062 = vmatprep.subr.mxu0 0.0
    %2063 = vmatpush1.msra.mxu0 0.0
    %2064 = vmatprep.subr.mxu0 0.0
    %2065 = vmatpush1.msra.mxu0 0.0
    %2066 = vmatprep.subr.mxu0 0.0
    %2067 = vmatpush1.msra.mxu0 0.0
    %2068 = vmatprep.subr.mxu0 0.0
    %2069 = vmatpush1.msra.mxu0 %v74
    %2070 = vmatprep.subr.mxu0 0.0
    %2071 = vmatpush1.msra.mxu0 %v73
    %2072 = vmatprep.subr.mxu0 0.0
    %2073 = vmatpush1.msra.mxu0 %v72
    %2074 = vmatprep.subr.mxu0 0.0
    %2075 = vmatpush1.msra.mxu0 %v71
    %2076 = vmatprep.subr.mxu0 0.0
    %2077 = vmatpush2.msra.mxu0 0.0
    %2078 = vmatprep.subr.mxu0 0.0
    %2079 = vmatpush2.msra.mxu0 0.0
    %2080 = vmatprep.subr.mxu0 0.0
    %2081 = vmatpush2.msra.mxu0 0.0
    %2082 = vmatprep.subr.mxu0 0.0
    %2083 = vmatpush2.msra.mxu0 0.0
    %2084 = vmatprep.subr.mxu0 0.0
    %2085 = vmatpush2.msra.mxu0 0.0
    %2086 = vmatprep.subr.mxu0 0.0
    %2087 = vmatpush2.msra.mxu0 0.0
    %2088 = vmatprep.subr.mxu0 0.0
    %2089 = vmatpush2.msra.mxu0 0.0
    %2090 = vmatprep.subr.mxu0 0.0
    %2091 = vmatpush2.msra.mxu0 0.0
    %2092 = vmatprep.subr.mxu0 0.0
    %2093 = vmatpush2.msra.mxu0 0.0
    %2094 = vmatprep.subr.mxu0 0.0
    %2095 = vmatpush2.msra.mxu0 0.0
    %2096 = vmatprep.subr.mxu0 0.0
    %2097 = vmatpush2.msra.mxu0 0.0
    %2098 = vmatprep.subr.mxu0 0.0
    %2099 = vmatpush2.msra.mxu0 0.0
    %2100 = vmatprep.subr.mxu0 0.0
    %2101 = vmatpush2.msra.mxu0 0.0
    %2102 = vmatprep.subr.mxu0 0.0
    %2103 = vmatpush2.msra.mxu0 0.0
    %2104 = vmatprep.subr.mxu0 0.0
    %2105 = vmatpush2.msra.mxu0 0.0
    %2106 = vmatprep.subr.mxu0 0.0
    %2107 = vmatpush2.msra.mxu0 0.0
    %2108 = vmatprep.mubr.f32.mxu0 0.0
    %2109 = vmatmul.mubr.f32.gmra.mxu0 %v362
    %v2110 = vpop.f32.mrf.mxu0
    %v2111 = vadd.f32 %v218, %v2110
    %v2112 = vpop.f32.mrf.mxu0
    %2113 = vdwg.mxu0
    %2114 = vmatprep.subr.mxu0 0.0
    %2115 = vmatpush1.msra.mxu0 0.0
    %2116 = vmatprep.subr.mxu0 0.0
    %2117 = vmatpush1.msra.mxu0 0.0
    %2118 = vmatprep.subr.mxu0 0.0
    %2119 = vmatpush1.msra.mxu0 0.0
    %2120 = vmatprep.subr.mxu0 0.0
    %2121 = vmatpush1.msra.mxu0 0.0
    %2122 = vmatprep.subr.mxu0 0.0
    %2123 = vmatpush1.msra.mxu0 0.0
    %2124 = vmatprep.subr.mxu0 0.0
    %2125 = vmatpush1.msra.mxu0 0.0
    %2126 = vmatprep.subr.mxu0 0.0
    %2127 = vmatpush1.msra.mxu0 0.0
    %2128 = vmatprep.subr.mxu0 0.0
    %2129 = vmatpush1.msra.mxu0 0.0
    %2130 = vmatprep.subr.mxu0 0.0
    %2131 = vmatpush1.msra.mxu0 0.0
    %2132 = vmatprep.subr.mxu0 0.0
    %2133 = vmatpush1.msra.mxu0 0.0
    %2134 = vmatprep.subr.mxu0 0.0
    %2135 = vmatpush1.msra.mxu0 0.0
    %2136 = vmatprep.subr.mxu0 0.0
    %2137 = vmatpush1.msra.mxu0 0.0
    %2138 = vmatprep.subr.mxu0 0.0
    %2139 = vmatpush1.msra.mxu0 %v78
    %2140 = vmatprep.subr.mxu0 0.0
    %2141 = vmatpush1.msra.mxu0 %v77
    %2142 = vmatprep.subr.mxu0 0.0
    %2143 = vmatpush1.msra.mxu0 %v76
    %2144 = vmatprep.subr.mxu0 0.0
    %2145 = vmatpush1.msra.mxu0 %v75
    %2146 = vmatprep.subr.mxu0 0.0
    %2147 = vmatpush2.msra.mxu0 0.0
    %2148 = vmatprep.subr.mxu0 0.0
    %2149 = vmatpush2.msra.mxu0 0.0
    %2150 = vmatprep.subr.mxu0 0.0
    %2151 = vmatpush2.msra.mxu0 0.0
    %2152 = vmatprep.subr.mxu0 0.0
    %2153 = vmatpush2.msra.mxu0 0.0
    %2154 = vmatprep.subr.mxu0 0.0
    %2155 = vmatpush2.msra.mxu0 0.0
    %2156 = vmatprep.subr.mxu0 0.0
    %2157 = vmatpush2.msra.mxu0 0.0
    %2158 = vmatprep.subr.mxu0 0.0
    %2159 = vmatpush2.msra.mxu0 0.0
    %2160 = vmatprep.subr.mxu0 0.0
    %2161 = vmatpush2.msra.mxu0 0.0
    %2162 = vmatprep.subr.mxu0 0.0
    %2163 = vmatpush2.msra.mxu0 0.0
    %2164 = vmatprep.subr.mxu0 0.0
    %2165 = vmatpush2.msra.mxu0 0.0
    %2166 = vmatprep.subr.mxu0 0.0
    %2167 = vmatpush2.msra.mxu0 0.0
    %2168 = vmatprep.subr.mxu0 0.0
    %2169 = vmatpush2.msra.mxu0 0.0
    %2170 = vmatprep.subr.mxu0 0.0
    %2171 = vmatpush2.msra.mxu0 0.0
    %2172 = vmatprep.subr.mxu0 0.0
    %2173 = vmatpush2.msra.mxu0 0.0
    %2174 = vmatprep.subr.mxu0 0.0
    %2175 = vmatpush2.msra.mxu0 0.0
    %2176 = vmatprep.subr.mxu0 0.0
    %2177 = vmatpush2.msra.mxu0 0.0
    %2178 = vmatprep.mubr.f32.mxu0 0.0
    %2179 = vmatmul.mubr.f32.gmra.mxu0 %v289
    %v2180 = vpop.f32.mrf.mxu0
    %v2181 = vadd.f32 %v222, %v2180
    %v2182 = vpop.f32.mrf.mxu0
    %2183 = vdwg.mxu0
    %2184 = vmatprep.subr.mxu0 0.0
    %2185 = vmatpush1.msra.mxu0 0.0
    %2186 = vmatprep.subr.mxu0 0.0
    %2187 = vmatpush1.msra.mxu0 0.0
    %2188 = vmatprep.subr.mxu0 0.0
    %2189 = vmatpush1.msra.mxu0 0.0
    %2190 = vmatprep.subr.mxu0 0.0
    %2191 = vmatpush1.msra.mxu0 0.0
    %2192 = vmatprep.subr.mxu0 0.0
    %2193 = vmatpush1.msra.mxu0 0.0
    %2194 = vmatprep.subr.mxu0 0.0
    %2195 = vmatpush1.msra.mxu0 0.0
    %2196 = vmatprep.subr.mxu0 0.0
    %2197 = vmatpush1.msra.mxu0 0.0
    %2198 = vmatprep.subr.mxu0 0.0
    %2199 = vmatpush1.msra.mxu0 0.0
    %2200 = vmatprep.subr.mxu0 0.0
    %2201 = vmatpush1.msra.mxu0 0.0
    %2202 = vmatprep.subr.mxu0 0.0
    %2203 = vmatpush1.msra.mxu0 0.0
    %2204 = vmatprep.subr.mxu0 0.0
    %2205 = vmatpush1.msra.mxu0 0.0
    %2206 = vmatprep.subr.mxu0 0.0
    %2207 = vmatpush1.msra.mxu0 0.0
    %2208 = vmatprep.subr.mxu0 0.0
    %2209 = vmatpush1.msra.mxu0 %v78
    %2210 = vmatprep.subr.mxu0 0.0
    %2211 = vmatpush1.msra.mxu0 %v77
    %2212 = vmatprep.subr.mxu0 0.0
    %2213 = vmatpush1.msra.mxu0 %v76
    %2214 = vmatprep.subr.mxu0 0.0
    %2215 = vmatpush1.msra.mxu0 %v75
    %2216 = vmatprep.subr.mxu0 0.0
    %2217 = vmatpush2.msra.mxu0 0.0
    %2218 = vmatprep.subr.mxu0 0.0
    %2219 = vmatpush2.msra.mxu0 0.0
    %2220 = vmatprep.subr.mxu0 0.0
    %2221 = vmatpush2.msra.mxu0 0.0
    %2222 = vmatprep.subr.mxu0 0.0
    %2223 = vmatpush2.msra.mxu0 0.0
    %2224 = vmatprep.subr.mxu0 0.0
    %2225 = vmatpush2.msra.mxu0 0.0
    %2226 = vmatprep.subr.mxu0 0.0
    %2227 = vmatpush2.msra.mxu0 0.0
    %2228 = vmatprep.subr.mxu0 0.0
    %2229 = vmatpush2.msra.mxu0 0.0
    %2230 = vmatprep.subr.mxu0 0.0
    %2231 = vmatpush2.msra.mxu0 0.0
    %2232 = vmatprep.subr.mxu0 0.0
    %2233 = vmatpush2.msra.mxu0 0.0
    %2234 = vmatprep.subr.mxu0 0.0
    %2235 = vmatpush2.msra.mxu0 0.0
    %2236 = vmatprep.subr.mxu0 0.0
    %2237 = vmatpush2.msra.mxu0 0.0
    %2238 = vmatprep.subr.mxu0 0.0
    %2239 = vmatpush2.msra.mxu0 0.0
    %2240 = vmatprep.subr.mxu0 0.0
    %2241 = vmatpush2.msra.mxu0 0.0
    %2242 = vmatprep.subr.mxu0 0.0
    %2243 = vmatpush2.msra.mxu0 0.0
    %2244 = vmatprep.subr.mxu0 0.0
    %2245 = vmatpush2.msra.mxu0 0.0
    %2246 = vmatprep.subr.mxu0 0.0
    %2247 = vmatpush2.msra.mxu0 0.0
    %2248 = vmatprep.mubr.f32.mxu0 0.0
    %2249 = vmatmul.mubr.f32.gmra.mxu0 %v362
    %v2250 = vpop.f32.mrf.mxu0
    %v2251 = vadd.f32 %v222, %v2250
    %v2252 = vpop.f32.mrf.mxu0
    %2253 = vdwg.mxu0
    %2254 = vmatprep.subr.mxu0 0.0
    %2255 = vmatpush1.msra.mxu0 0.0
    %2256 = vmatprep.subr.mxu0 0.0
    %2257 = vmatpush1.msra.mxu0 0.0
    %2258 = vmatprep.subr.mxu0 0.0
    %2259 = vmatpush1.msra.mxu0 0.0
    %2260 = vmatprep.subr.mxu0 0.0
    %2261 = vmatpush1.msra.mxu0 0.0
    %2262 = vmatprep.subr.mxu0 0.0
    %2263 = vmatpush1.msra.mxu0 0.0
    %2264 = vmatprep.subr.mxu0 0.0
    %2265 = vmatpush1.msra.mxu0 0.0
    %2266 = vmatprep.subr.mxu0 0.0
    %2267 = vmatpush1.msra.mxu0 0.0
    %2268 = vmatprep.subr.mxu0 0.0
    %2269 = vmatpush1.msra.mxu0 0.0
    %2270 = vmatprep.subr.mxu0 0.0
    %2271 = vmatpush1.msra.mxu0 0.0
    %2272 = vmatprep.subr.mxu0 0.0
    %2273 = vmatpush1.msra.mxu0 0.0
    %2274 = vmatprep.subr.mxu0 0.0
    %2275 = vmatpush1.msra.mxu0 0.0
    %2276 = vmatprep.subr.mxu0 0.0
    %2277 = vmatpush1.msra.mxu0 0.0
    %2278 = vmatprep.subr.mxu0 0.0
    %2279 = vmatpush1.msra.mxu0 %v82
    %2280 = vmatprep.subr.mxu0 0.0
    %2281 = vmatpush1.msra.mxu0 %v81
    %2282 = vmatprep.subr.mxu0 0.0
    %2283 = vmatpush1.msra.mxu0 %v80
    %2284 = vmatprep.subr.mxu0 0.0
    %2285 = vmatpush1.msra.mxu0 %v79
    %2286 = vmatprep.subr.mxu0 0.0
    %2287 = vmatpush2.msra.mxu0 0.0
    %2288 = vmatprep.subr.mxu0 0.0
    %2289 = vmatpush2.msra.mxu0 0.0
    %2290 = vmatprep.subr.mxu0 0.0
    %2291 = vmatpush2.msra.mxu0 0.0
    %2292 = vmatprep.subr.mxu0 0.0
    %2293 = vmatpush2.msra.mxu0 0.0
    %2294 = vmatprep.subr.mxu0 0.0
    %2295 = vmatpush2.msra.mxu0 0.0
    %2296 = vmatprep.subr.mxu0 0.0
    %2297 = vmatpush2.msra.mxu0 0.0
    %2298 = vmatprep.subr.mxu0 0.0
    %2299 = vmatpush2.msra.mxu0 0.0
    %2300 = vmatprep.subr.mxu0 0.0
    %2301 = vmatpush2.msra.mxu0 0.0
    %2302 = vmatprep.subr.mxu0 0.0
    %2303 = vmatpush2.msra.mxu0 0.0
    %2304 = vmatprep.subr.mxu0 0.0
    %2305 = vmatpush2.msra.mxu0 0.0
    %2306 = vmatprep.subr.mxu0 0.0
    %2307 = vmatpush2.msra.mxu0 0.0
    %2308 = vmatprep.subr.mxu0 0.0
    %2309 = vmatpush2.msra.mxu0 0.0
    %2310 = vmatprep.subr.mxu0 0.0
    %2311 = vmatpush2.msra.mxu0 0.0
    %2312 = vmatprep.subr.mxu0 0.0
    %2313 = vmatpush2.msra.mxu0 0.0
    %2314 = vmatprep.subr.mxu0 0.0
    %2315 = vmatpush2.msra.mxu0 0.0
    %2316 = vmatprep.subr.mxu0 0.0
    %2317 = vmatpush2.msra.mxu0 0.0
    %2318 = vmatprep.mubr.f32.mxu0 0.0
    %2319 = vmatmul.mubr.f32.gmra.mxu0 %v289
    %v2320 = vpop.f32.mrf.mxu0
    %v2321 = vadd.f32 %v226, %v2320
    %v2322 = vpop.f32.mrf.mxu0
    %2323 = vdwg.mxu0
    %2324 = vmatprep.subr.mxu0 0.0
    %2325 = vmatpush1.msra.mxu0 0.0
    %2326 = vmatprep.subr.mxu0 0.0
    %2327 = vmatpush1.msra.mxu0 0.0
    %2328 = vmatprep.subr.mxu0 0.0
    %2329 = vmatpush1.msra.mxu0 0.0
    %2330 = vmatprep.subr.mxu0 0.0
    %2331 = vmatpush1.msra.mxu0 0.0
    %2332 = vmatprep.subr.mxu0 0.0
    %2333 = vmatpush1.msra.mxu0 0.0
    %2334 = vmatprep.subr.mxu0 0.0
    %2335 = vmatpush1.msra.mxu0 0.0
    %2336 = vmatprep.subr.mxu0 0.0
    %2337 = vmatpush1.msra.mxu0 0.0
    %2338 = vmatprep.subr.mxu0 0.0
    %2339 = vmatpush1.msra.mxu0 0.0
    %2340 = vmatprep.subr.mxu0 0.0
    %2341 = vmatpush1.msra.mxu0 0.0
    %2342 = vmatprep.subr.mxu0 0.0
    %2343 = vmatpush1.msra.mxu0 0.0
    %2344 = vmatprep.subr.mxu0 0.0
    %2345 = vmatpush1.msra.mxu0 0.0
    %2346 = vmatprep.subr.mxu0 0.0
    %2347 = vmatpush1.msra.mxu0 0.0
    %2348 = vmatprep.subr.mxu0 0.0
    %2349 = vmatpush1.msra.mxu0 %v82
    %2350 = vmatprep.subr.mxu0 0.0
    %2351 = vmatpush1.msra.mxu0 %v81
    %2352 = vmatprep.subr.mxu0 0.0
    %2353 = vmatpush1.msra.mxu0 %v80
    %2354 = vmatprep.subr.mxu0 0.0
    %2355 = vmatpush1.msra.mxu0 %v79
    %2356 = vmatprep.subr.mxu0 0.0
    %2357 = vmatpush2.msra.mxu0 0.0
    %2358 = vmatprep.subr.mxu0 0.0
    %2359 = vmatpush2.msra.mxu0 0.0
    %2360 = vmatprep.subr.mxu0 0.0
    %2361 = vmatpush2.msra.mxu0 0.0
    %2362 = vmatprep.subr.mxu0 0.0
    %2363 = vmatpush2.msra.mxu0 0.0
    %2364 = vmatprep.subr.mxu0 0.0
    %2365 = vmatpush2.msra.mxu0 0.0
    %2366 = vmatprep.subr.mxu0 0.0
    %2367 = vmatpush2.msra.mxu0 0.0
    %2368 = vmatprep.subr.mxu0 0.0
    %2369 = vmatpush2.msra.mxu0 0.0
    %2370 = vmatprep.subr.mxu0 0.0
    %2371 = vmatpush2.msra.mxu0 0.0
    %2372 = vmatprep.subr.mxu0 0.0
    %2373 = vmatpush2.msra.mxu0 0.0
    %2374 = vmatprep.subr.mxu0 0.0
    %2375 = vmatpush2.msra.mxu0 0.0
    %2376 = vmatprep.subr.mxu0 0.0
    %2377 = vmatpush2.msra.mxu0 0.0
    %2378 = vmatprep.subr.mxu0 0.0
    %2379 = vmatpush2.msra.mxu0 0.0
    %2380 = vmatprep.subr.mxu0 0.0
    %2381 = vmatpush2.msra.mxu0 0.0
    %2382 = vmatprep.subr.mxu0 0.0
    %2383 = vmatpush2.msra.mxu0 0.0
    %2384 = vmatprep.subr.mxu0 0.0
    %2385 = vmatpush2.msra.mxu0 0.0
    %2386 = vmatprep.subr.mxu0 0.0
    %2387 = vmatpush2.msra.mxu0 0.0
    %2388 = vmatprep.mubr.f32.mxu0 0.0
    %2389 = vmatmul.mubr.f32.gmra.mxu0 %v362
    %v2390 = vpop.f32.mrf.mxu0
    %v2391 = vadd.f32 %v226, %v2390
    %v2392 = vpop.f32.mrf.mxu0
    %2393 = vdwg.mxu0
    %2394 = vmatprep.subr.mxu0 0.0
    %2395 = vmatpush1.msra.mxu0 0.0
    %2396 = vmatprep.subr.mxu0 0.0
    %2397 = vmatpush1.msra.mxu0 0.0
    %2398 = vmatprep.subr.mxu0 0.0
    %2399 = vmatpush1.msra.mxu0 0.0
    %2400 = vmatprep.subr.mxu0 0.0
    %2401 = vmatpush1.msra.mxu0 0.0
    %2402 = vmatprep.subr.mxu0 0.0
    %2403 = vmatpush1.msra.mxu0 0.0
    %2404 = vmatprep.subr.mxu0 0.0
    %2405 = vmatpush1.msra.mxu0 0.0
    %2406 = vmatprep.subr.mxu0 0.0
    %2407 = vmatpush1.msra.mxu0 0.0
    %2408 = vmatprep.subr.mxu0 0.0
    %2409 = vmatpush1.msra.mxu0 0.0
    %2410 = vmatprep.subr.mxu0 0.0
    %2411 = vmatpush1.msra.mxu0 0.0
    %2412 = vmatprep.subr.mxu0 0.0
    %2413 = vmatpush1.msra.mxu0 0.0
    %2414 = vmatprep.subr.mxu0 0.0
    %2415 = vmatpush1.msra.mxu0 0.0
    %2416 = vmatprep.subr.mxu0 0.0
    %2417 = vmatpush1.msra.mxu0 0.0
    %2418 = vmatprep.subr.mxu0 0.0
    %2419 = vmatpush1.msra.mxu0 %v86
    %2420 = vmatprep.subr.mxu0 0.0
    %2421 = vmatpush1.msra.mxu0 %v85
    %2422 = vmatprep.subr.mxu0 0.0
    %2423 = vmatpush1.msra.mxu0 %v84
    %2424 = vmatprep.subr.mxu0 0.0
    %2425 = vmatpush1.msra.mxu0 %v83
    %2426 = vmatprep.subr.mxu0 0.0
    %2427 = vmatpush2.msra.mxu0 0.0
    %2428 = vmatprep.subr.mxu0 0.0
    %2429 = vmatpush2.msra.mxu0 0.0
    %2430 = vmatprep.subr.mxu0 0.0
    %2431 = vmatpush2.msra.mxu0 0.0
    %2432 = vmatprep.subr.mxu0 0.0
    %2433 = vmatpush2.msra.mxu0 0.0
    %2434 = vmatprep.subr.mxu0 0.0
    %2435 = vmatpush2.msra.mxu0 0.0
    %2436 = vmatprep.subr.mxu0 0.0
    %2437 = vmatpush2.msra.mxu0 0.0
    %2438 = vmatprep.subr.mxu0 0.0
    %2439 = vmatpush2.msra.mxu0 0.0
    %2440 = vmatprep.subr.mxu0 0.0
    %2441 = vmatpush2.msra.mxu0 0.0
    %2442 = vmatprep.subr.mxu0 0.0
    %2443 = vmatpush2.msra.mxu0 0.0
    %2444 = vmatprep.subr.mxu0 0.0
    %2445 = vmatpush2.msra.mxu0 0.0
    %2446 = vmatprep.subr.mxu0 0.0
    %2447 = vmatpush2.msra.mxu0 0.0
    %2448 = vmatprep.subr.mxu0 0.0
    %2449 = vmatpush2.msra.mxu0 0.0
    %2450 = vmatprep.subr.mxu0 0.0
    %2451 = vmatpush2.msra.mxu0 0.0
    %2452 = vmatprep.subr.mxu0 0.0
    %2453 = vmatpush2.msra.mxu0 0.0
    %2454 = vmatprep.subr.mxu0 0.0
    %2455 = vmatpush2.msra.mxu0 0.0
    %2456 = vmatprep.subr.mxu0 0.0
    %2457 = vmatpush2.msra.mxu0 0.0
    %2458 = vmatprep.mubr.f32.mxu0 0.0
    %2459 = vmatmul.mubr.f32.gmra.mxu0 %v289
    %v2460 = vpop.f32.mrf.mxu0
    %v2461 = vadd.f32 %v230, %v2460
    %v2462 = vpop.f32.mrf.mxu0
    %2463 = vdwg.mxu0
    %2464 = vmatprep.subr.mxu0 0.0
    %2465 = vmatpush1.msra.mxu0 0.0
    %2466 = vmatprep.subr.mxu0 0.0
    %2467 = vmatpush1.msra.mxu0 0.0
    %2468 = vmatprep.subr.mxu0 0.0
    %2469 = vmatpush1.msra.mxu0 0.0
    %2470 = vmatprep.subr.mxu0 0.0
    %2471 = vmatpush1.msra.mxu0 0.0
    %2472 = vmatprep.subr.mxu0 0.0
    %2473 = vmatpush1.msra.mxu0 0.0
    %2474 = vmatprep.subr.mxu0 0.0
    %2475 = vmatpush1.msra.mxu0 0.0
    %2476 = vmatprep.subr.mxu0 0.0
    %2477 = vmatpush1.msra.mxu0 0.0
    %2478 = vmatprep.subr.mxu0 0.0
    %2479 = vmatpush1.msra.mxu0 0.0
    %2480 = vmatprep.subr.mxu0 0.0
    %2481 = vmatpush1.msra.mxu0 0.0
    %2482 = vmatprep.subr.mxu0 0.0
    %2483 = vmatpush1.msra.mxu0 0.0
    %2484 = vmatprep.subr.mxu0 0.0
    %2485 = vmatpush1.msra.mxu0 0.0
    %2486 = vmatprep.subr.mxu0 0.0
    %2487 = vmatpush1.msra.mxu0 0.0
    %2488 = vmatprep.subr.mxu0 0.0
    %2489 = vmatpush1.msra.mxu0 %v86
    %2490 = vmatprep.subr.mxu0 0.0
    %2491 = vmatpush1.msra.mxu0 %v85
    %2492 = vmatprep.subr.mxu0 0.0
    %2493 = vmatpush1.msra.mxu0 %v84
    %2494 = vmatprep.subr.mxu0 0.0
    %2495 = vmatpush1.msra.mxu0 %v83
    %2496 = vmatprep.subr.mxu0 0.0
    %2497 = vmatpush2.msra.mxu0 0.0
    %2498 = vmatprep.subr.mxu0 0.0
    %2499 = vmatpush2.msra.mxu0 0.0
    %2500 = vmatprep.subr.mxu0 0.0
    %2501 = vmatpush2.msra.mxu0 0.0
    %2502 = vmatprep.subr.mxu0 0.0
    %2503 = vmatpush2.msra.mxu0 0.0
    %2504 = vmatprep.subr.mxu0 0.0
    %2505 = vmatpush2.msra.mxu0 0.0
    %2506 = vmatprep.subr.mxu0 0.0
    %2507 = vmatpush2.msra.mxu0 0.0
    %2508 = vmatprep.subr.mxu0 0.0
    %2509 = vmatpush2.msra.mxu0 0.0
    %2510 = vmatprep.subr.mxu0 0.0
    %2511 = vmatpush2.msra.mxu0 0.0
    %2512 = vmatprep.subr.mxu0 0.0
    %2513 = vmatpush2.msra.mxu0 0.0
    %2514 = vmatprep.subr.mxu0 0.0
    %2515 = vmatpush2.msra.mxu0 0.0
    %2516 = vmatprep.subr.mxu0 0.0
    %2517 = vmatpush2.msra.mxu0 0.0
    %2518 = vmatprep.subr.mxu0 0.0
    %2519 = vmatpush2.msra.mxu0 0.0
    %2520 = vmatprep.subr.mxu0 0.0
    %2521 = vmatpush2.msra.mxu0 0.0
    %2522 = vmatprep.subr.mxu0 0.0
    %2523 = vmatpush2.msra.mxu0 0.0
    %2524 = vmatprep.subr.mxu0 0.0
    %2525 = vmatpush2.msra.mxu0 0.0
    %2526 = vmatprep.subr.mxu0 0.0
    %2527 = vmatpush2.msra.mxu0 0.0
    %2528 = vmatprep.mubr.f32.mxu0 0.0
    %2529 = vmatmul.mubr.f32.gmra.mxu0 %v362
    %v2530 = vpop.f32.mrf.mxu0
    %v2531 = vadd.f32 %v230, %v2530
    %v2532 = vpop.f32.mrf.mxu0
    %2533 = vdwg.mxu0
    %2534 = vmatprep.subr.mxu0 0.0
    %2535 = vmatpush1.msra.mxu0 0.0
    %2536 = vmatprep.subr.mxu0 0.0
    %2537 = vmatpush1.msra.mxu0 0.0
    %2538 = vmatprep.subr.mxu0 0.0
    %2539 = vmatpush1.msra.mxu0 0.0
    %2540 = vmatprep.subr.mxu0 0.0
    %2541 = vmatpush1.msra.mxu0 0.0
    %2542 = vmatprep.subr.mxu0 0.0
    %2543 = vmatpush1.msra.mxu0 0.0
    %2544 = vmatprep.subr.mxu0 0.0
    %2545 = vmatpush1.msra.mxu0 0.0
    %2546 = vmatprep.subr.mxu0 0.0
    %2547 = vmatpush1.msra.mxu0 0.0
    %2548 = vmatprep.subr.mxu0 0.0
    %2549 = vmatpush1.msra.mxu0 0.0
    %2550 = vmatprep.subr.mxu0 0.0
    %2551 = vmatpush1.msra.mxu0 0.0
    %2552 = vmatprep.subr.mxu0 0.0
    %2553 = vmatpush1.msra.mxu0 0.0
    %2554 = vmatprep.subr.mxu0 0.0
    %2555 = vmatpush1.msra.mxu0 0.0
    %2556 = vmatprep.subr.mxu0 0.0
    %2557 = vmatpush1.msra.mxu0 0.0
    %2558 = vmatprep.subr.mxu0 0.0
    %2559 = vmatpush1.msra.mxu0 %v90
    %2560 = vmatprep.subr.mxu0 0.0
    %2561 = vmatpush1.msra.mxu0 %v89
    %2562 = vmatprep.subr.mxu0 0.0
    %2563 = vmatpush1.msra.mxu0 %v88
    %2564 = vmatprep.subr.mxu0 0.0
    %2565 = vmatpush1.msra.mxu0 %v87
    %2566 = vmatprep.subr.mxu0 0.0
    %2567 = vmatpush2.msra.mxu0 0.0
    %2568 = vmatprep.subr.mxu0 0.0
    %2569 = vmatpush2.msra.mxu0 0.0
    %2570 = vmatprep.subr.mxu0 0.0
    %2571 = vmatpush2.msra.mxu0 0.0
    %2572 = vmatprep.subr.mxu0 0.0
    %2573 = vmatpush2.msra.mxu0 0.0
    %2574 = vmatprep.subr.mxu0 0.0
    %2575 = vmatpush2.msra.mxu0 0.0
    %2576 = vmatprep.subr.mxu0 0.0
    %2577 = vmatpush2.msra.mxu0 0.0
    %2578 = vmatprep.subr.mxu0 0.0
    %2579 = vmatpush2.msra.mxu0 0.0
    %2580 = vmatprep.subr.mxu0 0.0
    %2581 = vmatpush2.msra.mxu0 0.0
    %2582 = vmatprep.subr.mxu0 0.0
    %2583 = vmatpush2.msra.mxu0 0.0
    %2584 = vmatprep.subr.mxu0 0.0
    %2585 = vmatpush2.msra.mxu0 0.0
    %2586 = vmatprep.subr.mxu0 0.0
    %2587 = vmatpush2.msra.mxu0 0.0
    %2588 = vmatprep.subr.mxu0 0.0
    %2589 = vmatpush2.msra.mxu0 0.0
    %2590 = vmatprep.subr.mxu0 0.0
    %2591 = vmatpush2.msra.mxu0 0.0
    %2592 = vmatprep.subr.mxu0 0.0
    %2593 = vmatpush2.msra.mxu0 0.0
    %2594 = vmatprep.subr.mxu0 0.0
    %2595 = vmatpush2.msra.mxu0 0.0
    %2596 = vmatprep.subr.mxu0 0.0
    %2597 = vmatpush2.msra.mxu0 0.0
    %2598 = vmatprep.mubr.f32.mxu0 0.0
    %2599 = vmatmul.mubr.f32.gmra.mxu0 %v289
    %v2600 = vpop.f32.mrf.mxu0
    %v2601 = vadd.f32 %v234, %v2600
    %v2602 = vpop.f32.mrf.mxu0
    %2603 = vdwg.mxu0
    %2604 = vmatprep.subr.mxu0 0.0
    %2605 = vmatpush1.msra.mxu0 0.0
    %2606 = vmatprep.subr.mxu0 0.0
    %2607 = vmatpush1.msra.mxu0 0.0
    %2608 = vmatprep.subr.mxu0 0.0
    %2609 = vmatpush1.msra.mxu0 0.0
    %2610 = vmatprep.subr.mxu0 0.0
    %2611 = vmatpush1.msra.mxu0 0.0
    %2612 = vmatprep.subr.mxu0 0.0
    %2613 = vmatpush1.msra.mxu0 0.0
    %2614 = vmatprep.subr.mxu0 0.0
    %2615 = vmatpush1.msra.mxu0 0.0
    %2616 = vmatprep.subr.mxu0 0.0
    %2617 = vmatpush1.msra.mxu0 0.0
    %2618 = vmatprep.subr.mxu0 0.0
    %2619 = vmatpush1.msra.mxu0 0.0
    %2620 = vmatprep.subr.mxu0 0.0
    %2621 = vmatpush1.msra.mxu0 0.0
    %2622 = vmatprep.subr.mxu0 0.0
    %2623 = vmatpush1.msra.mxu0 0.0
    %2624 = vmatprep.subr.mxu0 0.0
    %2625 = vmatpush1.msra.mxu0 0.0
    %2626 = vmatprep.subr.mxu0 0.0
    %2627 = vmatpush1.msra.mxu0 0.0
    %2628 = vmatprep.subr.mxu0 0.0
    %2629 = vmatpush1.msra.mxu0 %v90
    %2630 = vmatprep.subr.mxu0 0.0
    %2631 = vmatpush1.msra.mxu0 %v89
    %2632 = vmatprep.subr.mxu0 0.0
    %2633 = vmatpush1.msra.mxu0 %v88
    %2634 = vmatprep.subr.mxu0 0.0
    %2635 = vmatpush1.msra.mxu0 %v87
    %2636 = vmatprep.subr.mxu0 0.0
    %2637 = vmatpush2.msra.mxu0 0.0
    %2638 = vmatprep.subr.mxu0 0.0
    %2639 = vmatpush2.msra.mxu0 0.0
    %2640 = vmatprep.subr.mxu0 0.0
    %2641 = vmatpush2.msra.mxu0 0.0
    %2642 = vmatprep.subr.mxu0 0.0
    %2643 = vmatpush2.msra.mxu0 0.0
    %2644 = vmatprep.subr.mxu0 0.0
    %2645 = vmatpush2.msra.mxu0 0.0
    %2646 = vmatprep.subr.mxu0 0.0
    %2647 = vmatpush2.msra.mxu0 0.0
    %2648 = vmatprep.subr.mxu0 0.0
    %2649 = vmatpush2.msra.mxu0 0.0
    %2650 = vmatprep.subr.mxu0 0.0
    %2651 = vmatpush2.msra.mxu0 0.0
    %2652 = vmatprep.subr.mxu0 0.0
    %2653 = vmatpush2.msra.mxu0 0.0
    %2654 = vmatprep.subr.mxu0 0.0
    %2655 = vmatpush2.msra.mxu0 0.0
    %2656 = vmatprep.subr.mxu0 0.0
    %2657 = vmatpush2.msra.mxu0 0.0
    %2658 = vmatprep.subr.mxu0 0.0
    %2659 = vmatpush2.msra.mxu0 0.0
    %2660 = vmatprep.subr.mxu0 0.0
    %2661 = vmatpush2.msra.mxu0 0.0
    %2662 = vmatprep.subr.mxu0 0.0
    %2663 = vmatpush2.msra.mxu0 0.0
    %2664 = vmatprep.subr.mxu0 0.0
    %2665 = vmatpush2.msra.mxu0 0.0
    %2666 = vmatprep.subr.mxu0 0.0
    %2667 = vmatpush2.msra.mxu0 0.0
    %2668 = vmatprep.mubr.f32.mxu0 0.0
    %2669 = vmatmul.mubr.f32.gmra.mxu0 %v362
    %v2670 = vpop.f32.mrf.mxu0
    %v2671 = vadd.f32 %v234, %v2670
    %v2672 = vpop.f32.mrf.mxu0
    %2673 = vdwg.mxu0
    %2674 = vmatprep.subr.mxu0 0.0
    %2675 = vmatpush1.msra.mxu0 0.0
    %2676 = vmatprep.subr.mxu0 0.0
    %2677 = vmatpush1.msra.mxu0 0.0
    %2678 = vmatprep.subr.mxu0 0.0
    %2679 = vmatpush1.msra.mxu0 0.0
    %2680 = vmatprep.subr.mxu0 0.0
    %2681 = vmatpush1.msra.mxu0 0.0
    %2682 = vmatprep.subr.mxu0 0.0
    %2683 = vmatpush1.msra.mxu0 0.0
    %2684 = vmatprep.subr.mxu0 0.0
    %2685 = vmatpush1.msra.mxu0 0.0
    %2686 = vmatprep.subr.mxu0 0.0
    %2687 = vmatpush1.msra.mxu0 0.0
    %2688 = vmatprep.subr.mxu0 0.0
    %2689 = vmatpush1.msra.mxu0 0.0
    %2690 = vmatprep.subr.mxu0 0.0
    %2691 = vmatpush1.msra.mxu0 0.0
    %2692 = vmatprep.subr.mxu0 0.0
    %2693 = vmatpush1.msra.mxu0 0.0
    %2694 = vmatprep.subr.mxu0 0.0
    %2695 = vmatpush1.msra.mxu0 0.0
    %2696 = vmatprep.subr.mxu0 0.0
    %2697 = vmatpush1.msra.mxu0 0.0
    %2698 = vmatprep.subr.mxu0 0.0
    %2699 = vmatpush1.msra.mxu0 %v94
    %2700 = vmatprep.subr.mxu0 0.0
    %2701 = vmatpush1.msra.mxu0 %v93
    %2702 = vmatprep.subr.mxu0 0.0
    %2703 = vmatpush1.msra.mxu0 %v92
    %2704 = vmatprep.subr.mxu0 0.0
    %2705 = vmatpush1.msra.mxu0 %v91
    %2706 = vmatprep.subr.mxu0 0.0
    %2707 = vmatpush2.msra.mxu0 0.0
    %2708 = vmatprep.subr.mxu0 0.0
    %2709 = vmatpush2.msra.mxu0 0.0
    %2710 = vmatprep.subr.mxu0 0.0
    %2711 = vmatpush2.msra.mxu0 0.0
    %2712 = vmatprep.subr.mxu0 0.0
    %2713 = vmatpush2.msra.mxu0 0.0
    %2714 = vmatprep.subr.mxu0 0.0
    %2715 = vmatpush2.msra.mxu0 0.0
    %2716 = vmatprep.subr.mxu0 0.0
    %2717 = vmatpush2.msra.mxu0 0.0
    %2718 = vmatprep.subr.mxu0 0.0
    %2719 = vmatpush2.msra.mxu0 0.0
    %2720 = vmatprep.subr.mxu0 0.0
    %2721 = vmatpush2.msra.mxu0 0.0
    %2722 = vmatprep.subr.mxu0 0.0
    %2723 = vmatpush2.msra.mxu0 0.0
    %2724 = vmatprep.subr.mxu0 0.0
    %2725 = vmatpush2.msra.mxu0 0.0
    %2726 = vmatprep.subr.mxu0 0.0
    %2727 = vmatpush2.msra.mxu0 0.0
    %2728 = vmatprep.subr.mxu0 0.0
    %2729 = vmatpush2.msra.mxu0 0.0
    %2730 = vmatprep.subr.mxu0 0.0
    %2731 = vmatpush2.msra.mxu0 0.0
    %2732 = vmatprep.subr.mxu0 0.0
    %2733 = vmatpush2.msra.mxu0 0.0
    %2734 = vmatprep.subr.mxu0 0.0
    %2735 = vmatpush2.msra.mxu0 0.0
    %2736 = vmatprep.subr.mxu0 0.0
    %2737 = vmatpush2.msra.mxu0 0.0
    %2738 = vmatprep.mubr.f32.mxu0 0.0
    %2739 = vmatmul.mubr.f32.gmra.mxu0 %v289
    %v2740 = vpop.f32.mrf.mxu0
    %v2741 = vadd.f32 %v238, %v2740
    %v2742 = vpop.f32.mrf.mxu0
    %2743 = vdwg.mxu0
    %2744 = vmatprep.subr.mxu0 0.0
    %2745 = vmatpush1.msra.mxu0 0.0
    %2746 = vmatprep.subr.mxu0 0.0
    %2747 = vmatpush1.msra.mxu0 0.0
    %2748 = vmatprep.subr.mxu0 0.0
    %2749 = vmatpush1.msra.mxu0 0.0
    %2750 = vmatprep.subr.mxu0 0.0
    %2751 = vmatpush1.msra.mxu0 0.0
    %2752 = vmatprep.subr.mxu0 0.0
    %2753 = vmatpush1.msra.mxu0 0.0
    %2754 = vmatprep.subr.mxu0 0.0
    %2755 = vmatpush1.msra.mxu0 0.0
    %2756 = vmatprep.subr.mxu0 0.0
    %2757 = vmatpush1.msra.mxu0 0.0
    %2758 = vmatprep.subr.mxu0 0.0
    %2759 = vmatpush1.msra.mxu0 0.0
    %2760 = vmatprep.subr.mxu0 0.0
    %2761 = vmatpush1.msra.mxu0 0.0
    %2762 = vmatprep.subr.mxu0 0.0
    %2763 = vmatpush1.msra.mxu0 0.0
    %2764 = vmatprep.subr.mxu0 0.0
    %2765 = vmatpush1.msra.mxu0 0.0
    %2766 = vmatprep.subr.mxu0 0.0
    %2767 = vmatpush1.msra.mxu0 0.0
    %2768 = vmatprep.subr.mxu0 0.0
    %2769 = vmatpush1.msra.mxu0 %v94
    %2770 = vmatprep.subr.mxu0 0.0
    %2771 = vmatpush1.msra.mxu0 %v93
    %2772 = vmatprep.subr.mxu0 0.0
    %2773 = vmatpush1.msra.mxu0 %v92
    %2774 = vmatprep.subr.mxu0 0.0
    %2775 = vmatpush1.msra.mxu0 %v91
    %2776 = vmatprep.subr.mxu0 0.0
    %2777 = vmatpush2.msra.mxu0 0.0
    %2778 = vmatprep.subr.mxu0 0.0
    %2779 = vmatpush2.msra.mxu0 0.0
    %2780 = vmatprep.subr.mxu0 0.0
    %2781 = vmatpush2.msra.mxu0 0.0
    %2782 = vmatprep.subr.mxu0 0.0
    %2783 = vmatpush2.msra.mxu0 0.0
    %2784 = vmatprep.subr.mxu0 0.0
    %2785 = vmatpush2.msra.mxu0 0.0
    %2786 = vmatprep.subr.mxu0 0.0
    %2787 = vmatpush2.msra.mxu0 0.0
    %2788 = vmatprep.subr.mxu0 0.0
    %2789 = vmatpush2.msra.mxu0 0.0
    %2790 = vmatprep.subr.mxu0 0.0
    %2791 = vmatpush2.msra.mxu0 0.0
    %2792 = vmatprep.subr.mxu0 0.0
    %2793 = vmatpush2.msra.mxu0 0.0
    %2794 = vmatprep.subr.mxu0 0.0
    %2795 = vmatpush2.msra.mxu0 0.0
    %2796 = vmatprep.subr.mxu0 0.0
    %2797 = vmatpush2.msra.mxu0 0.0
    %2798 = vmatprep.subr.mxu0 0.0
    %2799 = vmatpush2.msra.mxu0 0.0
    %2800 = vmatprep.subr.mxu0 0.0
    %2801 = vmatpush2.msra.mxu0 0.0
    %2802 = vmatprep.subr.mxu0 0.0
    %2803 = vmatpush2.msra.mxu0 0.0
    %2804 = vmatprep.subr.mxu0 0.0
    %2805 = vmatpush2.msra.mxu0 0.0
    %2806 = vmatprep.subr.mxu0 0.0
    %2807 = vmatpush2.msra.mxu0 0.0
    %2808 = vmatprep.mubr.f32.mxu0 0.0
    %2809 = vmatmul.mubr.f32.gmra.mxu0 %v362
    %v2810 = vpop.f32.mrf.mxu0
    %v2811 = vadd.f32 %v238, %v2810
    %v2812 = vpop.f32.mrf.mxu0
    %2813 = vdwg.mxu0
    %2814 = vmatprep.subr.mxu0 0.0
    %2815 = vmatpush1.msra.mxu0 0.0
    %2816 = vmatprep.subr.mxu0 0.0
    %2817 = vmatpush1.msra.mxu0 0.0
    %2818 = vmatprep.subr.mxu0 0.0
    %2819 = vmatpush1.msra.mxu0 0.0
    %2820 = vmatprep.subr.mxu0 0.0
    %2821 = vmatpush1.msra.mxu0 0.0
    %2822 = vmatprep.subr.mxu0 0.0
    %2823 = vmatpush1.msra.mxu0 0.0
    %2824 = vmatprep.subr.mxu0 0.0
    %2825 = vmatpush1.msra.mxu0 0.0
    %2826 = vmatprep.subr.mxu0 0.0
    %2827 = vmatpush1.msra.mxu0 0.0
    %2828 = vmatprep.subr.mxu0 0.0
    %2829 = vmatpush1.msra.mxu0 0.0
    %2830 = vmatprep.subr.mxu0 0.0
    %2831 = vmatpush1.msra.mxu0 0.0
    %2832 = vmatprep.subr.mxu0 0.0
    %2833 = vmatpush1.msra.mxu0 0.0
    %2834 = vmatprep.subr.mxu0 0.0
    %2835 = vmatpush1.msra.mxu0 0.0
    %2836 = vmatprep.subr.mxu0 0.0
    %2837 = vmatpush1.msra.mxu0 0.0
    %2838 = vmatprep.subr.mxu0 0.0
    %2839 = vmatpush1.msra.mxu0 %v98
    %2840 = vmatprep.subr.mxu0 0.0
    %2841 = vmatpush1.msra.mxu0 %v97
    %2842 = vmatprep.subr.mxu0 0.0
    %2843 = vmatpush1.msra.mxu0 %v96
    %2844 = vmatprep.subr.mxu0 0.0
    %2845 = vmatpush1.msra.mxu0 %v95
    %2846 = vmatprep.subr.mxu0 0.0
    %2847 = vmatpush2.msra.mxu0 0.0
    %2848 = vmatprep.subr.mxu0 0.0
    %2849 = vmatpush2.msra.mxu0 0.0
    %2850 = vmatprep.subr.mxu0 0.0
    %2851 = vmatpush2.msra.mxu0 0.0
    %2852 = vmatprep.subr.mxu0 0.0
    %2853 = vmatpush2.msra.mxu0 0.0
    %2854 = vmatprep.subr.mxu0 0.0
    %2855 = vmatpush2.msra.mxu0 0.0
    %2856 = vmatprep.subr.mxu0 0.0
    %2857 = vmatpush2.msra.mxu0 0.0
    %2858 = vmatprep.subr.mxu0 0.0
    %2859 = vmatpush2.msra.mxu0 0.0
    %2860 = vmatprep.subr.mxu0 0.0
    %2861 = vmatpush2.msra.mxu0 0.0
    %2862 = vmatprep.subr.mxu0 0.0
    %2863 = vmatpush2.msra.mxu0 0.0
    %2864 = vmatprep.subr.mxu0 0.0
    %2865 = vmatpush2.msra.mxu0 0.0
    %2866 = vmatprep.subr.mxu0 0.0
    %2867 = vmatpush2.msra.mxu0 0.0
    %2868 = vmatprep.subr.mxu0 0.0
    %2869 = vmatpush2.msra.mxu0 0.0
    %2870 = vmatprep.subr.mxu0 0.0
    %2871 = vmatpush2.msra.mxu0 0.0
    %2872 = vmatprep.subr.mxu0 0.0
    %2873 = vmatpush2.msra.mxu0 0.0
    %2874 = vmatprep.subr.mxu0 0.0
    %2875 = vmatpush2.msra.mxu0 0.0
    %2876 = vmatprep.subr.mxu0 0.0
    %2877 = vmatpush2.msra.mxu0 0.0
    %2878 = vmatprep.mubr.f32.mxu0 0.0
    %2879 = vmatmul.mubr.f32.gmra.mxu0 %v289
    %v2880 = vpop.f32.mrf.mxu0
    %v2881 = vadd.f32 %v242, %v2880
    %v2882 = vpop.f32.mrf.mxu0
    %2883 = vdwg.mxu0
    %2884 = vmatprep.subr.mxu0 0.0
    %2885 = vmatpush1.msra.mxu0 0.0
    %2886 = vmatprep.subr.mxu0 0.0
    %2887 = vmatpush1.msra.mxu0 0.0
    %2888 = vmatprep.subr.mxu0 0.0
    %2889 = vmatpush1.msra.mxu0 0.0
    %2890 = vmatprep.subr.mxu0 0.0
    %2891 = vmatpush1.msra.mxu0 0.0
    %2892 = vmatprep.subr.mxu0 0.0
    %2893 = vmatpush1.msra.mxu0 0.0
    %2894 = vmatprep.subr.mxu0 0.0
    %2895 = vmatpush1.msra.mxu0 0.0
    %2896 = vmatprep.subr.mxu0 0.0
    %2897 = vmatpush1.msra.mxu0 0.0
    %2898 = vmatprep.subr.mxu0 0.0
    %2899 = vmatpush1.msra.mxu0 0.0
    %2900 = vmatprep.subr.mxu0 0.0
    %2901 = vmatpush1.msra.mxu0 0.0
    %2902 = vmatprep.subr.mxu0 0.0
    %2903 = vmatpush1.msra.mxu0 0.0
    %2904 = vmatprep.subr.mxu0 0.0
    %2905 = vmatpush1.msra.mxu0 0.0
    %2906 = vmatprep.subr.mxu0 0.0
    %2907 = vmatpush1.msra.mxu0 0.0
    %2908 = vmatprep.subr.mxu0 0.0
    %2909 = vmatpush1.msra.mxu0 %v98
    %2910 = vmatprep.subr.mxu0 0.0
    %2911 = vmatpush1.msra.mxu0 %v97
    %2912 = vmatprep.subr.mxu0 0.0
    %2913 = vmatpush1.msra.mxu0 %v96
    %2914 = vmatprep.subr.mxu0 0.0
    %2915 = vmatpush1.msra.mxu0 %v95
    %2916 = vmatprep.subr.mxu0 0.0
    %2917 = vmatpush2.msra.mxu0 0.0
    %2918 = vmatprep.subr.mxu0 0.0
    %2919 = vmatpush2.msra.mxu0 0.0
    %2920 = vmatprep.subr.mxu0 0.0
    %2921 = vmatpush2.msra.mxu0 0.0
    %2922 = vmatprep.subr.mxu0 0.0
    %2923 = vmatpush2.msra.mxu0 0.0
    %2924 = vmatprep.subr.mxu0 0.0
    %2925 = vmatpush2.msra.mxu0 0.0
    %2926 = vmatprep.subr.mxu0 0.0
    %2927 = vmatpush2.msra.mxu0 0.0
    %2928 = vmatprep.subr.mxu0 0.0
    %2929 = vmatpush2.msra.mxu0 0.0
    %2930 = vmatprep.subr.mxu0 0.0
    %2931 = vmatpush2.msra.mxu0 0.0
    %2932 = vmatprep.subr.mxu0 0.0
    %2933 = vmatpush2.msra.mxu0 0.0
    %2934 = vmatprep.subr.mxu0 0.0
    %2935 = vmatpush2.msra.mxu0 0.0
    %2936 = vmatprep.subr.mxu0 0.0
    %2937 = vmatpush2.msra.mxu0 0.0
    %2938 = vmatprep.subr.mxu0 0.0
    %2939 = vmatpush2.msra.mxu0 0.0
    %2940 = vmatprep.subr.mxu0 0.0
    %2941 = vmatpush2.msra.mxu0 0.0
    %2942 = vmatprep.subr.mxu0 0.0
    %2943 = vmatpush2.msra.mxu0 0.0
    %2944 = vmatprep.subr.mxu0 0.0
    %2945 = vmatpush2.msra.mxu0 0.0
    %2946 = vmatprep.subr.mxu0 0.0
    %2947 = vmatpush2.msra.mxu0 0.0
    %2948 = vmatprep.mubr.f32.mxu0 0.0
    %2949 = vmatmul.mubr.f32.gmra.mxu0 %v362
    %v2950 = vpop.f32.mrf.mxu0
    %v2951 = vadd.f32 %v242, %v2950
    %v2952 = vpop.f32.mrf.mxu0
    %2953 = vdwg.mxu0
    %2954 = vmatprep.subr.mxu0 0.0
    %2955 = vmatpush1.msra.mxu0 0.0
    %2956 = vmatprep.subr.mxu0 0.0
    %2957 = vmatpush1.msra.mxu0 0.0
    %2958 = vmatprep.subr.mxu0 0.0
    %2959 = vmatpush1.msra.mxu0 0.0
    %2960 = vmatprep.subr.mxu0 0.0
    %2961 = vmatpush1.msra.mxu0 0.0
    %2962 = vmatprep.subr.mxu0 0.0
    %2963 = vmatpush1.msra.mxu0 0.0
    %2964 = vmatprep.subr.mxu0 0.0
    %2965 = vmatpush1.msra.mxu0 0.0
    %2966 = vmatprep.subr.mxu0 0.0
    %2967 = vmatpush1.msra.mxu0 0.0
    %2968 = vmatprep.subr.mxu0 0.0
    %2969 = vmatpush1.msra.mxu0 0.0
    %2970 = vmatprep.subr.mxu0 0.0
    %2971 = vmatpush1.msra.mxu0 0.0
    %2972 = vmatprep.subr.mxu0 0.0
    %2973 = vmatpush1.msra.mxu0 0.0
    %2974 = vmatprep.subr.mxu0 0.0
    %2975 = vmatpush1.msra.mxu0 0.0
    %2976 = vmatprep.subr.mxu0 0.0
    %2977 = vmatpush1.msra.mxu0 0.0
    %2978 = vmatprep.subr.mxu0 0.0
    %2979 = vmatpush1.msra.mxu0 %v102
    %2980 = vmatprep.subr.mxu0 0.0
    %2981 = vmatpush1.msra.mxu0 %v101
    %2982 = vmatprep.subr.mxu0 0.0
    %2983 = vmatpush1.msra.mxu0 %v100
    %2984 = vmatprep.subr.mxu0 0.0
    %2985 = vmatpush1.msra.mxu0 %v99
    %2986 = vmatprep.subr.mxu0 0.0
    %2987 = vmatpush2.msra.mxu0 0.0
    %2988 = vmatprep.subr.mxu0 0.0
    %2989 = vmatpush2.msra.mxu0 0.0
    %2990 = vmatprep.subr.mxu0 0.0
    %2991 = vmatpush2.msra.mxu0 0.0
    %2992 = vmatprep.subr.mxu0 0.0
    %2993 = vmatpush2.msra.mxu0 0.0
    %2994 = vmatprep.subr.mxu0 0.0
    %2995 = vmatpush2.msra.mxu0 0.0
    %2996 = vmatprep.subr.mxu0 0.0
    %2997 = vmatpush2.msra.mxu0 0.0
    %2998 = vmatprep.subr.mxu0 0.0
    %2999 = vmatpush2.msra.mxu0 0.0
    %3000 = vmatprep.subr.mxu0 0.0
    %3001 = vmatpush2.msra.mxu0 0.0
    %3002 = vmatprep.subr.mxu0 0.0
    %3003 = vmatpush2.msra.mxu0 0.0
    %3004 = vmatprep.subr.mxu0 0.0
    %3005 = vmatpush2.msra.mxu0 0.0
    %3006 = vmatprep.subr.mxu0 0.0
    %3007 = vmatpush2.msra.mxu0 0.0
    %3008 = vmatprep.subr.mxu0 0.0
    %3009 = vmatpush2.msra.mxu0 0.0
    %3010 = vmatprep.subr.mxu0 0.0
    %3011 = vmatpush2.msra.mxu0 0.0
    %3012 = vmatprep.subr.mxu0 0.0
    %3013 = vmatpush2.msra.mxu0 0.0
    %3014 = vmatprep.subr.mxu0 0.0
    %3015 = vmatpush2.msra.mxu0 0.0
    %3016 = vmatprep.subr.mxu0 0.0
    %3017 = vmatpush2.msra.mxu0 0.0
    %3018 = vmatprep.mubr.f32.mxu0 0.0
    %3019 = vmatmul.mubr.f32.gmra.mxu0 %v289
    %v3020 = vpop.f32.mrf.mxu0
    %v3021 = vadd.f32 %v246, %v3020
    %v3022 = vpop.f32.mrf.mxu0
    %3023 = vdwg.mxu0
    %3024 = vmatprep.subr.mxu0 0.0
    %3025 = vmatpush1.msra.mxu0 0.0
    %3026 = vmatprep.subr.mxu0 0.0
    %3027 = vmatpush1.msra.mxu0 0.0
    %3028 = vmatprep.subr.mxu0 0.0
    %3029 = vmatpush1.msra.mxu0 0.0
    %3030 = vmatprep.subr.mxu0 0.0
    %3031 = vmatpush1.msra.mxu0 0.0
    %3032 = vmatprep.subr.mxu0 0.0
    %3033 = vmatpush1.msra.mxu0 0.0
    %3034 = vmatprep.subr.mxu0 0.0
    %3035 = vmatpush1.msra.mxu0 0.0
    %3036 = vmatprep.subr.mxu0 0.0
    %3037 = vmatpush1.msra.mxu0 0.0
    %3038 = vmatprep.subr.mxu0 0.0
    %3039 = vmatpush1.msra.mxu0 0.0
    %3040 = vmatprep.subr.mxu0 0.0
    %3041 = vmatpush1.msra.mxu0 0.0
    %3042 = vmatprep.subr.mxu0 0.0
    %3043 = vmatpush1.msra.mxu0 0.0
    %3044 = vmatprep.subr.mxu0 0.0
    %3045 = vmatpush1.msra.mxu0 0.0
    %3046 = vmatprep.subr.mxu0 0.0
    %3047 = vmatpush1.msra.mxu0 0.0
    %3048 = vmatprep.subr.mxu0 0.0
    %3049 = vmatpush1.msra.mxu0 %v102
    %3050 = vmatprep.subr.mxu0 0.0
    %3051 = vmatpush1.msra.mxu0 %v101
    %3052 = vmatprep.subr.mxu0 0.0
    %3053 = vmatpush1.msra.mxu0 %v100
    %3054 = vmatprep.subr.mxu0 0.0
    %3055 = vmatpush1.msra.mxu0 %v99
    %3056 = vmatprep.subr.mxu0 0.0
    %3057 = vmatpush2.msra.mxu0 0.0
    %3058 = vmatprep.subr.mxu0 0.0
    %3059 = vmatpush2.msra.mxu0 0.0
    %3060 = vmatprep.subr.mxu0 0.0
    %3061 = vmatpush2.msra.mxu0 0.0
    %3062 = vmatprep.subr.mxu0 0.0
    %3063 = vmatpush2.msra.mxu0 0.0
    %3064 = vmatprep.subr.mxu0 0.0
    %3065 = vmatpush2.msra.mxu0 0.0
    %3066 = vmatprep.subr.mxu0 0.0
    %3067 = vmatpush2.msra.mxu0 0.0
    %3068 = vmatprep.subr.mxu0 0.0
    %3069 = vmatpush2.msra.mxu0 0.0
    %3070 = vmatprep.subr.mxu0 0.0
    %3071 = vmatpush2.msra.mxu0 0.0
    %3072 = vmatprep.subr.mxu0 0.0
    %3073 = vmatpush2.msra.mxu0 0.0
    %3074 = vmatprep.subr.mxu0 0.0
    %3075 = vmatpush2.msra.mxu0 0.0
    %3076 = vmatprep.subr.mxu0 0.0
    %3077 = vmatpush2.msra.mxu0 0.0
    %3078 = vmatprep.subr.mxu0 0.0
    %3079 = vmatpush2.msra.mxu0 0.0
    %3080 = vmatprep.subr.mxu0 0.0
    %3081 = vmatpush2.msra.mxu0 0.0
    %3082 = vmatprep.subr.mxu0 0.0
    %3083 = vmatpush2.msra.mxu0 0.0
    %3084 = vmatprep.subr.mxu0 0.0
    %3085 = vmatpush2.msra.mxu0 0.0
    %3086 = vmatprep.subr.mxu0 0.0
    %3087 = vmatpush2.msra.mxu0 0.0
    %3088 = vmatprep.mubr.f32.mxu0 0.0
    %3089 = vmatmul.mubr.f32.gmra.mxu0 %v362
    %v3090 = vpop.f32.mrf.mxu0
    %v3091 = vadd.f32 %v246, %v3090
    %v3092 = vpop.f32.mrf.mxu0
    %3093 = vdwg.mxu0
    %3094 = vmatprep.subr.mxu0 0.0
    %3095 = vmatpush1.msra.mxu0 0.0
    %3096 = vmatprep.subr.mxu0 0.0
    %3097 = vmatpush1.msra.mxu0 0.0
    %3098 = vmatprep.subr.mxu0 0.0
    %3099 = vmatpush1.msra.mxu0 0.0
    %3100 = vmatprep.subr.mxu0 0.0
    %3101 = vmatpush1.msra.mxu0 0.0
    %3102 = vmatprep.subr.mxu0 0.0
    %3103 = vmatpush1.msra.mxu0 0.0
    %3104 = vmatprep.subr.mxu0 0.0
    %3105 = vmatpush1.msra.mxu0 0.0
    %3106 = vmatprep.subr.mxu0 0.0
    %3107 = vmatpush1.msra.mxu0 0.0
    %3108 = vmatprep.subr.mxu0 0.0
    %3109 = vmatpush1.msra.mxu0 0.0
    %3110 = vmatprep.subr.mxu0 0.0
    %3111 = vmatpush1.msra.mxu0 0.0
    %3112 = vmatprep.subr.mxu0 0.0
    %3113 = vmatpush1.msra.mxu0 0.0
    %3114 = vmatprep.subr.mxu0 0.0
    %3115 = vmatpush1.msra.mxu0 0.0
    %3116 = vmatprep.subr.mxu0 0.0
    %3117 = vmatpush1.msra.mxu0 0.0
    %3118 = vmatprep.subr.mxu0 0.0
    %3119 = vmatpush1.msra.mxu0 %v106
    %3120 = vmatprep.subr.mxu0 0.0
    %3121 = vmatpush1.msra.mxu0 %v105
    %3122 = vmatprep.subr.mxu0 0.0
    %3123 = vmatpush1.msra.mxu0 %v104
    %3124 = vmatprep.subr.mxu0 0.0
    %3125 = vmatpush1.msra.mxu0 %v103
    %3126 = vmatprep.subr.mxu0 0.0
    %3127 = vmatpush2.msra.mxu0 0.0
    %3128 = vmatprep.subr.mxu0 0.0
    %3129 = vmatpush2.msra.mxu0 0.0
    %3130 = vmatprep.subr.mxu0 0.0
    %3131 = vmatpush2.msra.mxu0 0.0
    %3132 = vmatprep.subr.mxu0 0.0
    %3133 = vmatpush2.msra.mxu0 0.0
    %3134 = vmatprep.subr.mxu0 0.0
    %3135 = vmatpush2.msra.mxu0 0.0
    %3136 = vmatprep.subr.mxu0 0.0
    %3137 = vmatpush2.msra.mxu0 0.0
    %3138 = vmatprep.subr.mxu0 0.0
    %3139 = vmatpush2.msra.mxu0 0.0
    %3140 = vmatprep.subr.mxu0 0.0
    %3141 = vmatpush2.msra.mxu0 0.0
    %3142 = vmatprep.subr.mxu0 0.0
    %3143 = vmatpush2.msra.mxu0 0.0
    %3144 = vmatprep.subr.mxu0 0.0
    %3145 = vmatpush2.msra.mxu0 0.0
    %3146 = vmatprep.subr.mxu0 0.0
    %3147 = vmatpush2.msra.mxu0 0.0
    %3148 = vmatprep.subr.mxu0 0.0
    %3149 = vmatpush2.msra.mxu0 0.0
    %3150 = vmatprep.subr.mxu0 0.0
    %3151 = vmatpush2.msra.mxu0 0.0
    %3152 = vmatprep.subr.mxu0 0.0
    %3153 = vmatpush2.msra.mxu0 0.0
    %3154 = vmatprep.subr.mxu0 0.0
    %3155 = vmatpush2.msra.mxu0 0.0
    %3156 = vmatprep.subr.mxu0 0.0
    %3157 = vmatpush2.msra.mxu0 0.0
    %3158 = vmatprep.mubr.f32.mxu0 0.0
    %3159 = vmatmul.mubr.f32.gmra.mxu0 %v289
    %v3160 = vpop.f32.mrf.mxu0
    %v3161 = vadd.f32 %v250, %v3160
    %v3162 = vpop.f32.mrf.mxu0
    %3163 = vdwg.mxu0
    %3164 = vmatprep.subr.mxu0 0.0
    %3165 = vmatpush1.msra.mxu0 0.0
    %3166 = vmatprep.subr.mxu0 0.0
    %3167 = vmatpush1.msra.mxu0 0.0
    %3168 = vmatprep.subr.mxu0 0.0
    %3169 = vmatpush1.msra.mxu0 0.0
    %3170 = vmatprep.subr.mxu0 0.0
    %3171 = vmatpush1.msra.mxu0 0.0
    %3172 = vmatprep.subr.mxu0 0.0
    %3173 = vmatpush1.msra.mxu0 0.0
    %3174 = vmatprep.subr.mxu0 0.0
    %3175 = vmatpush1.msra.mxu0 0.0
    %3176 = vmatprep.subr.mxu0 0.0
    %3177 = vmatpush1.msra.mxu0 0.0
    %3178 = vmatprep.subr.mxu0 0.0
    %3179 = vmatpush1.msra.mxu0 0.0
    %3180 = vmatprep.subr.mxu0 0.0
    %3181 = vmatpush1.msra.mxu0 0.0
    %3182 = vmatprep.subr.mxu0 0.0
    %3183 = vmatpush1.msra.mxu0 0.0
    %3184 = vmatprep.subr.mxu0 0.0
    %3185 = vmatpush1.msra.mxu0 0.0
    %3186 = vmatprep.subr.mxu0 0.0
    %3187 = vmatpush1.msra.mxu0 0.0
    %3188 = vmatprep.subr.mxu0 0.0
    %3189 = vmatpush1.msra.mxu0 %v106
    %3190 = vmatprep.subr.mxu0 0.0
    %3191 = vmatpush1.msra.mxu0 %v105
    %3192 = vmatprep.subr.mxu0 0.0
    %3193 = vmatpush1.msra.mxu0 %v104
    %3194 = vmatprep.subr.mxu0 0.0
    %3195 = vmatpush1.msra.mxu0 %v103
    %3196 = vmatprep.subr.mxu0 0.0
    %3197 = vmatpush2.msra.mxu0 0.0
    %3198 = vmatprep.subr.mxu0 0.0
    %3199 = vmatpush2.msra.mxu0 0.0
    %3200 = vmatprep.subr.mxu0 0.0
    %3201 = vmatpush2.msra.mxu0 0.0
    %3202 = vmatprep.subr.mxu0 0.0
    %3203 = vmatpush2.msra.mxu0 0.0
    %3204 = vmatprep.subr.mxu0 0.0
    %3205 = vmatpush2.msra.mxu0 0.0
    %3206 = vmatprep.subr.mxu0 0.0
    %3207 = vmatpush2.msra.mxu0 0.0
    %3208 = vmatprep.subr.mxu0 0.0
    %3209 = vmatpush2.msra.mxu0 0.0
    %3210 = vmatprep.subr.mxu0 0.0
    %3211 = vmatpush2.msra.mxu0 0.0
    %3212 = vmatprep.subr.mxu0 0.0
    %3213 = vmatpush2.msra.mxu0 0.0
    %3214 = vmatprep.subr.mxu0 0.0
    %3215 = vmatpush2.msra.mxu0 0.0
    %3216 = vmatprep.subr.mxu0 0.0
    %3217 = vmatpush2.msra.mxu0 0.0
    %3218 = vmatprep.subr.mxu0 0.0
    %3219 = vmatpush2.msra.mxu0 0.0
    %3220 = vmatprep.subr.mxu0 0.0
    %3221 = vmatpush2.msra.mxu0 0.0
    %3222 = vmatprep.subr.mxu0 0.0
    %3223 = vmatpush2.msra.mxu0 0.0
    %3224 = vmatprep.subr.mxu0 0.0
    %3225 = vmatpush2.msra.mxu0 0.0
    %3226 = vmatprep.subr.mxu0 0.0
    %3227 = vmatpush2.msra.mxu0 0.0
    %3228 = vmatprep.mubr.f32.mxu0 0.0
    %3229 = vmatmul.mubr.f32.gmra.mxu0 %v362
    %v3230 = vpop.f32.mrf.mxu0
    %v3231 = vadd.f32 %v250, %v3230
    %v3232 = vpop.f32.mrf.mxu0
    %3233 = vdwg.mxu0
    %3234 = vmatprep.subr.mxu0 0.0
    %3235 = vmatpush1.msra.mxu0 0.0
    %3236 = vmatprep.subr.mxu0 0.0
    %3237 = vmatpush1.msra.mxu0 0.0
    %3238 = vmatprep.subr.mxu0 0.0
    %3239 = vmatpush1.msra.mxu0 0.0
    %3240 = vmatprep.subr.mxu0 0.0
    %3241 = vmatpush1.msra.mxu0 0.0
    %3242 = vmatprep.subr.mxu0 0.0
    %3243 = vmatpush1.msra.mxu0 0.0
    %3244 = vmatprep.subr.mxu0 0.0
    %3245 = vmatpush1.msra.mxu0 0.0
    %3246 = vmatprep.subr.mxu0 0.0
    %3247 = vmatpush1.msra.mxu0 0.0
    %3248 = vmatprep.subr.mxu0 0.0
    %3249 = vmatpush1.msra.mxu0 0.0
    %3250 = vmatprep.subr.mxu0 0.0
    %3251 = vmatpush1.msra.mxu0 0.0
    %3252 = vmatprep.subr.mxu0 0.0
    %3253 = vmatpush1.msra.mxu0 0.0
    %3254 = vmatprep.subr.mxu0 0.0
    %3255 = vmatpush1.msra.mxu0 0.0
    %3256 = vmatprep.subr.mxu0 0.0
    %3257 = vmatpush1.msra.mxu0 0.0
    %3258 = vmatprep.subr.mxu0 0.0
    %3259 = vmatpush1.msra.mxu0 %v110
    %3260 = vmatprep.subr.mxu0 0.0
    %3261 = vmatpush1.msra.mxu0 %v109
    %3262 = vmatprep.subr.mxu0 0.0
    %3263 = vmatpush1.msra.mxu0 %v108
    %3264 = vmatprep.subr.mxu0 0.0
    %3265 = vmatpush1.msra.mxu0 %v107
    %3266 = vmatprep.subr.mxu0 0.0
    %3267 = vmatpush2.msra.mxu0 0.0
    %3268 = vmatprep.subr.mxu0 0.0
    %3269 = vmatpush2.msra.mxu0 0.0
    %3270 = vmatprep.subr.mxu0 0.0
    %3271 = vmatpush2.msra.mxu0 0.0
    %3272 = vmatprep.subr.mxu0 0.0
    %3273 = vmatpush2.msra.mxu0 0.0
    %3274 = vmatprep.subr.mxu0 0.0
    %3275 = vmatpush2.msra.mxu0 0.0
    %3276 = vmatprep.subr.mxu0 0.0
    %3277 = vmatpush2.msra.mxu0 0.0
    %3278 = vmatprep.subr.mxu0 0.0
    %3279 = vmatpush2.msra.mxu0 0.0
    %3280 = vmatprep.subr.mxu0 0.0
    %3281 = vmatpush2.msra.mxu0 0.0
    %3282 = vmatprep.subr.mxu0 0.0
    %3283 = vmatpush2.msra.mxu0 0.0
    %3284 = vmatprep.subr.mxu0 0.0
    %3285 = vmatpush2.msra.mxu0 0.0
    %3286 = vmatprep.subr.mxu0 0.0
    %3287 = vmatpush2.msra.mxu0 0.0
    %3288 = vmatprep.subr.mxu0 0.0
    %3289 = vmatpush2.msra.mxu0 0.0
    %3290 = vmatprep.subr.mxu0 0.0
    %3291 = vmatpush2.msra.mxu0 0.0
    %3292 = vmatprep.subr.mxu0 0.0
    %3293 = vmatpush2.msra.mxu0 0.0
    %3294 = vmatprep.subr.mxu0 0.0
    %3295 = vmatpush2.msra.mxu0 0.0
    %3296 = vmatprep.subr.mxu0 0.0
    %3297 = vmatpush2.msra.mxu0 0.0
    %3298 = vmatprep.mubr.f32.mxu0 0.0
    %3299 = vmatmul.mubr.f32.gmra.mxu0 %v289
    %v3300 = vpop.f32.mrf.mxu0
    %v3301 = vadd.f32 %v254, %v3300
    %v3302 = vpop.f32.mrf.mxu0
    %3303 = vdwg.mxu0
    %3304 = vmatprep.subr.mxu0 0.0
    %3305 = vmatpush1.msra.mxu0 0.0
    %3306 = vmatprep.subr.mxu0 0.0
    %3307 = vmatpush1.msra.mxu0 0.0
    %3308 = vmatprep.subr.mxu0 0.0
    %3309 = vmatpush1.msra.mxu0 0.0
    %3310 = vmatprep.subr.mxu0 0.0
    %3311 = vmatpush1.msra.mxu0 0.0
    %3312 = vmatprep.subr.mxu0 0.0
    %3313 = vmatpush1.msra.mxu0 0.0
    %3314 = vmatprep.subr.mxu0 0.0
    %3315 = vmatpush1.msra.mxu0 0.0
    %3316 = vmatprep.subr.mxu0 0.0
    %3317 = vmatpush1.msra.mxu0 0.0
    %3318 = vmatprep.subr.mxu0 0.0
    %3319 = vmatpush1.msra.mxu0 0.0
    %3320 = vmatprep.subr.mxu0 0.0
    %3321 = vmatpush1.msra.mxu0 0.0
    %3322 = vmatprep.subr.mxu0 0.0
    %3323 = vmatpush1.msra.mxu0 0.0
    %3324 = vmatprep.subr.mxu0 0.0
    %3325 = vmatpush1.msra.mxu0 0.0
    %3326 = vmatprep.subr.mxu0 0.0
    %3327 = vmatpush1.msra.mxu0 0.0
    %3328 = vmatprep.subr.mxu0 0.0
    %3329 = vmatpush1.msra.mxu0 %v110
    %3330 = vmatprep.subr.mxu0 0.0
    %3331 = vmatpush1.msra.mxu0 %v109
    %3332 = vmatprep.subr.mxu0 0.0
    %3333 = vmatpush1.msra.mxu0 %v108
    %3334 = vmatprep.subr.mxu0 0.0
    %3335 = vmatpush1.msra.mxu0 %v107
    %3336 = vmatprep.subr.mxu0 0.0
    %3337 = vmatpush2.msra.mxu0 0.0
    %3338 = vmatprep.subr.mxu0 0.0
    %3339 = vmatpush2.msra.mxu0 0.0
    %3340 = vmatprep.subr.mxu0 0.0
    %3341 = vmatpush2.msra.mxu0 0.0
    %3342 = vmatprep.subr.mxu0 0.0
    %3343 = vmatpush2.msra.mxu0 0.0
    %3344 = vmatprep.subr.mxu0 0.0
    %3345 = vmatpush2.msra.mxu0 0.0
    %3346 = vmatprep.subr.mxu0 0.0
    %3347 = vmatpush2.msra.mxu0 0.0
    %3348 = vmatprep.subr.mxu0 0.0
    %3349 = vmatpush2.msra.mxu0 0.0
    %3350 = vmatprep.subr.mxu0 0.0
    %3351 = vmatpush2.msra.mxu0 0.0
    %3352 = vmatprep.subr.mxu0 0.0
    %3353 = vmatpush2.msra.mxu0 0.0
    %3354 = vmatprep.subr.mxu0 0.0
    %3355 = vmatpush2.msra.mxu0 0.0
    %3356 = vmatprep.subr.mxu0 0.0
    %3357 = vmatpush2.msra.mxu0 0.0
    %3358 = vmatprep.subr.mxu0 0.0
    %3359 = vmatpush2.msra.mxu0 0.0
    %3360 = vmatprep.subr.mxu0 0.0
    %3361 = vmatpush2.msra.mxu0 0.0
    %3362 = vmatprep.subr.mxu0 0.0
    %3363 = vmatpush2.msra.mxu0 0.0
    %3364 = vmatprep.subr.mxu0 0.0
    %3365 = vmatpush2.msra.mxu0 0.0
    %3366 = vmatprep.subr.mxu0 0.0
    %3367 = vmatpush2.msra.mxu0 0.0
    %3368 = vmatprep.mubr.f32.mxu0 0.0
    %3369 = vmatmul.mubr.f32.gmra.mxu0 %v362
    %v3370 = vpop.f32.mrf.mxu0
    %v3371 = vadd.f32 %v254, %v3370
    %v3372 = vpop.f32.mrf.mxu0
    %3373 = vdwg.mxu0
    %3374 = vmatprep.subr.mxu0 0.0
    %3375 = vmatpush1.msra.mxu0 0.0
    %3376 = vmatprep.subr.mxu0 0.0
    %3377 = vmatpush1.msra.mxu0 0.0
    %3378 = vmatprep.subr.mxu0 0.0
    %3379 = vmatpush1.msra.mxu0 0.0
    %3380 = vmatprep.subr.mxu0 0.0
    %3381 = vmatpush1.msra.mxu0 0.0
    %3382 = vmatprep.subr.mxu0 0.0
    %3383 = vmatpush1.msra.mxu0 0.0
    %3384 = vmatprep.subr.mxu0 0.0
    %3385 = vmatpush1.msra.mxu0 0.0
    %3386 = vmatprep.subr.mxu0 0.0
    %3387 = vmatpush1.msra.mxu0 0.0
    %3388 = vmatprep.subr.mxu0 0.0
    %3389 = vmatpush1.msra.mxu0 0.0
    %3390 = vmatprep.subr.mxu0 0.0
    %3391 = vmatpush1.msra.mxu0 0.0
    %3392 = vmatprep.subr.mxu0 0.0
    %3393 = vmatpush1.msra.mxu0 0.0
    %3394 = vmatprep.subr.mxu0 0.0
    %3395 = vmatpush1.msra.mxu0 0.0
    %3396 = vmatprep.subr.mxu0 0.0
    %3397 = vmatpush1.msra.mxu0 0.0
    %3398 = vmatprep.subr.mxu0 0.0
    %3399 = vmatpush1.msra.mxu0 %v114
    %3400 = vmatprep.subr.mxu0 0.0
    %3401 = vmatpush1.msra.mxu0 %v113
    %3402 = vmatprep.subr.mxu0 0.0
    %3403 = vmatpush1.msra.mxu0 %v112
    %3404 = vmatprep.subr.mxu0 0.0
    %3405 = vmatpush1.msra.mxu0 %v111
    %3406 = vmatprep.subr.mxu0 0.0
    %3407 = vmatpush2.msra.mxu0 0.0
    %3408 = vmatprep.subr.mxu0 0.0
    %3409 = vmatpush2.msra.mxu0 0.0
    %3410 = vmatprep.subr.mxu0 0.0
    %3411 = vmatpush2.msra.mxu0 0.0
    %3412 = vmatprep.subr.mxu0 0.0
    %3413 = vmatpush2.msra.mxu0 0.0
    %3414 = vmatprep.subr.mxu0 0.0
    %3415 = vmatpush2.msra.mxu0 0.0
    %3416 = vmatprep.subr.mxu0 0.0
    %3417 = vmatpush2.msra.mxu0 0.0
    %3418 = vmatprep.subr.mxu0 0.0
    %3419 = vmatpush2.msra.mxu0 0.0
    %3420 = vmatprep.subr.mxu0 0.0
    %3421 = vmatpush2.msra.mxu0 0.0
    %3422 = vmatprep.subr.mxu0 0.0
    %3423 = vmatpush2.msra.mxu0 0.0
    %3424 = vmatprep.subr.mxu0 0.0
    %3425 = vmatpush2.msra.mxu0 0.0
    %3426 = vmatprep.subr.mxu0 0.0
    %3427 = vmatpush2.msra.mxu0 0.0
    %3428 = vmatprep.subr.mxu0 0.0
    %3429 = vmatpush2.msra.mxu0 0.0
    %3430 = vmatprep.subr.mxu0 0.0
    %3431 = vmatpush2.msra.mxu0 0.0
    %3432 = vmatprep.subr.mxu0 0.0
    %3433 = vmatpush2.msra.mxu0 0.0
    %3434 = vmatprep.subr.mxu0 0.0
    %3435 = vmatpush2.msra.mxu0 0.0
    %3436 = vmatprep.subr.mxu0 0.0
    %3437 = vmatpush2.msra.mxu0 0.0
    %3438 = vmatprep.mubr.f32.mxu0 0.0
    %3439 = vmatmul.mubr.f32.gmra.mxu0 %v289
    %v3440 = vpop.f32.mrf.mxu0
    %v3441 = vadd.f32 %v258, %v3440
    %v3442 = vpop.f32.mrf.mxu0
    %3443 = vdwg.mxu0
    %3444 = vmatprep.subr.mxu0 0.0
    %3445 = vmatpush1.msra.mxu0 0.0
    %3446 = vmatprep.subr.mxu0 0.0
    %3447 = vmatpush1.msra.mxu0 0.0
    %3448 = vmatprep.subr.mxu0 0.0
    %3449 = vmatpush1.msra.mxu0 0.0
    %3450 = vmatprep.subr.mxu0 0.0
    %3451 = vmatpush1.msra.mxu0 0.0
    %3452 = vmatprep.subr.mxu0 0.0
    %3453 = vmatpush1.msra.mxu0 0.0
    %3454 = vmatprep.subr.mxu0 0.0
    %3455 = vmatpush1.msra.mxu0 0.0
    %3456 = vmatprep.subr.mxu0 0.0
    %3457 = vmatpush1.msra.mxu0 0.0
    %3458 = vmatprep.subr.mxu0 0.0
    %3459 = vmatpush1.msra.mxu0 0.0
    %3460 = vmatprep.subr.mxu0 0.0
    %3461 = vmatpush1.msra.mxu0 0.0
    %3462 = vmatprep.subr.mxu0 0.0
    %3463 = vmatpush1.msra.mxu0 0.0
    %3464 = vmatprep.subr.mxu0 0.0
    %3465 = vmatpush1.msra.mxu0 0.0
    %3466 = vmatprep.subr.mxu0 0.0
    %3467 = vmatpush1.msra.mxu0 0.0
    %3468 = vmatprep.subr.mxu0 0.0
    %3469 = vmatpush1.msra.mxu0 %v114
    %3470 = vmatprep.subr.mxu0 0.0
    %3471 = vmatpush1.msra.mxu0 %v113
    %3472 = vmatprep.subr.mxu0 0.0
    %3473 = vmatpush1.msra.mxu0 %v112
    %3474 = vmatprep.subr.mxu0 0.0
    %3475 = vmatpush1.msra.mxu0 %v111
    %3476 = vmatprep.subr.mxu0 0.0
    %3477 = vmatpush2.msra.mxu0 0.0
    %3478 = vmatprep.subr.mxu0 0.0
    %3479 = vmatpush2.msra.mxu0 0.0
    %3480 = vmatprep.subr.mxu0 0.0
    %3481 = vmatpush2.msra.mxu0 0.0
    %3482 = vmatprep.subr.mxu0 0.0
    %3483 = vmatpush2.msra.mxu0 0.0
    %3484 = vmatprep.subr.mxu0 0.0
    %3485 = vmatpush2.msra.mxu0 0.0
    %3486 = vmatprep.subr.mxu0 0.0
    %3487 = vmatpush2.msra.mxu0 0.0
    %3488 = vmatprep.subr.mxu0 0.0
    %3489 = vmatpush2.msra.mxu0 0.0
    %3490 = vmatprep.subr.mxu0 0.0
    %3491 = vmatpush2.msra.mxu0 0.0
    %3492 = vmatprep.subr.mxu0 0.0
    %3493 = vmatpush2.msra.mxu0 0.0
    %3494 = vmatprep.subr.mxu0 0.0
    %3495 = vmatpush2.msra.mxu0 0.0
    %3496 = vmatprep.subr.mxu0 0.0
    %3497 = vmatpush2.msra.mxu0 0.0
    %3498 = vmatprep.subr.mxu0 0.0
    %3499 = vmatpush2.msra.mxu0 0.0
    %3500 = vmatprep.subr.mxu0 0.0
    %3501 = vmatpush2.msra.mxu0 0.0
    %3502 = vmatprep.subr.mxu0 0.0
    %3503 = vmatpush2.msra.mxu0 0.0
    %3504 = vmatprep.subr.mxu0 0.0
    %3505 = vmatpush2.msra.mxu0 0.0
    %3506 = vmatprep.subr.mxu0 0.0
    %3507 = vmatpush2.msra.mxu0 0.0
    %3508 = vmatprep.mubr.f32.mxu0 0.0
    %3509 = vmatmul.mubr.f32.gmra.mxu0 %v362
    %v3510 = vpop.f32.mrf.mxu0
    %v3511 = vadd.f32 %v258, %v3510
    %v3512 = vpop.f32.mrf.mxu0
    %3513 = vdwg.mxu0
    %3514 = vmatprep.subr.mxu0 0.0
    %3515 = vmatpush1.msra.mxu0 0.0
    %3516 = vmatprep.subr.mxu0 0.0
    %3517 = vmatpush1.msra.mxu0 0.0
    %3518 = vmatprep.subr.mxu0 0.0
    %3519 = vmatpush1.msra.mxu0 0.0
    %3520 = vmatprep.subr.mxu0 0.0
    %3521 = vmatpush1.msra.mxu0 0.0
    %3522 = vmatprep.subr.mxu0 0.0
    %3523 = vmatpush1.msra.mxu0 0.0
    %3524 = vmatprep.subr.mxu0 0.0
    %3525 = vmatpush1.msra.mxu0 0.0
    %3526 = vmatprep.subr.mxu0 0.0
    %3527 = vmatpush1.msra.mxu0 0.0
    %3528 = vmatprep.subr.mxu0 0.0
    %3529 = vmatpush1.msra.mxu0 0.0
    %3530 = vmatprep.subr.mxu0 0.0
    %3531 = vmatpush1.msra.mxu0 0.0
    %3532 = vmatprep.subr.mxu0 0.0
    %3533 = vmatpush1.msra.mxu0 0.0
    %3534 = vmatprep.subr.mxu0 0.0
    %3535 = vmatpush1.msra.mxu0 0.0
    %3536 = vmatprep.subr.mxu0 0.0
    %3537 = vmatpush1.msra.mxu0 0.0
    %3538 = vmatprep.subr.mxu0 0.0
    %3539 = vmatpush1.msra.mxu0 %v118
    %3540 = vmatprep.subr.mxu0 0.0
    %3541 = vmatpush1.msra.mxu0 %v117
    %3542 = vmatprep.subr.mxu0 0.0
    %3543 = vmatpush1.msra.mxu0 %v116
    %3544 = vmatprep.subr.mxu0 0.0
    %3545 = vmatpush1.msra.mxu0 %v115
    %3546 = vmatprep.subr.mxu0 0.0
    %3547 = vmatpush2.msra.mxu0 0.0
    %3548 = vmatprep.subr.mxu0 0.0
    %3549 = vmatpush2.msra.mxu0 0.0
    %3550 = vmatprep.subr.mxu0 0.0
    %3551 = vmatpush2.msra.mxu0 0.0
    %3552 = vmatprep.subr.mxu0 0.0
    %3553 = vmatpush2.msra.mxu0 0.0
    %3554 = vmatprep.subr.mxu0 0.0
    %3555 = vmatpush2.msra.mxu0 0.0
    %3556 = vmatprep.subr.mxu0 0.0
    %3557 = vmatpush2.msra.mxu0 0.0
    %3558 = vmatprep.subr.mxu0 0.0
    %3559 = vmatpush2.msra.mxu0 0.0
    %3560 = vmatprep.subr.mxu0 0.0
    %3561 = vmatpush2.msra.mxu0 0.0
    %3562 = vmatprep.subr.mxu0 0.0
    %3563 = vmatpush2.msra.mxu0 0.0
    %3564 = vmatprep.subr.mxu0 0.0
    %3565 = vmatpush2.msra.mxu0 0.0
    %3566 = vmatprep.subr.mxu0 0.0
    %3567 = vmatpush2.msra.mxu0 0.0
    %3568 = vmatprep.subr.mxu0 0.0
    %3569 = vmatpush2.msra.mxu0 0.0
    %3570 = vmatprep.subr.mxu0 0.0
    %3571 = vmatpush2.msra.mxu0 0.0
    %3572 = vmatprep.subr.mxu0 0.0
    %3573 = vmatpush2.msra.mxu0 0.0
    %3574 = vmatprep.subr.mxu0 0.0
    %3575 = vmatpush2.msra.mxu0 0.0
    %3576 = vmatprep.subr.mxu0 0.0
    %3577 = vmatpush2.msra.mxu0 0.0
    %3578 = vmatprep.mubr.f32.mxu0 0.0
    %3579 = vmatmul.mubr.f32.gmra.mxu0 %v289
    %v3580 = vpop.f32.mrf.mxu0
    %v3581 = vadd.f32 %v262, %v3580
    %v3582 = vpop.f32.mrf.mxu0
    %3583 = vdwg.mxu0
    %3584 = vmatprep.subr.mxu0 0.0
    %3585 = vmatpush1.msra.mxu0 0.0
    %3586 = vmatprep.subr.mxu0 0.0
    %3587 = vmatpush1.msra.mxu0 0.0
    %3588 = vmatprep.subr.mxu0 0.0
    %3589 = vmatpush1.msra.mxu0 0.0
    %3590 = vmatprep.subr.mxu0 0.0
    %3591 = vmatpush1.msra.mxu0 0.0
    %3592 = vmatprep.subr.mxu0 0.0
    %3593 = vmatpush1.msra.mxu0 0.0
    %3594 = vmatprep.subr.mxu0 0.0
    %3595 = vmatpush1.msra.mxu0 0.0
    %3596 = vmatprep.subr.mxu0 0.0
    %3597 = vmatpush1.msra.mxu0 0.0
    %3598 = vmatprep.subr.mxu0 0.0
    %3599 = vmatpush1.msra.mxu0 0.0
    %3600 = vmatprep.subr.mxu0 0.0
    %3601 = vmatpush1.msra.mxu0 0.0
    %3602 = vmatprep.subr.mxu0 0.0
    %3603 = vmatpush1.msra.mxu0 0.0
    %3604 = vmatprep.subr.mxu0 0.0
    %3605 = vmatpush1.msra.mxu0 0.0
    %3606 = vmatprep.subr.mxu0 0.0
    %3607 = vmatpush1.msra.mxu0 0.0
    %3608 = vmatprep.subr.mxu0 0.0
    %3609 = vmatpush1.msra.mxu0 %v118
    %3610 = vmatprep.subr.mxu0 0.0
    %3611 = vmatpush1.msra.mxu0 %v117
    %3612 = vmatprep.subr.mxu0 0.0
    %3613 = vmatpush1.msra.mxu0 %v116
    %3614 = vmatprep.subr.mxu0 0.0
    %3615 = vmatpush1.msra.mxu0 %v115
    %3616 = vmatprep.subr.mxu0 0.0
    %3617 = vmatpush2.msra.mxu0 0.0
    %3618 = vmatprep.subr.mxu0 0.0
    %3619 = vmatpush2.msra.mxu0 0.0
    %3620 = vmatprep.subr.mxu0 0.0
    %3621 = vmatpush2.msra.mxu0 0.0
    %3622 = vmatprep.subr.mxu0 0.0
    %3623 = vmatpush2.msra.mxu0 0.0
    %3624 = vmatprep.subr.mxu0 0.0
    %3625 = vmatpush2.msra.mxu0 0.0
    %3626 = vmatprep.subr.mxu0 0.0
    %3627 = vmatpush2.msra.mxu0 0.0
    %3628 = vmatprep.subr.mxu0 0.0
    %3629 = vmatpush2.msra.mxu0 0.0
    %3630 = vmatprep.subr.mxu0 0.0
    %3631 = vmatpush2.msra.mxu0 0.0
    %3632 = vmatprep.subr.mxu0 0.0
    %3633 = vmatpush2.msra.mxu0 0.0
    %3634 = vmatprep.subr.mxu0 0.0
    %3635 = vmatpush2.msra.mxu0 0.0
    %3636 = vmatprep.subr.mxu0 0.0
    %3637 = vmatpush2.msra.mxu0 0.0
    %3638 = vmatprep.subr.mxu0 0.0
    %3639 = vmatpush2.msra.mxu0 0.0
    %3640 = vmatprep.subr.mxu0 0.0
    %3641 = vmatpush2.msra.mxu0 0.0
    %3642 = vmatprep.subr.mxu0 0.0
    %3643 = vmatpush2.msra.mxu0 0.0
    %3644 = vmatprep.subr.mxu0 0.0
    %3645 = vmatpush2.msra.mxu0 0.0
    %3646 = vmatprep.subr.mxu0 0.0
    %3647 = vmatpush2.msra.mxu0 0.0
    %3648 = vmatprep.mubr.f32.mxu0 0.0
    %3649 = vmatmul.mubr.f32.gmra.mxu0 %v362
    %v3650 = vpop.f32.mrf.mxu0
    %v3651 = vadd.f32 %v262, %v3650
    %v3652 = vpop.f32.mrf.mxu0
    %3653 = vdwg.mxu0
    %vm3654 = vcmask 31744
    %v3656 = vsel %vm3654, %v358, 0
    %v3659 = vsel %vm3654, %v1481, 0
    %3661 = vmatprep.subr.mxu0 0.0
    %3662 = vmatpush1.xpose.msra.mxu0 0.0
    %3663 = vmatprep.subr.mxu0 0.0
    %3664 = vmatpush1.xpose.msra.mxu0 0.0
    %3665 = vmatprep.subr.mxu0 0.0
    %3666 = vmatpush1.xpose.msra.mxu0 0.0
    %3667 = vmatprep.subr.mxu0 0.0
    %3668 = vmatpush1.xpose.msra.mxu0 0.0
    %3669 = vmatprep.subr.mxu0 0.0
    %3670 = vmatpush1.xpose.msra.mxu0 0.0
    %3671 = vmatprep.subr.mxu0 0.0
    %3672 = vmatpush1.xpose.msra.mxu0 0.0
    %3673 = vmatprep.subr.mxu0 0.0
    %3674 = vmatpush1.xpose.msra.mxu0 0.0
    %3675 = vmatprep.subr.mxu0 0.0
    %3676 = vmatpush1.xpose.msra.mxu0 0.0
    %3677 = vmatprep.subr.mxu0 0.0
    %3678 = vmatpush1.xpose.msra.mxu0 0.0
    %3679 = vmatprep.subr.mxu0 0.0
    %3680 = vmatpush1.xpose.msra.mxu0 0.0
    %3681 = vmatprep.subr.mxu0 0.0
    %3682 = vmatpush1.xpose.msra.mxu0 0.0
    %3683 = vmatprep.subr.mxu0 0.0
    %3684 = vmatpush1.xpose.msra.mxu0 0.0
    %3685 = vmatprep.subr.mxu0 0.0
    %3686 = vmatpush1.xpose.msra.mxu0 0.0
    %3687 = vmatprep.subr.mxu0 0.0
    %3688 = vmatpush1.xpose.msra.mxu0 0.0
    %3689 = vmatprep.subr.mxu0 0.0
    %3690 = vmatpush1.xpose.msra.mxu0 0.0
    %3691 = vmatprep.subr.mxu0 0.0
    %3692 = vmatpush1.xpose.msra.mxu0 %v3659
    %3693 = vmatprep.subr.mxu0 0.0
    %3694 = vmatpush2.xpose.msra.mxu0 0.0
    %3695 = vmatprep.subr.mxu0 0.0
    %3696 = vmatpush2.xpose.msra.mxu0 0.0
    %3697 = vmatprep.subr.mxu0 0.0
    %3698 = vmatpush2.xpose.msra.mxu0 0.0
    %3699 = vmatprep.subr.mxu0 0.0
    %3700 = vmatpush2.xpose.msra.mxu0 0.0
    %3701 = vmatprep.subr.mxu0 0.0
    %3702 = vmatpush2.xpose.msra.mxu0 0.0
    %3703 = vmatprep.subr.mxu0 0.0
    %3704 = vmatpush2.xpose.msra.mxu0 0.0
    %3705 = vmatprep.subr.mxu0 0.0
    %3706 = vmatpush2.xpose.msra.mxu0 0.0
    %3707 = vmatprep.subr.mxu0 0.0
    %3708 = vmatpush2.xpose.msra.mxu0 0.0
    %3709 = vmatprep.subr.mxu0 0.0
    %3710 = vmatpush2.xpose.msra.mxu0 0.0
    %3711 = vmatprep.subr.mxu0 0.0
    %3712 = vmatpush2.xpose.msra.mxu0 0.0
    %3713 = vmatprep.subr.mxu0 0.0
    %3714 = vmatpush2.xpose.msra.mxu0 0.0
    %3715 = vmatprep.subr.mxu0 0.0
    %3716 = vmatpush2.xpose.msra.mxu0 0.0
    %3717 = vmatprep.subr.mxu0 0.0
    %3718 = vmatpush2.xpose.msra.mxu0 0.0
    %3719 = vmatprep.subr.mxu0 0.0
    %3720 = vmatpush2.xpose.msra.mxu0 0.0
    %3721 = vmatprep.subr.mxu0 0.0
    %3722 = vmatpush2.xpose.msra.mxu0 0.0
    %3723 = vmatprep.subr.mxu0 0.0
    %3724 = vmatpush2.xpose.msra.mxu0 0.0
    %3725 = vmatprep.mubr.f32.mxu0 0.0
    %3726 = vmatmul.mubr.f32.gmra.mxu0 %v3656
    %v3727 = vpop.f32.mrf.mxu0
    %v3728 = vadd.f32 0.0, %v3727
    %v3729 = vpop.f32.mrf.mxu0
    %3730 = vdwg.mxu0
    %v3732 = vsel %vm3654, %v431, 0
    %v3735 = vsel %vm3654, %v1551, 0
    %3737 = vmatprep.subr.mxu0 0.0
    %3738 = vmatpush1.xpose.msra.mxu0 0.0
    %3739 = vmatprep.subr.mxu0 0.0
    %3740 = vmatpush1.xpose.msra.mxu0 0.0
    %3741 = vmatprep.subr.mxu0 0.0
    %3742 = vmatpush1.xpose.msra.mxu0 0.0
    %3743 = vmatprep.subr.mxu0 0.0
    %3744 = vmatpush1.xpose.msra.mxu0 0.0
    %3745 = vmatprep.subr.mxu0 0.0
    %3746 = vmatpush1.xpose.msra.mxu0 0.0
    %3747 = vmatprep.subr.mxu0 0.0
    %3748 = vmatpush1.xpose.msra.mxu0 0.0
    %3749 = vmatprep.subr.mxu0 0.0
    %3750 = vmatpush1.xpose.msra.mxu0 0.0
    %3751 = vmatprep.subr.mxu0 0.0
    %3752 = vmatpush1.xpose.msra.mxu0 0.0
    %3753 = vmatprep.subr.mxu0 0.0
    %3754 = vmatpush1.xpose.msra.mxu0 0.0
    %3755 = vmatprep.subr.mxu0 0.0
    %3756 = vmatpush1.xpose.msra.mxu0 0.0
    %3757 = vmatprep.subr.mxu0 0.0
    %3758 = vmatpush1.xpose.msra.mxu0 0.0
    %3759 = vmatprep.subr.mxu0 0.0
    %3760 = vmatpush1.xpose.msra.mxu0 0.0
    %3761 = vmatprep.subr.mxu0 0.0
    %3762 = vmatpush1.xpose.msra.mxu0 0.0
    %3763 = vmatprep.subr.mxu0 0.0
    %3764 = vmatpush1.xpose.msra.mxu0 0.0
    %3765 = vmatprep.subr.mxu0 0.0
    %3766 = vmatpush1.xpose.msra.mxu0 0.0
    %3767 = vmatprep.subr.mxu0 0.0
    %3768 = vmatpush1.xpose.msra.mxu0 %v3735
    %3769 = vmatprep.subr.mxu0 0.0
    %3770 = vmatpush2.xpose.msra.mxu0 0.0
    %3771 = vmatprep.subr.mxu0 0.0
    %3772 = vmatpush2.xpose.msra.mxu0 0.0
    %3773 = vmatprep.subr.mxu0 0.0
    %3774 = vmatpush2.xpose.msra.mxu0 0.0
    %3775 = vmatprep.subr.mxu0 0.0
    %3776 = vmatpush2.xpose.msra.mxu0 0.0
    %3777 = vmatprep.subr.mxu0 0.0
    %3778 = vmatpush2.xpose.msra.mxu0 0.0
    %3779 = vmatprep.subr.mxu0 0.0
    %3780 = vmatpush2.xpose.msra.mxu0 0.0
    %3781 = vmatprep.subr.mxu0 0.0
    %3782 = vmatpush2.xpose.msra.mxu0 0.0
    %3783 = vmatprep.subr.mxu0 0.0
    %3784 = vmatpush2.xpose.msra.mxu0 0.0
    %3785 = vmatprep.subr.mxu0 0.0
    %3786 = vmatpush2.xpose.msra.mxu0 0.0
    %3787 = vmatprep.subr.mxu0 0.0
    %3788 = vmatpush2.xpose.msra.mxu0 0.0
    %3789 = vmatprep.subr.mxu0 0.0
    %3790 = vmatpush2.xpose.msra.mxu0 0.0
    %3791 = vmatprep.subr.mxu0 0.0
    %3792 = vmatpush2.xpose.msra.mxu0 0.0
    %3793 = vmatprep.subr.mxu0 0.0
    %3794 = vmatpush2.xpose.msra.mxu0 0.0
    %3795 = vmatprep.subr.mxu0 0.0
    %3796 = vmatpush2.xpose.msra.mxu0 0.0
    %3797 = vmatprep.subr.mxu0 0.0
    %3798 = vmatpush2.xpose.msra.mxu0 0.0
    %3799 = vmatprep.subr.mxu0 0.0
    %3800 = vmatpush2.xpose.msra.mxu0 0.0
    %3801 = vmatprep.mubr.f32.mxu0 0.0
    %3802 = vmatmul.mubr.f32.gmra.mxu0 %v3732
    %v3803 = vpop.f32.mrf.mxu0
    %v3804 = vadd.f32 0.0, %v3803
    %v3805 = vpop.f32.mrf.mxu0
    %3806 = vdwg.mxu0
    %v3808 = vsel %vm3654, %v501, 0
    %v3811 = vsel %vm3654, %v1621, 0
    %3813 = vmatprep.subr.mxu0 0.0
    %3814 = vmatpush1.xpose.msra.mxu0 0.0
    %3815 = vmatprep.subr.mxu0 0.0
    %3816 = vmatpush1.xpose.msra.mxu0 0.0
    %3817 = vmatprep.subr.mxu0 0.0
    %3818 = vmatpush1.xpose.msra.mxu0 0.0
    %3819 = vmatprep.subr.mxu0 0.0
    %3820 = vmatpush1.xpose.msra.mxu0 0.0
    %3821 = vmatprep.subr.mxu0 0.0
    %3822 = vmatpush1.xpose.msra.mxu0 0.0
    %3823 = vmatprep.subr.mxu0 0.0
    %3824 = vmatpush1.xpose.msra.mxu0 0.0
    %3825 = vmatprep.subr.mxu0 0.0
    %3826 = vmatpush1.xpose.msra.mxu0 0.0
    %3827 = vmatprep.subr.mxu0 0.0
    %3828 = vmatpush1.xpose.msra.mxu0 0.0
    %3829 = vmatprep.subr.mxu0 0.0
    %3830 = vmatpush1.xpose.msra.mxu0 0.0
    %3831 = vmatprep.subr.mxu0 0.0
    %3832 = vmatpush1.xpose.msra.mxu0 0.0
    %3833 = vmatprep.subr.mxu0 0.0
    %3834 = vmatpush1.xpose.msra.mxu0 0.0
    %3835 = vmatprep.subr.mxu0 0.0
    %3836 = vmatpush1.xpose.msra.mxu0 0.0
    %3837 = vmatprep.subr.mxu0 0.0
    %3838 = vmatpush1.xpose.msra.mxu0 0.0
    %3839 = vmatprep.subr.mxu0 0.0
    %3840 = vmatpush1.xpose.msra.mxu0 0.0
    %3841 = vmatprep.subr.mxu0 0.0
    %3842 = vmatpush1.xpose.msra.mxu0 0.0
    %3843 = vmatprep.subr.mxu0 0.0
    %3844 = vmatpush1.xpose.msra.mxu0 %v3811
    %3845 = vmatprep.subr.mxu0 0.0
    %3846 = vmatpush2.xpose.msra.mxu0 0.0
    %3847 = vmatprep.subr.mxu0 0.0
    %3848 = vmatpush2.xpose.msra.mxu0 0.0
    %3849 = vmatprep.subr.mxu0 0.0
    %3850 = vmatpush2.xpose.msra.mxu0 0.0
    %3851 = vmatprep.subr.mxu0 0.0
    %3852 = vmatpush2.xpose.msra.mxu0 0.0
    %3853 = vmatprep.subr.mxu0 0.0
    %3854 = vmatpush2.xpose.msra.mxu0 0.0
    %3855 = vmatprep.subr.mxu0 0.0
    %3856 = vmatpush2.xpose.msra.mxu0 0.0
    %3857 = vmatprep.subr.mxu0 0.0
    %3858 = vmatpush2.xpose.msra.mxu0 0.0
    %3859 = vmatprep.subr.mxu0 0.0
    %3860 = vmatpush2.xpose.msra.mxu0 0.0
    %3861 = vmatprep.subr.mxu0 0.0
    %3862 = vmatpush2.xpose.msra.mxu0 0.0
    %3863 = vmatprep.subr.mxu0 0.0
    %3864 = vmatpush2.xpose.msra.mxu0 0.0
    %3865 = vmatprep.subr.mxu0 0.0
    %3866 = vmatpush2.xpose.msra.mxu0 0.0
    %3867 = vmatprep.subr.mxu0 0.0
    %3868 = vmatpush2.xpose.msra.mxu0 0.0
    %3869 = vmatprep.subr.mxu0 0.0
    %3870 = vmatpush2.xpose.msra.mxu0 0.0
    %3871 = vmatprep.subr.mxu0 0.0
    %3872 = vmatpush2.xpose.msra.mxu0 0.0
    %3873 = vmatprep.subr.mxu0 0.0
    %3874 = vmatpush2.xpose.msra.mxu0 0.0
    %3875 = vmatprep.subr.mxu0 0.0
    %3876 = vmatpush2.xpose.msra.mxu0 0.0
    %3877 = vmatprep.mubr.f32.mxu0 0.0
    %3878 = vmatmul.mubr.f32.gmra.mxu0 %v3808
    %v3879 = vpop.f32.mrf.mxu0
    %v3880 = vadd.f32 0.0, %v3879
    %v3881 = vpop.f32.mrf.mxu0
    %3882 = vdwg.mxu0
    %v3884 = vsel %vm3654, %v571, 0
    %v3887 = vsel %vm3654, %v1691, 0
    %3889 = vmatprep.subr.mxu0 0.0
    %3890 = vmatpush1.xpose.msra.mxu0 0.0
    %3891 = vmatprep.subr.mxu0 0.0
    %3892 = vmatpush1.xpose.msra.mxu0 0.0
    %3893 = vmatprep.subr.mxu0 0.0
    %3894 = vmatpush1.xpose.msra.mxu0 0.0
    %3895 = vmatprep.subr.mxu0 0.0
    %3896 = vmatpush1.xpose.msra.mxu0 0.0
    %3897 = vmatprep.subr.mxu0 0.0
    %3898 = vmatpush1.xpose.msra.mxu0 0.0
    %3899 = vmatprep.subr.mxu0 0.0
    %3900 = vmatpush1.xpose.msra.mxu0 0.0
    %3901 = vmatprep.subr.mxu0 0.0
    %3902 = vmatpush1.xpose.msra.mxu0 0.0
    %3903 = vmatprep.subr.mxu0 0.0
    %3904 = vmatpush1.xpose.msra.mxu0 0.0
    %3905 = vmatprep.subr.mxu0 0.0
    %3906 = vmatpush1.xpose.msra.mxu0 0.0
    %3907 = vmatprep.subr.mxu0 0.0
    %3908 = vmatpush1.xpose.msra.mxu0 0.0
    %3909 = vmatprep.subr.mxu0 0.0
    %3910 = vmatpush1.xpose.msra.mxu0 0.0
    %3911 = vmatprep.subr.mxu0 0.0
    %3912 = vmatpush1.xpose.msra.mxu0 0.0
    %3913 = vmatprep.subr.mxu0 0.0
    %3914 = vmatpush1.xpose.msra.mxu0 0.0
    %3915 = vmatprep.subr.mxu0 0.0
    %3916 = vmatpush1.xpose.msra.mxu0 0.0
    %3917 = vmatprep.subr.mxu0 0.0
    %3918 = vmatpush1.xpose.msra.mxu0 0.0
    %3919 = vmatprep.subr.mxu0 0.0
    %3920 = vmatpush1.xpose.msra.mxu0 %v3887
    %3921 = vmatprep.subr.mxu0 0.0
    %3922 = vmatpush2.xpose.msra.mxu0 0.0
    %3923 = vmatprep.subr.mxu0 0.0
    %3924 = vmatpush2.xpose.msra.mxu0 0.0
    %3925 = vmatprep.subr.mxu0 0.0
    %3926 = vmatpush2.xpose.msra.mxu0 0.0
    %3927 = vmatprep.subr.mxu0 0.0
    %3928 = vmatpush2.xpose.msra.mxu0 0.0
    %3929 = vmatprep.subr.mxu0 0.0
    %3930 = vmatpush2.xpose.msra.mxu0 0.0
    %3931 = vmatprep.subr.mxu0 0.0
    %3932 = vmatpush2.xpose.msra.mxu0 0.0
    %3933 = vmatprep.subr.mxu0 0.0
    %3934 = vmatpush2.xpose.msra.mxu0 0.0
    %3935 = vmatprep.subr.mxu0 0.0
    %3936 = vmatpush2.xpose.msra.mxu0 0.0
    %3937 = vmatprep.subr.mxu0 0.0
    %3938 = vmatpush2.xpose.msra.mxu0 0.0
    %3939 = vmatprep.subr.mxu0 0.0
    %3940 = vmatpush2.xpose.msra.mxu0 0.0
    %3941 = vmatprep.subr.mxu0 0.0
    %3942 = vmatpush2.xpose.msra.mxu0 0.0
    %3943 = vmatprep.subr.mxu0 0.0
    %3944 = vmatpush2.xpose.msra.mxu0 0.0
    %3945 = vmatprep.subr.mxu0 0.0
    %3946 = vmatpush2.xpose.msra.mxu0 0.0
    %3947 = vmatprep.subr.mxu0 0.0
    %3948 = vmatpush2.xpose.msra.mxu0 0.0
    %3949 = vmatprep.subr.mxu0 0.0
    %3950 = vmatpush2.xpose.msra.mxu0 0.0
    %3951 = vmatprep.subr.mxu0 0.0
    %3952 = vmatpush2.xpose.msra.mxu0 0.0
    %3953 = vmatprep.mubr.f32.mxu0 0.0
    %3954 = vmatmul.mubr.f32.gmra.mxu0 %v3884
    %v3955 = vpop.f32.mrf.mxu0
    %v3956 = vadd.f32 0.0, %v3955
    %v3957 = vpop.f32.mrf.mxu0
    %3958 = vdwg.mxu0
    %v3960 = vsel %vm3654, %v641, 0
    %v3963 = vsel %vm3654, %v1761, 0
    %3965 = vmatprep.subr.mxu0 0.0
    %3966 = vmatpush1.xpose.msra.mxu0 0.0
    %3967 = vmatprep.subr.mxu0 0.0
    %3968 = vmatpush1.xpose.msra.mxu0 0.0
    %3969 = vmatprep.subr.mxu0 0.0
    %3970 = vmatpush1.xpose.msra.mxu0 0.0
    %3971 = vmatprep.subr.mxu0 0.0
    %3972 = vmatpush1.xpose.msra.mxu0 0.0
    %3973 = vmatprep.subr.mxu0 0.0
    %3974 = vmatpush1.xpose.msra.mxu0 0.0
    %3975 = vmatprep.subr.mxu0 0.0
    %3976 = vmatpush1.xpose.msra.mxu0 0.0
    %3977 = vmatprep.subr.mxu0 0.0
    %3978 = vmatpush1.xpose.msra.mxu0 0.0
    %3979 = vmatprep.subr.mxu0 0.0
    %3980 = vmatpush1.xpose.msra.mxu0 0.0
    %3981 = vmatprep.subr.mxu0 0.0
    %3982 = vmatpush1.xpose.msra.mxu0 0.0
    %3983 = vmatprep.subr.mxu0 0.0
    %3984 = vmatpush1.xpose.msra.mxu0 0.0
    %3985 = vmatprep.subr.mxu0 0.0
    %3986 = vmatpush1.xpose.msra.mxu0 0.0
    %3987 = vmatprep.subr.mxu0 0.0
    %3988 = vmatpush1.xpose.msra.mxu0 0.0
    %3989 = vmatprep.subr.mxu0 0.0
    %3990 = vmatpush1.xpose.msra.mxu0 0.0
    %3991 = vmatprep.subr.mxu0 0.0
    %3992 = vmatpush1.xpose.msra.mxu0 0.0
    %3993 = vmatprep.subr.mxu0 0.0
    %3994 = vmatpush1.xpose.msra.mxu0 0.0
    %3995 = vmatprep.subr.mxu0 0.0
    %3996 = vmatpush1.xpose.msra.mxu0 %v3963
    %3997 = vmatprep.subr.mxu0 0.0
    %3998 = vmatpush2.xpose.msra.mxu0 0.0
    %3999 = vmatprep.subr.mxu0 0.0
    %4000 = vmatpush2.xpose.msra.mxu0 0.0
    %4001 = vmatprep.subr.mxu0 0.0
    %4002 = vmatpush2.xpose.msra.mxu0 0.0
    %4003 = vmatprep.subr.mxu0 0.0
    %4004 = vmatpush2.xpose.msra.mxu0 0.0
    %4005 = vmatprep.subr.mxu0 0.0
    %4006 = vmatpush2.xpose.msra.mxu0 0.0
    %4007 = vmatprep.subr.mxu0 0.0
    %4008 = vmatpush2.xpose.msra.mxu0 0.0
    %4009 = vmatprep.subr.mxu0 0.0
    %4010 = vmatpush2.xpose.msra.mxu0 0.0
    %4011 = vmatprep.subr.mxu0 0.0
    %4012 = vmatpush2.xpose.msra.mxu0 0.0
    %4013 = vmatprep.subr.mxu0 0.0
    %4014 = vmatpush2.xpose.msra.mxu0 0.0
    %4015 = vmatprep.subr.mxu0 0.0
    %4016 = vmatpush2.xpose.msra.mxu0 0.0
    %4017 = vmatprep.subr.mxu0 0.0
    %4018 = vmatpush2.xpose.msra.mxu0 0.0
    %4019 = vmatprep.subr.mxu0 0.0
    %4020 = vmatpush2.xpose.msra.mxu0 0.0
    %4021 = vmatprep.subr.mxu0 0.0
    %4022 = vmatpush2.xpose.msra.mxu0 0.0
    %4023 = vmatprep.subr.mxu0 0.0
    %4024 = vmatpush2.xpose.msra.mxu0 0.0
    %4025 = vmatprep.subr.mxu0 0.0
    %4026 = vmatpush2.xpose.msra.mxu0 0.0
    %4027 = vmatprep.subr.mxu0 0.0
    %4028 = vmatpush2.xpose.msra.mxu0 0.0
    %4029 = vmatprep.mubr.f32.mxu0 0.0
    %4030 = vmatmul.mubr.f32.gmra.mxu0 %v3960
    %v4031 = vpop.f32.mrf.mxu0
    %v4032 = vadd.f32 0.0, %v4031
    %v4033 = vpop.f32.mrf.mxu0
    %4034 = vdwg.mxu0
    %v4036 = vsel %vm3654, %v711, 0
    %v4039 = vsel %vm3654, %v1831, 0
    %4041 = vmatprep.subr.mxu0 0.0
    %4042 = vmatpush1.xpose.msra.mxu0 0.0
    %4043 = vmatprep.subr.mxu0 0.0
    %4044 = vmatpush1.xpose.msra.mxu0 0.0
    %4045 = vmatprep.subr.mxu0 0.0
    %4046 = vmatpush1.xpose.msra.mxu0 0.0
    %4047 = vmatprep.subr.mxu0 0.0
    %4048 = vmatpush1.xpose.msra.mxu0 0.0
    %4049 = vmatprep.subr.mxu0 0.0
    %4050 = vmatpush1.xpose.msra.mxu0 0.0
    %4051 = vmatprep.subr.mxu0 0.0
    %4052 = vmatpush1.xpose.msra.mxu0 0.0
    %4053 = vmatprep.subr.mxu0 0.0
    %4054 = vmatpush1.xpose.msra.mxu0 0.0
    %4055 = vmatprep.subr.mxu0 0.0
    %4056 = vmatpush1.xpose.msra.mxu0 0.0
    %4057 = vmatprep.subr.mxu0 0.0
    %4058 = vmatpush1.xpose.msra.mxu0 0.0
    %4059 = vmatprep.subr.mxu0 0.0
    %4060 = vmatpush1.xpose.msra.mxu0 0.0
    %4061 = vmatprep.subr.mxu0 0.0
    %4062 = vmatpush1.xpose.msra.mxu0 0.0
    %4063 = vmatprep.subr.mxu0 0.0
    %4064 = vmatpush1.xpose.msra.mxu0 0.0
    %4065 = vmatprep.subr.mxu0 0.0
    %4066 = vmatpush1.xpose.msra.mxu0 0.0
    %4067 = vmatprep.subr.mxu0 0.0
    %4068 = vmatpush1.xpose.msra.mxu0 0.0
    %4069 = vmatprep.subr.mxu0 0.0
    %4070 = vmatpush1.xpose.msra.mxu0 0.0
    %4071 = vmatprep.subr.mxu0 0.0
    %4072 = vmatpush1.xpose.msra.mxu0 %v4039
    %4073 = vmatprep.subr.mxu0 0.0
    %4074 = vmatpush2.xpose.msra.mxu0 0.0
    %4075 = vmatprep.subr.mxu0 0.0
    %4076 = vmatpush2.xpose.msra.mxu0 0.0
    %4077 = vmatprep.subr.mxu0 0.0
    %4078 = vmatpush2.xpose.msra.mxu0 0.0
    %4079 = vmatprep.subr.mxu0 0.0
    %4080 = vmatpush2.xpose.msra.mxu0 0.0
    %4081 = vmatprep.subr.mxu0 0.0
    %4082 = vmatpush2.xpose.msra.mxu0 0.0
    %4083 = vmatprep.subr.mxu0 0.0
    %4084 = vmatpush2.xpose.msra.mxu0 0.0
    %4085 = vmatprep.subr.mxu0 0.0
    %4086 = vmatpush2.xpose.msra.mxu0 0.0
    %4087 = vmatprep.subr.mxu0 0.0
    %4088 = vmatpush2.xpose.msra.mxu0 0.0
    %4089 = vmatprep.subr.mxu0 0.0
    %4090 = vmatpush2.xpose.msra.mxu0 0.0
    %4091 = vmatprep.subr.mxu0 0.0
    %4092 = vmatpush2.xpose.msra.mxu0 0.0
    %4093 = vmatprep.subr.mxu0 0.0
    %4094 = vmatpush2.xpose.msra.mxu0 0.0
    %4095 = vmatprep.subr.mxu0 0.0
    %4096 = vmatpush2.xpose.msra.mxu0 0.0
    %4097 = vmatprep.subr.mxu0 0.0
    %4098 = vmatpush2.xpose.msra.mxu0 0.0
    %4099 = vmatprep.subr.mxu0 0.0
    %4100 = vmatpush2.xpose.msra.mxu0 0.0
    %4101 = vmatprep.subr.mxu0 0.0
    %4102 = vmatpush2.xpose.msra.mxu0 0.0
    %4103 = vmatprep.subr.mxu0 0.0
    %4104 = vmatpush2.xpose.msra.mxu0 0.0
    %4105 = vmatprep.mubr.f32.mxu0 0.0
    %4106 = vmatmul.mubr.f32.gmra.mxu0 %v4036
    %v4107 = vpop.f32.mrf.mxu0
    %v4108 = vadd.f32 0.0, %v4107
    %v4109 = vpop.f32.mrf.mxu0
    %4110 = vdwg.mxu0
    %v4112 = vsel %vm3654, %v781, 0
    %v4115 = vsel %vm3654, %v1901, 0
    %4117 = vmatprep.subr.mxu0 0.0
    %4118 = vmatpush1.xpose.msra.mxu0 0.0
    %4119 = vmatprep.subr.mxu0 0.0
    %4120 = vmatpush1.xpose.msra.mxu0 0.0
    %4121 = vmatprep.subr.mxu0 0.0
    %4122 = vmatpush1.xpose.msra.mxu0 0.0
    %4123 = vmatprep.subr.mxu0 0.0
    %4124 = vmatpush1.xpose.msra.mxu0 0.0
    %4125 = vmatprep.subr.mxu0 0.0
    %4126 = vmatpush1.xpose.msra.mxu0 0.0
    %4127 = vmatprep.subr.mxu0 0.0
    %4128 = vmatpush1.xpose.msra.mxu0 0.0
    %4129 = vmatprep.subr.mxu0 0.0
    %4130 = vmatpush1.xpose.msra.mxu0 0.0
    %4131 = vmatprep.subr.mxu0 0.0
    %4132 = vmatpush1.xpose.msra.mxu0 0.0
    %4133 = vmatprep.subr.mxu0 0.0
    %4134 = vmatpush1.xpose.msra.mxu0 0.0
    %4135 = vmatprep.subr.mxu0 0.0
    %4136 = vmatpush1.xpose.msra.mxu0 0.0
    %4137 = vmatprep.subr.mxu0 0.0
    %4138 = vmatpush1.xpose.msra.mxu0 0.0
    %4139 = vmatprep.subr.mxu0 0.0
    %4140 = vmatpush1.xpose.msra.mxu0 0.0
    %4141 = vmatprep.subr.mxu0 0.0
    %4142 = vmatpush1.xpose.msra.mxu0 0.0
    %4143 = vmatprep.subr.mxu0 0.0
    %4144 = vmatpush1.xpose.msra.mxu0 0.0
    %4145 = vmatprep.subr.mxu0 0.0
    %4146 = vmatpush1.xpose.msra.mxu0 0.0
    %4147 = vmatprep.subr.mxu0 0.0
    %4148 = vmatpush1.xpose.msra.mxu0 %v4115
    %4149 = vmatprep.subr.mxu0 0.0
    %4150 = vmatpush2.xpose.msra.mxu0 0.0
    %4151 = vmatprep.subr.mxu0 0.0
    %4152 = vmatpush2.xpose.msra.mxu0 0.0
    %4153 = vmatprep.subr.mxu0 0.0
    %4154 = vmatpush2.xpose.msra.mxu0 0.0
    %4155 = vmatprep.subr.mxu0 0.0
    %4156 = vmatpush2.xpose.msra.mxu0 0.0
    %4157 = vmatprep.subr.mxu0 0.0
    %4158 = vmatpush2.xpose.msra.mxu0 0.0
    %4159 = vmatprep.subr.mxu0 0.0
    %4160 = vmatpush2.xpose.msra.mxu0 0.0
    %4161 = vmatprep.subr.mxu0 0.0
    %4162 = vmatpush2.xpose.msra.mxu0 0.0
    %4163 = vmatprep.subr.mxu0 0.0
    %4164 = vmatpush2.xpose.msra.mxu0 0.0
    %4165 = vmatprep.subr.mxu0 0.0
    %4166 = vmatpush2.xpose.msra.mxu0 0.0
    %4167 = vmatprep.subr.mxu0 0.0
    %4168 = vmatpush2.xpose.msra.mxu0 0.0
    %4169 = vmatprep.subr.mxu0 0.0
    %4170 = vmatpush2.xpose.msra.mxu0 0.0
    %4171 = vmatprep.subr.mxu0 0.0
    %4172 = vmatpush2.xpose.msra.mxu0 0.0
    %4173 = vmatprep.subr.mxu0 0.0
    %4174 = vmatpush2.xpose.msra.mxu0 0.0
    %4175 = vmatprep.subr.mxu0 0.0
    %4176 = vmatpush2.xpose.msra.mxu0 0.0
    %4177 = vmatprep.subr.mxu0 0.0
    %4178 = vmatpush2.xpose.msra.mxu0 0.0
    %4179 = vmatprep.subr.mxu0 0.0
    %4180 = vmatpush2.xpose.msra.mxu0 0.0
    %4181 = vmatprep.mubr.f32.mxu0 0.0
    %4182 = vmatmul.mubr.f32.gmra.mxu0 %v4112
    %v4183 = vpop.f32.mrf.mxu0
    %v4184 = vadd.f32 0.0, %v4183
    %v4185 = vpop.f32.mrf.mxu0
    %4186 = vdwg.mxu0
    %v4188 = vsel %vm3654, %v851, 0
    %v4191 = vsel %vm3654, %v1971, 0
    %4193 = vmatprep.subr.mxu0 0.0
    %4194 = vmatpush1.xpose.msra.mxu0 0.0
    %4195 = vmatprep.subr.mxu0 0.0
    %4196 = vmatpush1.xpose.msra.mxu0 0.0
    %4197 = vmatprep.subr.mxu0 0.0
    %4198 = vmatpush1.xpose.msra.mxu0 0.0
    %4199 = vmatprep.subr.mxu0 0.0
    %4200 = vmatpush1.xpose.msra.mxu0 0.0
    %4201 = vmatprep.subr.mxu0 0.0
    %4202 = vmatpush1.xpose.msra.mxu0 0.0
    %4203 = vmatprep.subr.mxu0 0.0
    %4204 = vmatpush1.xpose.msra.mxu0 0.0
    %4205 = vmatprep.subr.mxu0 0.0
    %4206 = vmatpush1.xpose.msra.mxu0 0.0
    %4207 = vmatprep.subr.mxu0 0.0
    %4208 = vmatpush1.xpose.msra.mxu0 0.0
    %4209 = vmatprep.subr.mxu0 0.0
    %4210 = vmatpush1.xpose.msra.mxu0 0.0
    %4211 = vmatprep.subr.mxu0 0.0
    %4212 = vmatpush1.xpose.msra.mxu0 0.0
    %4213 = vmatprep.subr.mxu0 0.0
    %4214 = vmatpush1.xpose.msra.mxu0 0.0
    %4215 = vmatprep.subr.mxu0 0.0
    %4216 = vmatpush1.xpose.msra.mxu0 0.0
    %4217 = vmatprep.subr.mxu0 0.0
    %4218 = vmatpush1.xpose.msra.mxu0 0.0
    %4219 = vmatprep.subr.mxu0 0.0
    %4220 = vmatpush1.xpose.msra.mxu0 0.0
    %4221 = vmatprep.subr.mxu0 0.0
    %4222 = vmatpush1.xpose.msra.mxu0 0.0
    %4223 = vmatprep.subr.mxu0 0.0
    %4224 = vmatpush1.xpose.msra.mxu0 %v4191
    %4225 = vmatprep.subr.mxu0 0.0
    %4226 = vmatpush2.xpose.msra.mxu0 0.0
    %4227 = vmatprep.subr.mxu0 0.0
    %4228 = vmatpush2.xpose.msra.mxu0 0.0
    %4229 = vmatprep.subr.mxu0 0.0
    %4230 = vmatpush2.xpose.msra.mxu0 0.0
    %4231 = vmatprep.subr.mxu0 0.0
    %4232 = vmatpush2.xpose.msra.mxu0 0.0
    %4233 = vmatprep.subr.mxu0 0.0
    %4234 = vmatpush2.xpose.msra.mxu0 0.0
    %4235 = vmatprep.subr.mxu0 0.0
    %4236 = vmatpush2.xpose.msra.mxu0 0.0
    %4237 = vmatprep.subr.mxu0 0.0
    %4238 = vmatpush2.xpose.msra.mxu0 0.0
    %4239 = vmatprep.subr.mxu0 0.0
    %4240 = vmatpush2.xpose.msra.mxu0 0.0
    %4241 = vmatprep.subr.mxu0 0.0
    %4242 = vmatpush2.xpose.msra.mxu0 0.0
    %4243 = vmatprep.subr.mxu0 0.0
    %4244 = vmatpush2.xpose.msra.mxu0 0.0
    %4245 = vmatprep.subr.mxu0 0.0
    %4246 = vmatpush2.xpose.msra.mxu0 0.0
    %4247 = vmatprep.subr.mxu0 0.0
    %4248 = vmatpush2.xpose.msra.mxu0 0.0
    %4249 = vmatprep.subr.mxu0 0.0
    %4250 = vmatpush2.xpose.msra.mxu0 0.0
    %4251 = vmatprep.subr.mxu0 0.0
    %4252 = vmatpush2.xpose.msra.mxu0 0.0
    %4253 = vmatprep.subr.mxu0 0.0
    %4254 = vmatpush2.xpose.msra.mxu0 0.0
    %4255 = vmatprep.subr.mxu0 0.0
    %4256 = vmatpush2.xpose.msra.mxu0 0.0
    %4257 = vmatprep.mubr.f32.mxu0 0.0
    %4258 = vmatmul.mubr.f32.gmra.mxu0 %v4188
    %v4259 = vpop.f32.mrf.mxu0
    %v4260 = vadd.f32 0.0, %v4259
    %v4261 = vpop.f32.mrf.mxu0
    %4262 = vdwg.mxu0
    %v4264 = vsel %vm3654, %v921, 0
    %v4267 = vsel %vm3654, %v2041, 0
    %4269 = vmatprep.subr.mxu0 0.0
    %4270 = vmatpush1.xpose.msra.mxu0 0.0
    %4271 = vmatprep.subr.mxu0 0.0
    %4272 = vmatpush1.xpose.msra.mxu0 0.0
    %4273 = vmatprep.subr.mxu0 0.0
    %4274 = vmatpush1.xpose.msra.mxu0 0.0
    %4275 = vmatprep.subr.mxu0 0.0
    %4276 = vmatpush1.xpose.msra.mxu0 0.0
    %4277 = vmatprep.subr.mxu0 0.0
    %4278 = vmatpush1.xpose.msra.mxu0 0.0
    %4279 = vmatprep.subr.mxu0 0.0
    %4280 = vmatpush1.xpose.msra.mxu0 0.0
    %4281 = vmatprep.subr.mxu0 0.0
    %4282 = vmatpush1.xpose.msra.mxu0 0.0
    %4283 = vmatprep.subr.mxu0 0.0
    %4284 = vmatpush1.xpose.msra.mxu0 0.0
    %4285 = vmatprep.subr.mxu0 0.0
    %4286 = vmatpush1.xpose.msra.mxu0 0.0
    %4287 = vmatprep.subr.mxu0 0.0
    %4288 = vmatpush1.xpose.msra.mxu0 0.0
    %4289 = vmatprep.subr.mxu0 0.0
    %4290 = vmatpush1.xpose.msra.mxu0 0.0
    %4291 = vmatprep.subr.mxu0 0.0
    %4292 = vmatpush1.xpose.msra.mxu0 0.0
    %4293 = vmatprep.subr.mxu0 0.0
    %4294 = vmatpush1.xpose.msra.mxu0 0.0
    %4295 = vmatprep.subr.mxu0 0.0
    %4296 = vmatpush1.xpose.msra.mxu0 0.0
    %4297 = vmatprep.subr.mxu0 0.0
    %4298 = vmatpush1.xpose.msra.mxu0 0.0
    %4299 = vmatprep.subr.mxu0 0.0
    %4300 = vmatpush1.xpose.msra.mxu0 %v4267
    %4301 = vmatprep.subr.mxu0 0.0
    %4302 = vmatpush2.xpose.msra.mxu0 0.0
    %4303 = vmatprep.subr.mxu0 0.0
    %4304 = vmatpush2.xpose.msra.mxu0 0.0
    %4305 = vmatprep.subr.mxu0 0.0
    %4306 = vmatpush2.xpose.msra.mxu0 0.0
    %4307 = vmatprep.subr.mxu0 0.0
    %4308 = vmatpush2.xpose.msra.mxu0 0.0
    %4309 = vmatprep.subr.mxu0 0.0
    %4310 = vmatpush2.xpose.msra.mxu0 0.0
    %4311 = vmatprep.subr.mxu0 0.0
    %4312 = vmatpush2.xpose.msra.mxu0 0.0
    %4313 = vmatprep.subr.mxu0 0.0
    %4314 = vmatpush2.xpose.msra.mxu0 0.0
    %4315 = vmatprep.subr.mxu0 0.0
    %4316 = vmatpush2.xpose.msra.mxu0 0.0
    %4317 = vmatprep.subr.mxu0 0.0
    %4318 = vmatpush2.xpose.msra.mxu0 0.0
    %4319 = vmatprep.subr.mxu0 0.0
    %4320 = vmatpush2.xpose.msra.mxu0 0.0
    %4321 = vmatprep.subr.mxu0 0.0
    %4322 = vmatpush2.xpose.msra.mxu0 0.0
    %4323 = vmatprep.subr.mxu0 0.0
    %4324 = vmatpush2.xpose.msra.mxu0 0.0
    %4325 = vmatprep.subr.mxu0 0.0
    %4326 = vmatpush2.xpose.msra.mxu0 0.0
    %4327 = vmatprep.subr.mxu0 0.0
    %4328 = vmatpush2.xpose.msra.mxu0 0.0
    %4329 = vmatprep.subr.mxu0 0.0
    %4330 = vmatpush2.xpose.msra.mxu0 0.0
    %4331 = vmatprep.subr.mxu0 0.0
    %4332 = vmatpush2.xpose.msra.mxu0 0.0
    %4333 = vmatprep.mubr.f32.mxu0 0.0
    %4334 = vmatmul.mubr.f32.gmra.mxu0 %v4264
    %v4335 = vpop.f32.mrf.mxu0
    %v4336 = vadd.f32 0.0, %v4335
    %v4337 = vpop.f32.mrf.mxu0
    %4338 = vdwg.mxu0
    %v4340 = vsel %vm3654, %v991, 0
    %v4343 = vsel %vm3654, %v2111, 0
    %4345 = vmatprep.subr.mxu0 0.0
    %4346 = vmatpush1.xpose.msra.mxu0 0.0
    %4347 = vmatprep.subr.mxu0 0.0
    %4348 = vmatpush1.xpose.msra.mxu0 0.0
    %4349 = vmatprep.subr.mxu0 0.0
    %4350 = vmatpush1.xpose.msra.mxu0 0.0
    %4351 = vmatprep.subr.mxu0 0.0
    %4352 = vmatpush1.xpose.msra.mxu0 0.0
    %4353 = vmatprep.subr.mxu0 0.0
    %4354 = vmatpush1.xpose.msra.mxu0 0.0
    %4355 = vmatprep.subr.mxu0 0.0
    %4356 = vmatpush1.xpose.msra.mxu0 0.0
    %4357 = vmatprep.subr.mxu0 0.0
    %4358 = vmatpush1.xpose.msra.mxu0 0.0
    %4359 = vmatprep.subr.mxu0 0.0
    %4360 = vmatpush1.xpose.msra.mxu0 0.0
    %4361 = vmatprep.subr.mxu0 0.0
    %4362 = vmatpush1.xpose.msra.mxu0 0.0
    %4363 = vmatprep.subr.mxu0 0.0
    %4364 = vmatpush1.xpose.msra.mxu0 0.0
    %4365 = vmatprep.subr.mxu0 0.0
    %4366 = vmatpush1.xpose.msra.mxu0 0.0
    %4367 = vmatprep.subr.mxu0 0.0
    %4368 = vmatpush1.xpose.msra.mxu0 0.0
    %4369 = vmatprep.subr.mxu0 0.0
    %4370 = vmatpush1.xpose.msra.mxu0 0.0
    %4371 = vmatprep.subr.mxu0 0.0
    %4372 = vmatpush1.xpose.msra.mxu0 0.0
    %4373 = vmatprep.subr.mxu0 0.0
    %4374 = vmatpush1.xpose.msra.mxu0 0.0
    %4375 = vmatprep.subr.mxu0 0.0
    %4376 = vmatpush1.xpose.msra.mxu0 %v4343
    %4377 = vmatprep.subr.mxu0 0.0
    %4378 = vmatpush2.xpose.msra.mxu0 0.0
    %4379 = vmatprep.subr.mxu0 0.0
    %4380 = vmatpush2.xpose.msra.mxu0 0.0
    %4381 = vmatprep.subr.mxu0 0.0
    %4382 = vmatpush2.xpose.msra.mxu0 0.0
    %4383 = vmatprep.subr.mxu0 0.0
    %4384 = vmatpush2.xpose.msra.mxu0 0.0
    %4385 = vmatprep.subr.mxu0 0.0
    %4386 = vmatpush2.xpose.msra.mxu0 0.0
    %4387 = vmatprep.subr.mxu0 0.0
    %4388 = vmatpush2.xpose.msra.mxu0 0.0
    %4389 = vmatprep.subr.mxu0 0.0
    %4390 = vmatpush2.xpose.msra.mxu0 0.0
    %4391 = vmatprep.subr.mxu0 0.0
    %4392 = vmatpush2.xpose.msra.mxu0 0.0
    %4393 = vmatprep.subr.mxu0 0.0
    %4394 = vmatpush2.xpose.msra.mxu0 0.0
    %4395 = vmatprep.subr.mxu0 0.0
    %4396 = vmatpush2.xpose.msra.mxu0 0.0
    %4397 = vmatprep.subr.mxu0 0.0
    %4398 = vmatpush2.xpose.msra.mxu0 0.0
    %4399 = vmatprep.subr.mxu0 0.0
    %4400 = vmatpush2.xpose.msra.mxu0 0.0
    %4401 = vmatprep.subr.mxu0 0.0
    %4402 = vmatpush2.xpose.msra.mxu0 0.0
    %4403 = vmatprep.subr.mxu0 0.0
    %4404 = vmatpush2.xpose.msra.mxu0 0.0
    %4405 = vmatprep.subr.mxu0 0.0
    %4406 = vmatpush2.xpose.msra.mxu0 0.0
    %4407 = vmatprep.subr.mxu0 0.0
    %4408 = vmatpush2.xpose.msra.mxu0 0.0
    %4409 = vmatprep.mubr.f32.mxu0 0.0
    %4410 = vmatmul.mubr.f32.gmra.mxu0 %v4340
    %v4411 = vpop.f32.mrf.mxu0
    %v4412 = vadd.f32 0.0, %v4411
    %v4413 = vpop.f32.mrf.mxu0
    %4414 = vdwg.mxu0
    %v4416 = vsel %vm3654, %v1061, 0
    %v4419 = vsel %vm3654, %v2181, 0
    %4421 = vmatprep.subr.mxu0 0.0
    %4422 = vmatpush1.xpose.msra.mxu0 0.0
    %4423 = vmatprep.subr.mxu0 0.0
    %4424 = vmatpush1.xpose.msra.mxu0 0.0
    %4425 = vmatprep.subr.mxu0 0.0
    %4426 = vmatpush1.xpose.msra.mxu0 0.0
    %4427 = vmatprep.subr.mxu0 0.0
    %4428 = vmatpush1.xpose.msra.mxu0 0.0
    %4429 = vmatprep.subr.mxu0 0.0
    %4430 = vmatpush1.xpose.msra.mxu0 0.0
    %4431 = vmatprep.subr.mxu0 0.0
    %4432 = vmatpush1.xpose.msra.mxu0 0.0
    %4433 = vmatprep.subr.mxu0 0.0
    %4434 = vmatpush1.xpose.msra.mxu0 0.0
    %4435 = vmatprep.subr.mxu0 0.0
    %4436 = vmatpush1.xpose.msra.mxu0 0.0
    %4437 = vmatprep.subr.mxu0 0.0
    %4438 = vmatpush1.xpose.msra.mxu0 0.0
    %4439 = vmatprep.subr.mxu0 0.0
    %4440 = vmatpush1.xpose.msra.mxu0 0.0
    %4441 = vmatprep.subr.mxu0 0.0
    %4442 = vmatpush1.xpose.msra.mxu0 0.0
    %4443 = vmatprep.subr.mxu0 0.0
    %4444 = vmatpush1.xpose.msra.mxu0 0.0
    %4445 = vmatprep.subr.mxu0 0.0
    %4446 = vmatpush1.xpose.msra.mxu0 0.0
    %4447 = vmatprep.subr.mxu0 0.0
    %4448 = vmatpush1.xpose.msra.mxu0 0.0
    %4449 = vmatprep.subr.mxu0 0.0
    %4450 = vmatpush1.xpose.msra.mxu0 0.0
    %4451 = vmatprep.subr.mxu0 0.0
    %4452 = vmatpush1.xpose.msra.mxu0 %v4419
    %4453 = vmatprep.subr.mxu0 0.0
    %4454 = vmatpush2.xpose.msra.mxu0 0.0
    %4455 = vmatprep.subr.mxu0 0.0
    %4456 = vmatpush2.xpose.msra.mxu0 0.0
    %4457 = vmatprep.subr.mxu0 0.0
    %4458 = vmatpush2.xpose.msra.mxu0 0.0
    %4459 = vmatprep.subr.mxu0 0.0
    %4460 = vmatpush2.xpose.msra.mxu0 0.0
    %4461 = vmatprep.subr.mxu0 0.0
    %4462 = vmatpush2.xpose.msra.mxu0 0.0
    %4463 = vmatprep.subr.mxu0 0.0
    %4464 = vmatpush2.xpose.msra.mxu0 0.0
    %4465 = vmatprep.subr.mxu0 0.0
    %4466 = vmatpush2.xpose.msra.mxu0 0.0
    %4467 = vmatprep.subr.mxu0 0.0
    %4468 = vmatpush2.xpose.msra.mxu0 0.0
    %4469 = vmatprep.subr.mxu0 0.0
    %4470 = vmatpush2.xpose.msra.mxu0 0.0
    %4471 = vmatprep.subr.mxu0 0.0
    %4472 = vmatpush2.xpose.msra.mxu0 0.0
    %4473 = vmatprep.subr.mxu0 0.0
    %4474 = vmatpush2.xpose.msra.mxu0 0.0
    %4475 = vmatprep.subr.mxu0 0.0
    %4476 = vmatpush2.xpose.msra.mxu0 0.0
    %4477 = vmatprep.subr.mxu0 0.0
    %4478 = vmatpush2.xpose.msra.mxu0 0.0
    %4479 = vmatprep.subr.mxu0 0.0
    %4480 = vmatpush2.xpose.msra.mxu0 0.0
    %4481 = vmatprep.subr.mxu0 0.0
    %4482 = vmatpush2.xpose.msra.mxu0 0.0
    %4483 = vmatprep.subr.mxu0 0.0
    %4484 = vmatpush2.xpose.msra.mxu0 0.0
    %4485 = vmatprep.mubr.f32.mxu0 0.0
    %4486 = vmatmul.mubr.f32.gmra.mxu0 %v4416
    %v4487 = vpop.f32.mrf.mxu0
    %v4488 = vadd.f32 0.0, %v4487
    %v4489 = vpop.f32.mrf.mxu0
    %4490 = vdwg.mxu0
    %v4492 = vsel %vm3654, %v1131, 0
    %v4495 = vsel %vm3654, %v2251, 0
    %4497 = vmatprep.subr.mxu0 0.0
    %4498 = vmatpush1.xpose.msra.mxu0 0.0
    %4499 = vmatprep.subr.mxu0 0.0
    %4500 = vmatpush1.xpose.msra.mxu0 0.0
    %4501 = vmatprep.subr.mxu0 0.0
    %4502 = vmatpush1.xpose.msra.mxu0 0.0
    %4503 = vmatprep.subr.mxu0 0.0
    %4504 = vmatpush1.xpose.msra.mxu0 0.0
    %4505 = vmatprep.subr.mxu0 0.0
    %4506 = vmatpush1.xpose.msra.mxu0 0.0
    %4507 = vmatprep.subr.mxu0 0.0
    %4508 = vmatpush1.xpose.msra.mxu0 0.0
    %4509 = vmatprep.subr.mxu0 0.0
    %4510 = vmatpush1.xpose.msra.mxu0 0.0
    %4511 = vmatprep.subr.mxu0 0.0
    %4512 = vmatpush1.xpose.msra.mxu0 0.0
    %4513 = vmatprep.subr.mxu0 0.0
    %4514 = vmatpush1.xpose.msra.mxu0 0.0
    %4515 = vmatprep.subr.mxu0 0.0
    %4516 = vmatpush1.xpose.msra.mxu0 0.0
    %4517 = vmatprep.subr.mxu0 0.0
    %4518 = vmatpush1.xpose.msra.mxu0 0.0
    %4519 = vmatprep.subr.mxu0 0.0
    %4520 = vmatpush1.xpose.msra.mxu0 0.0
    %4521 = vmatprep.subr.mxu0 0.0
    %4522 = vmatpush1.xpose.msra.mxu0 0.0
    %4523 = vmatprep.subr.mxu0 0.0
    %4524 = vmatpush1.xpose.msra.mxu0 0.0
    %4525 = vmatprep.subr.mxu0 0.0
    %4526 = vmatpush1.xpose.msra.mxu0 0.0
    %4527 = vmatprep.subr.mxu0 0.0
    %4528 = vmatpush1.xpose.msra.mxu0 %v4495
    %4529 = vmatprep.subr.mxu0 0.0
    %4530 = vmatpush2.xpose.msra.mxu0 0.0
    %4531 = vmatprep.subr.mxu0 0.0
    %4532 = vmatpush2.xpose.msra.mxu0 0.0
    %4533 = vmatprep.subr.mxu0 0.0
    %4534 = vmatpush2.xpose.msra.mxu0 0.0
    %4535 = vmatprep.subr.mxu0 0.0
    %4536 = vmatpush2.xpose.msra.mxu0 0.0
    %4537 = vmatprep.subr.mxu0 0.0
    %4538 = vmatpush2.xpose.msra.mxu0 0.0
    %4539 = vmatprep.subr.mxu0 0.0
    %4540 = vmatpush2.xpose.msra.mxu0 0.0
    %4541 = vmatprep.subr.mxu0 0.0
    %4542 = vmatpush2.xpose.msra.mxu0 0.0
    %4543 = vmatprep.subr.mxu0 0.0
    %4544 = vmatpush2.xpose.msra.mxu0 0.0
    %4545 = vmatprep.subr.mxu0 0.0
    %4546 = vmatpush2.xpose.msra.mxu0 0.0
    %4547 = vmatprep.subr.mxu0 0.0
    %4548 = vmatpush2.xpose.msra.mxu0 0.0
    %4549 = vmatprep.subr.mxu0 0.0
    %4550 = vmatpush2.xpose.msra.mxu0 0.0
    %4551 = vmatprep.subr.mxu0 0.0
    %4552 = vmatpush2.xpose.msra.mxu0 0.0
    %4553 = vmatprep.subr.mxu0 0.0
    %4554 = vmatpush2.xpose.msra.mxu0 0.0
    %4555 = vmatprep.subr.mxu0 0.0
    %4556 = vmatpush2.xpose.msra.mxu0 0.0
    %4557 = vmatprep.subr.mxu0 0.0
    %4558 = vmatpush2.xpose.msra.mxu0 0.0
    %4559 = vmatprep.subr.mxu0 0.0
    %4560 = vmatpush2.xpose.msra.mxu0 0.0
    %4561 = vmatprep.mubr.f32.mxu0 0.0
    %4562 = vmatmul.mubr.f32.gmra.mxu0 %v4492
    %v4563 = vpop.f32.mrf.mxu0
    %v4564 = vadd.f32 0.0, %v4563
    %v4565 = vpop.f32.mrf.mxu0
    %4566 = vdwg.mxu0
    %v4568 = vsel %vm3654, %v1201, 0
    %v4571 = vsel %vm3654, %v2321, 0
    %4573 = vmatprep.subr.mxu0 0.0
    %4574 = vmatpush1.xpose.msra.mxu0 0.0
    %4575 = vmatprep.subr.mxu0 0.0
    %4576 = vmatpush1.xpose.msra.mxu0 0.0
    %4577 = vmatprep.subr.mxu0 0.0
    %4578 = vmatpush1.xpose.msra.mxu0 0.0
    %4579 = vmatprep.subr.mxu0 0.0
    %4580 = vmatpush1.xpose.msra.mxu0 0.0
    %4581 = vmatprep.subr.mxu0 0.0
    %4582 = vmatpush1.xpose.msra.mxu0 0.0
    %4583 = vmatprep.subr.mxu0 0.0
    %4584 = vmatpush1.xpose.msra.mxu0 0.0
    %4585 = vmatprep.subr.mxu0 0.0
    %4586 = vmatpush1.xpose.msra.mxu0 0.0
    %4587 = vmatprep.subr.mxu0 0.0
    %4588 = vmatpush1.xpose.msra.mxu0 0.0
    %4589 = vmatprep.subr.mxu0 0.0
    %4590 = vmatpush1.xpose.msra.mxu0 0.0
    %4591 = vmatprep.subr.mxu0 0.0
    %4592 = vmatpush1.xpose.msra.mxu0 0.0
    %4593 = vmatprep.subr.mxu0 0.0
    %4594 = vmatpush1.xpose.msra.mxu0 0.0
    %4595 = vmatprep.subr.mxu0 0.0
    %4596 = vmatpush1.xpose.msra.mxu0 0.0
    %4597 = vmatprep.subr.mxu0 0.0
    %4598 = vmatpush1.xpose.msra.mxu0 0.0
    %4599 = vmatprep.subr.mxu0 0.0
    %4600 = vmatpush1.xpose.msra.mxu0 0.0
    %4601 = vmatprep.subr.mxu0 0.0
    %4602 = vmatpush1.xpose.msra.mxu0 0.0
    %4603 = vmatprep.subr.mxu0 0.0
    %4604 = vmatpush1.xpose.msra.mxu0 %v4571
    %4605 = vmatprep.subr.mxu0 0.0
    %4606 = vmatpush2.xpose.msra.mxu0 0.0
    %4607 = vmatprep.subr.mxu0 0.0
    %4608 = vmatpush2.xpose.msra.mxu0 0.0
    %4609 = vmatprep.subr.mxu0 0.0
    %4610 = vmatpush2.xpose.msra.mxu0 0.0
    %4611 = vmatprep.subr.mxu0 0.0
    %4612 = vmatpush2.xpose.msra.mxu0 0.0
    %4613 = vmatprep.subr.mxu0 0.0
    %4614 = vmatpush2.xpose.msra.mxu0 0.0
    %4615 = vmatprep.subr.mxu0 0.0
    %4616 = vmatpush2.xpose.msra.mxu0 0.0
    %4617 = vmatprep.subr.mxu0 0.0
    %4618 = vmatpush2.xpose.msra.mxu0 0.0
    %4619 = vmatprep.subr.mxu0 0.0
    %4620 = vmatpush2.xpose.msra.mxu0 0.0
    %4621 = vmatprep.subr.mxu0 0.0
    %4622 = vmatpush2.xpose.msra.mxu0 0.0
    %4623 = vmatprep.subr.mxu0 0.0
    %4624 = vmatpush2.xpose.msra.mxu0 0.0
    %4625 = vmatprep.subr.mxu0 0.0
    %4626 = vmatpush2.xpose.msra.mxu0 0.0
    %4627 = vmatprep.subr.mxu0 0.0
    %4628 = vmatpush2.xpose.msra.mxu0 0.0
    %4629 = vmatprep.subr.mxu0 0.0
    %4630 = vmatpush2.xpose.msra.mxu0 0.0
    %4631 = vmatprep.subr.mxu0 0.0
    %4632 = vmatpush2.xpose.msra.mxu0 0.0
    %4633 = vmatprep.subr.mxu0 0.0
    %4634 = vmatpush2.xpose.msra.mxu0 0.0
    %4635 = vmatprep.subr.mxu0 0.0
    %4636 = vmatpush2.xpose.msra.mxu0 0.0
    %4637 = vmatprep.mubr.f32.mxu0 0.0
    %4638 = vmatmul.mubr.f32.gmra.mxu0 %v4568
    %v4639 = vpop.f32.mrf.mxu0
    %v4640 = vadd.f32 0.0, %v4639
    %v4641 = vpop.f32.mrf.mxu0
    %4642 = vdwg.mxu0
    %v4644 = vsel %vm3654, %v1271, 0
    %v4647 = vsel %vm3654, %v2391, 0
    %4649 = vmatprep.subr.mxu0 0.0
    %4650 = vmatpush1.xpose.msra.mxu0 0.0
    %4651 = vmatprep.subr.mxu0 0.0
    %4652 = vmatpush1.xpose.msra.mxu0 0.0
    %4653 = vmatprep.subr.mxu0 0.0
    %4654 = vmatpush1.xpose.msra.mxu0 0.0
    %4655 = vmatprep.subr.mxu0 0.0
    %4656 = vmatpush1.xpose.msra.mxu0 0.0
    %4657 = vmatprep.subr.mxu0 0.0
    %4658 = vmatpush1.xpose.msra.mxu0 0.0
    %4659 = vmatprep.subr.mxu0 0.0
    %4660 = vmatpush1.xpose.msra.mxu0 0.0
    %4661 = vmatprep.subr.mxu0 0.0
    %4662 = vmatpush1.xpose.msra.mxu0 0.0
    %4663 = vmatprep.subr.mxu0 0.0
    %4664 = vmatpush1.xpose.msra.mxu0 0.0
    %4665 = vmatprep.subr.mxu0 0.0
    %4666 = vmatpush1.xpose.msra.mxu0 0.0
    %4667 = vmatprep.subr.mxu0 0.0
    %4668 = vmatpush1.xpose.msra.mxu0 0.0
    %4669 = vmatprep.subr.mxu0 0.0
    %4670 = vmatpush1.xpose.msra.mxu0 0.0
    %4671 = vmatprep.subr.mxu0 0.0
    %4672 = vmatpush1.xpose.msra.mxu0 0.0
    %4673 = vmatprep.subr.mxu0 0.0
    %4674 = vmatpush1.xpose.msra.mxu0 0.0
    %4675 = vmatprep.subr.mxu0 0.0
    %4676 = vmatpush1.xpose.msra.mxu0 0.0
    %4677 = vmatprep.subr.mxu0 0.0
    %4678 = vmatpush1.xpose.msra.mxu0 0.0
    %4679 = vmatprep.subr.mxu0 0.0
    %4680 = vmatpush1.xpose.msra.mxu0 %v4647
    %4681 = vmatprep.subr.mxu0 0.0
    %4682 = vmatpush2.xpose.msra.mxu0 0.0
    %4683 = vmatprep.subr.mxu0 0.0
    %4684 = vmatpush2.xpose.msra.mxu0 0.0
    %4685 = vmatprep.subr.mxu0 0.0
    %4686 = vmatpush2.xpose.msra.mxu0 0.0
    %4687 = vmatprep.subr.mxu0 0.0
    %4688 = vmatpush2.xpose.msra.mxu0 0.0
    %4689 = vmatprep.subr.mxu0 0.0
    %4690 = vmatpush2.xpose.msra.mxu0 0.0
    %4691 = vmatprep.subr.mxu0 0.0
    %4692 = vmatpush2.xpose.msra.mxu0 0.0
    %4693 = vmatprep.subr.mxu0 0.0
    %4694 = vmatpush2.xpose.msra.mxu0 0.0
    %4695 = vmatprep.subr.mxu0 0.0
    %4696 = vmatpush2.xpose.msra.mxu0 0.0
    %4697 = vmatprep.subr.mxu0 0.0
    %4698 = vmatpush2.xpose.msra.mxu0 0.0
    %4699 = vmatprep.subr.mxu0 0.0
    %4700 = vmatpush2.xpose.msra.mxu0 0.0
    %4701 = vmatprep.subr.mxu0 0.0
    %4702 = vmatpush2.xpose.msra.mxu0 0.0
    %4703 = vmatprep.subr.mxu0 0.0
    %4704 = vmatpush2.xpose.msra.mxu0 0.0
    %4705 = vmatprep.subr.mxu0 0.0
    %4706 = vmatpush2.xpose.msra.mxu0 0.0
    %4707 = vmatprep.subr.mxu0 0.0
    %4708 = vmatpush2.xpose.msra.mxu0 0.0
    %4709 = vmatprep.subr.mxu0 0.0
    %4710 = vmatpush2.xpose.msra.mxu0 0.0
    %4711 = vmatprep.subr.mxu0 0.0
    %4712 = vmatpush2.xpose.msra.mxu0 0.0
    %4713 = vmatprep.mubr.f32.mxu0 0.0
    %4714 = vmatmul.mubr.f32.gmra.mxu0 %v4644
    %v4715 = vpop.f32.mrf.mxu0
    %v4716 = vadd.f32 0.0, %v4715
    %v4717 = vpop.f32.mrf.mxu0
    %4718 = vdwg.mxu0
    %v4720 = vsel %vm3654, %v1341, 0
    %v4723 = vsel %vm3654, %v2461, 0
    %4725 = vmatprep.subr.mxu0 0.0
    %4726 = vmatpush1.xpose.msra.mxu0 0.0
    %4727 = vmatprep.subr.mxu0 0.0
    %4728 = vmatpush1.xpose.msra.mxu0 0.0
    %4729 = vmatprep.subr.mxu0 0.0
    %4730 = vmatpush1.xpose.msra.mxu0 0.0
    %4731 = vmatprep.subr.mxu0 0.0
    %4732 = vmatpush1.xpose.msra.mxu0 0.0
    %4733 = vmatprep.subr.mxu0 0.0
    %4734 = vmatpush1.xpose.msra.mxu0 0.0
    %4735 = vmatprep.subr.mxu0 0.0
    %4736 = vmatpush1.xpose.msra.mxu0 0.0
    %4737 = vmatprep.subr.mxu0 0.0
    %4738 = vmatpush1.xpose.msra.mxu0 0.0
    %4739 = vmatprep.subr.mxu0 0.0
    %4740 = vmatpush1.xpose.msra.mxu0 0.0
    %4741 = vmatprep.subr.mxu0 0.0
    %4742 = vmatpush1.xpose.msra.mxu0 0.0
    %4743 = vmatprep.subr.mxu0 0.0
    %4744 = vmatpush1.xpose.msra.mxu0 0.0
    %4745 = vmatprep.subr.mxu0 0.0
    %4746 = vmatpush1.xpose.msra.mxu0 0.0
    %4747 = vmatprep.subr.mxu0 0.0
    %4748 = vmatpush1.xpose.msra.mxu0 0.0
    %4749 = vmatprep.subr.mxu0 0.0
    %4750 = vmatpush1.xpose.msra.mxu0 0.0
    %4751 = vmatprep.subr.mxu0 0.0
    %4752 = vmatpush1.xpose.msra.mxu0 0.0
    %4753 = vmatprep.subr.mxu0 0.0
    %4754 = vmatpush1.xpose.msra.mxu0 0.0
    %4755 = vmatprep.subr.mxu0 0.0
    %4756 = vmatpush1.xpose.msra.mxu0 %v4723
    %4757 = vmatprep.subr.mxu0 0.0
    %4758 = vmatpush2.xpose.msra.mxu0 0.0
    %4759 = vmatprep.subr.mxu0 0.0
    %4760 = vmatpush2.xpose.msra.mxu0 0.0
    %4761 = vmatprep.subr.mxu0 0.0
    %4762 = vmatpush2.xpose.msra.mxu0 0.0
    %4763 = vmatprep.subr.mxu0 0.0
    %4764 = vmatpush2.xpose.msra.mxu0 0.0
    %4765 = vmatprep.subr.mxu0 0.0
    %4766 = vmatpush2.xpose.msra.mxu0 0.0
    %4767 = vmatprep.subr.mxu0 0.0
    %4768 = vmatpush2.xpose.msra.mxu0 0.0
    %4769 = vmatprep.subr.mxu0 0.0
    %4770 = vmatpush2.xpose.msra.mxu0 0.0
    %4771 = vmatprep.subr.mxu0 0.0
    %4772 = vmatpush2.xpose.msra.mxu0 0.0
    %4773 = vmatprep.subr.mxu0 0.0
    %4774 = vmatpush2.xpose.msra.mxu0 0.0
    %4775 = vmatprep.subr.mxu0 0.0
    %4776 = vmatpush2.xpose.msra.mxu0 0.0
    %4777 = vmatprep.subr.mxu0 0.0
    %4778 = vmatpush2.xpose.msra.mxu0 0.0
    %4779 = vmatprep.subr.mxu0 0.0
    %4780 = vmatpush2.xpose.msra.mxu0 0.0
    %4781 = vmatprep.subr.mxu0 0.0
    %4782 = vmatpush2.xpose.msra.mxu0 0.0
    %4783 = vmatprep.subr.mxu0 0.0
    %4784 = vmatpush2.xpose.msra.mxu0 0.0
    %4785 = vmatprep.subr.mxu0 0.0
    %4786 = vmatpush2.xpose.msra.mxu0 0.0
    %4787 = vmatprep.subr.mxu0 0.0
    %4788 = vmatpush2.xpose.msra.mxu0 0.0
    %4789 = vmatprep.mubr.f32.mxu0 0.0
    %4790 = vmatmul.mubr.f32.gmra.mxu0 %v4720
    %v4791 = vpop.f32.mrf.mxu0
    %v4792 = vadd.f32 0.0, %v4791
    %v4793 = vpop.f32.mrf.mxu0
    %4794 = vdwg.mxu0
    %v4796 = vsel %vm3654, %v1411, 0
    %v4799 = vsel %vm3654, %v2531, 0
    %4801 = vmatprep.subr.mxu0 0.0
    %4802 = vmatpush1.xpose.msra.mxu0 0.0
    %4803 = vmatprep.subr.mxu0 0.0
    %4804 = vmatpush1.xpose.msra.mxu0 0.0
    %4805 = vmatprep.subr.mxu0 0.0
    %4806 = vmatpush1.xpose.msra.mxu0 0.0
    %4807 = vmatprep.subr.mxu0 0.0
    %4808 = vmatpush1.xpose.msra.mxu0 0.0
    %4809 = vmatprep.subr.mxu0 0.0
    %4810 = vmatpush1.xpose.msra.mxu0 0.0
    %4811 = vmatprep.subr.mxu0 0.0
    %4812 = vmatpush1.xpose.msra.mxu0 0.0
    %4813 = vmatprep.subr.mxu0 0.0
    %4814 = vmatpush1.xpose.msra.mxu0 0.0
    %4815 = vmatprep.subr.mxu0 0.0
    %4816 = vmatpush1.xpose.msra.mxu0 0.0
    %4817 = vmatprep.subr.mxu0 0.0
    %4818 = vmatpush1.xpose.msra.mxu0 0.0
    %4819 = vmatprep.subr.mxu0 0.0
    %4820 = vmatpush1.xpose.msra.mxu0 0.0
    %4821 = vmatprep.subr.mxu0 0.0
    %4822 = vmatpush1.xpose.msra.mxu0 0.0
    %4823 = vmatprep.subr.mxu0 0.0
    %4824 = vmatpush1.xpose.msra.mxu0 0.0
    %4825 = vmatprep.subr.mxu0 0.0
    %4826 = vmatpush1.xpose.msra.mxu0 0.0
    %4827 = vmatprep.subr.mxu0 0.0
    %4828 = vmatpush1.xpose.msra.mxu0 0.0
    %4829 = vmatprep.subr.mxu0 0.0
    %4830 = vmatpush1.xpose.msra.mxu0 0.0
    %4831 = vmatprep.subr.mxu0 0.0
    %4832 = vmatpush1.xpose.msra.mxu0 %v4799
    %4833 = vmatprep.subr.mxu0 0.0
    %4834 = vmatpush2.xpose.msra.mxu0 0.0
    %4835 = vmatprep.subr.mxu0 0.0
    %4836 = vmatpush2.xpose.msra.mxu0 0.0
    %4837 = vmatprep.subr.mxu0 0.0
    %4838 = vmatpush2.xpose.msra.mxu0 0.0
    %4839 = vmatprep.subr.mxu0 0.0
    %4840 = vmatpush2.xpose.msra.mxu0 0.0
    %4841 = vmatprep.subr.mxu0 0.0
    %4842 = vmatpush2.xpose.msra.mxu0 0.0
    %4843 = vmatprep.subr.mxu0 0.0
    %4844 = vmatpush2.xpose.msra.mxu0 0.0
    %4845 = vmatprep.subr.mxu0 0.0
    %4846 = vmatpush2.xpose.msra.mxu0 0.0
    %4847 = vmatprep.subr.mxu0 0.0
    %4848 = vmatpush2.xpose.msra.mxu0 0.0
    %4849 = vmatprep.subr.mxu0 0.0
    %4850 = vmatpush2.xpose.msra.mxu0 0.0
    %4851 = vmatprep.subr.mxu0 0.0
    %4852 = vmatpush2.xpose.msra.mxu0 0.0
    %4853 = vmatprep.subr.mxu0 0.0
    %4854 = vmatpush2.xpose.msra.mxu0 0.0
    %4855 = vmatprep.subr.mxu0 0.0
    %4856 = vmatpush2.xpose.msra.mxu0 0.0
    %4857 = vmatprep.subr.mxu0 0.0
    %4858 = vmatpush2.xpose.msra.mxu0 0.0
    %4859 = vmatprep.subr.mxu0 0.0
    %4860 = vmatpush2.xpose.msra.mxu0 0.0
    %4861 = vmatprep.subr.mxu0 0.0
    %4862 = vmatpush2.xpose.msra.mxu0 0.0
    %4863 = vmatprep.subr.mxu0 0.0
    %4864 = vmatpush2.xpose.msra.mxu0 0.0
    %4865 = vmatprep.mubr.f32.mxu0 0.0
    %4866 = vmatmul.mubr.f32.gmra.mxu0 %v4796
    %v4867 = vpop.f32.mrf.mxu0
    %v4868 = vadd.f32 0.0, %v4867
    %v4869 = vpop.f32.mrf.mxu0
    %4870 = vdwg.mxu0
    %vm4871 = vcmask 64512
    %v4872 = vsel %vm4871, %v3728, -inf
    %4873 = vmax.xlane.f32.xlu0 %v4872
    %v4874 = vpop.xlane.xlu0 %4873
    %v4875 = vsel %vm4871, %v3804, -inf
    %4876 = vmax.xlane.f32.xlu0 %v4875
    %v4877 = vpop.xlane.xlu0 %4876
    %v4878 = vsel %vm4871, %v3880, -inf
    %4879 = vmax.xlane.f32.xlu0 %v4878
    %v4880 = vpop.xlane.xlu0 %4879
    %v4881 = vsel %vm4871, %v3956, -inf
    %4882 = vmax.xlane.f32.xlu0 %v4881
    %v4883 = vpop.xlane.xlu0 %4882
    %v4884 = vsel %vm4871, %v4032, -inf
    %4885 = vmax.xlane.f32.xlu0 %v4884
    %v4886 = vpop.xlane.xlu0 %4885
    %v4887 = vsel %vm4871, %v4108, -inf
    %4888 = vmax.xlane.f32.xlu0 %v4887
    %v4889 = vpop.xlane.xlu0 %4888
    %v4890 = vsel %vm4871, %v4184, -inf
    %4891 = vmax.xlane.f32.xlu0 %v4890
    %v4892 = vpop.xlane.xlu0 %4891
    %v4893 = vsel %vm4871, %v4260, -inf
    %4894 = vmax.xlane.f32.xlu0 %v4893
    %v4895 = vpop.xlane.xlu0 %4894
    %v4896 = vsel %vm4871, %v4336, -inf
    %4897 = vmax.xlane.f32.xlu0 %v4896
    %v4898 = vpop.xlane.xlu0 %4897
    %v4899 = vsel %vm4871, %v4412, -inf
    %4900 = vmax.xlane.f32.xlu0 %v4899
    %v4901 = vpop.xlane.xlu0 %4900
    %v4902 = vsel %vm4871, %v4488, -inf
    %4903 = vmax.xlane.f32.xlu0 %v4902
    %v4904 = vpop.xlane.xlu0 %4903
    %v4905 = vsel %vm4871, %v4564, -inf
    %4906 = vmax.xlane.f32.xlu0 %v4905
    %v4907 = vpop.xlane.xlu0 %4906
    %v4908 = vsel %vm4871, %v4640, -inf
    %4909 = vmax.xlane.f32.xlu0 %v4908
    %v4910 = vpop.xlane.xlu0 %4909
    %v4911 = vsel %vm4871, %v4716, -inf
    %4912 = vmax.xlane.f32.xlu0 %v4911
    %v4913 = vpop.xlane.xlu0 %4912
    %v4914 = vsel %vm4871, %v4792, -inf
    %4915 = vmax.xlane.f32.xlu0 %v4914
    %v4916 = vpop.xlane.xlu0 %4915
    %v4917 = vsel %vm4871, %v4868, -inf
    %4918 = vmax.xlane.f32.xlu0 %v4917
    %v4919 = vpop.xlane.xlu0 %4918
    %v4920 = vsub.f32 %v3728, %v4874
    %v4921 = vsub.f32 %v3804, %v4877
    %v4922 = vsub.f32 %v3880, %v4880
    %v4923 = vsub.f32 %v3956, %v4883
    %v4924 = vsub.f32 %v4032, %v4886
    %v4925 = vsub.f32 %v4108, %v4889
    %v4926 = vsub.f32 %v4184, %v4892
    %v4927 = vsub.f32 %v4260, %v4895
    %v4928 = vsub.f32 %v4336, %v4898
    %v4929 = vsub.f32 %v4412, %v4901
    %v4930 = vsub.f32 %v4488, %v4904
    %v4931 = vsub.f32 %v4564, %v4907
    %v4932 = vsub.f32 %v4640, %v4910
    %v4933 = vsub.f32 %v4716, %v4913
    %v4934 = vsub.f32 %v4792, %v4916
    %v4935 = vsub.f32 %v4868, %v4919
    %v4936 = vmul.f32 %v4920, 1.442695
    %v4937 = vpow.pop %v4936
    %v4938 = vmul.f32 %v4921, 1.442695
    %v4939 = vpow.pop %v4938
    %v4940 = vmul.f32 %v4922, 1.442695
    %v4941 = vpow.pop %v4940
    %v4942 = vmul.f32 %v4923, 1.442695
    %v4943 = vpow.pop %v4942
    %v4944 = vmul.f32 %v4924, 1.442695
    %v4945 = vpow.pop %v4944
    %v4946 = vmul.f32 %v4925, 1.442695
    %v4947 = vpow.pop %v4946
    %v4948 = vmul.f32 %v4926, 1.442695
    %v4949 = vpow.pop %v4948
    %v4950 = vmul.f32 %v4927, 1.442695
    %v4951 = vpow.pop %v4950
    %v4952 = vmul.f32 %v4928, 1.442695
    %v4953 = vpow.pop %v4952
    %v4954 = vmul.f32 %v4929, 1.442695
    %v4955 = vpow.pop %v4954
    %v4956 = vmul.f32 %v4930, 1.442695
    %v4957 = vpow.pop %v4956
    %v4958 = vmul.f32 %v4931, 1.442695
    %v4959 = vpow.pop %v4958
    %v4960 = vmul.f32 %v4932, 1.442695
    %v4961 = vpow.pop %v4960
    %v4962 = vmul.f32 %v4933, 1.442695
    %v4963 = vpow.pop %v4962
    %v4964 = vmul.f32 %v4934, 1.442695
    %v4965 = vpow.pop %v4964
    %v4966 = vmul.f32 %v4935, 1.442695
    %v4967 = vpow.pop %v4966
    %v4968 = vsel %vm4871, %v4937, 0.0
    %4969 = vadd.xlane.f32.xlu0 %v4968
    %v4970 = vpop.xlane.xlu0 %4969
    %v4971 = vsel %vm4871, %v4939, 0.0
    %4972 = vadd.xlane.f32.xlu0 %v4971
    %v4973 = vpop.xlane.xlu0 %4972
    %v4974 = vsel %vm4871, %v4941, 0.0
    %4975 = vadd.xlane.f32.xlu0 %v4974
    %v4976 = vpop.xlane.xlu0 %4975
    %v4977 = vsel %vm4871, %v4943, 0.0
    %4978 = vadd.xlane.f32.xlu0 %v4977
    %v4979 = vpop.xlane.xlu0 %4978
    %v4980 = vsel %vm4871, %v4945, 0.0
    %4981 = vadd.xlane.f32.xlu0 %v4980
    %v4982 = vpop.xlane.xlu0 %4981
    %v4983 = vsel %vm4871, %v4947, 0.0
    %4984 = vadd.xlane.f32.xlu0 %v4983
    %v4985 = vpop.xlane.xlu0 %4984
    %v4986 = vsel %vm4871, %v4949, 0.0
    %4987 = vadd.xlane.f32.xlu0 %v4986
    %v4988 = vpop.xlane.xlu0 %4987
    %v4989 = vsel %vm4871, %v4951, 0.0
    %4990 = vadd.xlane.f32.xlu0 %v4989
    %v4991 = vpop.xlane.xlu0 %4990
    %v4992 = vsel %vm4871, %v4953, 0.0
    %4993 = vadd.xlane.f32.xlu0 %v4992
    %v4994 = vpop.xlane.xlu0 %4993
    %v4995 = vsel %vm4871, %v4955, 0.0
    %4996 = vadd.xlane.f32.xlu0 %v4995
    %v4997 = vpop.xlane.xlu0 %4996
    %v4998 = vsel %vm4871, %v4957, 0.0
    %4999 = vadd.xlane.f32.xlu0 %v4998
    %v5000 = vpop.xlane.xlu0 %4999
    %v5001 = vsel %vm4871, %v4959, 0.0
    %5002 = vadd.xlane.f32.xlu0 %v5001
    %v5003 = vpop.xlane.xlu0 %5002
    %v5004 = vsel %vm4871, %v4961, 0.0
    %5005 = vadd.xlane.f32.xlu0 %v5004
    %v5006 = vpop.xlane.xlu0 %5005
    %v5007 = vsel %vm4871, %v4963, 0.0
    %5008 = vadd.xlane.f32.xlu0 %v5007
    %v5009 = vpop.xlane.xlu0 %5008
    %v5010 = vsel %vm4871, %v4965, 0.0
    %5011 = vadd.xlane.f32.xlu0 %v5010
    %v5012 = vpop.xlane.xlu0 %5011
    %v5013 = vsel %vm4871, %v4967, 0.0
    %5014 = vadd.xlane.f32.xlu0 %v5013
    %v5015 = vpop.xlane.xlu0 %5014
    %v5016 = vrcp.pop %v4970
    %v5017 = vrcp.pop %v4973
    %v5018 = vrcp.pop %v4976
    %v5019 = vrcp.pop %v4979
    %v5020 = vrcp.pop %v4982
    %v5021 = vrcp.pop %v4985
    %v5022 = vrcp.pop %v4988
    %v5023 = vrcp.pop %v4991
    %v5024 = vrcp.pop %v4994
    %v5025 = vrcp.pop %v4997
    %v5026 = vrcp.pop %v5000
    %v5027 = vrcp.pop %v5003
    %v5028 = vrcp.pop %v5006
    %v5029 = vrcp.pop %v5009
    %v5030 = vrcp.pop %v5012
    %v5031 = vrcp.pop %v5015
    %v5032 = vmul.f32 %v4937, %v5016
    %v5033 = vmul.f32 %v4939, %v5017
    %v5034 = vmul.f32 %v4941, %v5018
    %v5035 = vmul.f32 %v4943, %v5019
    %v5036 = vmul.f32 %v4945, %v5020
    %v5037 = vmul.f32 %v4947, %v5021
    %v5038 = vmul.f32 %v4949, %v5022
    %v5039 = vmul.f32 %v4951, %v5023
    %v5040 = vmul.f32 %v4953, %v5024
    %v5041 = vmul.f32 %v4955, %v5025
    %v5042 = vmul.f32 %v4957, %v5026
    %v5043 = vmul.f32 %v4959, %v5027
    %v5044 = vmul.f32 %v4961, %v5028
    %v5045 = vmul.f32 %v4963, %v5029
    %v5046 = vmul.f32 %v4965, %v5030
    %v5047 = vmul.f32 %v4967, %v5031
    %v5049 = vsel %vm4871, %v5032, 0
    %5051 = vmatprep.subr.mxu0 0.0
    %5052 = vmatpush1.msra.mxu0 0.0
    %5053 = vmatprep.subr.mxu0 0.0
    %5054 = vmatpush1.msra.mxu0 0.0
    %5055 = vmatprep.subr.mxu0 0.0
    %5056 = vmatpush1.msra.mxu0 0.0
    %5057 = vmatprep.subr.mxu0 0.0
    %5058 = vmatpush1.msra.mxu0 0.0
    %5059 = vmatprep.subr.mxu0 0.0
    %5060 = vmatpush1.msra.mxu0 0.0
    %5061 = vmatprep.subr.mxu0 0.0
    %5062 = vmatpush1.msra.mxu0 0.0
    %5063 = vmatprep.subr.mxu0 0.0
    %5064 = vmatpush1.msra.mxu0 0.0
    %5065 = vmatprep.subr.mxu0 0.0
    %5066 = vmatpush1.msra.mxu0 0.0
    %5067 = vmatprep.subr.mxu0 0.0
    %5068 = vmatpush1.msra.mxu0 0.0
    %5069 = vmatprep.subr.mxu0 0.0
    %5070 = vmatpush1.msra.mxu0 0.0
    %5071 = vmatprep.subr.mxu0 0.0
    %5072 = vmatpush1.msra.mxu0 0.0
    %5073 = vmatprep.subr.mxu0 0.0
    %5074 = vmatpush1.msra.mxu0 0.0
    %5075 = vmatprep.subr.mxu0 0.0
    %5076 = vmatpush1.msra.mxu0 0.0
    %5077 = vmatprep.subr.mxu0 0.0
    %5078 = vmatpush1.msra.mxu0 0.0
    %5079 = vmatprep.subr.mxu0 0.0
    %5080 = vmatpush1.msra.mxu0 0.0
    %5081 = vmatprep.subr.mxu0 0.0
    %5082 = vmatpush1.msra.mxu0 %v2601
    %5083 = vmatprep.subr.mxu0 0.0
    %5084 = vmatpush2.msra.mxu0 0.0
    %5085 = vmatprep.subr.mxu0 0.0
    %5086 = vmatpush2.msra.mxu0 0.0
    %5087 = vmatprep.subr.mxu0 0.0
    %5088 = vmatpush2.msra.mxu0 0.0
    %5089 = vmatprep.subr.mxu0 0.0
    %5090 = vmatpush2.msra.mxu0 0.0
    %5091 = vmatprep.subr.mxu0 0.0
    %5092 = vmatpush2.msra.mxu0 0.0
    %5093 = vmatprep.subr.mxu0 0.0
    %5094 = vmatpush2.msra.mxu0 0.0
    %5095 = vmatprep.subr.mxu0 0.0
    %5096 = vmatpush2.msra.mxu0 0.0
    %5097 = vmatprep.subr.mxu0 0.0
    %5098 = vmatpush2.msra.mxu0 0.0
    %5099 = vmatprep.subr.mxu0 0.0
    %5100 = vmatpush2.msra.mxu0 0.0
    %5101 = vmatprep.subr.mxu0 0.0
    %5102 = vmatpush2.msra.mxu0 0.0
    %5103 = vmatprep.subr.mxu0 0.0
    %5104 = vmatpush2.msra.mxu0 0.0
    %5105 = vmatprep.subr.mxu0 0.0
    %5106 = vmatpush2.msra.mxu0 0.0
    %5107 = vmatprep.subr.mxu0 0.0
    %5108 = vmatpush2.msra.mxu0 0.0
    %5109 = vmatprep.subr.mxu0 0.0
    %5110 = vmatpush2.msra.mxu0 0.0
    %5111 = vmatprep.subr.mxu0 0.0
    %5112 = vmatpush2.msra.mxu0 0.0
    %5113 = vmatprep.subr.mxu0 0.0
    %5114 = vmatpush2.msra.mxu0 0.0
    %5115 = vmatprep.mubr.f32.mxu0 0.0
    %5116 = vmatmul.mubr.f32.gmra.mxu0 %v5049
    %v5117 = vpop.f32.mrf.mxu0
    %v5118 = vadd.f32 0.0, %v5117
    %v5119 = vpop.f32.mrf.mxu0
    %5120 = vdwg.mxu0
    %v5122 = vsel %vm4871, %v5033, 0
    %5124 = vmatprep.subr.mxu0 0.0
    %5125 = vmatpush1.msra.mxu0 0.0
    %5126 = vmatprep.subr.mxu0 0.0
    %5127 = vmatpush1.msra.mxu0 0.0
    %5128 = vmatprep.subr.mxu0 0.0
    %5129 = vmatpush1.msra.mxu0 0.0
    %5130 = vmatprep.subr.mxu0 0.0
    %5131 = vmatpush1.msra.mxu0 0.0
    %5132 = vmatprep.subr.mxu0 0.0
    %5133 = vmatpush1.msra.mxu0 0.0
    %5134 = vmatprep.subr.mxu0 0.0
    %5135 = vmatpush1.msra.mxu0 0.0
    %5136 = vmatprep.subr.mxu0 0.0
    %5137 = vmatpush1.msra.mxu0 0.0
    %5138 = vmatprep.subr.mxu0 0.0
    %5139 = vmatpush1.msra.mxu0 0.0
    %5140 = vmatprep.subr.mxu0 0.0
    %5141 = vmatpush1.msra.mxu0 0.0
    %5142 = vmatprep.subr.mxu0 0.0
    %5143 = vmatpush1.msra.mxu0 0.0
    %5144 = vmatprep.subr.mxu0 0.0
    %5145 = vmatpush1.msra.mxu0 0.0
    %5146 = vmatprep.subr.mxu0 0.0
    %5147 = vmatpush1.msra.mxu0 0.0
    %5148 = vmatprep.subr.mxu0 0.0
    %5149 = vmatpush1.msra.mxu0 0.0
    %5150 = vmatprep.subr.mxu0 0.0
    %5151 = vmatpush1.msra.mxu0 0.0
    %5152 = vmatprep.subr.mxu0 0.0
    %5153 = vmatpush1.msra.mxu0 0.0
    %5154 = vmatprep.subr.mxu0 0.0
    %5155 = vmatpush1.msra.mxu0 %v2671
    %5156 = vmatprep.subr.mxu0 0.0
    %5157 = vmatpush2.msra.mxu0 0.0
    %5158 = vmatprep.subr.mxu0 0.0
    %5159 = vmatpush2.msra.mxu0 0.0
    %5160 = vmatprep.subr.mxu0 0.0
    %5161 = vmatpush2.msra.mxu0 0.0
    %5162 = vmatprep.subr.mxu0 0.0
    %5163 = vmatpush2.msra.mxu0 0.0
    %5164 = vmatprep.subr.mxu0 0.0
    %5165 = vmatpush2.msra.mxu0 0.0
    %5166 = vmatprep.subr.mxu0 0.0
    %5167 = vmatpush2.msra.mxu0 0.0
    %5168 = vmatprep.subr.mxu0 0.0
    %5169 = vmatpush2.msra.mxu0 0.0
    %5170 = vmatprep.subr.mxu0 0.0
    %5171 = vmatpush2.msra.mxu0 0.0
    %5172 = vmatprep.subr.mxu0 0.0
    %5173 = vmatpush2.msra.mxu0 0.0
    %5174 = vmatprep.subr.mxu0 0.0
    %5175 = vmatpush2.msra.mxu0 0.0
    %5176 = vmatprep.subr.mxu0 0.0
    %5177 = vmatpush2.msra.mxu0 0.0
    %5178 = vmatprep.subr.mxu0 0.0
    %5179 = vmatpush2.msra.mxu0 0.0
    %5180 = vmatprep.subr.mxu0 0.0
    %5181 = vmatpush2.msra.mxu0 0.0
    %5182 = vmatprep.subr.mxu0 0.0
    %5183 = vmatpush2.msra.mxu0 0.0
    %5184 = vmatprep.subr.mxu0 0.0
    %5185 = vmatpush2.msra.mxu0 0.0
    %5186 = vmatprep.subr.mxu0 0.0
    %5187 = vmatpush2.msra.mxu0 0.0
    %5188 = vmatprep.mubr.f32.mxu0 0.0
    %5189 = vmatmul.mubr.f32.gmra.mxu0 %v5122
    %v5190 = vpop.f32.mrf.mxu0
    %v5191 = vadd.f32 0.0, %v5190
    %v5192 = vpop.f32.mrf.mxu0
    %5193 = vdwg.mxu0
    %v5195 = vsel %vm4871, %v5034, 0
    %5197 = vmatprep.subr.mxu0 0.0
    %5198 = vmatpush1.msra.mxu0 0.0
    %5199 = vmatprep.subr.mxu0 0.0
    %5200 = vmatpush1.msra.mxu0 0.0
    %5201 = vmatprep.subr.mxu0 0.0
    %5202 = vmatpush1.msra.mxu0 0.0
    %5203 = vmatprep.subr.mxu0 0.0
    %5204 = vmatpush1.msra.mxu0 0.0
    %5205 = vmatprep.subr.mxu0 0.0
    %5206 = vmatpush1.msra.mxu0 0.0
    %5207 = vmatprep.subr.mxu0 0.0
    %5208 = vmatpush1.msra.mxu0 0.0
    %5209 = vmatprep.subr.mxu0 0.0
    %5210 = vmatpush1.msra.mxu0 0.0
    %5211 = vmatprep.subr.mxu0 0.0
    %5212 = vmatpush1.msra.mxu0 0.0
    %5213 = vmatprep.subr.mxu0 0.0
    %5214 = vmatpush1.msra.mxu0 0.0
    %5215 = vmatprep.subr.mxu0 0.0
    %5216 = vmatpush1.msra.mxu0 0.0
    %5217 = vmatprep.subr.mxu0 0.0
    %5218 = vmatpush1.msra.mxu0 0.0
    %5219 = vmatprep.subr.mxu0 0.0
    %5220 = vmatpush1.msra.mxu0 0.0
    %5221 = vmatprep.subr.mxu0 0.0
    %5222 = vmatpush1.msra.mxu0 0.0
    %5223 = vmatprep.subr.mxu0 0.0
    %5224 = vmatpush1.msra.mxu0 0.0
    %5225 = vmatprep.subr.mxu0 0.0
    %5226 = vmatpush1.msra.mxu0 0.0
    %5227 = vmatprep.subr.mxu0 0.0
    %5228 = vmatpush1.msra.mxu0 %v2741
    %5229 = vmatprep.subr.mxu0 0.0
    %5230 = vmatpush2.msra.mxu0 0.0
    %5231 = vmatprep.subr.mxu0 0.0
    %5232 = vmatpush2.msra.mxu0 0.0
    %5233 = vmatprep.subr.mxu0 0.0
    %5234 = vmatpush2.msra.mxu0 0.0
    %5235 = vmatprep.subr.mxu0 0.0
    %5236 = vmatpush2.msra.mxu0 0.0
    %5237 = vmatprep.subr.mxu0 0.0
    %5238 = vmatpush2.msra.mxu0 0.0
    %5239 = vmatprep.subr.mxu0 0.0
    %5240 = vmatpush2.msra.mxu0 0.0
    %5241 = vmatprep.subr.mxu0 0.0
    %5242 = vmatpush2.msra.mxu0 0.0
    %5243 = vmatprep.subr.mxu0 0.0
    %5244 = vmatpush2.msra.mxu0 0.0
    %5245 = vmatprep.subr.mxu0 0.0
    %5246 = vmatpush2.msra.mxu0 0.0
    %5247 = vmatprep.subr.mxu0 0.0
    %5248 = vmatpush2.msra.mxu0 0.0
    %5249 = vmatprep.subr.mxu0 0.0
    %5250 = vmatpush2.msra.mxu0 0.0
    %5251 = vmatprep.subr.mxu0 0.0
    %5252 = vmatpush2.msra.mxu0 0.0
    %5253 = vmatprep.subr.mxu0 0.0
    %5254 = vmatpush2.msra.mxu0 0.0
    %5255 = vmatprep.subr.mxu0 0.0
    %5256 = vmatpush2.msra.mxu0 0.0
    %5257 = vmatprep.subr.mxu0 0.0
    %5258 = vmatpush2.msra.mxu0 0.0
    %5259 = vmatprep.subr.mxu0 0.0
    %5260 = vmatpush2.msra.mxu0 0.0
    %5261 = vmatprep.mubr.f32.mxu0 0.0
    %5262 = vmatmul.mubr.f32.gmra.mxu0 %v5195
    %v5263 = vpop.f32.mrf.mxu0
    %v5264 = vadd.f32 0.0, %v5263
    %v5265 = vpop.f32.mrf.mxu0
    %5266 = vdwg.mxu0
    %v5268 = vsel %vm4871, %v5035, 0
    %5270 = vmatprep.subr.mxu0 0.0
    %5271 = vmatpush1.msra.mxu0 0.0
    %5272 = vmatprep.subr.mxu0 0.0
    %5273 = vmatpush1.msra.mxu0 0.0
    %5274 = vmatprep.subr.mxu0 0.0
    %5275 = vmatpush1.msra.mxu0 0.0
    %5276 = vmatprep.subr.mxu0 0.0
    %5277 = vmatpush1.msra.mxu0 0.0
    %5278 = vmatprep.subr.mxu0 0.0
    %5279 = vmatpush1.msra.mxu0 0.0
    %5280 = vmatprep.subr.mxu0 0.0
    %5281 = vmatpush1.msra.mxu0 0.0
    %5282 = vmatprep.subr.mxu0 0.0
    %5283 = vmatpush1.msra.mxu0 0.0
    %5284 = vmatprep.subr.mxu0 0.0
    %5285 = vmatpush1.msra.mxu0 0.0
    %5286 = vmatprep.subr.mxu0 0.0
    %5287 = vmatpush1.msra.mxu0 0.0
    %5288 = vmatprep.subr.mxu0 0.0
    %5289 = vmatpush1.msra.mxu0 0.0
    %5290 = vmatprep.subr.mxu0 0.0
    %5291 = vmatpush1.msra.mxu0 0.0
    %5292 = vmatprep.subr.mxu0 0.0
    %5293 = vmatpush1.msra.mxu0 0.0
    %5294 = vmatprep.subr.mxu0 0.0
    %5295 = vmatpush1.msra.mxu0 0.0
    %5296 = vmatprep.subr.mxu0 0.0
    %5297 = vmatpush1.msra.mxu0 0.0
    %5298 = vmatprep.subr.mxu0 0.0
    %5299 = vmatpush1.msra.mxu0 0.0
    %5300 = vmatprep.subr.mxu0 0.0
    %5301 = vmatpush1.msra.mxu0 %v2811
    %5302 = vmatprep.subr.mxu0 0.0
    %5303 = vmatpush2.msra.mxu0 0.0
    %5304 = vmatprep.subr.mxu0 0.0
    %5305 = vmatpush2.msra.mxu0 0.0
    %5306 = vmatprep.subr.mxu0 0.0
    %5307 = vmatpush2.msra.mxu0 0.0
    %5308 = vmatprep.subr.mxu0 0.0
    %5309 = vmatpush2.msra.mxu0 0.0
    %5310 = vmatprep.subr.mxu0 0.0
    %5311 = vmatpush2.msra.mxu0 0.0
    %5312 = vmatprep.subr.mxu0 0.0
    %5313 = vmatpush2.msra.mxu0 0.0
    %5314 = vmatprep.subr.mxu0 0.0
    %5315 = vmatpush2.msra.mxu0 0.0
    %5316 = vmatprep.subr.mxu0 0.0
    %5317 = vmatpush2.msra.mxu0 0.0
    %5318 = vmatprep.subr.mxu0 0.0
    %5319 = vmatpush2.msra.mxu0 0.0
    %5320 = vmatprep.subr.mxu0 0.0
    %5321 = vmatpush2.msra.mxu0 0.0
    %5322 = vmatprep.subr.mxu0 0.0
    %5323 = vmatpush2.msra.mxu0 0.0
    %5324 = vmatprep.subr.mxu0 0.0
    %5325 = vmatpush2.msra.mxu0 0.0
    %5326 = vmatprep.subr.mxu0 0.0
    %5327 = vmatpush2.msra.mxu0 0.0
    %5328 = vmatprep.subr.mxu0 0.0
    %5329 = vmatpush2.msra.mxu0 0.0
    %5330 = vmatprep.subr.mxu0 0.0
    %5331 = vmatpush2.msra.mxu0 0.0
    %5332 = vmatprep.subr.mxu0 0.0
    %5333 = vmatpush2.msra.mxu0 0.0
    %5334 = vmatprep.mubr.f32.mxu0 0.0
    %5335 = vmatmul.mubr.f32.gmra.mxu0 %v5268
    %v5336 = vpop.f32.mrf.mxu0
    %v5337 = vadd.f32 0.0, %v5336
    %v5338 = vpop.f32.mrf.mxu0
    %5339 = vdwg.mxu0
    %v5341 = vsel %vm4871, %v5036, 0
    %5343 = vmatprep.subr.mxu0 0.0
    %5344 = vmatpush1.msra.mxu0 0.0
    %5345 = vmatprep.subr.mxu0 0.0
    %5346 = vmatpush1.msra.mxu0 0.0
    %5347 = vmatprep.subr.mxu0 0.0
    %5348 = vmatpush1.msra.mxu0 0.0
    %5349 = vmatprep.subr.mxu0 0.0
    %5350 = vmatpush1.msra.mxu0 0.0
    %5351 = vmatprep.subr.mxu0 0.0
    %5352 = vmatpush1.msra.mxu0 0.0
    %5353 = vmatprep.subr.mxu0 0.0
    %5354 = vmatpush1.msra.mxu0 0.0
    %5355 = vmatprep.subr.mxu0 0.0
    %5356 = vmatpush1.msra.mxu0 0.0
    %5357 = vmatprep.subr.mxu0 0.0
    %5358 = vmatpush1.msra.mxu0 0.0
    %5359 = vmatprep.subr.mxu0 0.0
    %5360 = vmatpush1.msra.mxu0 0.0
    %5361 = vmatprep.subr.mxu0 0.0
    %5362 = vmatpush1.msra.mxu0 0.0
    %5363 = vmatprep.subr.mxu0 0.0
    %5364 = vmatpush1.msra.mxu0 0.0
    %5365 = vmatprep.subr.mxu0 0.0
    %5366 = vmatpush1.msra.mxu0 0.0
    %5367 = vmatprep.subr.mxu0 0.0
    %5368 = vmatpush1.msra.mxu0 0.0
    %5369 = vmatprep.subr.mxu0 0.0
    %5370 = vmatpush1.msra.mxu0 0.0
    %5371 = vmatprep.subr.mxu0 0.0
    %5372 = vmatpush1.msra.mxu0 0.0
    %5373 = vmatprep.subr.mxu0 0.0
    %5374 = vmatpush1.msra.mxu0 %v2881
    %5375 = vmatprep.subr.mxu0 0.0
    %5376 = vmatpush2.msra.mxu0 0.0
    %5377 = vmatprep.subr.mxu0 0.0
    %5378 = vmatpush2.msra.mxu0 0.0
    %5379 = vmatprep.subr.mxu0 0.0
    %5380 = vmatpush2.msra.mxu0 0.0
    %5381 = vmatprep.subr.mxu0 0.0
    %5382 = vmatpush2.msra.mxu0 0.0
    %5383 = vmatprep.subr.mxu0 0.0
    %5384 = vmatpush2.msra.mxu0 0.0
    %5385 = vmatprep.subr.mxu0 0.0
    %5386 = vmatpush2.msra.mxu0 0.0
    %5387 = vmatprep.subr.mxu0 0.0
    %5388 = vmatpush2.msra.mxu0 0.0
    %5389 = vmatprep.subr.mxu0 0.0
    %5390 = vmatpush2.msra.mxu0 0.0
    %5391 = vmatprep.subr.mxu0 0.0
    %5392 = vmatpush2.msra.mxu0 0.0
    %5393 = vmatprep.subr.mxu0 0.0
    %5394 = vmatpush2.msra.mxu0 0.0
    %5395 = vmatprep.subr.mxu0 0.0
    %5396 = vmatpush2.msra.mxu0 0.0
    %5397 = vmatprep.subr.mxu0 0.0
    %5398 = vmatpush2.msra.mxu0 0.0
    %5399 = vmatprep.subr.mxu0 0.0
    %5400 = vmatpush2.msra.mxu0 0.0
    %5401 = vmatprep.subr.mxu0 0.0
    %5402 = vmatpush2.msra.mxu0 0.0
    %5403 = vmatprep.subr.mxu0 0.0
    %5404 = vmatpush2.msra.mxu0 0.0
    %5405 = vmatprep.subr.mxu0 0.0
    %5406 = vmatpush2.msra.mxu0 0.0
    %5407 = vmatprep.mubr.f32.mxu0 0.0
    %5408 = vmatmul.mubr.f32.gmra.mxu0 %v5341
    %v5409 = vpop.f32.mrf.mxu0
    %v5410 = vadd.f32 0.0, %v5409
    %v5411 = vpop.f32.mrf.mxu0
    %5412 = vdwg.mxu0
    %v5414 = vsel %vm4871, %v5037, 0
    %5416 = vmatprep.subr.mxu0 0.0
    %5417 = vmatpush1.msra.mxu0 0.0
    %5418 = vmatprep.subr.mxu0 0.0
    %5419 = vmatpush1.msra.mxu0 0.0
    %5420 = vmatprep.subr.mxu0 0.0
    %5421 = vmatpush1.msra.mxu0 0.0
    %5422 = vmatprep.subr.mxu0 0.0
    %5423 = vmatpush1.msra.mxu0 0.0
    %5424 = vmatprep.subr.mxu0 0.0
    %5425 = vmatpush1.msra.mxu0 0.0
    %5426 = vmatprep.subr.mxu0 0.0
    %5427 = vmatpush1.msra.mxu0 0.0
    %5428 = vmatprep.subr.mxu0 0.0
    %5429 = vmatpush1.msra.mxu0 0.0
    %5430 = vmatprep.subr.mxu0 0.0
    %5431 = vmatpush1.msra.mxu0 0.0
    %5432 = vmatprep.subr.mxu0 0.0
    %5433 = vmatpush1.msra.mxu0 0.0
    %5434 = vmatprep.subr.mxu0 0.0
    %5435 = vmatpush1.msra.mxu0 0.0
    %5436 = vmatprep.subr.mxu0 0.0
    %5437 = vmatpush1.msra.mxu0 0.0
    %5438 = vmatprep.subr.mxu0 0.0
    %5439 = vmatpush1.msra.mxu0 0.0
    %5440 = vmatprep.subr.mxu0 0.0
    %5441 = vmatpush1.msra.mxu0 0.0
    %5442 = vmatprep.subr.mxu0 0.0
    %5443 = vmatpush1.msra.mxu0 0.0
    %5444 = vmatprep.subr.mxu0 0.0
    %5445 = vmatpush1.msra.mxu0 0.0
    %5446 = vmatprep.subr.mxu0 0.0
    %5447 = vmatpush1.msra.mxu0 %v2951
    %5448 = vmatprep.subr.mxu0 0.0
    %5449 = vmatpush2.msra.mxu0 0.0
    %5450 = vmatprep.subr.mxu0 0.0
    %5451 = vmatpush2.msra.mxu0 0.0
    %5452 = vmatprep.subr.mxu0 0.0
    %5453 = vmatpush2.msra.mxu0 0.0
    %5454 = vmatprep.subr.mxu0 0.0
    %5455 = vmatpush2.msra.mxu0 0.0
    %5456 = vmatprep.subr.mxu0 0.0
    %5457 = vmatpush2.msra.mxu0 0.0
    %5458 = vmatprep.subr.mxu0 0.0
    %5459 = vmatpush2.msra.mxu0 0.0
    %5460 = vmatprep.subr.mxu0 0.0
    %5461 = vmatpush2.msra.mxu0 0.0
    %5462 = vmatprep.subr.mxu0 0.0
    %5463 = vmatpush2.msra.mxu0 0.0
    %5464 = vmatprep.subr.mxu0 0.0
    %5465 = vmatpush2.msra.mxu0 0.0
    %5466 = vmatprep.subr.mxu0 0.0
    %5467 = vmatpush2.msra.mxu0 0.0
    %5468 = vmatprep.subr.mxu0 0.0
    %5469 = vmatpush2.msra.mxu0 0.0
    %5470 = vmatprep.subr.mxu0 0.0
    %5471 = vmatpush2.msra.mxu0 0.0
    %5472 = vmatprep.subr.mxu0 0.0
    %5473 = vmatpush2.msra.mxu0 0.0
    %5474 = vmatprep.subr.mxu0 0.0
    %5475 = vmatpush2.msra.mxu0 0.0
    %5476 = vmatprep.subr.mxu0 0.0
    %5477 = vmatpush2.msra.mxu0 0.0
    %5478 = vmatprep.subr.mxu0 0.0
    %5479 = vmatpush2.msra.mxu0 0.0
    %5480 = vmatprep.mubr.f32.mxu0 0.0
    %5481 = vmatmul.mubr.f32.gmra.mxu0 %v5414
    %v5482 = vpop.f32.mrf.mxu0
    %v5483 = vadd.f32 0.0, %v5482
    %v5484 = vpop.f32.mrf.mxu0
    %5485 = vdwg.mxu0
    %v5487 = vsel %vm4871, %v5038, 0
    %5489 = vmatprep.subr.mxu0 0.0
    %5490 = vmatpush1.msra.mxu0 0.0
    %5491 = vmatprep.subr.mxu0 0.0
    %5492 = vmatpush1.msra.mxu0 0.0
    %5493 = vmatprep.subr.mxu0 0.0
    %5494 = vmatpush1.msra.mxu0 0.0
    %5495 = vmatprep.subr.mxu0 0.0
    %5496 = vmatpush1.msra.mxu0 0.0
    %5497 = vmatprep.subr.mxu0 0.0
    %5498 = vmatpush1.msra.mxu0 0.0
    %5499 = vmatprep.subr.mxu0 0.0
    %5500 = vmatpush1.msra.mxu0 0.0
    %5501 = vmatprep.subr.mxu0 0.0
    %5502 = vmatpush1.msra.mxu0 0.0
    %5503 = vmatprep.subr.mxu0 0.0
    %5504 = vmatpush1.msra.mxu0 0.0
    %5505 = vmatprep.subr.mxu0 0.0
    %5506 = vmatpush1.msra.mxu0 0.0
    %5507 = vmatprep.subr.mxu0 0.0
    %5508 = vmatpush1.msra.mxu0 0.0
    %5509 = vmatprep.subr.mxu0 0.0
    %5510 = vmatpush1.msra.mxu0 0.0
    %5511 = vmatprep.subr.mxu0 0.0
    %5512 = vmatpush1.msra.mxu0 0.0
    %5513 = vmatprep.subr.mxu0 0.0
    %5514 = vmatpush1.msra.mxu0 0.0
    %5515 = vmatprep.subr.mxu0 0.0
    %5516 = vmatpush1.msra.mxu0 0.0
    %5517 = vmatprep.subr.mxu0 0.0
    %5518 = vmatpush1.msra.mxu0 0.0
    %5519 = vmatprep.subr.mxu0 0.0
    %5520 = vmatpush1.msra.mxu0 %v3021
    %5521 = vmatprep.subr.mxu0 0.0
    %5522 = vmatpush2.msra.mxu0 0.0
    %5523 = vmatprep.subr.mxu0 0.0
    %5524 = vmatpush2.msra.mxu0 0.0
    %5525 = vmatprep.subr.mxu0 0.0
    %5526 = vmatpush2.msra.mxu0 0.0
    %5527 = vmatprep.subr.mxu0 0.0
    %5528 = vmatpush2.msra.mxu0 0.0
    %5529 = vmatprep.subr.mxu0 0.0
    %5530 = vmatpush2.msra.mxu0 0.0
    %5531 = vmatprep.subr.mxu0 0.0
    %5532 = vmatpush2.msra.mxu0 0.0
    %5533 = vmatprep.subr.mxu0 0.0
    %5534 = vmatpush2.msra.mxu0 0.0
    %5535 = vmatprep.subr.mxu0 0.0
    %5536 = vmatpush2.msra.mxu0 0.0
    %5537 = vmatprep.subr.mxu0 0.0
    %5538 = vmatpush2.msra.mxu0 0.0
    %5539 = vmatprep.subr.mxu0 0.0
    %5540 = vmatpush2.msra.mxu0 0.0
    %5541 = vmatprep.subr.mxu0 0.0
    %5542 = vmatpush2.msra.mxu0 0.0
    %5543 = vmatprep.subr.mxu0 0.0
    %5544 = vmatpush2.msra.mxu0 0.0
    %5545 = vmatprep.subr.mxu0 0.0
    %5546 = vmatpush2.msra.mxu0 0.0
    %5547 = vmatprep.subr.mxu0 0.0
    %5548 = vmatpush2.msra.mxu0 0.0
    %5549 = vmatprep.subr.mxu0 0.0
    %5550 = vmatpush2.msra.mxu0 0.0
    %5551 = vmatprep.subr.mxu0 0.0
    %5552 = vmatpush2.msra.mxu0 0.0
    %5553 = vmatprep.mubr.f32.mxu0 0.0
    %5554 = vmatmul.mubr.f32.gmra.mxu0 %v5487
    %v5555 = vpop.f32.mrf.mxu0
    %v5556 = vadd.f32 0.0, %v5555
    %v5557 = vpop.f32.mrf.mxu0
    %5558 = vdwg.mxu0
    %v5560 = vsel %vm4871, %v5039, 0
    %5562 = vmatprep.subr.mxu0 0.0
    %5563 = vmatpush1.msra.mxu0 0.0
    %5564 = vmatprep.subr.mxu0 0.0
    %5565 = vmatpush1.msra.mxu0 0.0
    %5566 = vmatprep.subr.mxu0 0.0
    %5567 = vmatpush1.msra.mxu0 0.0
    %5568 = vmatprep.subr.mxu0 0.0
    %5569 = vmatpush1.msra.mxu0 0.0
    %5570 = vmatprep.subr.mxu0 0.0
    %5571 = vmatpush1.msra.mxu0 0.0
    %5572 = vmatprep.subr.mxu0 0.0
    %5573 = vmatpush1.msra.mxu0 0.0
    %5574 = vmatprep.subr.mxu0 0.0
    %5575 = vmatpush1.msra.mxu0 0.0
    %5576 = vmatprep.subr.mxu0 0.0
    %5577 = vmatpush1.msra.mxu0 0.0
    %5578 = vmatprep.subr.mxu0 0.0
    %5579 = vmatpush1.msra.mxu0 0.0
    %5580 = vmatprep.subr.mxu0 0.0
    %5581 = vmatpush1.msra.mxu0 0.0
    %5582 = vmatprep.subr.mxu0 0.0
    %5583 = vmatpush1.msra.mxu0 0.0
    %5584 = vmatprep.subr.mxu0 0.0
    %5585 = vmatpush1.msra.mxu0 0.0
    %5586 = vmatprep.subr.mxu0 0.0
    %5587 = vmatpush1.msra.mxu0 0.0
    %5588 = vmatprep.subr.mxu0 0.0
    %5589 = vmatpush1.msra.mxu0 0.0
    %5590 = vmatprep.subr.mxu0 0.0
    %5591 = vmatpush1.msra.mxu0 0.0
    %5592 = vmatprep.subr.mxu0 0.0
    %5593 = vmatpush1.msra.mxu0 %v3091
    %5594 = vmatprep.subr.mxu0 0.0
    %5595 = vmatpush2.msra.mxu0 0.0
    %5596 = vmatprep.subr.mxu0 0.0
    %5597 = vmatpush2.msra.mxu0 0.0
    %5598 = vmatprep.subr.mxu0 0.0
    %5599 = vmatpush2.msra.mxu0 0.0
    %5600 = vmatprep.subr.mxu0 0.0
    %5601 = vmatpush2.msra.mxu0 0.0
    %5602 = vmatprep.subr.mxu0 0.0
    %5603 = vmatpush2.msra.mxu0 0.0
    %5604 = vmatprep.subr.mxu0 0.0
    %5605 = vmatpush2.msra.mxu0 0.0
    %5606 = vmatprep.subr.mxu0 0.0
    %5607 = vmatpush2.msra.mxu0 0.0
    %5608 = vmatprep.subr.mxu0 0.0
    %5609 = vmatpush2.msra.mxu0 0.0
    %5610 = vmatprep.subr.mxu0 0.0
    %5611 = vmatpush2.msra.mxu0 0.0
    %5612 = vmatprep.subr.mxu0 0.0
    %5613 = vmatpush2.msra.mxu0 0.0
    %5614 = vmatprep.subr.mxu0 0.0
    %5615 = vmatpush2.msra.mxu0 0.0
    %5616 = vmatprep.subr.mxu0 0.0
    %5617 = vmatpush2.msra.mxu0 0.0
    %5618 = vmatprep.subr.mxu0 0.0
    %5619 = vmatpush2.msra.mxu0 0.0
    %5620 = vmatprep.subr.mxu0 0.0
    %5621 = vmatpush2.msra.mxu0 0.0
    %5622 = vmatprep.subr.mxu0 0.0
    %5623 = vmatpush2.msra.mxu0 0.0
    %5624 = vmatprep.subr.mxu0 0.0
    %5625 = vmatpush2.msra.mxu0 0.0
    %5626 = vmatprep.mubr.f32.mxu0 0.0
    %5627 = vmatmul.mubr.f32.gmra.mxu0 %v5560
    %v5628 = vpop.f32.mrf.mxu0
    %v5629 = vadd.f32 0.0, %v5628
    %v5630 = vpop.f32.mrf.mxu0
    %5631 = vdwg.mxu0
    %v5633 = vsel %vm4871, %v5040, 0
    %5635 = vmatprep.subr.mxu0 0.0
    %5636 = vmatpush1.msra.mxu0 0.0
    %5637 = vmatprep.subr.mxu0 0.0
    %5638 = vmatpush1.msra.mxu0 0.0
    %5639 = vmatprep.subr.mxu0 0.0
    %5640 = vmatpush1.msra.mxu0 0.0
    %5641 = vmatprep.subr.mxu0 0.0
    %5642 = vmatpush1.msra.mxu0 0.0
    %5643 = vmatprep.subr.mxu0 0.0
    %5644 = vmatpush1.msra.mxu0 0.0
    %5645 = vmatprep.subr.mxu0 0.0
    %5646 = vmatpush1.msra.mxu0 0.0
    %5647 = vmatprep.subr.mxu0 0.0
    %5648 = vmatpush1.msra.mxu0 0.0
    %5649 = vmatprep.subr.mxu0 0.0
    %5650 = vmatpush1.msra.mxu0 0.0
    %5651 = vmatprep.subr.mxu0 0.0
    %5652 = vmatpush1.msra.mxu0 0.0
    %5653 = vmatprep.subr.mxu0 0.0
    %5654 = vmatpush1.msra.mxu0 0.0
    %5655 = vmatprep.subr.mxu0 0.0
    %5656 = vmatpush1.msra.mxu0 0.0
    %5657 = vmatprep.subr.mxu0 0.0
    %5658 = vmatpush1.msra.mxu0 0.0
    %5659 = vmatprep.subr.mxu0 0.0
    %5660 = vmatpush1.msra.mxu0 0.0
    %5661 = vmatprep.subr.mxu0 0.0
    %5662 = vmatpush1.msra.mxu0 0.0
    %5663 = vmatprep.subr.mxu0 0.0
    %5664 = vmatpush1.msra.mxu0 0.0
    %5665 = vmatprep.subr.mxu0 0.0
    %5666 = vmatpush1.msra.mxu0 %v3161
    %5667 = vmatprep.subr.mxu0 0.0
    %5668 = vmatpush2.msra.mxu0 0.0
    %5669 = vmatprep.subr.mxu0 0.0
    %5670 = vmatpush2.msra.mxu0 0.0
    %5671 = vmatprep.subr.mxu0 0.0
    %5672 = vmatpush2.msra.mxu0 0.0
    %5673 = vmatprep.subr.mxu0 0.0
    %5674 = vmatpush2.msra.mxu0 0.0
    %5675 = vmatprep.subr.mxu0 0.0
    %5676 = vmatpush2.msra.mxu0 0.0
    %5677 = vmatprep.subr.mxu0 0.0
    %5678 = vmatpush2.msra.mxu0 0.0
    %5679 = vmatprep.subr.mxu0 0.0
    %5680 = vmatpush2.msra.mxu0 0.0
    %5681 = vmatprep.subr.mxu0 0.0
    %5682 = vmatpush2.msra.mxu0 0.0
    %5683 = vmatprep.subr.mxu0 0.0
    %5684 = vmatpush2.msra.mxu0 0.0
    %5685 = vmatprep.subr.mxu0 0.0
    %5686 = vmatpush2.msra.mxu0 0.0
    %5687 = vmatprep.subr.mxu0 0.0
    %5688 = vmatpush2.msra.mxu0 0.0
    %5689 = vmatprep.subr.mxu0 0.0
    %5690 = vmatpush2.msra.mxu0 0.0
    %5691 = vmatprep.subr.mxu0 0.0
    %5692 = vmatpush2.msra.mxu0 0.0
    %5693 = vmatprep.subr.mxu0 0.0
    %5694 = vmatpush2.msra.mxu0 0.0
    %5695 = vmatprep.subr.mxu0 0.0
    %5696 = vmatpush2.msra.mxu0 0.0
    %5697 = vmatprep.subr.mxu0 0.0
    %5698 = vmatpush2.msra.mxu0 0.0
    %5699 = vmatprep.mubr.f32.mxu0 0.0
    %5700 = vmatmul.mubr.f32.gmra.mxu0 %v5633
    %v5701 = vpop.f32.mrf.mxu0
    %v5702 = vadd.f32 0.0, %v5701
    %v5703 = vpop.f32.mrf.mxu0
    %5704 = vdwg.mxu0
    %v5706 = vsel %vm4871, %v5041, 0
    %5708 = vmatprep.subr.mxu0 0.0
    %5709 = vmatpush1.msra.mxu0 0.0
    %5710 = vmatprep.subr.mxu0 0.0
    %5711 = vmatpush1.msra.mxu0 0.0
    %5712 = vmatprep.subr.mxu0 0.0
    %5713 = vmatpush1.msra.mxu0 0.0
    %5714 = vmatprep.subr.mxu0 0.0
    %5715 = vmatpush1.msra.mxu0 0.0
    %5716 = vmatprep.subr.mxu0 0.0
    %5717 = vmatpush1.msra.mxu0 0.0
    %5718 = vmatprep.subr.mxu0 0.0
    %5719 = vmatpush1.msra.mxu0 0.0
    %5720 = vmatprep.subr.mxu0 0.0
    %5721 = vmatpush1.msra.mxu0 0.0
    %5722 = vmatprep.subr.mxu0 0.0
    %5723 = vmatpush1.msra.mxu0 0.0
    %5724 = vmatprep.subr.mxu0 0.0
    %5725 = vmatpush1.msra.mxu0 0.0
    %5726 = vmatprep.subr.mxu0 0.0
    %5727 = vmatpush1.msra.mxu0 0.0
    %5728 = vmatprep.subr.mxu0 0.0
    %5729 = vmatpush1.msra.mxu0 0.0
    %5730 = vmatprep.subr.mxu0 0.0
    %5731 = vmatpush1.msra.mxu0 0.0
    %5732 = vmatprep.subr.mxu0 0.0
    %5733 = vmatpush1.msra.mxu0 0.0
    %5734 = vmatprep.subr.mxu0 0.0
    %5735 = vmatpush1.msra.mxu0 0.0
    %5736 = vmatprep.subr.mxu0 0.0
    %5737 = vmatpush1.msra.mxu0 0.0
    %5738 = vmatprep.subr.mxu0 0.0
    %5739 = vmatpush1.msra.mxu0 %v3231
    %5740 = vmatprep.subr.mxu0 0.0
    %5741 = vmatpush2.msra.mxu0 0.0
    %5742 = vmatprep.subr.mxu0 0.0
    %5743 = vmatpush2.msra.mxu0 0.0
    %5744 = vmatprep.subr.mxu0 0.0
    %5745 = vmatpush2.msra.mxu0 0.0
    %5746 = vmatprep.subr.mxu0 0.0
    %5747 = vmatpush2.msra.mxu0 0.0
    %5748 = vmatprep.subr.mxu0 0.0
    %5749 = vmatpush2.msra.mxu0 0.0
    %5750 = vmatprep.subr.mxu0 0.0
    %5751 = vmatpush2.msra.mxu0 0.0
    %5752 = vmatprep.subr.mxu0 0.0
    %5753 = vmatpush2.msra.mxu0 0.0
    %5754 = vmatprep.subr.mxu0 0.0
    %5755 = vmatpush2.msra.mxu0 0.0
    %5756 = vmatprep.subr.mxu0 0.0
    %5757 = vmatpush2.msra.mxu0 0.0
    %5758 = vmatprep.subr.mxu0 0.0
    %5759 = vmatpush2.msra.mxu0 0.0
    %5760 = vmatprep.subr.mxu0 0.0
    %5761 = vmatpush2.msra.mxu0 0.0
    %5762 = vmatprep.subr.mxu0 0.0
    %5763 = vmatpush2.msra.mxu0 0.0
    %5764 = vmatprep.subr.mxu0 0.0
    %5765 = vmatpush2.msra.mxu0 0.0
    %5766 = vmatprep.subr.mxu0 0.0
    %5767 = vmatpush2.msra.mxu0 0.0
    %5768 = vmatprep.subr.mxu0 0.0
    %5769 = vmatpush2.msra.mxu0 0.0
    %5770 = vmatprep.subr.mxu0 0.0
    %5771 = vmatpush2.msra.mxu0 0.0
    %5772 = vmatprep.mubr.f32.mxu0 0.0
    %5773 = vmatmul.mubr.f32.gmra.mxu0 %v5706
    %v5774 = vpop.f32.mrf.mxu0
    %v5775 = vadd.f32 0.0, %v5774
    %v5776 = vpop.f32.mrf.mxu0
    %5777 = vdwg.mxu0
    %v5779 = vsel %vm4871, %v5042, 0
    %5781 = vmatprep.subr.mxu0 0.0
    %5782 = vmatpush1.msra.mxu0 0.0
    %5783 = vmatprep.subr.mxu0 0.0
    %5784 = vmatpush1.msra.mxu0 0.0
    %5785 = vmatprep.subr.mxu0 0.0
    %5786 = vmatpush1.msra.mxu0 0.0
    %5787 = vmatprep.subr.mxu0 0.0
    %5788 = vmatpush1.msra.mxu0 0.0
    %5789 = vmatprep.subr.mxu0 0.0
    %5790 = vmatpush1.msra.mxu0 0.0
    %5791 = vmatprep.subr.mxu0 0.0
    %5792 = vmatpush1.msra.mxu0 0.0
    %5793 = vmatprep.subr.mxu0 0.0
    %5794 = vmatpush1.msra.mxu0 0.0
    %5795 = vmatprep.subr.mxu0 0.0
    %5796 = vmatpush1.msra.mxu0 0.0
    %5797 = vmatprep.subr.mxu0 0.0
    %5798 = vmatpush1.msra.mxu0 0.0
    %5799 = vmatprep.subr.mxu0 0.0
    %5800 = vmatpush1.msra.mxu0 0.0
    %5801 = vmatprep.subr.mxu0 0.0
    %5802 = vmatpush1.msra.mxu0 0.0
    %5803 = vmatprep.subr.mxu0 0.0
    %5804 = vmatpush1.msra.mxu0 0.0
    %5805 = vmatprep.subr.mxu0 0.0
    %5806 = vmatpush1.msra.mxu0 0.0
    %5807 = vmatprep.subr.mxu0 0.0
    %5808 = vmatpush1.msra.mxu0 0.0
    %5809 = vmatprep.subr.mxu0 0.0
    %5810 = vmatpush1.msra.mxu0 0.0
    %5811 = vmatprep.subr.mxu0 0.0
    %5812 = vmatpush1.msra.mxu0 %v3301
    %5813 = vmatprep.subr.mxu0 0.0
    %5814 = vmatpush2.msra.mxu0 0.0
    %5815 = vmatprep.subr.mxu0 0.0
    %5816 = vmatpush2.msra.mxu0 0.0
    %5817 = vmatprep.subr.mxu0 0.0
    %5818 = vmatpush2.msra.mxu0 0.0
    %5819 = vmatprep.subr.mxu0 0.0
    %5820 = vmatpush2.msra.mxu0 0.0
    %5821 = vmatprep.subr.mxu0 0.0
    %5822 = vmatpush2.msra.mxu0 0.0
    %5823 = vmatprep.subr.mxu0 0.0
    %5824 = vmatpush2.msra.mxu0 0.0
    %5825 = vmatprep.subr.mxu0 0.0
    %5826 = vmatpush2.msra.mxu0 0.0
    %5827 = vmatprep.subr.mxu0 0.0
    %5828 = vmatpush2.msra.mxu0 0.0
    %5829 = vmatprep.subr.mxu0 0.0
    %5830 = vmatpush2.msra.mxu0 0.0
    %5831 = vmatprep.subr.mxu0 0.0
    %5832 = vmatpush2.msra.mxu0 0.0
    %5833 = vmatprep.subr.mxu0 0.0
    %5834 = vmatpush2.msra.mxu0 0.0
    %5835 = vmatprep.subr.mxu0 0.0
    %5836 = vmatpush2.msra.mxu0 0.0
    %5837 = vmatprep.subr.mxu0 0.0
    %5838 = vmatpush2.msra.mxu0 0.0
    %5839 = vmatprep.subr.mxu0 0.0
    %5840 = vmatpush2.msra.mxu0 0.0
    %5841 = vmatprep.subr.mxu0 0.0
    %5842 = vmatpush2.msra.mxu0 0.0
    %5843 = vmatprep.subr.mxu0 0.0
    %5844 = vmatpush2.msra.mxu0 0.0
    %5845 = vmatprep.mubr.f32.mxu0 0.0
    %5846 = vmatmul.mubr.f32.gmra.mxu0 %v5779
    %v5847 = vpop.f32.mrf.mxu0
    %v5848 = vadd.f32 0.0, %v5847
    %v5849 = vpop.f32.mrf.mxu0
    %5850 = vdwg.mxu0
    %v5852 = vsel %vm4871, %v5043, 0
    %5854 = vmatprep.subr.mxu0 0.0
    %5855 = vmatpush1.msra.mxu0 0.0
    %5856 = vmatprep.subr.mxu0 0.0
    %5857 = vmatpush1.msra.mxu0 0.0
    %5858 = vmatprep.subr.mxu0 0.0
    %5859 = vmatpush1.msra.mxu0 0.0
    %5860 = vmatprep.subr.mxu0 0.0
    %5861 = vmatpush1.msra.mxu0 0.0
    %5862 = vmatprep.subr.mxu0 0.0
    %5863 = vmatpush1.msra.mxu0 0.0
    %5864 = vmatprep.subr.mxu0 0.0
    %5865 = vmatpush1.msra.mxu0 0.0
    %5866 = vmatprep.subr.mxu0 0.0
    %5867 = vmatpush1.msra.mxu0 0.0
    %5868 = vmatprep.subr.mxu0 0.0
    %5869 = vmatpush1.msra.mxu0 0.0
    %5870 = vmatprep.subr.mxu0 0.0
    %5871 = vmatpush1.msra.mxu0 0.0
    %5872 = vmatprep.subr.mxu0 0.0
    %5873 = vmatpush1.msra.mxu0 0.0
    %5874 = vmatprep.subr.mxu0 0.0
    %5875 = vmatpush1.msra.mxu0 0.0
    %5876 = vmatprep.subr.mxu0 0.0
    %5877 = vmatpush1.msra.mxu0 0.0
    %5878 = vmatprep.subr.mxu0 0.0
    %5879 = vmatpush1.msra.mxu0 0.0
    %5880 = vmatprep.subr.mxu0 0.0
    %5881 = vmatpush1.msra.mxu0 0.0
    %5882 = vmatprep.subr.mxu0 0.0
    %5883 = vmatpush1.msra.mxu0 0.0
    %5884 = vmatprep.subr.mxu0 0.0
    %5885 = vmatpush1.msra.mxu0 %v3371
    %5886 = vmatprep.subr.mxu0 0.0
    %5887 = vmatpush2.msra.mxu0 0.0
    %5888 = vmatprep.subr.mxu0 0.0
    %5889 = vmatpush2.msra.mxu0 0.0
    %5890 = vmatprep.subr.mxu0 0.0
    %5891 = vmatpush2.msra.mxu0 0.0
    %5892 = vmatprep.subr.mxu0 0.0
    %5893 = vmatpush2.msra.mxu0 0.0
    %5894 = vmatprep.subr.mxu0 0.0
    %5895 = vmatpush2.msra.mxu0 0.0
    %5896 = vmatprep.subr.mxu0 0.0
    %5897 = vmatpush2.msra.mxu0 0.0
    %5898 = vmatprep.subr.mxu0 0.0
    %5899 = vmatpush2.msra.mxu0 0.0
    %5900 = vmatprep.subr.mxu0 0.0
    %5901 = vmatpush2.msra.mxu0 0.0
    %5902 = vmatprep.subr.mxu0 0.0
    %5903 = vmatpush2.msra.mxu0 0.0
    %5904 = vmatprep.subr.mxu0 0.0
    %5905 = vmatpush2.msra.mxu0 0.0
    %5906 = vmatprep.subr.mxu0 0.0
    %5907 = vmatpush2.msra.mxu0 0.0
    %5908 = vmatprep.subr.mxu0 0.0
    %5909 = vmatpush2.msra.mxu0 0.0
    %5910 = vmatprep.subr.mxu0 0.0
    %5911 = vmatpush2.msra.mxu0 0.0
    %5912 = vmatprep.subr.mxu0 0.0
    %5913 = vmatpush2.msra.mxu0 0.0
    %5914 = vmatprep.subr.mxu0 0.0
    %5915 = vmatpush2.msra.mxu0 0.0
    %5916 = vmatprep.subr.mxu0 0.0
    %5917 = vmatpush2.msra.mxu0 0.0
    %5918 = vmatprep.mubr.f32.mxu0 0.0
    %5919 = vmatmul.mubr.f32.gmra.mxu0 %v5852
    %v5920 = vpop.f32.mrf.mxu0
    %v5921 = vadd.f32 0.0, %v5920
    %v5922 = vpop.f32.mrf.mxu0
    %5923 = vdwg.mxu0
    %v5925 = vsel %vm4871, %v5044, 0
    %5927 = vmatprep.subr.mxu0 0.0
    %5928 = vmatpush1.msra.mxu0 0.0
    %5929 = vmatprep.subr.mxu0 0.0
    %5930 = vmatpush1.msra.mxu0 0.0
    %5931 = vmatprep.subr.mxu0 0.0
    %5932 = vmatpush1.msra.mxu0 0.0
    %5933 = vmatprep.subr.mxu0 0.0
    %5934 = vmatpush1.msra.mxu0 0.0
    %5935 = vmatprep.subr.mxu0 0.0
    %5936 = vmatpush1.msra.mxu0 0.0
    %5937 = vmatprep.subr.mxu0 0.0
    %5938 = vmatpush1.msra.mxu0 0.0
    %5939 = vmatprep.subr.mxu0 0.0
    %5940 = vmatpush1.msra.mxu0 0.0
    %5941 = vmatprep.subr.mxu0 0.0
    %5942 = vmatpush1.msra.mxu0 0.0
    %5943 = vmatprep.subr.mxu0 0.0
    %5944 = vmatpush1.msra.mxu0 0.0
    %5945 = vmatprep.subr.mxu0 0.0
    %5946 = vmatpush1.msra.mxu0 0.0
    %5947 = vmatprep.subr.mxu0 0.0
    %5948 = vmatpush1.msra.mxu0 0.0
    %5949 = vmatprep.subr.mxu0 0.0
    %5950 = vmatpush1.msra.mxu0 0.0
    %5951 = vmatprep.subr.mxu0 0.0
    %5952 = vmatpush1.msra.mxu0 0.0
    %5953 = vmatprep.subr.mxu0 0.0
    %5954 = vmatpush1.msra.mxu0 0.0
    %5955 = vmatprep.subr.mxu0 0.0
    %5956 = vmatpush1.msra.mxu0 0.0
    %5957 = vmatprep.subr.mxu0 0.0
    %5958 = vmatpush1.msra.mxu0 %v3441
    %5959 = vmatprep.subr.mxu0 0.0
    %5960 = vmatpush2.msra.mxu0 0.0
    %5961 = vmatprep.subr.mxu0 0.0
    %5962 = vmatpush2.msra.mxu0 0.0
    %5963 = vmatprep.subr.mxu0 0.0
    %5964 = vmatpush2.msra.mxu0 0.0
    %5965 = vmatprep.subr.mxu0 0.0
    %5966 = vmatpush2.msra.mxu0 0.0
    %5967 = vmatprep.subr.mxu0 0.0
    %5968 = vmatpush2.msra.mxu0 0.0
    %5969 = vmatprep.subr.mxu0 0.0
    %5970 = vmatpush2.msra.mxu0 0.0
    %5971 = vmatprep.subr.mxu0 0.0
    %5972 = vmatpush2.msra.mxu0 0.0
    %5973 = vmatprep.subr.mxu0 0.0
    %5974 = vmatpush2.msra.mxu0 0.0
    %5975 = vmatprep.subr.mxu0 0.0
    %5976 = vmatpush2.msra.mxu0 0.0
    %5977 = vmatprep.subr.mxu0 0.0
    %5978 = vmatpush2.msra.mxu0 0.0
    %5979 = vmatprep.subr.mxu0 0.0
    %5980 = vmatpush2.msra.mxu0 0.0
    %5981 = vmatprep.subr.mxu0 0.0
    %5982 = vmatpush2.msra.mxu0 0.0
    %5983 = vmatprep.subr.mxu0 0.0
    %5984 = vmatpush2.msra.mxu0 0.0
    %5985 = vmatprep.subr.mxu0 0.0
    %5986 = vmatpush2.msra.mxu0 0.0
    %5987 = vmatprep.subr.mxu0 0.0
    %5988 = vmatpush2.msra.mxu0 0.0
    %5989 = vmatprep.subr.mxu0 0.0
    %5990 = vmatpush2.msra.mxu0 0.0
    %5991 = vmatprep.mubr.f32.mxu0 0.0
    %5992 = vmatmul.mubr.f32.gmra.mxu0 %v5925
    %v5993 = vpop.f32.mrf.mxu0
    %v5994 = vadd.f32 0.0, %v5993
    %v5995 = vpop.f32.mrf.mxu0
    %5996 = vdwg.mxu0
    %v5998 = vsel %vm4871, %v5045, 0
    %6000 = vmatprep.subr.mxu0 0.0
    %6001 = vmatpush1.msra.mxu0 0.0
    %6002 = vmatprep.subr.mxu0 0.0
    %6003 = vmatpush1.msra.mxu0 0.0
    %6004 = vmatprep.subr.mxu0 0.0
    %6005 = vmatpush1.msra.mxu0 0.0
    %6006 = vmatprep.subr.mxu0 0.0
    %6007 = vmatpush1.msra.mxu0 0.0
    %6008 = vmatprep.subr.mxu0 0.0
    %6009 = vmatpush1.msra.mxu0 0.0
    %6010 = vmatprep.subr.mxu0 0.0
    %6011 = vmatpush1.msra.mxu0 0.0
    %6012 = vmatprep.subr.mxu0 0.0
    %6013 = vmatpush1.msra.mxu0 0.0
    %6014 = vmatprep.subr.mxu0 0.0
    %6015 = vmatpush1.msra.mxu0 0.0
    %6016 = vmatprep.subr.mxu0 0.0
    %6017 = vmatpush1.msra.mxu0 0.0
    %6018 = vmatprep.subr.mxu0 0.0
    %6019 = vmatpush1.msra.mxu0 0.0
    %6020 = vmatprep.subr.mxu0 0.0
    %6021 = vmatpush1.msra.mxu0 0.0
    %6022 = vmatprep.subr.mxu0 0.0
    %6023 = vmatpush1.msra.mxu0 0.0
    %6024 = vmatprep.subr.mxu0 0.0
    %6025 = vmatpush1.msra.mxu0 0.0
    %6026 = vmatprep.subr.mxu0 0.0
    %6027 = vmatpush1.msra.mxu0 0.0
    %6028 = vmatprep.subr.mxu0 0.0
    %6029 = vmatpush1.msra.mxu0 0.0
    %6030 = vmatprep.subr.mxu0 0.0
    %6031 = vmatpush1.msra.mxu0 %v3511
    %6032 = vmatprep.subr.mxu0 0.0
    %6033 = vmatpush2.msra.mxu0 0.0
    %6034 = vmatprep.subr.mxu0 0.0
    %6035 = vmatpush2.msra.mxu0 0.0
    %6036 = vmatprep.subr.mxu0 0.0
    %6037 = vmatpush2.msra.mxu0 0.0
    %6038 = vmatprep.subr.mxu0 0.0
    %6039 = vmatpush2.msra.mxu0 0.0
    %6040 = vmatprep.subr.mxu0 0.0
    %6041 = vmatpush2.msra.mxu0 0.0
    %6042 = vmatprep.subr.mxu0 0.0
    %6043 = vmatpush2.msra.mxu0 0.0
    %6044 = vmatprep.subr.mxu0 0.0
    %6045 = vmatpush2.msra.mxu0 0.0
    %6046 = vmatprep.subr.mxu0 0.0
    %6047 = vmatpush2.msra.mxu0 0.0
    %6048 = vmatprep.subr.mxu0 0.0
    %6049 = vmatpush2.msra.mxu0 0.0
    %6050 = vmatprep.subr.mxu0 0.0
    %6051 = vmatpush2.msra.mxu0 0.0
    %6052 = vmatprep.subr.mxu0 0.0
    %6053 = vmatpush2.msra.mxu0 0.0
    %6054 = vmatprep.subr.mxu0 0.0
    %6055 = vmatpush2.msra.mxu0 0.0
    %6056 = vmatprep.subr.mxu0 0.0
    %6057 = vmatpush2.msra.mxu0 0.0
    %6058 = vmatprep.subr.mxu0 0.0
    %6059 = vmatpush2.msra.mxu0 0.0
    %6060 = vmatprep.subr.mxu0 0.0
    %6061 = vmatpush2.msra.mxu0 0.0
    %6062 = vmatprep.subr.mxu0 0.0
    %6063 = vmatpush2.msra.mxu0 0.0
    %6064 = vmatprep.mubr.f32.mxu0 0.0
    %6065 = vmatmul.mubr.f32.gmra.mxu0 %v5998
    %v6066 = vpop.f32.mrf.mxu0
    %v6067 = vadd.f32 0.0, %v6066
    %v6068 = vpop.f32.mrf.mxu0
    %6069 = vdwg.mxu0
    %v6071 = vsel %vm4871, %v5046, 0
    %6073 = vmatprep.subr.mxu0 0.0
    %6074 = vmatpush1.msra.mxu0 0.0
    %6075 = vmatprep.subr.mxu0 0.0
    %6076 = vmatpush1.msra.mxu0 0.0
    %6077 = vmatprep.subr.mxu0 0.0
    %6078 = vmatpush1.msra.mxu0 0.0
    %6079 = vmatprep.subr.mxu0 0.0
    %6080 = vmatpush1.msra.mxu0 0.0
    %6081 = vmatprep.subr.mxu0 0.0
    %6082 = vmatpush1.msra.mxu0 0.0
    %6083 = vmatprep.subr.mxu0 0.0
    %6084 = vmatpush1.msra.mxu0 0.0
    %6085 = vmatprep.subr.mxu0 0.0
    %6086 = vmatpush1.msra.mxu0 0.0
    %6087 = vmatprep.subr.mxu0 0.0
    %6088 = vmatpush1.msra.mxu0 0.0
    %6089 = vmatprep.subr.mxu0 0.0
    %6090 = vmatpush1.msra.mxu0 0.0
    %6091 = vmatprep.subr.mxu0 0.0
    %6092 = vmatpush1.msra.mxu0 0.0
    %6093 = vmatprep.subr.mxu0 0.0
    %6094 = vmatpush1.msra.mxu0 0.0
    %6095 = vmatprep.subr.mxu0 0.0
    %6096 = vmatpush1.msra.mxu0 0.0
    %6097 = vmatprep.subr.mxu0 0.0
    %6098 = vmatpush1.msra.mxu0 0.0
    %6099 = vmatprep.subr.mxu0 0.0
    %6100 = vmatpush1.msra.mxu0 0.0
    %6101 = vmatprep.subr.mxu0 0.0
    %6102 = vmatpush1.msra.mxu0 0.0
    %6103 = vmatprep.subr.mxu0 0.0
    %6104 = vmatpush1.msra.mxu0 %v3581
    %6105 = vmatprep.subr.mxu0 0.0
    %6106 = vmatpush2.msra.mxu0 0.0
    %6107 = vmatprep.subr.mxu0 0.0
    %6108 = vmatpush2.msra.mxu0 0.0
    %6109 = vmatprep.subr.mxu0 0.0
    %6110 = vmatpush2.msra.mxu0 0.0
    %6111 = vmatprep.subr.mxu0 0.0
    %6112 = vmatpush2.msra.mxu0 0.0
    %6113 = vmatprep.subr.mxu0 0.0
    %6114 = vmatpush2.msra.mxu0 0.0
    %6115 = vmatprep.subr.mxu0 0.0
    %6116 = vmatpush2.msra.mxu0 0.0
    %6117 = vmatprep.subr.mxu0 0.0
    %6118 = vmatpush2.msra.mxu0 0.0
    %6119 = vmatprep.subr.mxu0 0.0
    %6120 = vmatpush2.msra.mxu0 0.0
    %6121 = vmatprep.subr.mxu0 0.0
    %6122 = vmatpush2.msra.mxu0 0.0
    %6123 = vmatprep.subr.mxu0 0.0
    %6124 = vmatpush2.msra.mxu0 0.0
    %6125 = vmatprep.subr.mxu0 0.0
    %6126 = vmatpush2.msra.mxu0 0.0
    %6127 = vmatprep.subr.mxu0 0.0
    %6128 = vmatpush2.msra.mxu0 0.0
    %6129 = vmatprep.subr.mxu0 0.0
    %6130 = vmatpush2.msra.mxu0 0.0
    %6131 = vmatprep.subr.mxu0 0.0
    %6132 = vmatpush2.msra.mxu0 0.0
    %6133 = vmatprep.subr.mxu0 0.0
    %6134 = vmatpush2.msra.mxu0 0.0
    %6135 = vmatprep.subr.mxu0 0.0
    %6136 = vmatpush2.msra.mxu0 0.0
    %6137 = vmatprep.mubr.f32.mxu0 0.0
    %6138 = vmatmul.mubr.f32.gmra.mxu0 %v6071
    %v6139 = vpop.f32.mrf.mxu0
    %v6140 = vadd.f32 0.0, %v6139
    %v6141 = vpop.f32.mrf.mxu0
    %6142 = vdwg.mxu0
    %v6144 = vsel %vm4871, %v5047, 0
    %6146 = vmatprep.subr.mxu0 0.0
    %6147 = vmatpush1.msra.mxu0 0.0
    %6148 = vmatprep.subr.mxu0 0.0
    %6149 = vmatpush1.msra.mxu0 0.0
    %6150 = vmatprep.subr.mxu0 0.0
    %6151 = vmatpush1.msra.mxu0 0.0
    %6152 = vmatprep.subr.mxu0 0.0
    %6153 = vmatpush1.msra.mxu0 0.0
    %6154 = vmatprep.subr.mxu0 0.0
    %6155 = vmatpush1.msra.mxu0 0.0
    %6156 = vmatprep.subr.mxu0 0.0
    %6157 = vmatpush1.msra.mxu0 0.0
    %6158 = vmatprep.subr.mxu0 0.0
    %6159 = vmatpush1.msra.mxu0 0.0
    %6160 = vmatprep.subr.mxu0 0.0
    %6161 = vmatpush1.msra.mxu0 0.0
    %6162 = vmatprep.subr.mxu0 0.0
    %6163 = vmatpush1.msra.mxu0 0.0
    %6164 = vmatprep.subr.mxu0 0.0
    %6165 = vmatpush1.msra.mxu0 0.0
    %6166 = vmatprep.subr.mxu0 0.0
    %6167 = vmatpush1.msra.mxu0 0.0
    %6168 = vmatprep.subr.mxu0 0.0
    %6169 = vmatpush1.msra.mxu0 0.0
    %6170 = vmatprep.subr.mxu0 0.0
    %6171 = vmatpush1.msra.mxu0 0.0
    %6172 = vmatprep.subr.mxu0 0.0
    %6173 = vmatpush1.msra.mxu0 0.0
    %6174 = vmatprep.subr.mxu0 0.0
    %6175 = vmatpush1.msra.mxu0 0.0
    %6176 = vmatprep.subr.mxu0 0.0
    %6177 = vmatpush1.msra.mxu0 %v3651
    %6178 = vmatprep.subr.mxu0 0.0
    %6179 = vmatpush2.msra.mxu0 0.0
    %6180 = vmatprep.subr.mxu0 0.0
    %6181 = vmatpush2.msra.mxu0 0.0
    %6182 = vmatprep.subr.mxu0 0.0
    %6183 = vmatpush2.msra.mxu0 0.0
    %6184 = vmatprep.subr.mxu0 0.0
    %6185 = vmatpush2.msra.mxu0 0.0
    %6186 = vmatprep.subr.mxu0 0.0
    %6187 = vmatpush2.msra.mxu0 0.0
    %6188 = vmatprep.subr.mxu0 0.0
    %6189 = vmatpush2.msra.mxu0 0.0
    %6190 = vmatprep.subr.mxu0 0.0
    %6191 = vmatpush2.msra.mxu0 0.0
    %6192 = vmatprep.subr.mxu0 0.0
    %6193 = vmatpush2.msra.mxu0 0.0
    %6194 = vmatprep.subr.mxu0 0.0
    %6195 = vmatpush2.msra.mxu0 0.0
    %6196 = vmatprep.subr.mxu0 0.0
    %6197 = vmatpush2.msra.mxu0 0.0
    %6198 = vmatprep.subr.mxu0 0.0
    %6199 = vmatpush2.msra.mxu0 0.0
    %6200 = vmatprep.subr.mxu0 0.0
    %6201 = vmatpush2.msra.mxu0 0.0
    %6202 = vmatprep.subr.mxu0 0.0
    %6203 = vmatpush2.msra.mxu0 0.0
    %6204 = vmatprep.subr.mxu0 0.0
    %6205 = vmatpush2.msra.mxu0 0.0
    %6206 = vmatprep.subr.mxu0 0.0
    %6207 = vmatpush2.msra.mxu0 0.0
    %6208 = vmatprep.subr.mxu0 0.0
    %6209 = vmatpush2.msra.mxu0 0.0
    %6210 = vmatprep.mubr.f32.mxu0 0.0
    %6211 = vmatmul.mubr.f32.gmra.mxu0 %v6144
    %v6212 = vpop.f32.mrf.mxu0
    %v6213 = vadd.f32 0.0, %v6212
    %v6214 = vpop.f32.mrf.mxu0
    %6215 = vdwg.mxu0
    %v6216 = vld [vmem:[%s3] sm:$0xf]
    %v6217 = vld [vmem:[%s3 + $0x4] sm:$0xf]
    %v6218 = vld [vmem:[%s3 + $0x8] sm:$0xf]
    %v6219 = vld [vmem:[%s3 + $0xc] sm:$0xf]
    %v6220 = vld [vmem:[%s3 + $0x10] sm:$0xf]
    %v6221 = vld [vmem:[%s3 + $0x14] sm:$0xf]
    %v6222 = vld [vmem:[%s3 + $0x18] sm:$0xf]
    %v6223 = vld [vmem:[%s3 + $0x1c] sm:$0xf]
    %v6225 = vsel %vm3654, %v5118, 0
    %vm6227 = vcmask 1043456
    %v6229 = vsel %vm6227, %v6216, 0
    %6231 = vmatprep.subr.mxu0 0.0
    %6232 = vmatpush1.msra.mxu0 0.0
    %6233 = vmatprep.subr.mxu0 0.0
    %6234 = vmatpush1.msra.mxu0 0.0
    %6235 = vmatprep.subr.mxu0 0.0
    %6236 = vmatpush1.msra.mxu0 0.0
    %6237 = vmatprep.subr.mxu0 0.0
    %6238 = vmatpush1.msra.mxu0 0.0
    %6239 = vmatprep.subr.mxu0 0.0
    %6240 = vmatpush1.msra.mxu0 0.0
    %6241 = vmatprep.subr.mxu0 0.0
    %6242 = vmatpush1.msra.mxu0 0.0
    %6243 = vmatprep.subr.mxu0 0.0
    %6244 = vmatpush1.msra.mxu0 0.0
    %6245 = vmatprep.subr.mxu0 0.0
    %6246 = vmatpush1.msra.mxu0 0.0
    %6247 = vmatprep.subr.mxu0 0.0
    %6248 = vmatpush1.msra.mxu0 0.0
    %6249 = vmatprep.subr.mxu0 0.0
    %6250 = vmatpush1.msra.mxu0 0.0
    %6251 = vmatprep.subr.mxu0 0.0
    %6252 = vmatpush1.msra.mxu0 0.0
    %6253 = vmatprep.subr.mxu0 0.0
    %6254 = vmatpush1.msra.mxu0 0.0
    %6255 = vmatprep.subr.mxu0 0.0
    %6256 = vmatpush1.msra.mxu0 0.0
    %6257 = vmatprep.subr.mxu0 0.0
    %6258 = vmatpush1.msra.mxu0 0.0
    %6259 = vmatprep.subr.mxu0 0.0
    %6260 = vmatpush1.msra.mxu0 0.0
    %6261 = vmatprep.subr.mxu0 0.0
    %6262 = vmatpush1.msra.mxu0 %v6229
    %6263 = vmatprep.subr.mxu0 0.0
    %6264 = vmatpush2.msra.mxu0 0.0
    %6265 = vmatprep.subr.mxu0 0.0
    %6266 = vmatpush2.msra.mxu0 0.0
    %6267 = vmatprep.subr.mxu0 0.0
    %6268 = vmatpush2.msra.mxu0 0.0
    %6269 = vmatprep.subr.mxu0 0.0
    %6270 = vmatpush2.msra.mxu0 0.0
    %6271 = vmatprep.subr.mxu0 0.0
    %6272 = vmatpush2.msra.mxu0 0.0
    %6273 = vmatprep.subr.mxu0 0.0
    %6274 = vmatpush2.msra.mxu0 0.0
    %6275 = vmatprep.subr.mxu0 0.0
    %6276 = vmatpush2.msra.mxu0 0.0
    %6277 = vmatprep.subr.mxu0 0.0
    %6278 = vmatpush2.msra.mxu0 0.0
    %6279 = vmatprep.subr.mxu0 0.0
    %6280 = vmatpush2.msra.mxu0 0.0
    %6281 = vmatprep.subr.mxu0 0.0
    %6282 = vmatpush2.msra.mxu0 0.0
    %6283 = vmatprep.subr.mxu0 0.0
    %6284 = vmatpush2.msra.mxu0 0.0
    %6285 = vmatprep.subr.mxu0 0.0
    %6286 = vmatpush2.msra.mxu0 0.0
    %6287 = vmatprep.subr.mxu0 0.0
    %6288 = vmatpush2.msra.mxu0 0.0
    %6289 = vmatprep.subr.mxu0 0.0
    %6290 = vmatpush2.msra.mxu0 0.0
    %6291 = vmatprep.subr.mxu0 0.0
    %6292 = vmatpush2.msra.mxu0 0.0
    %6293 = vmatprep.subr.mxu0 0.0
    %6294 = vmatpush2.msra.mxu0 0.0
    %6295 = vmatprep.mubr.f32.mxu0 0.0
    %6296 = vmatmul.mubr.f32.gmra.mxu0 %v6225
    %v6297 = vpop.f32.mrf.mxu0
    %v6298 = vadd.f32 0.0, %v6297
    %v6299 = vpop.f32.mrf.mxu0
    %6300 = vdwg.mxu0
    %v6302 = vsel %vm3654, %v5191, 0
    %6304 = vmatprep.subr.mxu0 0.0
    %6305 = vmatpush1.msra.mxu0 0.0
    %6306 = vmatprep.subr.mxu0 0.0
    %6307 = vmatpush1.msra.mxu0 0.0
    %6308 = vmatprep.subr.mxu0 0.0
    %6309 = vmatpush1.msra.mxu0 0.0
    %6310 = vmatprep.subr.mxu0 0.0
    %6311 = vmatpush1.msra.mxu0 0.0
    %6312 = vmatprep.subr.mxu0 0.0
    %6313 = vmatpush1.msra.mxu0 0.0
    %6314 = vmatprep.subr.mxu0 0.0
    %6315 = vmatpush1.msra.mxu0 0.0
    %6316 = vmatprep.subr.mxu0 0.0
    %6317 = vmatpush1.msra.mxu0 0.0
    %6318 = vmatprep.subr.mxu0 0.0
    %6319 = vmatpush1.msra.mxu0 0.0
    %6320 = vmatprep.subr.mxu0 0.0
    %6321 = vmatpush1.msra.mxu0 0.0
    %6322 = vmatprep.subr.mxu0 0.0
    %6323 = vmatpush1.msra.mxu0 0.0
    %6324 = vmatprep.subr.mxu0 0.0
    %6325 = vmatpush1.msra.mxu0 0.0
    %6326 = vmatprep.subr.mxu0 0.0
    %6327 = vmatpush1.msra.mxu0 0.0
    %6328 = vmatprep.subr.mxu0 0.0
    %6329 = vmatpush1.msra.mxu0 0.0
    %6330 = vmatprep.subr.mxu0 0.0
    %6331 = vmatpush1.msra.mxu0 0.0
    %6332 = vmatprep.subr.mxu0 0.0
    %6333 = vmatpush1.msra.mxu0 0.0
    %6334 = vmatprep.subr.mxu0 0.0
    %6335 = vmatpush1.msra.mxu0 %v6229
    %6336 = vmatprep.subr.mxu0 0.0
    %6337 = vmatpush2.msra.mxu0 0.0
    %6338 = vmatprep.subr.mxu0 0.0
    %6339 = vmatpush2.msra.mxu0 0.0
    %6340 = vmatprep.subr.mxu0 0.0
    %6341 = vmatpush2.msra.mxu0 0.0
    %6342 = vmatprep.subr.mxu0 0.0
    %6343 = vmatpush2.msra.mxu0 0.0
    %6344 = vmatprep.subr.mxu0 0.0
    %6345 = vmatpush2.msra.mxu0 0.0
    %6346 = vmatprep.subr.mxu0 0.0
    %6347 = vmatpush2.msra.mxu0 0.0
    %6348 = vmatprep.subr.mxu0 0.0
    %6349 = vmatpush2.msra.mxu0 0.0
    %6350 = vmatprep.subr.mxu0 0.0
    %6351 = vmatpush2.msra.mxu0 0.0
    %6352 = vmatprep.subr.mxu0 0.0
    %6353 = vmatpush2.msra.mxu0 0.0
    %6354 = vmatprep.subr.mxu0 0.0
    %6355 = vmatpush2.msra.mxu0 0.0
    %6356 = vmatprep.subr.mxu0 0.0
    %6357 = vmatpush2.msra.mxu0 0.0
    %6358 = vmatprep.subr.mxu0 0.0
    %6359 = vmatpush2.msra.mxu0 0.0
    %6360 = vmatprep.subr.mxu0 0.0
    %6361 = vmatpush2.msra.mxu0 0.0
    %6362 = vmatprep.subr.mxu0 0.0
    %6363 = vmatpush2.msra.mxu0 0.0
    %6364 = vmatprep.subr.mxu0 0.0
    %6365 = vmatpush2.msra.mxu0 0.0
    %6366 = vmatprep.subr.mxu0 0.0
    %6367 = vmatpush2.msra.mxu0 0.0
    %6368 = vmatprep.mubr.f32.mxu0 0.0
    %6369 = vmatmul.mubr.f32.gmra.mxu0 %v6302
    %v6370 = vpop.f32.mrf.mxu0
    %v6371 = vadd.f32 0.0, %v6370
    %v6372 = vpop.f32.mrf.mxu0
    %6373 = vdwg.mxu0
    %v6375 = vsel %vm3654, %v5264, 0
    %v6378 = vsel %vm6227, %v6217, 0
    %6380 = vmatprep.subr.mxu0 0.0
    %6381 = vmatpush1.msra.mxu0 0.0
    %6382 = vmatprep.subr.mxu0 0.0
    %6383 = vmatpush1.msra.mxu0 0.0
    %6384 = vmatprep.subr.mxu0 0.0
    %6385 = vmatpush1.msra.mxu0 0.0
    %6386 = vmatprep.subr.mxu0 0.0
    %6387 = vmatpush1.msra.mxu0 0.0
    %6388 = vmatprep.subr.mxu0 0.0
    %6389 = vmatpush1.msra.mxu0 0.0
    %6390 = vmatprep.subr.mxu0 0.0
    %6391 = vmatpush1.msra.mxu0 0.0
    %6392 = vmatprep.subr.mxu0 0.0
    %6393 = vmatpush1.msra.mxu0 0.0
    %6394 = vmatprep.subr.mxu0 0.0
    %6395 = vmatpush1.msra.mxu0 0.0
    %6396 = vmatprep.subr.mxu0 0.0
    %6397 = vmatpush1.msra.mxu0 0.0
    %6398 = vmatprep.subr.mxu0 0.0
    %6399 = vmatpush1.msra.mxu0 0.0
    %6400 = vmatprep.subr.mxu0 0.0
    %6401 = vmatpush1.msra.mxu0 0.0
    %6402 = vmatprep.subr.mxu0 0.0
    %6403 = vmatpush1.msra.mxu0 0.0
    %6404 = vmatprep.subr.mxu0 0.0
    %6405 = vmatpush1.msra.mxu0 0.0
    %6406 = vmatprep.subr.mxu0 0.0
    %6407 = vmatpush1.msra.mxu0 0.0
    %6408 = vmatprep.subr.mxu0 0.0
    %6409 = vmatpush1.msra.mxu0 0.0
    %6410 = vmatprep.subr.mxu0 0.0
    %6411 = vmatpush1.msra.mxu0 %v6378
    %6412 = vmatprep.subr.mxu0 0.0
    %6413 = vmatpush2.msra.mxu0 0.0
    %6414 = vmatprep.subr.mxu0 0.0
    %6415 = vmatpush2.msra.mxu0 0.0
    %6416 = vmatprep.subr.mxu0 0.0
    %6417 = vmatpush2.msra.mxu0 0.0
    %6418 = vmatprep.subr.mxu0 0.0
    %6419 = vmatpush2.msra.mxu0 0.0
    %6420 = vmatprep.subr.mxu0 0.0
    %6421 = vmatpush2.msra.mxu0 0.0
    %6422 = vmatprep.subr.mxu0 0.0
    %6423 = vmatpush2.msra.mxu0 0.0
    %6424 = vmatprep.subr.mxu0 0.0
    %6425 = vmatpush2.msra.mxu0 0.0
    %6426 = vmatprep.subr.mxu0 0.0
    %6427 = vmatpush2.msra.mxu0 0.0
    %6428 = vmatprep.subr.mxu0 0.0
    %6429 = vmatpush2.msra.mxu0 0.0
    %6430 = vmatprep.subr.mxu0 0.0
    %6431 = vmatpush2.msra.mxu0 0.0
    %6432 = vmatprep.subr.mxu0 0.0
    %6433 = vmatpush2.msra.mxu0 0.0
    %6434 = vmatprep.subr.mxu0 0.0
    %6435 = vmatpush2.msra.mxu0 0.0
    %6436 = vmatprep.subr.mxu0 0.0
    %6437 = vmatpush2.msra.mxu0 0.0
    %6438 = vmatprep.subr.mxu0 0.0
    %6439 = vmatpush2.msra.mxu0 0.0
    %6440 = vmatprep.subr.mxu0 0.0
    %6441 = vmatpush2.msra.mxu0 0.0
    %6442 = vmatprep.subr.mxu0 0.0
    %6443 = vmatpush2.msra.mxu0 0.0
    %6444 = vmatprep.mubr.f32.mxu0 0.0
    %6445 = vmatmul.mubr.f32.gmra.mxu0 %v6375
    %v6446 = vpop.f32.mrf.mxu0
    %v6447 = vadd.f32 0.0, %v6446
    %v6448 = vpop.f32.mrf.mxu0
    %6449 = vdwg.mxu0
    %v6451 = vsel %vm3654, %v5337, 0
    %6453 = vmatprep.subr.mxu0 0.0
    %6454 = vmatpush1.msra.mxu0 0.0
    %6455 = vmatprep.subr.mxu0 0.0
    %6456 = vmatpush1.msra.mxu0 0.0
    %6457 = vmatprep.subr.mxu0 0.0
    %6458 = vmatpush1.msra.mxu0 0.0
    %6459 = vmatprep.subr.mxu0 0.0
    %6460 = vmatpush1.msra.mxu0 0.0
    %6461 = vmatprep.subr.mxu0 0.0
    %6462 = vmatpush1.msra.mxu0 0.0
    %6463 = vmatprep.subr.mxu0 0.0
    %6464 = vmatpush1.msra.mxu0 0.0
    %6465 = vmatprep.subr.mxu0 0.0
    %6466 = vmatpush1.msra.mxu0 0.0
    %6467 = vmatprep.subr.mxu0 0.0
    %6468 = vmatpush1.msra.mxu0 0.0
    %6469 = vmatprep.subr.mxu0 0.0
    %6470 = vmatpush1.msra.mxu0 0.0
    %6471 = vmatprep.subr.mxu0 0.0
    %6472 = vmatpush1.msra.mxu0 0.0
    %6473 = vmatprep.subr.mxu0 0.0
    %6474 = vmatpush1.msra.mxu0 0.0
    %6475 = vmatprep.subr.mxu0 0.0
    %6476 = vmatpush1.msra.mxu0 0.0
    %6477 = vmatprep.subr.mxu0 0.0
    %6478 = vmatpush1.msra.mxu0 0.0
    %6479 = vmatprep.subr.mxu0 0.0
    %6480 = vmatpush1.msra.mxu0 0.0
    %6481 = vmatprep.subr.mxu0 0.0
    %6482 = vmatpush1.msra.mxu0 0.0
    %6483 = vmatprep.subr.mxu0 0.0
    %6484 = vmatpush1.msra.mxu0 %v6378
    %6485 = vmatprep.subr.mxu0 0.0
    %6486 = vmatpush2.msra.mxu0 0.0
    %6487 = vmatprep.subr.mxu0 0.0
    %6488 = vmatpush2.msra.mxu0 0.0
    %6489 = vmatprep.subr.mxu0 0.0
    %6490 = vmatpush2.msra.mxu0 0.0
    %6491 = vmatprep.subr.mxu0 0.0
    %6492 = vmatpush2.msra.mxu0 0.0
    %6493 = vmatprep.subr.mxu0 0.0
    %6494 = vmatpush2.msra.mxu0 0.0
    %6495 = vmatprep.subr.mxu0 0.0
    %6496 = vmatpush2.msra.mxu0 0.0
    %6497 = vmatprep.subr.mxu0 0.0
    %6498 = vmatpush2.msra.mxu0 0.0
    %6499 = vmatprep.subr.mxu0 0.0
    %6500 = vmatpush2.msra.mxu0 0.0
    %6501 = vmatprep.subr.mxu0 0.0
    %6502 = vmatpush2.msra.mxu0 0.0
    %6503 = vmatprep.subr.mxu0 0.0
    %6504 = vmatpush2.msra.mxu0 0.0
    %6505 = vmatprep.subr.mxu0 0.0
    %6506 = vmatpush2.msra.mxu0 0.0
    %6507 = vmatprep.subr.mxu0 0.0
    %6508 = vmatpush2.msra.mxu0 0.0
    %6509 = vmatprep.subr.mxu0 0.0
    %6510 = vmatpush2.msra.mxu0 0.0
    %6511 = vmatprep.subr.mxu0 0.0
    %6512 = vmatpush2.msra.mxu0 0.0
    %6513 = vmatprep.subr.mxu0 0.0
    %6514 = vmatpush2.msra.mxu0 0.0
    %6515 = vmatprep.subr.mxu0 0.0
    %6516 = vmatpush2.msra.mxu0 0.0
    %6517 = vmatprep.mubr.f32.mxu0 0.0
    %6518 = vmatmul.mubr.f32.gmra.mxu0 %v6451
    %v6519 = vpop.f32.mrf.mxu0
    %v6520 = vadd.f32 0.0, %v6519
    %v6521 = vpop.f32.mrf.mxu0
    %6522 = vdwg.mxu0
    %v6524 = vsel %vm3654, %v5410, 0
    %v6527 = vsel %vm6227, %v6218, 0
    %6529 = vmatprep.subr.mxu0 0.0
    %6530 = vmatpush1.msra.mxu0 0.0
    %6531 = vmatprep.subr.mxu0 0.0
    %6532 = vmatpush1.msra.mxu0 0.0
    %6533 = vmatprep.subr.mxu0 0.0
    %6534 = vmatpush1.msra.mxu0 0.0
    %6535 = vmatprep.subr.mxu0 0.0
    %6536 = vmatpush1.msra.mxu0 0.0
    %6537 = vmatprep.subr.mxu0 0.0
    %6538 = vmatpush1.msra.mxu0 0.0
    %6539 = vmatprep.subr.mxu0 0.0
    %6540 = vmatpush1.msra.mxu0 0.0
    %6541 = vmatprep.subr.mxu0 0.0
    %6542 = vmatpush1.msra.mxu0 0.0
    %6543 = vmatprep.subr.mxu0 0.0
    %6544 = vmatpush1.msra.mxu0 0.0
    %6545 = vmatprep.subr.mxu0 0.0
    %6546 = vmatpush1.msra.mxu0 0.0
    %6547 = vmatprep.subr.mxu0 0.0
    %6548 = vmatpush1.msra.mxu0 0.0
    %6549 = vmatprep.subr.mxu0 0.0
    %6550 = vmatpush1.msra.mxu0 0.0
    %6551 = vmatprep.subr.mxu0 0.0
    %6552 = vmatpush1.msra.mxu0 0.0
    %6553 = vmatprep.subr.mxu0 0.0
    %6554 = vmatpush1.msra.mxu0 0.0
    %6555 = vmatprep.subr.mxu0 0.0
    %6556 = vmatpush1.msra.mxu0 0.0
    %6557 = vmatprep.subr.mxu0 0.0
    %6558 = vmatpush1.msra.mxu0 0.0
    %6559 = vmatprep.subr.mxu0 0.0
    %6560 = vmatpush1.msra.mxu0 %v6527
    %6561 = vmatprep.subr.mxu0 0.0
    %6562 = vmatpush2.msra.mxu0 0.0
    %6563 = vmatprep.subr.mxu0 0.0
    %6564 = vmatpush2.msra.mxu0 0.0
    %6565 = vmatprep.subr.mxu0 0.0
    %6566 = vmatpush2.msra.mxu0 0.0
    %6567 = vmatprep.subr.mxu0 0.0
    %6568 = vmatpush2.msra.mxu0 0.0
    %6569 = vmatprep.subr.mxu0 0.0
    %6570 = vmatpush2.msra.mxu0 0.0
    %6571 = vmatprep.subr.mxu0 0.0
    %6572 = vmatpush2.msra.mxu0 0.0
    %6573 = vmatprep.subr.mxu0 0.0
    %6574 = vmatpush2.msra.mxu0 0.0
    %6575 = vmatprep.subr.mxu0 0.0
    %6576 = vmatpush2.msra.mxu0 0.0
    %6577 = vmatprep.subr.mxu0 0.0
    %6578 = vmatpush2.msra.mxu0 0.0
    %6579 = vmatprep.subr.mxu0 0.0
    %6580 = vmatpush2.msra.mxu0 0.0
    %6581 = vmatprep.subr.mxu0 0.0
    %6582 = vmatpush2.msra.mxu0 0.0
    %6583 = vmatprep.subr.mxu0 0.0
    %6584 = vmatpush2.msra.mxu0 0.0
    %6585 = vmatprep.subr.mxu0 0.0
    %6586 = vmatpush2.msra.mxu0 0.0
    %6587 = vmatprep.subr.mxu0 0.0
    %6588 = vmatpush2.msra.mxu0 0.0
    %6589 = vmatprep.subr.mxu0 0.0
    %6590 = vmatpush2.msra.mxu0 0.0
    %6591 = vmatprep.subr.mxu0 0.0
    %6592 = vmatpush2.msra.mxu0 0.0
    %6593 = vmatprep.mubr.f32.mxu0 0.0
    %6594 = vmatmul.mubr.f32.gmra.mxu0 %v6524
    %v6595 = vpop.f32.mrf.mxu0
    %v6596 = vadd.f32 0.0, %v6595
    %v6597 = vpop.f32.mrf.mxu0
    %6598 = vdwg.mxu0
    %v6600 = vsel %vm3654, %v5483, 0
    %6602 = vmatprep.subr.mxu0 0.0
    %6603 = vmatpush1.msra.mxu0 0.0
    %6604 = vmatprep.subr.mxu0 0.0
    %6605 = vmatpush1.msra.mxu0 0.0
    %6606 = vmatprep.subr.mxu0 0.0
    %6607 = vmatpush1.msra.mxu0 0.0
    %6608 = vmatprep.subr.mxu0 0.0
    %6609 = vmatpush1.msra.mxu0 0.0
    %6610 = vmatprep.subr.mxu0 0.0
    %6611 = vmatpush1.msra.mxu0 0.0
    %6612 = vmatprep.subr.mxu0 0.0
    %6613 = vmatpush1.msra.mxu0 0.0
    %6614 = vmatprep.subr.mxu0 0.0
    %6615 = vmatpush1.msra.mxu0 0.0
    %6616 = vmatprep.subr.mxu0 0.0
    %6617 = vmatpush1.msra.mxu0 0.0
    %6618 = vmatprep.subr.mxu0 0.0
    %6619 = vmatpush1.msra.mxu0 0.0
    %6620 = vmatprep.subr.mxu0 0.0
    %6621 = vmatpush1.msra.mxu0 0.0
    %6622 = vmatprep.subr.mxu0 0.0
    %6623 = vmatpush1.msra.mxu0 0.0
    %6624 = vmatprep.subr.mxu0 0.0
    %6625 = vmatpush1.msra.mxu0 0.0
    %6626 = vmatprep.subr.mxu0 0.0
    %6627 = vmatpush1.msra.mxu0 0.0
    %6628 = vmatprep.subr.mxu0 0.0
    %6629 = vmatpush1.msra.mxu0 0.0
    %6630 = vmatprep.subr.mxu0 0.0
    %6631 = vmatpush1.msra.mxu0 0.0
    %6632 = vmatprep.subr.mxu0 0.0
    %6633 = vmatpush1.msra.mxu0 %v6527
    %6634 = vmatprep.subr.mxu0 0.0
    %6635 = vmatpush2.msra.mxu0 0.0
    %6636 = vmatprep.subr.mxu0 0.0
    %6637 = vmatpush2.msra.mxu0 0.0
    %6638 = vmatprep.subr.mxu0 0.0
    %6639 = vmatpush2.msra.mxu0 0.0
    %6640 = vmatprep.subr.mxu0 0.0
    %6641 = vmatpush2.msra.mxu0 0.0
    %6642 = vmatprep.subr.mxu0 0.0
    %6643 = vmatpush2.msra.mxu0 0.0
    %6644 = vmatprep.subr.mxu0 0.0
    %6645 = vmatpush2.msra.mxu0 0.0
    %6646 = vmatprep.subr.mxu0 0.0
    %6647 = vmatpush2.msra.mxu0 0.0
    %6648 = vmatprep.subr.mxu0 0.0
    %6649 = vmatpush2.msra.mxu0 0.0
    %6650 = vmatprep.subr.mxu0 0.0
    %6651 = vmatpush2.msra.mxu0 0.0
    %6652 = vmatprep.subr.mxu0 0.0
    %6653 = vmatpush2.msra.mxu0 0.0
    %6654 = vmatprep.subr.mxu0 0.0
    %6655 = vmatpush2.msra.mxu0 0.0
    %6656 = vmatprep.subr.mxu0 0.0
    %6657 = vmatpush2.msra.mxu0 0.0
    %6658 = vmatprep.subr.mxu0 0.0
    %6659 = vmatpush2.msra.mxu0 0.0
    %6660 = vmatprep.subr.mxu0 0.0
    %6661 = vmatpush2.msra.mxu0 0.0
    %6662 = vmatprep.subr.mxu0 0.0
    %6663 = vmatpush2.msra.mxu0 0.0
    %6664 = vmatprep.subr.mxu0 0.0
    %6665 = vmatpush2.msra.mxu0 0.0
    %6666 = vmatprep.mubr.f32.mxu0 0.0
    %6667 = vmatmul.mubr.f32.gmra.mxu0 %v6600
    %v6668 = vpop.f32.mrf.mxu0
    %v6669 = vadd.f32 0.0, %v6668
    %v6670 = vpop.f32.mrf.mxu0
    %6671 = vdwg.mxu0
    %v6673 = vsel %vm3654, %v5556, 0
    %v6676 = vsel %vm6227, %v6219, 0
    %6678 = vmatprep.subr.mxu0 0.0
    %6679 = vmatpush1.msra.mxu0 0.0
    %6680 = vmatprep.subr.mxu0 0.0
    %6681 = vmatpush1.msra.mxu0 0.0
    %6682 = vmatprep.subr.mxu0 0.0
    %6683 = vmatpush1.msra.mxu0 0.0
    %6684 = vmatprep.subr.mxu0 0.0
    %6685 = vmatpush1.msra.mxu0 0.0
    %6686 = vmatprep.subr.mxu0 0.0
    %6687 = vmatpush1.msra.mxu0 0.0
    %6688 = vmatprep.subr.mxu0 0.0
    %6689 = vmatpush1.msra.mxu0 0.0
    %6690 = vmatprep.subr.mxu0 0.0
    %6691 = vmatpush1.msra.mxu0 0.0
    %6692 = vmatprep.subr.mxu0 0.0
    %6693 = vmatpush1.msra.mxu0 0.0
    %6694 = vmatprep.subr.mxu0 0.0
    %6695 = vmatpush1.msra.mxu0 0.0
    %6696 = vmatprep.subr.mxu0 0.0
    %6697 = vmatpush1.msra.mxu0 0.0
    %6698 = vmatprep.subr.mxu0 0.0
    %6699 = vmatpush1.msra.mxu0 0.0
    %6700 = vmatprep.subr.mxu0 0.0
    %6701 = vmatpush1.msra.mxu0 0.0
    %6702 = vmatprep.subr.mxu0 0.0
    %6703 = vmatpush1.msra.mxu0 0.0
    %6704 = vmatprep.subr.mxu0 0.0
    %6705 = vmatpush1.msra.mxu0 0.0
    %6706 = vmatprep.subr.mxu0 0.0
    %6707 = vmatpush1.msra.mxu0 0.0
    %6708 = vmatprep.subr.mxu0 0.0
    %6709 = vmatpush1.msra.mxu0 %v6676
    %6710 = vmatprep.subr.mxu0 0.0
    %6711 = vmatpush2.msra.mxu0 0.0
    %6712 = vmatprep.subr.mxu0 0.0
    %6713 = vmatpush2.msra.mxu0 0.0
    %6714 = vmatprep.subr.mxu0 0.0
    %6715 = vmatpush2.msra.mxu0 0.0
    %6716 = vmatprep.subr.mxu0 0.0
    %6717 = vmatpush2.msra.mxu0 0.0
    %6718 = vmatprep.subr.mxu0 0.0
    %6719 = vmatpush2.msra.mxu0 0.0
    %6720 = vmatprep.subr.mxu0 0.0
    %6721 = vmatpush2.msra.mxu0 0.0
    %6722 = vmatprep.subr.mxu0 0.0
    %6723 = vmatpush2.msra.mxu0 0.0
    %6724 = vmatprep.subr.mxu0 0.0
    %6725 = vmatpush2.msra.mxu0 0.0
    %6726 = vmatprep.subr.mxu0 0.0
    %6727 = vmatpush2.msra.mxu0 0.0
    %6728 = vmatprep.subr.mxu0 0.0
    %6729 = vmatpush2.msra.mxu0 0.0
    %6730 = vmatprep.subr.mxu0 0.0
    %6731 = vmatpush2.msra.mxu0 0.0
    %6732 = vmatprep.subr.mxu0 0.0
    %6733 = vmatpush2.msra.mxu0 0.0
    %6734 = vmatprep.subr.mxu0 0.0
    %6735 = vmatpush2.msra.mxu0 0.0
    %6736 = vmatprep.subr.mxu0 0.0
    %6737 = vmatpush2.msra.mxu0 0.0
    %6738 = vmatprep.subr.mxu0 0.0
    %6739 = vmatpush2.msra.mxu0 0.0
    %6740 = vmatprep.subr.mxu0 0.0
    %6741 = vmatpush2.msra.mxu0 0.0
    %6742 = vmatprep.mubr.f32.mxu0 0.0
    %6743 = vmatmul.mubr.f32.gmra.mxu0 %v6673
    %v6744 = vpop.f32.mrf.mxu0
    %v6745 = vadd.f32 0.0, %v6744
    %v6746 = vpop.f32.mrf.mxu0
    %6747 = vdwg.mxu0
    %v6749 = vsel %vm3654, %v5629, 0
    %6751 = vmatprep.subr.mxu0 0.0
    %6752 = vmatpush1.msra.mxu0 0.0
    %6753 = vmatprep.subr.mxu0 0.0
    %6754 = vmatpush1.msra.mxu0 0.0
    %6755 = vmatprep.subr.mxu0 0.0
    %6756 = vmatpush1.msra.mxu0 0.0
    %6757 = vmatprep.subr.mxu0 0.0
    %6758 = vmatpush1.msra.mxu0 0.0
    %6759 = vmatprep.subr.mxu0 0.0
    %6760 = vmatpush1.msra.mxu0 0.0
    %6761 = vmatprep.subr.mxu0 0.0
    %6762 = vmatpush1.msra.mxu0 0.0
    %6763 = vmatprep.subr.mxu0 0.0
    %6764 = vmatpush1.msra.mxu0 0.0
    %6765 = vmatprep.subr.mxu0 0.0
    %6766 = vmatpush1.msra.mxu0 0.0
    %6767 = vmatprep.subr.mxu0 0.0
    %6768 = vmatpush1.msra.mxu0 0.0
    %6769 = vmatprep.subr.mxu0 0.0
    %6770 = vmatpush1.msra.mxu0 0.0
    %6771 = vmatprep.subr.mxu0 0.0
    %6772 = vmatpush1.msra.mxu0 0.0
    %6773 = vmatprep.subr.mxu0 0.0
    %6774 = vmatpush1.msra.mxu0 0.0
    %6775 = vmatprep.subr.mxu0 0.0
    %6776 = vmatpush1.msra.mxu0 0.0
    %6777 = vmatprep.subr.mxu0 0.0
    %6778 = vmatpush1.msra.mxu0 0.0
    %6779 = vmatprep.subr.mxu0 0.0
    %6780 = vmatpush1.msra.mxu0 0.0
    %6781 = vmatprep.subr.mxu0 0.0
    %6782 = vmatpush1.msra.mxu0 %v6676
    %6783 = vmatprep.subr.mxu0 0.0
    %6784 = vmatpush2.msra.mxu0 0.0
    %6785 = vmatprep.subr.mxu0 0.0
    %6786 = vmatpush2.msra.mxu0 0.0
    %6787 = vmatprep.subr.mxu0 0.0
    %6788 = vmatpush2.msra.mxu0 0.0
    %6789 = vmatprep.subr.mxu0 0.0
    %6790 = vmatpush2.msra.mxu0 0.0
    %6791 = vmatprep.subr.mxu0 0.0
    %6792 = vmatpush2.msra.mxu0 0.0
    %6793 = vmatprep.subr.mxu0 0.0
    %6794 = vmatpush2.msra.mxu0 0.0
    %6795 = vmatprep.subr.mxu0 0.0
    %6796 = vmatpush2.msra.mxu0 0.0
    %6797 = vmatprep.subr.mxu0 0.0
    %6798 = vmatpush2.msra.mxu0 0.0
    %6799 = vmatprep.subr.mxu0 0.0
    %6800 = vmatpush2.msra.mxu0 0.0
    %6801 = vmatprep.subr.mxu0 0.0
    %6802 = vmatpush2.msra.mxu0 0.0
    %6803 = vmatprep.subr.mxu0 0.0
    %6804 = vmatpush2.msra.mxu0 0.0
    %6805 = vmatprep.subr.mxu0 0.0
    %6806 = vmatpush2.msra.mxu0 0.0
    %6807 = vmatprep.subr.mxu0 0.0
    %6808 = vmatpush2.msra.mxu0 0.0
    %6809 = vmatprep.subr.mxu0 0.0
    %6810 = vmatpush2.msra.mxu0 0.0
    %6811 = vmatprep.subr.mxu0 0.0
    %6812 = vmatpush2.msra.mxu0 0.0
    %6813 = vmatprep.subr.mxu0 0.0
    %6814 = vmatpush2.msra.mxu0 0.0
    %6815 = vmatprep.mubr.f32.mxu0 0.0
    %6816 = vmatmul.mubr.f32.gmra.mxu0 %v6749
    %v6817 = vpop.f32.mrf.mxu0
    %v6818 = vadd.f32 0.0, %v6817
    %v6819 = vpop.f32.mrf.mxu0
    %6820 = vdwg.mxu0
    %v6822 = vsel %vm3654, %v5702, 0
    %v6825 = vsel %vm6227, %v6220, 0
    %6827 = vmatprep.subr.mxu0 0.0
    %6828 = vmatpush1.msra.mxu0 0.0
    %6829 = vmatprep.subr.mxu0 0.0
    %6830 = vmatpush1.msra.mxu0 0.0
    %6831 = vmatprep.subr.mxu0 0.0
    %6832 = vmatpush1.msra.mxu0 0.0
    %6833 = vmatprep.subr.mxu0 0.0
    %6834 = vmatpush1.msra.mxu0 0.0
    %6835 = vmatprep.subr.mxu0 0.0
    %6836 = vmatpush1.msra.mxu0 0.0
    %6837 = vmatprep.subr.mxu0 0.0
    %6838 = vmatpush1.msra.mxu0 0.0
    %6839 = vmatprep.subr.mxu0 0.0
    %6840 = vmatpush1.msra.mxu0 0.0
    %6841 = vmatprep.subr.mxu0 0.0
    %6842 = vmatpush1.msra.mxu0 0.0
    %6843 = vmatprep.subr.mxu0 0.0
    %6844 = vmatpush1.msra.mxu0 0.0
    %6845 = vmatprep.subr.mxu0 0.0
    %6846 = vmatpush1.msra.mxu0 0.0
    %6847 = vmatprep.subr.mxu0 0.0
    %6848 = vmatpush1.msra.mxu0 0.0
    %6849 = vmatprep.subr.mxu0 0.0
    %6850 = vmatpush1.msra.mxu0 0.0
    %6851 = vmatprep.subr.mxu0 0.0
    %6852 = vmatpush1.msra.mxu0 0.0
    %6853 = vmatprep.subr.mxu0 0.0
    %6854 = vmatpush1.msra.mxu0 0.0
    %6855 = vmatprep.subr.mxu0 0.0
    %6856 = vmatpush1.msra.mxu0 0.0
    %6857 = vmatprep.subr.mxu0 0.0
    %6858 = vmatpush1.msra.mxu0 %v6825
    %6859 = vmatprep.subr.mxu0 0.0
    %6860 = vmatpush2.msra.mxu0 0.0
    %6861 = vmatprep.subr.mxu0 0.0
    %6862 = vmatpush2.msra.mxu0 0.0
    %6863 = vmatprep.subr.mxu0 0.0
    %6864 = vmatpush2.msra.mxu0 0.0
    %6865 = vmatprep.subr.mxu0 0.0
    %6866 = vmatpush2.msra.mxu0 0.0
    %6867 = vmatprep.subr.mxu0 0.0
    %6868 = vmatpush2.msra.mxu0 0.0
    %6869 = vmatprep.subr.mxu0 0.0
    %6870 = vmatpush2.msra.mxu0 0.0
    %6871 = vmatprep.subr.mxu0 0.0
    %6872 = vmatpush2.msra.mxu0 0.0
    %6873 = vmatprep.subr.mxu0 0.0
    %6874 = vmatpush2.msra.mxu0 0.0
    %6875 = vmatprep.subr.mxu0 0.0
    %6876 = vmatpush2.msra.mxu0 0.0
    %6877 = vmatprep.subr.mxu0 0.0
    %6878 = vmatpush2.msra.mxu0 0.0
    %6879 = vmatprep.subr.mxu0 0.0
    %6880 = vmatpush2.msra.mxu0 0.0
    %6881 = vmatprep.subr.mxu0 0.0
    %6882 = vmatpush2.msra.mxu0 0.0
    %6883 = vmatprep.subr.mxu0 0.0
    %6884 = vmatpush2.msra.mxu0 0.0
    %6885 = vmatprep.subr.mxu0 0.0
    %6886 = vmatpush2.msra.mxu0 0.0
    %6887 = vmatprep.subr.mxu0 0.0
    %6888 = vmatpush2.msra.mxu0 0.0
    %6889 = vmatprep.subr.mxu0 0.0
    %6890 = vmatpush2.msra.mxu0 0.0
    %6891 = vmatprep.mubr.f32.mxu0 0.0
    %6892 = vmatmul.mubr.f32.gmra.mxu0 %v6822
    %v6893 = vpop.f32.mrf.mxu0
    %v6894 = vadd.f32 0.0, %v6893
    %v6895 = vpop.f32.mrf.mxu0
    %6896 = vdwg.mxu0
    %v6898 = vsel %vm3654, %v5775, 0
    %6900 = vmatprep.subr.mxu0 0.0
    %6901 = vmatpush1.msra.mxu0 0.0
    %6902 = vmatprep.subr.mxu0 0.0
    %6903 = vmatpush1.msra.mxu0 0.0
    %6904 = vmatprep.subr.mxu0 0.0
    %6905 = vmatpush1.msra.mxu0 0.0
    %6906 = vmatprep.subr.mxu0 0.0
    %6907 = vmatpush1.msra.mxu0 0.0
    %6908 = vmatprep.subr.mxu0 0.0
    %6909 = vmatpush1.msra.mxu0 0.0
    %6910 = vmatprep.subr.mxu0 0.0
    %6911 = vmatpush1.msra.mxu0 0.0
    %6912 = vmatprep.subr.mxu0 0.0
    %6913 = vmatpush1.msra.mxu0 0.0
    %6914 = vmatprep.subr.mxu0 0.0
    %6915 = vmatpush1.msra.mxu0 0.0
    %6916 = vmatprep.subr.mxu0 0.0
    %6917 = vmatpush1.msra.mxu0 0.0
    %6918 = vmatprep.subr.mxu0 0.0
    %6919 = vmatpush1.msra.mxu0 0.0
    %6920 = vmatprep.subr.mxu0 0.0
    %6921 = vmatpush1.msra.mxu0 0.0
    %6922 = vmatprep.subr.mxu0 0.0
    %6923 = vmatpush1.msra.mxu0 0.0
    %6924 = vmatprep.subr.mxu0 0.0
    %6925 = vmatpush1.msra.mxu0 0.0
    %6926 = vmatprep.subr.mxu0 0.0
    %6927 = vmatpush1.msra.mxu0 0.0
    %6928 = vmatprep.subr.mxu0 0.0
    %6929 = vmatpush1.msra.mxu0 0.0
    %6930 = vmatprep.subr.mxu0 0.0
    %6931 = vmatpush1.msra.mxu0 %v6825
    %6932 = vmatprep.subr.mxu0 0.0
    %6933 = vmatpush2.msra.mxu0 0.0
    %6934 = vmatprep.subr.mxu0 0.0
    %6935 = vmatpush2.msra.mxu0 0.0
    %6936 = vmatprep.subr.mxu0 0.0
    %6937 = vmatpush2.msra.mxu0 0.0
    %6938 = vmatprep.subr.mxu0 0.0
    %6939 = vmatpush2.msra.mxu0 0.0
    %6940 = vmatprep.subr.mxu0 0.0
    %6941 = vmatpush2.msra.mxu0 0.0
    %6942 = vmatprep.subr.mxu0 0.0
    %6943 = vmatpush2.msra.mxu0 0.0
    %6944 = vmatprep.subr.mxu0 0.0
    %6945 = vmatpush2.msra.mxu0 0.0
    %6946 = vmatprep.subr.mxu0 0.0
    %6947 = vmatpush2.msra.mxu0 0.0
    %6948 = vmatprep.subr.mxu0 0.0
    %6949 = vmatpush2.msra.mxu0 0.0
    %6950 = vmatprep.subr.mxu0 0.0
    %6951 = vmatpush2.msra.mxu0 0.0
    %6952 = vmatprep.subr.mxu0 0.0
    %6953 = vmatpush2.msra.mxu0 0.0
    %6954 = vmatprep.subr.mxu0 0.0
    %6955 = vmatpush2.msra.mxu0 0.0
    %6956 = vmatprep.subr.mxu0 0.0
    %6957 = vmatpush2.msra.mxu0 0.0
    %6958 = vmatprep.subr.mxu0 0.0
    %6959 = vmatpush2.msra.mxu0 0.0
    %6960 = vmatprep.subr.mxu0 0.0
    %6961 = vmatpush2.msra.mxu0 0.0
    %6962 = vmatprep.subr.mxu0 0.0
    %6963 = vmatpush2.msra.mxu0 0.0
    %6964 = vmatprep.mubr.f32.mxu0 0.0
    %6965 = vmatmul.mubr.f32.gmra.mxu0 %v6898
    %v6966 = vpop.f32.mrf.mxu0
    %v6967 = vadd.f32 0.0, %v6966
    %v6968 = vpop.f32.mrf.mxu0
    %6969 = vdwg.mxu0
    %v6971 = vsel %vm3654, %v5848, 0
    %v6974 = vsel %vm6227, %v6221, 0
    %6976 = vmatprep.subr.mxu0 0.0
    %6977 = vmatpush1.msra.mxu0 0.0
    %6978 = vmatprep.subr.mxu0 0.0
    %6979 = vmatpush1.msra.mxu0 0.0
    %6980 = vmatprep.subr.mxu0 0.0
    %6981 = vmatpush1.msra.mxu0 0.0
    %6982 = vmatprep.subr.mxu0 0.0
    %6983 = vmatpush1.msra.mxu0 0.0
    %6984 = vmatprep.subr.mxu0 0.0
    %6985 = vmatpush1.msra.mxu0 0.0
    %6986 = vmatprep.subr.mxu0 0.0
    %6987 = vmatpush1.msra.mxu0 0.0
    %6988 = vmatprep.subr.mxu0 0.0
    %6989 = vmatpush1.msra.mxu0 0.0
    %6990 = vmatprep.subr.mxu0 0.0
    %6991 = vmatpush1.msra.mxu0 0.0
    %6992 = vmatprep.subr.mxu0 0.0
    %6993 = vmatpush1.msra.mxu0 0.0
    %6994 = vmatprep.subr.mxu0 0.0
    %6995 = vmatpush1.msra.mxu0 0.0
    %6996 = vmatprep.subr.mxu0 0.0
    %6997 = vmatpush1.msra.mxu0 0.0
    %6998 = vmatprep.subr.mxu0 0.0
    %6999 = vmatpush1.msra.mxu0 0.0
    %7000 = vmatprep.subr.mxu0 0.0
    %7001 = vmatpush1.msra.mxu0 0.0
    %7002 = vmatprep.subr.mxu0 0.0
    %7003 = vmatpush1.msra.mxu0 0.0
    %7004 = vmatprep.subr.mxu0 0.0
    %7005 = vmatpush1.msra.mxu0 0.0
    %7006 = vmatprep.subr.mxu0 0.0
    %7007 = vmatpush1.msra.mxu0 %v6974
    %7008 = vmatprep.subr.mxu0 0.0
    %7009 = vmatpush2.msra.mxu0 0.0
    %7010 = vmatprep.subr.mxu0 0.0
    %7011 = vmatpush2.msra.mxu0 0.0
    %7012 = vmatprep.subr.mxu0 0.0
    %7013 = vmatpush2.msra.mxu0 0.0
    %7014 = vmatprep.subr.mxu0 0.0
    %7015 = vmatpush2.msra.mxu0 0.0
    %7016 = vmatprep.subr.mxu0 0.0
    %7017 = vmatpush2.msra.mxu0 0.0
    %7018 = vmatprep.subr.mxu0 0.0
    %7019 = vmatpush2.msra.mxu0 0.0
    %7020 = vmatprep.subr.mxu0 0.0
    %7021 = vmatpush2.msra.mxu0 0.0
    %7022 = vmatprep.subr.mxu0 0.0
    %7023 = vmatpush2.msra.mxu0 0.0
    %7024 = vmatprep.subr.mxu0 0.0
    %7025 = vmatpush2.msra.mxu0 0.0
    %7026 = vmatprep.subr.mxu0 0.0
    %7027 = vmatpush2.msra.mxu0 0.0
    %7028 = vmatprep.subr.mxu0 0.0
    %7029 = vmatpush2.msra.mxu0 0.0
    %7030 = vmatprep.subr.mxu0 0.0
    %7031 = vmatpush2.msra.mxu0 0.0
    %7032 = vmatprep.subr.mxu0 0.0
    %7033 = vmatpush2.msra.mxu0 0.0
    %7034 = vmatprep.subr.mxu0 0.0
    %7035 = vmatpush2.msra.mxu0 0.0
    %7036 = vmatprep.subr.mxu0 0.0
    %7037 = vmatpush2.msra.mxu0 0.0
    %7038 = vmatprep.subr.mxu0 0.0
    %7039 = vmatpush2.msra.mxu0 0.0
    %7040 = vmatprep.mubr.f32.mxu0 0.0
    %7041 = vmatmul.mubr.f32.gmra.mxu0 %v6971
    %v7042 = vpop.f32.mrf.mxu0
    %v7043 = vadd.f32 0.0, %v7042
    %v7044 = vpop.f32.mrf.mxu0
    %7045 = vdwg.mxu0
    %v7047 = vsel %vm3654, %v5921, 0
    %7049 = vmatprep.subr.mxu0 0.0
    %7050 = vmatpush1.msra.mxu0 0.0
    %7051 = vmatprep.subr.mxu0 0.0
    %7052 = vmatpush1.msra.mxu0 0.0
    %7053 = vmatprep.subr.mxu0 0.0
    %7054 = vmatpush1.msra.mxu0 0.0
    %7055 = vmatprep.subr.mxu0 0.0
    %7056 = vmatpush1.msra.mxu0 0.0
    %7057 = vmatprep.subr.mxu0 0.0
    %7058 = vmatpush1.msra.mxu0 0.0
    %7059 = vmatprep.subr.mxu0 0.0
    %7060 = vmatpush1.msra.mxu0 0.0
    %7061 = vmatprep.subr.mxu0 0.0
    %7062 = vmatpush1.msra.mxu0 0.0
    %7063 = vmatprep.subr.mxu0 0.0
    %7064 = vmatpush1.msra.mxu0 0.0
    %7065 = vmatprep.subr.mxu0 0.0
    %7066 = vmatpush1.msra.mxu0 0.0
    %7067 = vmatprep.subr.mxu0 0.0
    %7068 = vmatpush1.msra.mxu0 0.0
    %7069 = vmatprep.subr.mxu0 0.0
    %7070 = vmatpush1.msra.mxu0 0.0
    %7071 = vmatprep.subr.mxu0 0.0
    %7072 = vmatpush1.msra.mxu0 0.0
    %7073 = vmatprep.subr.mxu0 0.0
    %7074 = vmatpush1.msra.mxu0 0.0
    %7075 = vmatprep.subr.mxu0 0.0
    %7076 = vmatpush1.msra.mxu0 0.0
    %7077 = vmatprep.subr.mxu0 0.0
    %7078 = vmatpush1.msra.mxu0 0.0
    %7079 = vmatprep.subr.mxu0 0.0
    %7080 = vmatpush1.msra.mxu0 %v6974
    %7081 = vmatprep.subr.mxu0 0.0
    %7082 = vmatpush2.msra.mxu0 0.0
    %7083 = vmatprep.subr.mxu0 0.0
    %7084 = vmatpush2.msra.mxu0 0.0
    %7085 = vmatprep.subr.mxu0 0.0
    %7086 = vmatpush2.msra.mxu0 0.0
    %7087 = vmatprep.subr.mxu0 0.0
    %7088 = vmatpush2.msra.mxu0 0.0
    %7089 = vmatprep.subr.mxu0 0.0
    %7090 = vmatpush2.msra.mxu0 0.0
    %7091 = vmatprep.subr.mxu0 0.0
    %7092 = vmatpush2.msra.mxu0 0.0
    %7093 = vmatprep.subr.mxu0 0.0
    %7094 = vmatpush2.msra.mxu0 0.0
    %7095 = vmatprep.subr.mxu0 0.0
    %7096 = vmatpush2.msra.mxu0 0.0
    %7097 = vmatprep.subr.mxu0 0.0
    %7098 = vmatpush2.msra.mxu0 0.0
    %7099 = vmatprep.subr.mxu0 0.0
    %7100 = vmatpush2.msra.mxu0 0.0
    %7101 = vmatprep.subr.mxu0 0.0
    %7102 = vmatpush2.msra.mxu0 0.0
    %7103 = vmatprep.subr.mxu0 0.0
    %7104 = vmatpush2.msra.mxu0 0.0
    %7105 = vmatprep.subr.mxu0 0.0
    %7106 = vmatpush2.msra.mxu0 0.0
    %7107 = vmatprep.subr.mxu0 0.0
    %7108 = vmatpush2.msra.mxu0 0.0
    %7109 = vmatprep.subr.mxu0 0.0
    %7110 = vmatpush2.msra.mxu0 0.0
    %7111 = vmatprep.subr.mxu0 0.0
    %7112 = vmatpush2.msra.mxu0 0.0
    %7113 = vmatprep.mubr.f32.mxu0 0.0
    %7114 = vmatmul.mubr.f32.gmra.mxu0 %v7047
    %v7115 = vpop.f32.mrf.mxu0
    %v7116 = vadd.f32 0.0, %v7115
    %v7117 = vpop.f32.mrf.mxu0
    %7118 = vdwg.mxu0
    %v7120 = vsel %vm3654, %v5994, 0
    %v7123 = vsel %vm6227, %v6222, 0
    %7125 = vmatprep.subr.mxu0 0.0
    %7126 = vmatpush1.msra.mxu0 0.0
    %7127 = vmatprep.subr.mxu0 0.0
    %7128 = vmatpush1.msra.mxu0 0.0
    %7129 = vmatprep.subr.mxu0 0.0
    %7130 = vmatpush1.msra.mxu0 0.0
    %7131 = vmatprep.subr.mxu0 0.0
    %7132 = vmatpush1.msra.mxu0 0.0
    %7133 = vmatprep.subr.mxu0 0.0
    %7134 = vmatpush1.msra.mxu0 0.0
    %7135 = vmatprep.subr.mxu0 0.0
    %7136 = vmatpush1.msra.mxu0 0.0
    %7137 = vmatprep.subr.mxu0 0.0
    %7138 = vmatpush1.msra.mxu0 0.0
    %7139 = vmatprep.subr.mxu0 0.0
    %7140 = vmatpush1.msra.mxu0 0.0
    %7141 = vmatprep.subr.mxu0 0.0
    %7142 = vmatpush1.msra.mxu0 0.0
    %7143 = vmatprep.subr.mxu0 0.0
    %7144 = vmatpush1.msra.mxu0 0.0
    %7145 = vmatprep.subr.mxu0 0.0
    %7146 = vmatpush1.msra.mxu0 0.0
    %7147 = vmatprep.subr.mxu0 0.0
    %7148 = vmatpush1.msra.mxu0 0.0
    %7149 = vmatprep.subr.mxu0 0.0
    %7150 = vmatpush1.msra.mxu0 0.0
    %7151 = vmatprep.subr.mxu0 0.0
    %7152 = vmatpush1.msra.mxu0 0.0
    %7153 = vmatprep.subr.mxu0 0.0
    %7154 = vmatpush1.msra.mxu0 0.0
    %7155 = vmatprep.subr.mxu0 0.0
    %7156 = vmatpush1.msra.mxu0 %v7123
    %7157 = vmatprep.subr.mxu0 0.0
    %7158 = vmatpush2.msra.mxu0 0.0
    %7159 = vmatprep.subr.mxu0 0.0
    %7160 = vmatpush2.msra.mxu0 0.0
    %7161 = vmatprep.subr.mxu0 0.0
    %7162 = vmatpush2.msra.mxu0 0.0
    %7163 = vmatprep.subr.mxu0 0.0
    %7164 = vmatpush2.msra.mxu0 0.0
    %7165 = vmatprep.subr.mxu0 0.0
    %7166 = vmatpush2.msra.mxu0 0.0
    %7167 = vmatprep.subr.mxu0 0.0
    %7168 = vmatpush2.msra.mxu0 0.0
    %7169 = vmatprep.subr.mxu0 0.0
    %7170 = vmatpush2.msra.mxu0 0.0
    %7171 = vmatprep.subr.mxu0 0.0
    %7172 = vmatpush2.msra.mxu0 0.0
    %7173 = vmatprep.subr.mxu0 0.0
    %7174 = vmatpush2.msra.mxu0 0.0
    %7175 = vmatprep.subr.mxu0 0.0
    %7176 = vmatpush2.msra.mxu0 0.0
    %7177 = vmatprep.subr.mxu0 0.0
    %7178 = vmatpush2.msra.mxu0 0.0
    %7179 = vmatprep.subr.mxu0 0.0
    %7180 = vmatpush2.msra.mxu0 0.0
    %7181 = vmatprep.subr.mxu0 0.0
    %7182 = vmatpush2.msra.mxu0 0.0
    %7183 = vmatprep.subr.mxu0 0.0
    %7184 = vmatpush2.msra.mxu0 0.0
    %7185 = vmatprep.subr.mxu0 0.0
    %7186 = vmatpush2.msra.mxu0 0.0
    %7187 = vmatprep.subr.mxu0 0.0
    %7188 = vmatpush2.msra.mxu0 0.0
    %7189 = vmatprep.mubr.f32.mxu0 0.0
    %7190 = vmatmul.mubr.f32.gmra.mxu0 %v7120
    %v7191 = vpop.f32.mrf.mxu0
    %v7192 = vadd.f32 0.0, %v7191
    %v7193 = vpop.f32.mrf.mxu0
    %7194 = vdwg.mxu0
    %v7196 = vsel %vm3654, %v6067, 0
    %7198 = vmatprep.subr.mxu0 0.0
    %7199 = vmatpush1.msra.mxu0 0.0
    %7200 = vmatprep.subr.mxu0 0.0
    %7201 = vmatpush1.msra.mxu0 0.0
    %7202 = vmatprep.subr.mxu0 0.0
    %7203 = vmatpush1.msra.mxu0 0.0
    %7204 = vmatprep.subr.mxu0 0.0
    %7205 = vmatpush1.msra.mxu0 0.0
    %7206 = vmatprep.subr.mxu0 0.0
    %7207 = vmatpush1.msra.mxu0 0.0
    %7208 = vmatprep.subr.mxu0 0.0
    %7209 = vmatpush1.msra.mxu0 0.0
    %7210 = vmatprep.subr.mxu0 0.0
    %7211 = vmatpush1.msra.mxu0 0.0
    %7212 = vmatprep.subr.mxu0 0.0
    %7213 = vmatpush1.msra.mxu0 0.0
    %7214 = vmatprep.subr.mxu0 0.0
    %7215 = vmatpush1.msra.mxu0 0.0
    %7216 = vmatprep.subr.mxu0 0.0
    %7217 = vmatpush1.msra.mxu0 0.0
    %7218 = vmatprep.subr.mxu0 0.0
    %7219 = vmatpush1.msra.mxu0 0.0
    %7220 = vmatprep.subr.mxu0 0.0
    %7221 = vmatpush1.msra.mxu0 0.0
    %7222 = vmatprep.subr.mxu0 0.0
    %7223 = vmatpush1.msra.mxu0 0.0
    %7224 = vmatprep.subr.mxu0 0.0
    %7225 = vmatpush1.msra.mxu0 0.0
    %7226 = vmatprep.subr.mxu0 0.0
    %7227 = vmatpush1.msra.mxu0 0.0
    %7228 = vmatprep.subr.mxu0 0.0
    %7229 = vmatpush1.msra.mxu0 %v7123
    %7230 = vmatprep.subr.mxu0 0.0
    %7231 = vmatpush2.msra.mxu0 0.0
    %7232 = vmatprep.subr.mxu0 0.0
    %7233 = vmatpush2.msra.mxu0 0.0
    %7234 = vmatprep.subr.mxu0 0.0
    %7235 = vmatpush2.msra.mxu0 0.0
    %7236 = vmatprep.subr.mxu0 0.0
    %7237 = vmatpush2.msra.mxu0 0.0
    %7238 = vmatprep.subr.mxu0 0.0
    %7239 = vmatpush2.msra.mxu0 0.0
    %7240 = vmatprep.subr.mxu0 0.0
    %7241 = vmatpush2.msra.mxu0 0.0
    %7242 = vmatprep.subr.mxu0 0.0
    %7243 = vmatpush2.msra.mxu0 0.0
    %7244 = vmatprep.subr.mxu0 0.0
    %7245 = vmatpush2.msra.mxu0 0.0
    %7246 = vmatprep.subr.mxu0 0.0
    %7247 = vmatpush2.msra.mxu0 0.0
    %7248 = vmatprep.subr.mxu0 0.0
    %7249 = vmatpush2.msra.mxu0 0.0
    %7250 = vmatprep.subr.mxu0 0.0
    %7251 = vmatpush2.msra.mxu0 0.0
    %7252 = vmatprep.subr.mxu0 0.0
    %7253 = vmatpush2.msra.mxu0 0.0
    %7254 = vmatprep.subr.mxu0 0.0
    %7255 = vmatpush2.msra.mxu0 0.0
    %7256 = vmatprep.subr.mxu0 0.0
    %7257 = vmatpush2.msra.mxu0 0.0
    %7258 = vmatprep.subr.mxu0 0.0
    %7259 = vmatpush2.msra.mxu0 0.0
    %7260 = vmatprep.subr.mxu0 0.0
    %7261 = vmatpush2.msra.mxu0 0.0
    %7262 = vmatprep.mubr.f32.mxu0 0.0
    %7263 = vmatmul.mubr.f32.gmra.mxu0 %v7196
    %v7264 = vpop.f32.mrf.mxu0
    %v7265 = vadd.f32 0.0, %v7264
    %v7266 = vpop.f32.mrf.mxu0
    %7267 = vdwg.mxu0
    %v7269 = vsel %vm3654, %v6140, 0
    %v7272 = vsel %vm6227, %v6223, 0
    %7274 = vmatprep.subr.mxu0 0.0
    %7275 = vmatpush1.msra.mxu0 0.0
    %7276 = vmatprep.subr.mxu0 0.0
    %7277 = vmatpush1.msra.mxu0 0.0
    %7278 = vmatprep.subr.mxu0 0.0
    %7279 = vmatpush1.msra.mxu0 0.0
    %7280 = vmatprep.subr.mxu0 0.0
    %7281 = vmatpush1.msra.mxu0 0.0
    %7282 = vmatprep.subr.mxu0 0.0
    %7283 = vmatpush1.msra.mxu0 0.0
    %7284 = vmatprep.subr.mxu0 0.0
    %7285 = vmatpush1.msra.mxu0 0.0
    %7286 = vmatprep.subr.mxu0 0.0
    %7287 = vmatpush1.msra.mxu0 0.0
    %7288 = vmatprep.subr.mxu0 0.0
    %7289 = vmatpush1.msra.mxu0 0.0
    %7290 = vmatprep.subr.mxu0 0.0
    %7291 = vmatpush1.msra.mxu0 0.0
    %7292 = vmatprep.subr.mxu0 0.0
    %7293 = vmatpush1.msra.mxu0 0.0
    %7294 = vmatprep.subr.mxu0 0.0
    %7295 = vmatpush1.msra.mxu0 0.0
    %7296 = vmatprep.subr.mxu0 0.0
    %7297 = vmatpush1.msra.mxu0 0.0
    %7298 = vmatprep.subr.mxu0 0.0
    %7299 = vmatpush1.msra.mxu0 0.0
    %7300 = vmatprep.subr.mxu0 0.0
    %7301 = vmatpush1.msra.mxu0 0.0
    %7302 = vmatprep.subr.mxu0 0.0
    %7303 = vmatpush1.msra.mxu0 0.0
    %7304 = vmatprep.subr.mxu0 0.0
    %7305 = vmatpush1.msra.mxu0 %v7272
    %7306 = vmatprep.subr.mxu0 0.0
    %7307 = vmatpush2.msra.mxu0 0.0
    %7308 = vmatprep.subr.mxu0 0.0
    %7309 = vmatpush2.msra.mxu0 0.0
    %7310 = vmatprep.subr.mxu0 0.0
    %7311 = vmatpush2.msra.mxu0 0.0
    %7312 = vmatprep.subr.mxu0 0.0
    %7313 = vmatpush2.msra.mxu0 0.0
    %7314 = vmatprep.subr.mxu0 0.0
    %7315 = vmatpush2.msra.mxu0 0.0
    %7316 = vmatprep.subr.mxu0 0.0
    %7317 = vmatpush2.msra.mxu0 0.0
    %7318 = vmatprep.subr.mxu0 0.0
    %7319 = vmatpush2.msra.mxu0 0.0
    %7320 = vmatprep.subr.mxu0 0.0
    %7321 = vmatpush2.msra.mxu0 0.0
    %7322 = vmatprep.subr.mxu0 0.0
    %7323 = vmatpush2.msra.mxu0 0.0
    %7324 = vmatprep.subr.mxu0 0.0
    %7325 = vmatpush2.msra.mxu0 0.0
    %7326 = vmatprep.subr.mxu0 0.0
    %7327 = vmatpush2.msra.mxu0 0.0
    %7328 = vmatprep.subr.mxu0 0.0
    %7329 = vmatpush2.msra.mxu0 0.0
    %7330 = vmatprep.subr.mxu0 0.0
    %7331 = vmatpush2.msra.mxu0 0.0
    %7332 = vmatprep.subr.mxu0 0.0
    %7333 = vmatpush2.msra.mxu0 0.0
    %7334 = vmatprep.subr.mxu0 0.0
    %7335 = vmatpush2.msra.mxu0 0.0
    %7336 = vmatprep.subr.mxu0 0.0
    %7337 = vmatpush2.msra.mxu0 0.0
    %7338 = vmatprep.mubr.f32.mxu0 0.0
    %7339 = vmatmul.mubr.f32.gmra.mxu0 %v7269
    %v7340 = vpop.f32.mrf.mxu0
    %v7341 = vadd.f32 0.0, %v7340
    %v7342 = vpop.f32.mrf.mxu0
    %7343 = vdwg.mxu0
    %v7345 = vsel %vm3654, %v6213, 0
    %7347 = vmatprep.subr.mxu0 0.0
    %7348 = vmatpush1.msra.mxu0 0.0
    %7349 = vmatprep.subr.mxu0 0.0
    %7350 = vmatpush1.msra.mxu0 0.0
    %7351 = vmatprep.subr.mxu0 0.0
    %7352 = vmatpush1.msra.mxu0 0.0
    %7353 = vmatprep.subr.mxu0 0.0
    %7354 = vmatpush1.msra.mxu0 0.0
    %7355 = vmatprep.subr.mxu0 0.0
    %7356 = vmatpush1.msra.mxu0 0.0
    %7357 = vmatprep.subr.mxu0 0.0
    %7358 = vmatpush1.msra.mxu0 0.0
    %7359 = vmatprep.subr.mxu0 0.0
    %7360 = vmatpush1.msra.mxu0 0.0
    %7361 = vmatprep.subr.mxu0 0.0
    %7362 = vmatpush1.msra.mxu0 0.0
    %7363 = vmatprep.subr.mxu0 0.0
    %7364 = vmatpush1.msra.mxu0 0.0
    %7365 = vmatprep.subr.mxu0 0.0
    %7366 = vmatpush1.msra.mxu0 0.0
    %7367 = vmatprep.subr.mxu0 0.0
    %7368 = vmatpush1.msra.mxu0 0.0
    %7369 = vmatprep.subr.mxu0 0.0
    %7370 = vmatpush1.msra.mxu0 0.0
    %7371 = vmatprep.subr.mxu0 0.0
    %7372 = vmatpush1.msra.mxu0 0.0
    %7373 = vmatprep.subr.mxu0 0.0
    %7374 = vmatpush1.msra.mxu0 0.0
    %7375 = vmatprep.subr.mxu0 0.0
    %7376 = vmatpush1.msra.mxu0 0.0
    %7377 = vmatprep.subr.mxu0 0.0
    %7378 = vmatpush1.msra.mxu0 %v7272
    %7379 = vmatprep.subr.mxu0 0.0
    %7380 = vmatpush2.msra.mxu0 0.0
    %7381 = vmatprep.subr.mxu0 0.0
    %7382 = vmatpush2.msra.mxu0 0.0
    %7383 = vmatprep.subr.mxu0 0.0
    %7384 = vmatpush2.msra.mxu0 0.0
    %7385 = vmatprep.subr.mxu0 0.0
    %7386 = vmatpush2.msra.mxu0 0.0
    %7387 = vmatprep.subr.mxu0 0.0
    %7388 = vmatpush2.msra.mxu0 0.0
    %7389 = vmatprep.subr.mxu0 0.0
    %7390 = vmatpush2.msra.mxu0 0.0
    %7391 = vmatprep.subr.mxu0 0.0
    %7392 = vmatpush2.msra.mxu0 0.0
    %7393 = vmatprep.subr.mxu0 0.0
    %7394 = vmatpush2.msra.mxu0 0.0
    %7395 = vmatprep.subr.mxu0 0.0
    %7396 = vmatpush2.msra.mxu0 0.0
    %7397 = vmatprep.subr.mxu0 0.0
    %7398 = vmatpush2.msra.mxu0 0.0
    %7399 = vmatprep.subr.mxu0 0.0
    %7400 = vmatpush2.msra.mxu0 0.0
    %7401 = vmatprep.subr.mxu0 0.0
    %7402 = vmatpush2.msra.mxu0 0.0
    %7403 = vmatprep.subr.mxu0 0.0
    %7404 = vmatpush2.msra.mxu0 0.0
    %7405 = vmatprep.subr.mxu0 0.0
    %7406 = vmatpush2.msra.mxu0 0.0
    %7407 = vmatprep.subr.mxu0 0.0
    %7408 = vmatpush2.msra.mxu0 0.0
    %7409 = vmatprep.subr.mxu0 0.0
    %7410 = vmatpush2.msra.mxu0 0.0
    %7411 = vmatprep.mubr.f32.mxu0 0.0
    %7412 = vmatmul.mubr.f32.gmra.mxu0 %v7345
    %v7413 = vpop.f32.mrf.mxu0
    %v7414 = vadd.f32 0.0, %v7413
    %v7415 = vpop.f32.mrf.mxu0
    %7416 = vdwg.mxu0
    %v7417 = vadd.f32 %v6298, %v6447
    %v7418 = vadd.f32 %v6371, %v6520
    %v7419 = vadd.f32 %v7417, %v6596
    %v7420 = vadd.f32 %v7418, %v6669
    %v7421 = vadd.f32 %v7419, %v6745
    %v7422 = vadd.f32 %v7420, %v6818
    %v7423 = vadd.f32 %v7421, %v6894
    %v7424 = vadd.f32 %v7422, %v6967
    %v7425 = vadd.f32 %v7423, %v7043
    %v7426 = vadd.f32 %v7424, %v7116
    %v7427 = vadd.f32 %v7425, %v7192
    %v7428 = vadd.f32 %v7426, %v7265
    %v7429 = vadd.f32 %v7427, %v7341
    %v7430 = vadd.f32 %v7428, %v7414
    %v7431 = vld [vmem:[%s4] sm:$0x1]
    %v7433 = vlaneseq
    %v7434 = vshrl.u32 %v7433, 7
    %v7435 = vsub.s32 0, %v7434
    %v7436 = vrot.slane %v7431, %v7435
    %v7438 = vadd.f32 %v7429, %v7436
    %v7439 = vadd.f32 %v7430, %v7436
    %7440 = vst.msk [vmem:[#allocation2] sm:$0xff] %vm287, %v7438
    %7441 = vst.msk [vmem:[#allocation2 + $0x8] sm:$0xff] %vm287, %v7439
    // Predicated region
    $region22: #{tpu_custom_call.1} parent=1 // pred_check
      _
    $region23: #{tpu_custom_call.1} parent=1 // pred_check_branch
      %7443 = sbr.rel (0) target = $region25
    $region24: #{tpu_custom_call.1} parent=1 // pred_region
      %s7445 = ssub.s32 256, 256
      %7446 = vsyncadd [#allocation3], %s7445
      %s7447 = sshll.u32 [#allocation2], 4
      %s7448 = int_to_ptr.vmem [resolvable:$true] %s7447
      %7453 = dma.vmem_to_hbm [thread:$0]  %s7448, 256, %s5, [#allocation3], 128, 128, 8
    $region25: #{tpu_custom_call.1} parent=1 // pred_fallthru
      _
    // Predicated region
    $region26: #{tpu_custom_call.1} parent=1 // pred_check
      _
    $region27: #{tpu_custom_call.1} parent=1 // pred_check_branch
      %7455 = sbr.rel (0) target = $region29
    $region28: #{tpu_custom_call.1} parent=1 // pred_region
      %7456 = dma.done [#allocation3], 256
    $region29: #{tpu_custom_call.1} parent=1 // pred_fallthru
      _
    %7457 = vsyncpa [#allocation3], 1

</llo_original>
